<compile_context>
chip_gen: v7x
topology: tpu7x:2x2x1
jax: 0.10.0
libtpu: 0.0.40
codegen_flags: <defaults>
</compile_context>

<pallas_src>
import functools
import math

import jax
import jax.numpy as jnp
from jax.experimental import pallas as pl
from jax.experimental.pallas import tpu as pltpu

_VMEM_LIMIT = 64 * 1024 * 1024  # above the 32 MiB scoped default


# ----------------------------------------------------------------------------
# tiling helpers
# ----------------------------------------------------------------------------
def _pick_tile(dim, cap, align):
    """Largest tile <= cap that evenly divides `dim` and respects alignment."""
    if dim <= cap:
        return dim
    t = (cap // align) * align
    while t >= align:
        if dim % t == 0:
            return t
        t -= align
    # TODO(synk): falls back to the full dim for awkward shapes; may blow VMEM.
    return dim


def _lane_tile(dim, cap):
    """Lane-dim tile; prefer 256 alignment (full-depth v6e/v7x 256x256 MXU)."""
    align = 256 if dim % 256 == 0 else 128
    return _pick_tile(dim, cap, align)


def _row_tile(dim, cap):
    """Row tile (sublane-aligned), preferring >= 2 grid steps (v7x megacore)."""
    if dim >= 16:
        cap = min(cap, max(8, (dim // 2) // 8 * 8))
    return _pick_tile(dim, cap, 8)


# ----------------------------------------------------------------------------
# tiled linear:  o = x @ w + b   (bf16 in / bf16 out, f32 accumulation)
# ----------------------------------------------------------------------------
def _linear_kernel(x_ref, w_ref, b_ref, o_ref, acc_ref):
    @pl.when(pl.program_id(2) == 0)
    def _():
        acc_ref[...] = jnp.zeros_like(acc_ref)

    acc_ref[...] += jnp.dot(x_ref[...], w_ref[...],
                            preferred_element_type=jnp.float32)

    @pl.when(pl.program_id(2) == pl.num_programs(2) - 1)
    def _():
        # f32 scratch kept (output is bf16, so accumulating in o_ref directly
        # would lose precision); bias add done once in f32 at the last K step.
        o_ref[...] = (acc_ref[...] + b_ref[...]).astype(o_ref.dtype)


def linear(x, w, b, out_dtype=jnp.bfloat16,
           tm_cap=512, tn_cap=1024, tk_cap=1024):
    """x: (M, K) bf16, w: (K, N) bf16, b: (N,) f32 -> (M, N) out_dtype."""
    M, K = x.shape
    N = w.shape[1]
    tm = _row_tile(M, tm_cap)
    tn = _lane_tile(N, tn_cap)
    tk = _lane_tile(K, tk_cap)
    grid = (M // tm, N // tn, K // tk)
    return pl.pallas_call(
        _linear_kernel,
        out_shape=jax.ShapeDtypeStruct((M, N), out_dtype),
        grid=grid,
        in_specs=[pl.BlockSpec((tm, tk), lambda i, j, k: (i, k)),
                  pl.BlockSpec((tk, tn), lambda i, j, k: (k, j)),
                  pl.BlockSpec((1, tn), lambda i, j, k: (0, j))],
        out_specs=pl.BlockSpec((tm, tn), lambda i, j, k: (i, j)),
        scratch_shapes=[pltpu.VMEM((tm, tn), jnp.float32)],
        compiler_params=pltpu.CompilerParams(
            dimension_semantics=("parallel", "parallel", "arbitrary"),
            vmem_limit_bytes=_VMEM_LIMIT),
    )(x, w, b.reshape(1, N))


# ----------------------------------------------------------------------------
# fused attention block: MHA core + out-projection + residual + LayerNorm
# q/k/v read as D-wide slabs of the fused projection via BlockSpec indices
# ----------------------------------------------------------------------------
def _attn_block_kernel(q_ref, k_ref, v_ref, bias_ref, r_ref, wo_ref, bo_ref,
                       g_ref, bt_ref, o_ref, y_sc, *, nhead, eps):
    S, D = q_ref.shape[1], q_ref.shape[2]
    Dh = D // nhead
    q = q_ref[0]                 # (S, D) bf16; wq already carries 1/sqrt(Dh)
    k = k_ref[0]
    v = v_ref[0]
    bias = bias_ref[0]           # (1, S) f32 additive key-padding bias

    for h in range(nhead):       # static loop, static lane slices
        lo = h * Dh
        qh = q[:, lo:lo + Dh]
        kh = k[:, lo:lo + Dh]
        vh = v[:, lo:lo + Dh]
        s = jax.lax.dot_general(qh, kh, (((1,), (1,)), ((), ())),
                                preferred_element_type=jnp.float32)
        s = s + bias
        m = jnp.max(s, axis=-1, keepdims=True)
        p = jnp.exp(s - m)
        denom = jnp.sum(p, axis=-1, keepdims=True)
        p = p * pl.reciprocal(denom, approx=True)
        # per-head write into lane-dense VMEM scratch (no concatenate)
        y_sc[:, lo:lo + Dh] = jnp.dot(p.astype(jnp.bfloat16), vh,
                                      preferred_element_type=jnp.float32)

    # out-projection + residual + LayerNorm (post-norm), f32 math
    y = jnp.dot(y_sc[...].astype(jnp.bfloat16), wo_ref[...],
                preferred_element_type=jnp.float32)
    y = y + bo_ref[...] + r_ref[0].astype(jnp.float32)
    mean = jnp.mean(y, axis=-1, keepdims=True)
    yc = y - mean
    var = jnp.mean(yc * yc, axis=-1, keepdims=True)
    out = yc * jax.lax.rsqrt(var + eps) * g_ref[...] + bt_ref[...]
    o_ref[...] = out[None].astype(o_ref.dtype)


def attention_block(q_src, kv_src, bias, res, wo, bo, gamma, beta, *,
                    nhead, q_idx, k_idx, v_idx, eps=1e-5):
    """Fused post-norm MHA block.

    q_src: (B, S, Dq_tot) bf16, kv_src: (B, S, Dkv_tot) bf16 - the q/k/v slabs
    are selected with last-dim block indices (no wrapper-side slices/copies).
    bias: (B, 1, S) f32, res: (B, S, D) bf16.  Returns (B, S, D) bf16.
    """
    B, S, D = res.shape

    def slab(idx):
        return pl.BlockSpec((1, S, D), lambda b, idx=idx: (b, 0, idx))

    vec = pl.BlockSpec((1, D), lambda b: (0, 0))
    # TODO(synk): grid-invariant weight specs could use pipeline_mode=
    # pl.Buffered(1) to halve their VMEM footprint on v7x (64 MiB VMEM).
    return pl.pallas_call(
        functools.partial(_attn_block_kernel, nhead=nhead, eps=eps),
        out_shape=jax.ShapeDtypeStruct((B, S, D), jnp.bfloat16),
        grid=(B,),
        in_specs=[slab(q_idx),                                   # q
                  slab(k_idx),                                   # k
                  slab(v_idx),                                   # v
                  pl.BlockSpec((1, 1, S), lambda b: (b, 0, 0)),  # bias
                  pl.BlockSpec((1, S, D), lambda b: (b, 0, 0)),  # residual
                  pl.BlockSpec((D, D), lambda b: (0, 0)),        # wo
                  vec, vec, vec],                                # bo, gamma, beta
        out_specs=pl.BlockSpec((1, S, D), lambda b: (b, 0, 0)),
        scratch_shapes=[pltpu.VMEM((S, D), jnp.float32)],
        compiler_params=pltpu.CompilerParams(
            dimension_semantics=("parallel",),
            vmem_limit_bytes=_VMEM_LIMIT),
    )(q_src, kv_src, kv_src, bias, res, wo, bo.reshape(1, D),
      gamma.reshape(1, D), beta.reshape(1, D))


# ----------------------------------------------------------------------------
# fused FFN (linear1 + ReLU + linear2) + residual + LayerNorm
# ----------------------------------------------------------------------------
def _ffn_ln_kernel(x_ref, w1_ref, b1_ref, w2_ref, b2_ref, g_ref, bt_ref,
                   o_ref, *, eps):
    x = x_ref[...]                                              # bf16
    h = jnp.dot(x, w1_ref[...],
                preferred_element_type=jnp.float32) + b1_ref[...]
    h = jnp.maximum(h, 0.0)                                     # ReLU
    f = jnp.dot(h.astype(jnp.bfloat16), w2_ref[...],
                preferred_element_type=jnp.float32) + b2_ref[...]
    y = f + x.astype(jnp.float32)                               # residual (f32)
    mean = jnp.mean(y, axis=-1, keepdims=True)
    yc = y - mean
    var = jnp.mean(yc * yc, axis=-1, keepdims=True)
    o_ref[...] = (yc * jax.lax.rsqrt(var + eps) * g_ref[...]
                  + bt_ref[...]).astype(o_ref.dtype)


def ffn_layernorm(x, w1, b1, w2, b2, gamma, beta, out_dtype=jnp.float32,
                  eps=1e-5, tm_cap=256):
    """x: (M, D) bf16; w1: (D, F) bf16; w2: (F, D) bf16 -> LN(x + FFN(x))."""
    M, D = x.shape
    F = w1.shape[1]
    tm = _row_tile(M, tm_cap)
    row = pl.BlockSpec((tm, D), lambda i: (i, 0))
    vec = pl.BlockSpec((1, D), lambda i: (0, 0))
    # TODO(synk): for very large dim_ff (GPT2-XL scale) add an F-tiling grid
    # axis with an f32 accumulator for the second matmul and pl.Buffered(1) on
    # the grid-invariant weights (v7x 64 MiB VMEM budget).
    return pl.pallas_call(
        functools.partial(_ffn_ln_kernel, eps=eps),
        out_shape=jax.ShapeDtypeStruct((M, D), out_dtype),
        grid=(M // tm,),
        in_specs=[row,
                  pl.BlockSpec((D, F), lambda i: (0, 0)),
                  pl.BlockSpec((1, F), lambda i: (0, 0)),
                  pl.BlockSpec((F, D), lambda i: (0, 0)),
                  vec, vec, vec],
        out_specs=row,
        compiler_params=pltpu.CompilerParams(
            dimension_semantics=("parallel",),
            vmem_limit_bytes=_VMEM_LIMIT),
    )(x, w1, b1.reshape(1, F), w2, b2.reshape(1, D),
      gamma.reshape(1, D), beta.reshape(1, D))


# ----------------------------------------------------------------------------
# model assembly (plain-JAX glue around the kernels)
# ----------------------------------------------------------------------------
def gpt2_forward(tokens, src_mask, params, nhead):
    """tokens: int (B, S); src_mask: bool (B, S), True = padding."""
    B, S = tokens.shape
    D = params["emb"].shape[1]
    M = B * S

    # encoder = Embedding + sinusoidal PositionalEncoding (dropout = identity);
    # activations handed to kernels in bf16.
    x = (params["emb"][tokens] + params["pe"][:S][None, :, :]).astype(jnp.bfloat16)
    x2d = x.reshape(M, D)

    # additive key-padding bias shared by tgt_/memory_key_padding_mask
    bias = jnp.where(src_mask, -1e30, 0.0).astype(jnp.float32)[:, None, :]

    # one (D, 5D) projection of the embedding output (memory == src):
    #   q_sa | k_sa | v_sa | k_mem | v_mem   (1/sqrt(Dh) folded into q weights)
    qkv5 = linear(x2d, params["w_qkv5"], params["b_qkv5"]).reshape(B, S, 5 * D)

    # --- self-attention block (attention + out-proj + residual + LN fused) ---
    x1 = attention_block(qkv5, qkv5, bias, x,
                         params["wo_sa"], params["bo_sa"],
                         params["ln1_g"], params["ln1_b"],
                         nhead=nhead, q_idx=0, k_idx=1, v_idx=2)

    # --- cross-attention over memory (k/v already projected inside qkv5) ---
    q_ca = linear(x1.reshape(M, D),
                  params["wq_ca"], params["bq_ca"]).reshape(B, S, D)
    x2 = attention_block(q_ca, qkv5, bias, x1,
                         params["wo_ca"], params["bo_ca"],
                         params["ln2_g"], params["ln2_b"],
                         nhead=nhead, q_idx=0, k_idx=3, v_idx=4)

    # --- fused FFN (linear1 + ReLU + linear2) + residual + LayerNorm ---
    out = ffn_layernorm(x2.reshape(M, D), params["w1"], params["b1"],
                        params["w2"], params["b2"],
                        params["ln3_g"], params["ln3_b"])
    return out.reshape(B, S, D)


# ----------------------------------------------------------------------------
# deterministic parameter init + MXU-friendly preparation
# ----------------------------------------------------------------------------
def _sinusoidal_pe(max_len, d_model):
    pos = jnp.arange(max_len, dtype=jnp.float32)[:, None]
    div = jnp.exp(jnp.arange(0, d_model, 2, dtype=jnp.float32)
                  * (-math.log(10000.0) / d_model))
    pe = jnp.zeros((max_len, d_model), jnp.float32)
    pe = pe.at[:, 0::2].set(jnp.sin(pos * div))
    pe = pe.at[:, 1::2].set(jnp.cos(pos * div))
    return pe


def init_params(key, ntoken, d_model, dim_ff, max_len):
    def w(k, shape):
        return jax.random.normal(k, shape, jnp.float32) * 0.02

    def attn_params(k):
        ks = jax.random.split(k, 4)
        z = jnp.zeros((d_model,), jnp.float32)
        return {"wq": w(ks[0], (d_model, d_model)), "bq": z,
                "wk": w(ks[1], (d_model, d_model)), "bk": z,
                "wv": w(ks[2], (d_model, d_model)), "bv": z,
                "wo": w(ks[3], (d_model, d_model)), "bo": z}

    ks = jax.random.split(key, 5)
    ones = jnp.ones((d_model,), jnp.float32)
    zeros = jnp.zeros((d_model,), jnp.float32)
    return {
        "emb": w(ks[0], (ntoken, d_model)),
        "pe": _sinusoidal_pe(max_len, d_model),
        "self_attn": attn_params(ks[1]),
        "cross_attn": attn_params(ks[2]),
        "w1": w(ks[3], (d_model, dim_ff)), "b1": jnp.zeros((dim_ff,), jnp.float32),
        "w2": w(ks[4], (dim_ff, d_model)), "b2": zeros,
        "ln1_g": ones, "ln1_b": zeros,
        "ln2_g": ones, "ln2_b": zeros,
        "ln3_g": ones, "ln3_b": zeros,
    }


def prepare_params(raw, nhead):
    """Fuse self-attn QKV + cross-attn KV into one (D, 5D) weight, fold
    1/sqrt(Dh) into the q weights, cast MXU weights to bf16 (biases/LN f32)."""
    D = raw["emb"].shape[1]
    scale = 1.0 / math.sqrt(D // nhead)
    bf = lambda a: a.astype(jnp.bfloat16)

    sa, ca = raw["self_attn"], raw["cross_attn"]
    return {
        "emb": raw["emb"],
        "pe": raw["pe"],
        "w_qkv5": bf(jnp.concatenate(
            [sa["wq"] * scale, sa["wk"], sa["wv"], ca["wk"], ca["wv"]], axis=1)),
        "b_qkv5": jnp.concatenate(
            [sa["bq"] * scale, sa["bk"], sa["bv"], ca["bk"], ca["bv"]]),
        "wo_sa": bf(sa["wo"]), "bo_sa": sa["bo"],
        "wq_ca": bf(ca["wq"] * scale), "bq_ca": ca["bq"] * scale,
        "wo_ca": bf(ca["wo"]), "bo_ca": ca["bo"],
        "w1": bf(raw["w1"]), "b1": raw["b1"],
        "w2": bf(raw["w2"]), "b2": raw["b2"],
        "ln1_g": raw["ln1_g"], "ln1_b": raw["ln1_b"],
        "ln2_g": raw["ln2_g"], "ln2_b": raw["ln2_b"],
        "ln3_g": raw["ln3_g"], "ln3_b": raw["ln3_b"],
    }


# ----------------------------------------------------------------------------
if __name__ == "__main__":
    B, S = 2, 8
    ntoken, d_model, nhead = 100, 128, 8
    dim_ff = 2048  # nn.TransformerDecoderLayer default dim_feedforward

    key = jax.random.PRNGKey(0)
    pkey, tkey = jax.random.split(key)
    raw_params = init_params(pkey, ntoken, d_model, dim_ff, max_len=S)
    params = prepare_params(raw_params, nhead)

    tokens = jax.random.randint(tkey, (B, S), 0, ntoken, dtype=jnp.int32)
    # key padding mask: True = ignore this position (batch 1 has 2 pad tokens)
    src_mask = jnp.array([[False] * S,
                          [False] * (S - 2) + [True] * 2])

    fwd = jax.jit(functools.partial(gpt2_forward, nhead=nhead))
    out = fwd(tokens, src_mask, params)
    jax.block_until_ready(out)
    assert out.shape == (B, S, d_model) and out.dtype == jnp.float32
    assert bool(jnp.all(jnp.isfinite(out)))
    print("KERNEL_OK")
</pallas_src>

<mosaic_0001>
module attributes {stable_mosaic.version = 11 : i64} {
  func.func @_linear_kernel(%arg0: i32, %arg1: i32, %arg2: i32, %arg3: memref<8x128xbf16, #tpu.memory_space<vmem>>, %arg4: memref<128x128xbf16, #tpu.memory_space<vmem>>, %arg5: memref<1x128xf32, #tpu.memory_space<vmem>>, %arg6: memref<8x128xbf16, #tpu.memory_space<vmem>>, %arg7: memref<8x128xf32, #tpu.memory_space<vmem>>) attributes {dimension_semantics = [#tpu.dimension_semantics<parallel>, #tpu.dimension_semantics<parallel>, #tpu.dimension_semantics<arbitrary>], iteration_bounds = array<i64: 2, 1, 1>, scalar_prefetch = 0 : i64, scratch_operands = 1 : i64, tpu.core_type = #tpu.core_type<tc>, window_params = [{transform_indices = @transform_0, window_bounds = array<i64: 8, 128>}, {transform_indices = @transform_1, window_bounds = array<i64: 128, 128>}, {transform_indices = @transform_2, window_bounds = array<i64: 1, 128>}, {transform_indices = @transform_3, window_bounds = array<i64: 8, 128>}]} {
    %c0_i32 = arith.constant 0 : i32
    %0 = arith.cmpi eq, %arg2, %c0_i32 : i32
    %1 = arith.extui %0 : i1 to i32
    %c0_i32_0 = arith.constant 0 : i32
    %2 = arith.cmpi ne, %1, %c0_i32_0 : i32
    scf.if %2 {
      %cst_10 = arith.constant 0.000000e+00 : f32
      %12 = vector.broadcast %cst_10 : f32 to vector<8x128xf32>
      %c0_11 = arith.constant 0 : index
      %c0_12 = arith.constant 0 : index
      %13 = vector.load %arg7[%c0_11, %c0_12] : memref<8x128xf32, #tpu.memory_space<vmem>>, vector<8x128xf32>
      tpu.vector_store %arg7[%c0_11, %c0_12], %12 {strides = array<i32>} : memref<8x128xf32, #tpu.memory_space<vmem>>, vector<8x128xf32>,
    } else {
    }
    %c0 = arith.constant 0 : index
    %c0_1 = arith.constant 0 : index
    %3 = vector.load %arg7[%c0, %c0_1] : memref<8x128xf32, #tpu.memory_space<vmem>>, vector<8x128xf32>
    %c0_2 = arith.constant 0 : index
    %c0_3 = arith.constant 0 : index
    %4 = vector.load %arg3[%c0_2, %c0_3] : memref<8x128xbf16, #tpu.memory_space<vmem>>, vector<8x128xbf16>
    %c0_4 = arith.constant 0 : index
    %c0_5 = arith.constant 0 : index
    %5 = vector.load %arg4[%c0_4, %c0_5] : memref<128x128xbf16, #tpu.memory_space<vmem>>, vector<128x128xbf16>
    %cst = arith.constant dense<0.000000e+00> : vector<8x128xf32>
    %6 = tpu.matmul %4, %5, %cst {dimension_numbers = #tpu.dot_dimension_numbers<[1], [0], [0], [1], [0, 0, 1, 1], [], []>} : vector<8x128xbf16>, vector<128x128xbf16>, vector<8x128xf32> -> vector<8x128xf32>
    %7 = arith.addf %3, %6 : vector<8x128xf32>
    %c0_6 = arith.constant 0 : index
    %c0_7 = arith.constant 0 : index
    %8 = vector.load %arg7[%c0_6, %c0_7] : memref<8x128xf32, #tpu.memory_space<vmem>>, vector<8x128xf32>
    tpu.vector_store %arg7[%c0_6, %c0_7], %7 {strides = array<i32>} : memref<8x128xf32, #tpu.memory_space<vmem>>, vector<8x128xf32>,
    %c0_i32_8 = arith.constant 0 : i32
    %9 = arith.cmpi eq, %arg2, %c0_i32_8 : i32
    %10 = arith.extui %9 : i1 to i32
    %c0_i32_9 = arith.constant 0 : i32
    %11 = arith.cmpi ne, %10, %c0_i32_9 : i32
    scf.if %11 {
      %c0_10 = arith.constant 0 : index
      %c0_11 = arith.constant 0 : index
      %12 = vector.load %arg7[%c0_10, %c0_11] : memref<8x128xf32, #tpu.memory_space<vmem>>, vector<8x128xf32>
      %c0_12 = arith.constant 0 : index
      %c0_13 = arith.constant 0 : index
      %13 = vector.load %arg5[%c0_12, %c0_13] : memref<1x128xf32, #tpu.memory_space<vmem>>, vector<1x128xf32>
      %14 = vector.broadcast %13 : vector<1x128xf32> to vector<8x128xf32>
      %15 = arith.addf %12, %14 : vector<8x128xf32>
      %16 = arith.truncf %15 : vector<8x128xf32> to vector<8x128xbf16>
      %c0_14 = arith.constant 0 : index
      %c0_15 = arith.constant 0 : index
      %17 = vector.load %arg6[%c0_14, %c0_15] : memref<8x128xbf16, #tpu.memory_space<vmem>>, vector<8x128xbf16>
      tpu.vector_store %arg6[%c0_14, %c0_15], %16 {strides = array<i32>} : memref<8x128xbf16, #tpu.memory_space<vmem>>, vector<8x128xbf16>,
    } else {
    }
    return
  }
  func.func @transform_0(%arg0: i32, %arg1: i32, %arg2: i32) -> (i32, i32) {
    %c0_i32 = arith.constant 0 : i32
    return %arg0, %arg2 : i32, i32
  }
  func.func @transform_1(%arg0: i32, %arg1: i32, %arg2: i32) -> (i32, i32) {
    %c0_i32 = arith.constant 0 : i32
    return %arg2, %arg1 : i32, i32
  }
  func.func @transform_2(%arg0: i32, %arg1: i32, %arg2: i32) -> (i32, i32) {
    %c0_i32 = arith.constant 0 : i32
    %c0_i32_0 = arith.constant 0 : i32
    return %c0_i32, %arg1 : i32, i32
  }
  func.func @transform_3(%arg0: i32, %arg1: i32, %arg2: i32) -> (i32, i32) {
    %c0_i32 = arith.constant 0 : i32
    return %arg0, %arg1 : i32, i32
  }
}

module attributes {stable_mosaic.version = 11 : i64} {
  func.func @_linear_kernel(%arg0: i32, %arg1: i32, %arg2: i32, %arg3: memref<8x128xbf16, #tpu.memory_space<vmem>>, %arg4: memref<128x640xbf16, #tpu.memory_space<vmem>>, %arg5: memref<1x640xf32, #tpu.memory_space<vmem>>, %arg6: memref<8x640xbf16, #tpu.memory_space<vmem>>, %arg7: memref<8x640xf32, #tpu.memory_space<vmem>>) attributes {dimension_semantics = [#tpu.dimension_semantics<parallel>, #tpu.dimension_semantics<parallel>, #tpu.dimension_semantics<arbitrary>], iteration_bounds = array<i64: 2, 1, 1>, scalar_prefetch = 0 : i64, scratch_operands = 1 : i64, tpu.core_type = #tpu.core_type<tc>, window_params = [{transform_indices = @transform_0, window_bounds = array<i64: 8, 128>}, {transform_indices = @transform_1, window_bounds = array<i64: 128, 640>}, {transform_indices = @transform_2, window_bounds = array<i64: 1, 640>}, {transform_indices = @transform_3, window_bounds = array<i64: 8, 640>}]} {
    %c0_i32 = arith.constant 0 : i32
    %0 = arith.cmpi eq, %arg2, %c0_i32 : i32
    %1 = arith.extui %0 : i1 to i32
    %c0_i32_0 = arith.constant 0 : i32
    %2 = arith.cmpi ne, %1, %c0_i32_0 : i32
    scf.if %2 {
      %cst_10 = arith.constant 0.000000e+00 : f32
      %12 = vector.broadcast %cst_10 : f32 to vector<8x640xf32>
      %c0_11 = arith.constant 0 : index
      %c0_12 = arith.constant 0 : index
      %13 = vector.load %arg7[%c0_11, %c0_12] : memref<8x640xf32, #tpu.memory_space<vmem>>, vector<8x640xf32>
      tpu.vector_store %arg7[%c0_11, %c0_12], %12 {strides = array<i32>} : memref<8x640xf32, #tpu.memory_space<vmem>>, vector<8x640xf32>,
    } else {
    }
    %c0 = arith.constant 0 : index
    %c0_1 = arith.constant 0 : index
    %3 = vector.load %arg7[%c0, %c0_1] : memref<8x640xf32, #tpu.memory_space<vmem>>, vector<8x640xf32>
    %c0_2 = arith.constant 0 : index
    %c0_3 = arith.constant 0 : index
    %4 = vector.load %arg3[%c0_2, %c0_3] : memref<8x128xbf16, #tpu.memory_space<vmem>>, vector<8x128xbf16>
    %c0_4 = arith.constant 0 : index
    %c0_5 = arith.constant 0 : index
    %5 = vector.load %arg4[%c0_4, %c0_5] : memref<128x640xbf16, #tpu.memory_space<vmem>>, vector<128x640xbf16>
    %cst = arith.constant dense<0.000000e+00> : vector<8x640xf32>
    %6 = tpu.matmul %4, %5, %cst {dimension_numbers = #tpu.dot_dimension_numbers<[1], [0], [0], [1], [0, 0, 1, 1], [], []>} : vector<8x128xbf16>, vector<128x640xbf16>, vector<8x640xf32> -> vector<8x640xf32>
    %7 = arith.addf %3, %6 : vector<8x640xf32>
    %c0_6 = arith.constant 0 : index
    %c0_7 = arith.constant 0 : index
    %8 = vector.load %arg7[%c0_6, %c0_7] : memref<8x640xf32, #tpu.memory_space<vmem>>, vector<8x640xf32>
    tpu.vector_store %arg7[%c0_6, %c0_7], %7 {strides = array<i32>} : memref<8x640xf32, #tpu.memory_space<vmem>>, vector<8x640xf32>,
    %c0_i32_8 = arith.constant 0 : i32
    %9 = arith.cmpi eq, %arg2, %c0_i32_8 : i32
    %10 = arith.extui %9 : i1 to i32
    %c0_i32_9 = arith.constant 0 : i32
    %11 = arith.cmpi ne, %10, %c0_i32_9 : i32
    scf.if %11 {
      %c0_10 = arith.constant 0 : index
      %c0_11 = arith.constant 0 : index
      %12 = vector.load %arg7[%c0_10, %c0_11] : memref<8x640xf32, #tpu.memory_space<vmem>>, vector<8x640xf32>
      %c0_12 = arith.constant 0 : index
      %c0_13 = arith.constant 0 : index
      %13 = vector.load %arg5[%c0_12, %c0_13] : memref<1x640xf32, #tpu.memory_space<vmem>>, vector<1x640xf32>
      %14 = vector.broadcast %13 : vector<1x640xf32> to vector<8x640xf32>
      %15 = arith.addf %12, %14 : vector<8x640xf32>
      %16 = arith.truncf %15 : vector<8x640xf32> to vector<8x640xbf16>
      %c0_14 = arith.constant 0 : index
      %c0_15 = arith.constant 0 : index
      %17 = vector.load %arg6[%c0_14, %c0_15] : memref<8x640xbf16, #tpu.memory_space<vmem>>, vector<8x640xbf16>
      tpu.vector_store %arg6[%c0_14, %c0_15], %16 {strides = array<i32>} : memref<8x640xbf16, #tpu.memory_space<vmem>>, vector<8x640xbf16>,
    } else {
    }
    return
  }
  func.func @transform_0(%arg0: i32, %arg1: i32, %arg2: i32) -> (i32, i32) {
    %c0_i32 = arith.constant 0 : i32
    return %arg0, %arg2 : i32, i32
  }
  func.func @transform_1(%arg0: i32, %arg1: i32, %arg2: i32) -> (i32, i32) {
    %c0_i32 = arith.constant 0 : i32
    return %arg2, %arg1 : i32, i32
  }
  func.func @transform_2(%arg0: i32, %arg1: i32, %arg2: i32) -> (i32, i32) {
    %c0_i32 = arith.constant 0 : i32
    %c0_i32_0 = arith.constant 0 : i32
    return %c0_i32, %arg1 : i32, i32
  }
  func.func @transform_3(%arg0: i32, %arg1: i32, %arg2: i32) -> (i32, i32) {
    %c0_i32 = arith.constant 0 : i32
    return %arg0, %arg1 : i32, i32
  }
}

module attributes {stable_mosaic.version = 11 : i64} {
  func.func @_attn_block_kernel(%arg0: i32, %arg1: memref<1x8x128xbf16, #tpu.memory_space<vmem>>, %arg2: memref<1x8x128xbf16, #tpu.memory_space<vmem>>, %arg3: memref<1x8x128xbf16, #tpu.memory_space<vmem>>, %arg4: memref<1x1x8xf32, #tpu.memory_space<vmem>>, %arg5: memref<1x8x128xbf16, #tpu.memory_space<vmem>>, %arg6: memref<128x128xbf16, #tpu.memory_space<vmem>>, %arg7: memref<1x128xf32, #tpu.memory_space<vmem>>, %arg8: memref<1x128xf32, #tpu.memory_space<vmem>>, %arg9: memref<1x128xf32, #tpu.memory_space<vmem>>, %arg10: memref<1x8x128xbf16, #tpu.memory_space<vmem>>, %arg11: memref<8x128xf32, #tpu.memory_space<vmem>>) attributes {dimension_semantics = [#tpu.dimension_semantics<parallel>], iteration_bounds = array<i64: 2>, scalar_prefetch = 0 : i64, scratch_operands = 1 : i64, tpu.core_type = #tpu.core_type<tc>, window_params = [{transform_indices = @transform_0, window_bounds = array<i64: 1, 8, 128>}, {transform_indices = @transform_1, window_bounds = array<i64: 1, 8, 128>}, {transform_indices = @transform_2, window_bounds = array<i64: 1, 8, 128>}, {transform_indices = @transform_3, window_bounds = array<i64: 1, 1, 8>}, {transform_indices = @transform_4, window_bounds = array<i64: 1, 8, 128>}, {pipeline_mode = #tpu.pipeline_mode<synchronous>, transform_indices = @transform_5, window_bounds = array<i64: 128, 128>}, {pipeline_mode = #tpu.pipeline_mode<synchronous>, transform_indices = @transform_6, window_bounds = array<i64: 1, 128>}, {pipeline_mode = #tpu.pipeline_mode<synchronous>, transform_indices = @transform_7, window_bounds = array<i64: 1, 128>}, {pipeline_mode = #tpu.pipeline_mode<synchronous>, transform_indices = @transform_8, window_bounds = array<i64: 1, 128>}, {transform_indices = @transform_9, window_bounds = array<i64: 1, 8, 128>}]} {
    %c0 = arith.constant 0 : index
    %c0_0 = arith.constant 0 : index
    %c0_1 = arith.constant 0 : index
    %0 = vector.load %arg1[%c0, %c0_0, %c0_1] : memref<1x8x128xbf16, #tpu.memory_space<vmem>>, vector<1x8x128xbf16>
    %1 = vector.shape_cast %0 : vector<1x8x128xbf16> to vector<8x128xbf16>
    %c0_2 = arith.constant 0 : index
    %c0_3 = arith.constant 0 : index
    %c0_4 = arith.constant 0 : index
    %2 = vector.load %arg2[%c0_2, %c0_3, %c0_4] : memref<1x8x128xbf16, #tpu.memory_space<vmem>>, vector<1x8x128xbf16>
    %3 = vector.shape_cast %2 : vector<1x8x128xbf16> to vector<8x128xbf16>
    %c0_5 = arith.constant 0 : index
    %c0_6 = arith.constant 0 : index
    %c0_7 = arith.constant 0 : index
    %4 = vector.load %arg3[%c0_5, %c0_6, %c0_7] : memref<1x8x128xbf16, #tpu.memory_space<vmem>>, vector<1x8x128xbf16>
    %5 = vector.shape_cast %4 : vector<1x8x128xbf16> to vector<8x128xbf16>
    %c0_8 = arith.constant 0 : index
    %c0_9 = arith.constant 0 : index
    %c0_10 = arith.constant 0 : index
    %6 = vector.load %arg4[%c0_8, %c0_9, %c0_10] : memref<1x1x8xf32, #tpu.memory_space<vmem>>, vector<1x1x8xf32>
    %7 = vector.shape_cast %6 : vector<1x1x8xf32> to vector<1x8xf32>
    %8 = vector.extract_strided_slice %1 {offsets = [0, 0], sizes = [8, 16], strides = [1, 1]} : vector<8x128xbf16> to vector<8x16xbf16>
    %9 = vector.extract_strided_slice %3 {offsets = [0, 0], sizes = [8, 16], strides = [1, 1]} : vector<8x128xbf16> to vector<8x16xbf16>
    %10 = vector.extract_strided_slice %5 {offsets = [0, 0], sizes = [8, 16], strides = [1, 1]} : vector<8x128xbf16> to vector<8x16xbf16>
    %cst = arith.constant dense<0.000000e+00> : vector<8x8xf32>
    %11 = tpu.matmul %8, %9, %cst {dimension_numbers = #tpu.dot_dimension_numbers<[1], [1], [0], [0], [0, 0, 1, 0], [], []>} : vector<8x16xbf16>, vector<8x16xbf16>, vector<8x8xf32> -> vector<8x8xf32>
    %12 = vector.broadcast %7 : vector<1x8xf32> to vector<8x8xf32>
    %13 = arith.addf %11, %12 : vector<8x8xf32>
    %cst_11 = arith.constant dense<0xFF800000> : vector<8xf32>
    %14 = vector.multi_reduction <maximumf>, %13, %cst_11 [1] : vector<8x8xf32> to vector<8xf32>
    %15 = vector.shape_cast %14 : vector<8xf32> to vector<8x1xf32>
    %16 = vector.broadcast %15 : vector<8x1xf32> to vector<8x8xf32>
    %17 = arith.subf %13, %16 : vector<8x8xf32>
    %18 = math.exp %17 : vector<8x8xf32>
    %cst_12 = arith.constant dense<0.000000e+00> : vector<8xf32>
    %19 = vector.multi_reduction <add>, %18, %cst_12 [1] : vector<8x8xf32> to vector<8xf32>
    %20 = vector.shape_cast %19 : vector<8xf32> to vector<8x1xf32>
    %21 = tpu.reciprocal %20 {approx = true} : vector<8x1xf32> -> vector<8x1xf32>
    %22 = vector.broadcast %21 : vector<8x1xf32> to vector<8x8xf32>
    %23 = arith.mulf %18, %22 : vector<8x8xf32>
    %24 = arith.truncf %23 : vector<8x8xf32> to vector<8x8xbf16>
    %cst_13 = arith.constant dense<0.000000e+00> : vector<8x16xf32>
    %25 = tpu.matmul %24, %10, %cst_13 {dimension_numbers = #tpu.dot_dimension_numbers<[1], [0], [0], [1], [0, 0, 1, 1], [], []>} : vector<8x8xbf16>, vector<8x16xbf16>, vector<8x16xf32> -> vector<8x16xf32>
    %c0_14 = arith.constant 0 : index
    %c0_15 = arith.constant 0 : index
    %26 = vector.load %arg11[%c0_14, %c0_15] : memref<8x128xf32, #tpu.memory_space<vmem>>, vector<8x16xf32>
    tpu.vector_store %arg11[%c0_14, %c0_15], %25 {strides = array<i32>} : memref<8x128xf32, #tpu.memory_space<vmem>>, vector<8x16xf32>,
    %27 = vector.extract_strided_slice %1 {offsets = [0, 16], sizes = [8, 16], strides = [1, 1]} : vector<8x128xbf16> to vector<8x16xbf16>
    %28 = vector.extract_strided_slice %3 {offsets = [0, 16], sizes = [8, 16], strides = [1, 1]} : vector<8x128xbf16> to vector<8x16xbf16>
    %29 = vector.extract_strided_slice %5 {offsets = [0, 16], sizes = [8, 16], strides = [1, 1]} : vector<8x128xbf16> to vector<8x16xbf16>
    %cst_16 = arith.constant dense<0.000000e+00> : vector<8x8xf32>
    %30 = tpu.matmul %27, %28, %cst_16 {dimension_numbers = #tpu.dot_dimension_numbers<[1], [1], [0], [0], [0, 0, 1, 0], [], []>} : vector<8x16xbf16>, vector<8x16xbf16>, vector<8x8xf32> -> vector<8x8xf32>
    %31 = vector.broadcast %7 : vector<1x8xf32> to vector<8x8xf32>
    %32 = arith.addf %30, %31 : vector<8x8xf32>
    %cst_17 = arith.constant dense<0xFF800000> : vector<8xf32>
    %33 = vector.multi_reduction <maximumf>, %32, %cst_17 [1] : vector<8x8xf32> to vector<8xf32>
    %34 = vector.shape_cast %33 : vector<8xf32> to vector<8x1xf32>
    %35 = vector.broadcast %34 : vector<8x1xf32> to vector<8x8xf32>
    %36 = arith.subf %32, %35 : vector<8x8xf32>
    %37 = math.exp %36 : vector<8x8xf32>
    %cst_18 = arith.constant dense<0.000000e+00> : vector<8xf32>
    %38 = vector.multi_reduction <add>, %37, %cst_18 [1] : vector<8x8xf32> to vector<8xf32>
    %39 = vector.shape_cast %38 : vector<8xf32> to vector<8x1xf32>
    %40 = tpu.reciprocal %39 {approx = true} : vector<8x1xf32> -> vector<8x1xf32>
    %41 = vector.broadcast %40 : vector<8x1xf32> to vector<8x8xf32>
    %42 = arith.mulf %37, %41 : vector<8x8xf32>
    %43 = arith.truncf %42 : vector<8x8xf32> to vector<8x8xbf16>
    %cst_19 = arith.constant dense<0.000000e+00> : vector<8x16xf32>
    %44 = tpu.matmul %43, %29, %cst_19 {dimension_numbers = #tpu.dot_dimension_numbers<[1], [0], [0], [1], [0, 0, 1, 1], [], []>} : vector<8x8xbf16>, vector<8x16xbf16>, vector<8x16xf32> -> vector<8x16xf32>
    %c0_20 = arith.constant 0 : index
    %c16 = arith.constant 16 : index
    %45 = vector.load %arg11[%c0_20, %c16] : memref<8x128xf32, #tpu.memory_space<vmem>>, vector<8x16xf32>
    tpu.vector_store %arg11[%c0_20, %c16], %44 {strides = array<i32>} : memref<8x128xf32, #tpu.memory_space<vmem>>, vector<8x16xf32>,
    %46 = vector.extract_strided_slice %1 {offsets = [0, 32], sizes = [8, 16], strides = [1, 1]} : vector<8x128xbf16> to vector<8x16xbf16>
    %47 = vector.extract_strided_slice %3 {offsets = [0, 32], sizes = [8, 16], strides = [1, 1]} : vector<8x128xbf16> to vector<8x16xbf16>
    %48 = vector.extract_strided_slice %5 {offsets = [0, 32], sizes = [8, 16], strides = [1, 1]} : vector<8x128xbf16> to vector<8x16xbf16>
    %cst_21 = arith.constant dense<0.000000e+00> : vector<8x8xf32>
    %49 = tpu.matmul %46, %47, %cst_21 {dimension_numbers = #tpu.dot_dimension_numbers<[1], [1], [0], [0], [0, 0, 1, 0], [], []>} : vector<8x16xbf16>, vector<8x16xbf16>, vector<8x8xf32> -> vector<8x8xf32>
    %50 = vector.broadcast %7 : vector<1x8xf32> to vector<8x8xf32>
    %51 = arith.addf %49, %50 : vector<8x8xf32>
    %cst_22 = arith.constant dense<0xFF800000> : vector<8xf32>
    %52 = vector.multi_reduction <maximumf>, %51, %cst_22 [1] : vector<8x8xf32> to vector<8xf32>
    %53 = vector.shape_cast %52 : vector<8xf32> to vector<8x1xf32>
    %54 = vector.broadcast %53 : vector<8x1xf32> to vector<8x8xf32>
    %55 = arith.subf %51, %54 : vector<8x8xf32>
    %56 = math.exp %55 : vector<8x8xf32>
    %cst_23 = arith.constant dense<0.000000e+00> : vector<8xf32>
    %57 = vector.multi_reduction <add>, %56, %cst_23 [1] : vector<8x8xf32> to vector<8xf32>
    %58 = vector.shape_cast %57 : vector<8xf32> to vector<8x1xf32>
    %59 = tpu.reciprocal %58 {approx = true} : vector<8x1xf32> -> vector<8x1xf32>
    %60 = vector.broadcast %59 : vector<8x1xf32> to vector<8x8xf32>
    %61 = arith.mulf %56, %60 : vector<8x8xf32>
    %62 = arith.truncf %61 : vector<8x8xf32> to vector<8x8xbf16>
    %cst_24 = arith.constant dense<0.000000e+00> : vector<8x16xf32>
    %63 = tpu.matmul %62, %48, %cst_24 {dimension_numbers = #tpu.dot_dimension_numbers<[1], [0], [0], [1], [0, 0, 1, 1], [], []>} : vector<8x8xbf16>, vector<8x16xbf16>, vector<8x16xf32> -> vector<8x16xf32>
    %c0_25 = arith.constant 0 : index
    %c32 = arith.constant 32 : index
    %64 = vector.load %arg11[%c0_25, %c32] : memref<8x128xf32, #tpu.memory_space<vmem>>, vector<8x16xf32>
    tpu.vector_store %arg11[%c0_25, %c32], %63 {strides = array<i32>} : memref<8x128xf32, #tpu.memory_space<vmem>>, vector<8x16xf32>,
    %65 = vector.extract_strided_slice %1 {offsets = [0, 48], sizes = [8, 16], strides = [1, 1]} : vector<8x128xbf16> to vector<8x16xbf16>
    %66 = vector.extract_strided_slice %3 {offsets = [0, 48], sizes = [8, 16], strides = [1, 1]} : vector<8x128xbf16> to vector<8x16xbf16>
    %67 = vector.extract_strided_slice %5 {offsets = [0, 48], sizes = [8, 16], strides = [1, 1]} : vector<8x128xbf16> to vector<8x16xbf16>
    %cst_26 = arith.constant dense<0.000000e+00> : vector<8x8xf32>
    %68 = tpu.matmul %65, %66, %cst_26 {dimension_numbers = #tpu.dot_dimension_numbers<[1], [1], [0], [0], [0, 0, 1, 0], [], []>} : vector<8x16xbf16>, vector<8x16xbf16>, vector<8x8xf32> -> vector<8x8xf32>
    %69 = vector.broadcast %7 : vector<1x8xf32> to vector<8x8xf32>
    %70 = arith.addf %68, %69 : vector<8x8xf32>
    %cst_27 = arith.constant dense<0xFF800000> : vector<8xf32>
    %71 = vector.multi_reduction <maximumf>, %70, %cst_27 [1] : vector<8x8xf32> to vector<8xf32>
    %72 = vector.shape_cast %71 : vector<8xf32> to vector<8x1xf32>
    %73 = vector.broadcast %72 : vector<8x1xf32> to vector<8x8xf32>
    %74 = arith.subf %70, %73 : vector<8x8xf32>
    %75 = math.exp %74 : vector<8x8xf32>
    %cst_28 = arith.constant dense<0.000000e+00> : vector<8xf32>
    %76 = vector.multi_reduction <add>, %75, %cst_28 [1] : vector<8x8xf32> to vector<8xf32>
    %77 = vector.shape_cast %76 : vector<8xf32> to vector<8x1xf32>
    %78 = tpu.reciprocal %77 {approx = true} : vector<8x1xf32> -> vector<8x1xf32>
    %79 = vector.broadcast %78 : vector<8x1xf32> to vector<8x8xf32>
    %80 = arith.mulf %75, %79 : vector<8x8xf32>
    %81 = arith.truncf %80 : vector<8x8xf32> to vector<8x8xbf16>
    %cst_29 = arith.constant dense<0.000000e+00> : vector<8x16xf32>
    %82 = tpu.matmul %81, %67, %cst_29 {dimension_numbers = #tpu.dot_dimension_numbers<[1], [0], [0], [1], [0, 0, 1, 1], [], []>} : vector<8x8xbf16>, vector<8x16xbf16>, vector<8x16xf32> -> vector<8x16xf32>
    %c0_30 = arith.constant 0 : index
    %c48 = arith.constant 48 : index
    %83 = vector.load %arg11[%c0_30, %c48] : memref<8x128xf32, #tpu.memory_space<vmem>>, vector<8x16xf32>
    tpu.vector_store %arg11[%c0_30, %c48], %82 {strides = array<i32>} : memref<8x128xf32, #tpu.memory_space<vmem>>, vector<8x16xf32>,
    %84 = vector.extract_strided_slice %1 {offsets = [0, 64], sizes = [8, 16], strides = [1, 1]} : vector<8x128xbf16> to vector<8x16xbf16>
    %85 = vector.extract_strided_slice %3 {offsets = [0, 64], sizes = [8, 16], strides = [1, 1]} : vector<8x128xbf16> to vector<8x16xbf16>
    %86 = vector.extract_strided_slice %5 {offsets = [0, 64], sizes = [8, 16], strides = [1, 1]} : vector<8x128xbf16> to vector<8x16xbf16>
    %cst_31 = arith.constant dense<0.000000e+00> : vector<8x8xf32>
    %87 = tpu.matmul %84, %85, %cst_31 {dimension_numbers = #tpu.dot_dimension_numbers<[1], [1], [0], [0], [0, 0, 1, 0], [], []>} : vector<8x16xbf16>, vector<8x16xbf16>, vector<8x8xf32> -> vector<8x8xf32>
    %88 = vector.broadcast %7 : vector<1x8xf32> to vector<8x8xf32>
    %89 = arith.addf %87, %88 : vector<8x8xf32>
    %cst_32 = arith.constant dense<0xFF800000> : vector<8xf32>
    %90 = vector.multi_reduction <maximumf>, %89, %cst_32 [1] : vector<8x8xf32> to vector<8xf32>
    %91 = vector.shape_cast %90 : vector<8xf32> to vector<8x1xf32>
    %92 = vector.broadcast %91 : vector<8x1xf32> to vector<8x8xf32>
    %93 = arith.subf %89, %92 : vector<8x8xf32>
    %94 = math.exp %93 : vector<8x8xf32>
    %cst_33 = arith.constant dense<0.000000e+00> : vector<8xf32>
    %95 = vector.multi_reduction <add>, %94, %cst_33 [1] : vector<8x8xf32> to vector<8xf32>
    %96 = vector.shape_cast %95 : vector<8xf32> to vector<8x1xf32>
    %97 = tpu.reciprocal %96 {approx = true} : vector<8x1xf32> -> vector<8x1xf32>
    %98 = vector.broadcast %97 : vector<8x1xf32> to vector<8x8xf32>
    %99 = arith.mulf %94, %98 : vector<8x8xf32>
    %100 = arith.truncf %99 : vector<8x8xf32> to vector<8x8xbf16>
    %cst_34 = arith.constant dense<0.000000e+00> : vector<8x16xf32>
    %101 = tpu.matmul %100, %86, %cst_34 {dimension_numbers = #tpu.dot_dimension_numbers<[1], [0], [0], [1], [0, 0, 1, 1], [], []>} : vector<8x8xbf16>, vector<8x16xbf16>, vector<8x16xf32> -> vector<8x16xf32>
    %c0_35 = arith.constant 0 : index
    %c64 = arith.constant 64 : index
    %102 = vector.load %arg11[%c0_35, %c64] : memref<8x128xf32, #tpu.memory_space<vmem>>, vector<8x16xf32>
    tpu.vector_store %arg11[%c0_35, %c64], %101 {strides = array<i32>} : memref<8x128xf32, #tpu.memory_space<vmem>>, vector<8x16xf32>,
    %103 = vector.extract_strided_slice %1 {offsets = [0, 80], sizes = [8, 16], strides = [1, 1]} : vector<8x128xbf16> to vector<8x16xbf16>
    %104 = vector.extract_strided_slice %3 {offsets = [0, 80], sizes = [8, 16], strides = [1, 1]} : vector<8x128xbf16> to vector<8x16xbf16>
    %105 = vector.extract_strided_slice %5 {offsets = [0, 80], sizes = [8, 16], strides = [1, 1]} : vector<8x128xbf16> to vector<8x16xbf16>
    %cst_36 = arith.constant dense<0.000000e+00> : vector<8x8xf32>
    %106 = tpu.matmul %103, %104, %cst_36 {dimension_numbers = #tpu.dot_dimension_numbers<[1], [1], [0], [0], [0, 0, 1, 0], [], []>} : vector<8x16xbf16>, vector<8x16xbf16>, vector<8x8xf32> -> vector<8x8xf32>
    %107 = vector.broadcast %7 : vector<1x8xf32> to vector<8x8xf32>
    %108 = arith.addf %106, %107 : vector<8x8xf32>
    %cst_37 = arith.constant dense<0xFF800000> : vector<8xf32>
    %109 = vector.multi_reduction <maximumf>, %108, %cst_37 [1] : vector<8x8xf32> to vector<8xf32>
    %110 = vector.shape_cast %109 : vector<8xf32> to vector<8x1xf32>
    %111 = vector.broadcast %110 : vector<8x1xf32> to vector<8x8xf32>
    %112 = arith.subf %108, %111 : vector<8x8xf32>
    %113 = math.exp %112 : vector<8x8xf32>
    %cst_38 = arith.constant dense<0.000000e+00> : vector<8xf32>
    %114 = vector.multi_reduction <add>, %113, %cst_38 [1] : vector<8x8xf32> to vector<8xf32>
    %115 = vector.shape_cast %114 : vector<8xf32> to vector<8x1xf32>
    %116 = tpu.reciprocal %115 {approx = true} : vector<8x1xf32> -> vector<8x1xf32>
    %117 = vector.broadcast %116 : vector<8x1xf32> to vector<8x8xf32>
    %118 = arith.mulf %113, %117 : vector<8x8xf32>
    %119 = arith.truncf %118 : vector<8x8xf32> to vector<8x8xbf16>
    %cst_39 = arith.constant dense<0.000000e+00> : vector<8x16xf32>
    %120 = tpu.matmul %119, %105, %cst_39 {dimension_numbers = #tpu.dot_dimension_numbers<[1], [0], [0], [1], [0, 0, 1, 1], [], []>} : vector<8x8xbf16>, vector<8x16xbf16>, vector<8x16xf32> -> vector<8x16xf32>
    %c0_40 = arith.constant 0 : index
    %c80 = arith.constant 80 : index
    %121 = vector.load %arg11[%c0_40, %c80] : memref<8x128xf32, #tpu.memory_space<vmem>>, vector<8x16xf32>
    tpu.vector_store %arg11[%c0_40, %c80], %120 {strides = array<i32>} : memref<8x128xf32, #tpu.memory_space<vmem>>, vector<8x16xf32>,
    %122 = vector.extract_strided_slice %1 {offsets = [0, 96], sizes = [8, 16], strides = [1, 1]} : vector<8x128xbf16> to vector<8x16xbf16>
    %123 = vector.extract_strided_slice %3 {offsets = [0, 96], sizes = [8, 16], strides = [1, 1]} : vector<8x128xbf16> to vector<8x16xbf16>
    %124 = vector.extract_strided_slice %5 {offsets = [0, 96], sizes = [8, 16], strides = [1, 1]} : vector<8x128xbf16> to vector<8x16xbf16>
    %cst_41 = arith.constant dense<0.000000e+00> : vector<8x8xf32>
    %125 = tpu.matmul %122, %123, %cst_41 {dimension_numbers = #tpu.dot_dimension_numbers<[1], [1], [0], [0], [0, 0, 1, 0], [], []>} : vector<8x16xbf16>, vector<8x16xbf16>, vector<8x8xf32> -> vector<8x8xf32>
    %126 = vector.broadcast %7 : vector<1x8xf32> to vector<8x8xf32>
    %127 = arith.addf %125, %126 : vector<8x8xf32>
    %cst_42 = arith.constant dense<0xFF800000> : vector<8xf32>
    %128 = vector.multi_reduction <maximumf>, %127, %cst_42 [1] : vector<8x8xf32> to vector<8xf32>
    %129 = vector.shape_cast %128 : vector<8xf32> to vector<8x1xf32>
    %130 = vector.broadcast %129 : vector<8x1xf32> to vector<8x8xf32>
    %131 = arith.subf %127, %130 : vector<8x8xf32>
    %132 = math.exp %131 : vector<8x8xf32>
    %cst_43 = arith.constant dense<0.000000e+00> : vector<8xf32>
    %133 = vector.multi_reduction <add>, %132, %cst_43 [1] : vector<8x8xf32> to vector<8xf32>
    %134 = vector.shape_cast %133 : vector<8xf32> to vector<8x1xf32>
    %135 = tpu.reciprocal %134 {approx = true} : vector<8x1xf32> -> vector<8x1xf32>
    %136 = vector.broadcast %135 : vector<8x1xf32> to vector<8x8xf32>
    %137 = arith.mulf %132, %136 : vector<8x8xf32>
    %138 = arith.truncf %137 : vector<8x8xf32> to vector<8x8xbf16>
    %cst_44 = arith.constant dense<0.000000e+00> : vector<8x16xf32>
    %139 = tpu.matmul %138, %124, %cst_44 {dimension_numbers = #tpu.dot_dimension_numbers<[1], [0], [0], [1], [0, 0, 1, 1], [], []>} : vector<8x8xbf16>, vector<8x16xbf16>, vector<8x16xf32> -> vector<8x16xf32>
    %c0_45 = arith.constant 0 : index
    %c96 = arith.constant 96 : index
    %140 = vector.load %arg11[%c0_45, %c96] : memref<8x128xf32, #tpu.memory_space<vmem>>, vector<8x16xf32>
    tpu.vector_store %arg11[%c0_45, %c96], %139 {strides = array<i32>} : memref<8x128xf32, #tpu.memory_space<vmem>>, vector<8x16xf32>,
    %141 = vector.extract_strided_slice %1 {offsets = [0, 112], sizes = [8, 16], strides = [1, 1]} : vector<8x128xbf16> to vector<8x16xbf16>
    %142 = vector.extract_strided_slice %3 {offsets = [0, 112], sizes = [8, 16], strides = [1, 1]} : vector<8x128xbf16> to vector<8x16xbf16>
    %143 = vector.extract_strided_slice %5 {offsets = [0, 112], sizes = [8, 16], strides = [1, 1]} : vector<8x128xbf16> to vector<8x16xbf16>
    %cst_46 = arith.constant dense<0.000000e+00> : vector<8x8xf32>
    %144 = tpu.matmul %141, %142, %cst_46 {dimension_numbers = #tpu.dot_dimension_numbers<[1], [1], [0], [0], [0, 0, 1, 0], [], []>} : vector<8x16xbf16>, vector<8x16xbf16>, vector<8x8xf32> -> vector<8x8xf32>
    %145 = vector.broadcast %7 : vector<1x8xf32> to vector<8x8xf32>
    %146 = arith.addf %144, %145 : vector<8x8xf32>
    %cst_47 = arith.constant dense<0xFF800000> : vector<8xf32>
    %147 = vector.multi_reduction <maximumf>, %146, %cst_47 [1] : vector<8x8xf32> to vector<8xf32>
    %148 = vector.shape_cast %147 : vector<8xf32> to vector<8x1xf32>
    %149 = vector.broadcast %148 : vector<8x1xf32> to vector<8x8xf32>
    %150 = arith.subf %146, %149 : vector<8x8xf32>
    %151 = math.exp %150 : vector<8x8xf32>
    %cst_48 = arith.constant dense<0.000000e+00> : vector<8xf32>
    %152 = vector.multi_reduction <add>, %151, %cst_48 [1] : vector<8x8xf32> to vector<8xf32>
    %153 = vector.shape_cast %152 : vector<8xf32> to vector<8x1xf32>
    %154 = tpu.reciprocal %153 {approx = true} : vector<8x1xf32> -> vector<8x1xf32>
    %155 = vector.broadcast %154 : vector<8x1xf32> to vector<8x8xf32>
    %156 = arith.mulf %151, %155 : vector<8x8xf32>
    %157 = arith.truncf %156 : vector<8x8xf32> to vector<8x8xbf16>
    %cst_49 = arith.constant dense<0.000000e+00> : vector<8x16xf32>
    %158 = tpu.matmul %157, %143, %cst_49 {dimension_numbers = #tpu.dot_dimension_numbers<[1], [0], [0], [1], [0, 0, 1, 1], [], []>} : vector<8x8xbf16>, vector<8x16xbf16>, vector<8x16xf32> -> vector<8x16xf32>
    %c0_50 = arith.constant 0 : index
    %c112 = arith.constant 112 : index
    %159 = vector.load %arg11[%c0_50, %c112] : memref<8x128xf32, #tpu.memory_space<vmem>>, vector<8x16xf32>
    tpu.vector_store %arg11[%c0_50, %c112], %158 {strides = array<i32>} : memref<8x128xf32, #tpu.memory_space<vmem>>, vector<8x16xf32>,
    %c0_51 = arith.constant 0 : index
    %c0_52 = arith.constant 0 : index
    %160 = vector.load %arg11[%c0_51, %c0_52] : memref<8x128xf32, #tpu.memory_space<vmem>>, vector<8x128xf32>
    %161 = arith.truncf %160 : vector<8x128xf32> to vector<8x128xbf16>
    %c0_53 = arith.constant 0 : index
    %c0_54 = arith.constant 0 : index
    %162 = vector.load %arg6[%c0_53, %c0_54] : memref<128x128xbf16, #tpu.memory_space<vmem>>, vector<128x128xbf16>
    %cst_55 = arith.constant dense<0.000000e+00> : vector<8x128xf32>
    %163 = tpu.matmul %161, %162, %cst_55 {dimension_numbers = #tpu.dot_dimension_numbers<[1], [0], [0], [1], [0, 0, 1, 1], [], []>} : vector<8x128xbf16>, vector<128x128xbf16>, vector<8x128xf32> -> vector<8x128xf32>
    %c0_56 = arith.constant 0 : index
    %c0_57 = arith.constant 0 : index
    %164 = vector.load %arg7[%c0_56, %c0_57] : memref<1x128xf32, #tpu.memory_space<vmem>>, vector<1x128xf32>
    %165 = vector.broadcast %164 : vector<1x128xf32> to vector<8x128xf32>
    %166 = arith.addf %163, %165 : vector<8x128xf32>
    %c0_58 = arith.constant 0 : index
    %c0_59 = arith.constant 0 : index
    %c0_60 = arith.constant 0 : index
    %167 = vector.load %arg5[%c0_58, %c0_59, %c0_60] : memref<1x8x128xbf16, #tpu.memory_space<vmem>>, vector<1x8x128xbf16>
    %168 = vector.shape_cast %167 : vector<1x8x128xbf16> to vector<8x128xbf16>
    %169 = arith.extf %168 : vector<8x128xbf16> to vector<8x128xf32>
    %170 = arith.addf %166, %169 : vector<8x128xf32>
    %cst_61 = arith.constant dense<0.000000e+00> : vector<8xf32>
    %171 = vector.multi_reduction <add>, %170, %cst_61 [1] : vector<8x128xf32> to vector<8xf32>
    %172 = vector.shape_cast %171 : vector<8xf32> to vector<8x1xf32>
    %cst_62 = arith.constant 1.280000e+02 : f32
    %173 = vector.broadcast %cst_62 : f32 to vector<8x1xf32>
    %174 = arith.divf %172, %173 : vector<8x1xf32>
    %175 = vector.broadcast %174 : vector<8x1xf32> to vector<8x128xf32>
    %176 = arith.subf %170, %175 : vector<8x128xf32>
    %177 = arith.mulf %176, %176 : vector<8x128xf32>
    %cst_63 = arith.constant dense<0.000000e+00> : vector<8xf32>
    %178 = vector.multi_reduction <add>, %177, %cst_63 [1] : vector<8x128xf32> to vector<8xf32>
    %179 = vector.shape_cast %178 : vector<8xf32> to vector<8x1xf32>
    %cst_64 = arith.constant 1.280000e+02 : f32
    %180 = vector.broadcast %cst_64 : f32 to vector<8x1xf32>
    %181 = arith.divf %179, %180 : vector<8x1xf32>
    %cst_65 = arith.constant 9.99999974E-6 : f32
    %182 = vector.broadcast %cst_65 : f32 to vector<8x1xf32>
    %183 = arith.addf %181, %182 : vector<8x1xf32>
    %184 = math.rsqrt %183 : vector<8x1xf32>
    %185 = vector.broadcast %184 : vector<8x1xf32> to vector<8x128xf32>
    %186 = arith.mulf %176, %185 : vector<8x128xf32>
    %c0_66 = arith.constant 0 : index
    %c0_67 = arith.constant 0 : index
    %187 = vector.load %arg8[%c0_66, %c0_67] : memref<1x128xf32, #tpu.memory_space<vmem>>, vector<1x128xf32>
    %188 = vector.broadcast %187 : vector<1x128xf32> to vector<8x128xf32>
    %189 = arith.mulf %186, %188 : vector<8x128xf32>
    %c0_68 = arith.constant 0 : index
    %c0_69 = arith.constant 0 : index
    %190 = vector.load %arg9[%c0_68, %c0_69] : memref<1x128xf32, #tpu.memory_space<vmem>>, vector<1x128xf32>
    %191 = vector.broadcast %190 : vector<1x128xf32> to vector<8x128xf32>
    %192 = arith.addf %189, %191 : vector<8x128xf32>
    %193 = vector.shape_cast %192 : vector<8x128xf32> to vector<1x8x128xf32>
    %194 = arith.truncf %193 : vector<1x8x128xf32> to vector<1x8x128xbf16>
    %c0_70 = arith.constant 0 : index
    %c0_71 = arith.constant 0 : index
    %c0_72 = arith.constant 0 : index
    %195 = vector.load %arg10[%c0_70, %c0_71, %c0_72] : memref<1x8x128xbf16, #tpu.memory_space<vmem>>, vector<1x8x128xbf16>
    tpu.vector_store %arg10[%c0_70, %c0_71, %c0_72], %194 {strides = array<i32>} : memref<1x8x128xbf16, #tpu.memory_space<vmem>>, vector<1x8x128xbf16>,
    return
  }
  func.func @transform_0(%arg0: i32) -> (i32, i32, i32) {
    %c0_i32 = arith.constant 0 : i32
    %c0_i32_0 = arith.constant 0 : i32
    %c0_i32_1 = arith.constant 0 : i32
    return %arg0, %c0_i32, %c0_i32_0 : i32, i32, i32
  }
  func.func @transform_1(%arg0: i32) -> (i32, i32, i32) {
    %c0_i32 = arith.constant 0 : i32
    %c1_i32 = arith.constant 1 : i32
    %c0_i32_0 = arith.constant 0 : i32
    return %arg0, %c0_i32, %c1_i32 : i32, i32, i32
  }
  func.func @transform_2(%arg0: i32) -> (i32, i32, i32) {
    %c0_i32 = arith.constant 0 : i32
    %c2_i32 = arith.constant 2 : i32
    %c0_i32_0 = arith.constant 0 : i32
    return %arg0, %c0_i32, %c2_i32 : i32, i32, i32
  }
  func.func @transform_3(%arg0: i32) -> (i32, i32, i32) {
    %c0_i32 = arith.constant 0 : i32
    %c0_i32_0 = arith.constant 0 : i32
    %c0_i32_1 = arith.constant 0 : i32
    return %arg0, %c0_i32, %c0_i32_0 : i32, i32, i32
  }
  func.func @transform_4(%arg0: i32) -> (i32, i32, i32) {
    %c0_i32 = arith.constant 0 : i32
    %c0_i32_0 = arith.constant 0 : i32
    %c0_i32_1 = arith.constant 0 : i32
    return %arg0, %c0_i32, %c0_i32_0 : i32, i32, i32
  }
  func.func @transform_5(%arg0: i32) -> (i32, i32) {
    %c0_i32 = arith.constant 0 : i32
    %c0_i32_0 = arith.constant 0 : i32
    %c0_i32_1 = arith.constant 0 : i32
    return %c0_i32, %c0_i32_0 : i32, i32
  }
  func.func @transform_6(%arg0: i32) -> (i32, i32) {
    %c0_i32 = arith.constant 0 : i32
    %c0_i32_0 = arith.constant 0 : i32
    %c0_i32_1 = arith.constant 0 : i32
    return %c0_i32, %c0_i32_0 : i32, i32
  }
  func.func @transform_7(%arg0: i32) -> (i32, i32) {
    %c0_i32 = arith.constant 0 : i32
    %c0_i32_0 = arith.constant 0 : i32
    %c0_i32_1 = arith.constant 0 : i32
    return %c0_i32, %c0_i32_0 : i32, i32
  }
  func.func @transform_8(%arg0: i32) -> (i32, i32) {
    %c0_i32 = arith.constant 0 : i32
    %c0_i32_0 = arith.constant 0 : i32
    %c0_i32_1 = arith.constant 0 : i32
    return %c0_i32, %c0_i32_0 : i32, i32
  }
  func.func @transform_9(%arg0: i32) -> (i32, i32, i32) {
    %c0_i32 = arith.constant 0 : i32
    %c0_i32_0 = arith.constant 0 : i32
    %c0_i32_1 = arith.constant 0 : i32
    return %arg0, %c0_i32, %c0_i32_0 : i32, i32, i32
  }
}

module attributes {stable_mosaic.version = 11 : i64} {
  func.func @_attn_block_kernel(%arg0: i32, %arg1: memref<1x8x128xbf16, #tpu.memory_space<vmem>>, %arg2: memref<1x8x128xbf16, #tpu.memory_space<vmem>>, %arg3: memref<1x8x128xbf16, #tpu.memory_space<vmem>>, %arg4: memref<1x1x8xf32, #tpu.memory_space<vmem>>, %arg5: memref<1x8x128xbf16, #tpu.memory_space<vmem>>, %arg6: memref<128x128xbf16, #tpu.memory_space<vmem>>, %arg7: memref<1x128xf32, #tpu.memory_space<vmem>>, %arg8: memref<1x128xf32, #tpu.memory_space<vmem>>, %arg9: memref<1x128xf32, #tpu.memory_space<vmem>>, %arg10: memref<1x8x128xbf16, #tpu.memory_space<vmem>>, %arg11: memref<8x128xf32, #tpu.memory_space<vmem>>) attributes {dimension_semantics = [#tpu.dimension_semantics<parallel>], iteration_bounds = array<i64: 2>, scalar_prefetch = 0 : i64, scratch_operands = 1 : i64, tpu.core_type = #tpu.core_type<tc>, window_params = [{transform_indices = @transform_0, window_bounds = array<i64: 1, 8, 128>}, {transform_indices = @transform_1, window_bounds = array<i64: 1, 8, 128>}, {transform_indices = @transform_2, window_bounds = array<i64: 1, 8, 128>}, {transform_indices = @transform_3, window_bounds = array<i64: 1, 1, 8>}, {transform_indices = @transform_4, window_bounds = array<i64: 1, 8, 128>}, {pipeline_mode = #tpu.pipeline_mode<synchronous>, transform_indices = @transform_5, window_bounds = array<i64: 128, 128>}, {pipeline_mode = #tpu.pipeline_mode<synchronous>, transform_indices = @transform_6, window_bounds = array<i64: 1, 128>}, {pipeline_mode = #tpu.pipeline_mode<synchronous>, transform_indices = @transform_7, window_bounds = array<i64: 1, 128>}, {pipeline_mode = #tpu.pipeline_mode<synchronous>, transform_indices = @transform_8, window_bounds = array<i64: 1, 128>}, {transform_indices = @transform_9, window_bounds = array<i64: 1, 8, 128>}]} {
    %c0 = arith.constant 0 : index
    %c0_0 = arith.constant 0 : index
    %c0_1 = arith.constant 0 : index
    %0 = vector.load %arg1[%c0, %c0_0, %c0_1] : memref<1x8x128xbf16, #tpu.memory_space<vmem>>, vector<1x8x128xbf16>
    %1 = vector.shape_cast %0 : vector<1x8x128xbf16> to vector<8x128xbf16>
    %c0_2 = arith.constant 0 : index
    %c0_3 = arith.constant 0 : index
    %c0_4 = arith.constant 0 : index
    %2 = vector.load %arg2[%c0_2, %c0_3, %c0_4] : memref<1x8x128xbf16, #tpu.memory_space<vmem>>, vector<1x8x128xbf16>
    %3 = vector.shape_cast %2 : vector<1x8x128xbf16> to vector<8x128xbf16>
    %c0_5 = arith.constant 0 : index
    %c0_6 = arith.constant 0 : index
    %c0_7 = arith.constant 0 : index
    %4 = vector.load %arg3[%c0_5, %c0_6, %c0_7] : memref<1x8x128xbf16, #tpu.memory_space<vmem>>, vector<1x8x128xbf16>
    %5 = vector.shape_cast %4 : vector<1x8x128xbf16> to vector<8x128xbf16>
    %c0_8 = arith.constant 0 : index
    %c0_9 = arith.constant 0 : index
    %c0_10 = arith.constant 0 : index
    %6 = vector.load %arg4[%c0_8, %c0_9, %c0_10] : memref<1x1x8xf32, #tpu.memory_space<vmem>>, vector<1x1x8xf32>
    %7 = vector.shape_cast %6 : vector<1x1x8xf32> to vector<1x8xf32>
    %8 = vector.extract_strided_slice %1 {offsets = [0, 0], sizes = [8, 16], strides = [1, 1]} : vector<8x128xbf16> to vector<8x16xbf16>
    %9 = vector.extract_strided_slice %3 {offsets = [0, 0], sizes = [8, 16], strides = [1, 1]} : vector<8x128xbf16> to vector<8x16xbf16>
    %10 = vector.extract_strided_slice %5 {offsets = [0, 0], sizes = [8, 16], strides = [1, 1]} : vector<8x128xbf16> to vector<8x16xbf16>
    %cst = arith.constant dense<0.000000e+00> : vector<8x8xf32>
    %11 = tpu.matmul %8, %9, %cst {dimension_numbers = #tpu.dot_dimension_numbers<[1], [1], [0], [0], [0, 0, 1, 0], [], []>} : vector<8x16xbf16>, vector<8x16xbf16>, vector<8x8xf32> -> vector<8x8xf32>
    %12 = vector.broadcast %7 : vector<1x8xf32> to vector<8x8xf32>
    %13 = arith.addf %11, %12 : vector<8x8xf32>
    %cst_11 = arith.constant dense<0xFF800000> : vector<8xf32>
    %14 = vector.multi_reduction <maximumf>, %13, %cst_11 [1] : vector<8x8xf32> to vector<8xf32>
    %15 = vector.shape_cast %14 : vector<8xf32> to vector<8x1xf32>
    %16 = vector.broadcast %15 : vector<8x1xf32> to vector<8x8xf32>
    %17 = arith.subf %13, %16 : vector<8x8xf32>
    %18 = math.exp %17 : vector<8x8xf32>
    %cst_12 = arith.constant dense<0.000000e+00> : vector<8xf32>
    %19 = vector.multi_reduction <add>, %18, %cst_12 [1] : vector<8x8xf32> to vector<8xf32>
    %20 = vector.shape_cast %19 : vector<8xf32> to vector<8x1xf32>
    %21 = tpu.reciprocal %20 {approx = true} : vector<8x1xf32> -> vector<8x1xf32>
    %22 = vector.broadcast %21 : vector<8x1xf32> to vector<8x8xf32>
    %23 = arith.mulf %18, %22 : vector<8x8xf32>
    %24 = arith.truncf %23 : vector<8x8xf32> to vector<8x8xbf16>
    %cst_13 = arith.constant dense<0.000000e+00> : vector<8x16xf32>
    %25 = tpu.matmul %24, %10, %cst_13 {dimension_numbers = #tpu.dot_dimension_numbers<[1], [0], [0], [1], [0, 0, 1, 1], [], []>} : vector<8x8xbf16>, vector<8x16xbf16>, vector<8x16xf32> -> vector<8x16xf32>
    %c0_14 = arith.constant 0 : index
    %c0_15 = arith.constant 0 : index
    %26 = vector.load %arg11[%c0_14, %c0_15] : memref<8x128xf32, #tpu.memory_space<vmem>>, vector<8x16xf32>
    tpu.vector_store %arg11[%c0_14, %c0_15], %25 {strides = array<i32>} : memref<8x128xf32, #tpu.memory_space<vmem>>, vector<8x16xf32>,
    %27 = vector.extract_strided_slice %1 {offsets = [0, 16], sizes = [8, 16], strides = [1, 1]} : vector<8x128xbf16> to vector<8x16xbf16>
    %28 = vector.extract_strided_slice %3 {offsets = [0, 16], sizes = [8, 16], strides = [1, 1]} : vector<8x128xbf16> to vector<8x16xbf16>
    %29 = vector.extract_strided_slice %5 {offsets = [0, 16], sizes = [8, 16], strides = [1, 1]} : vector<8x128xbf16> to vector<8x16xbf16>
    %cst_16 = arith.constant dense<0.000000e+00> : vector<8x8xf32>
    %30 = tpu.matmul %27, %28, %cst_16 {dimension_numbers = #tpu.dot_dimension_numbers<[1], [1], [0], [0], [0, 0, 1, 0], [], []>} : vector<8x16xbf16>, vector<8x16xbf16>, vector<8x8xf32> -> vector<8x8xf32>
    %31 = vector.broadcast %7 : vector<1x8xf32> to vector<8x8xf32>
    %32 = arith.addf %30, %31 : vector<8x8xf32>
    %cst_17 = arith.constant dense<0xFF800000> : vector<8xf32>
    %33 = vector.multi_reduction <maximumf>, %32, %cst_17 [1] : vector<8x8xf32> to vector<8xf32>
    %34 = vector.shape_cast %33 : vector<8xf32> to vector<8x1xf32>
    %35 = vector.broadcast %34 : vector<8x1xf32> to vector<8x8xf32>
    %36 = arith.subf %32, %35 : vector<8x8xf32>
    %37 = math.exp %36 : vector<8x8xf32>
    %cst_18 = arith.constant dense<0.000000e+00> : vector<8xf32>
    %38 = vector.multi_reduction <add>, %37, %cst_18 [1] : vector<8x8xf32> to vector<8xf32>
    %39 = vector.shape_cast %38 : vector<8xf32> to vector<8x1xf32>
    %40 = tpu.reciprocal %39 {approx = true} : vector<8x1xf32> -> vector<8x1xf32>
    %41 = vector.broadcast %40 : vector<8x1xf32> to vector<8x8xf32>
    %42 = arith.mulf %37, %41 : vector<8x8xf32>
    %43 = arith.truncf %42 : vector<8x8xf32> to vector<8x8xbf16>
    %cst_19 = arith.constant dense<0.000000e+00> : vector<8x16xf32>
    %44 = tpu.matmul %43, %29, %cst_19 {dimension_numbers = #tpu.dot_dimension_numbers<[1], [0], [0], [1], [0, 0, 1, 1], [], []>} : vector<8x8xbf16>, vector<8x16xbf16>, vector<8x16xf32> -> vector<8x16xf32>
    %c0_20 = arith.constant 0 : index
    %c16 = arith.constant 16 : index
    %45 = vector.load %arg11[%c0_20, %c16] : memref<8x128xf32, #tpu.memory_space<vmem>>, vector<8x16xf32>
    tpu.vector_store %arg11[%c0_20, %c16], %44 {strides = array<i32>} : memref<8x128xf32, #tpu.memory_space<vmem>>, vector<8x16xf32>,
    %46 = vector.extract_strided_slice %1 {offsets = [0, 32], sizes = [8, 16], strides = [1, 1]} : vector<8x128xbf16> to vector<8x16xbf16>
    %47 = vector.extract_strided_slice %3 {offsets = [0, 32], sizes = [8, 16], strides = [1, 1]} : vector<8x128xbf16> to vector<8x16xbf16>
    %48 = vector.extract_strided_slice %5 {offsets = [0, 32], sizes = [8, 16], strides = [1, 1]} : vector<8x128xbf16> to vector<8x16xbf16>
    %cst_21 = arith.constant dense<0.000000e+00> : vector<8x8xf32>
    %49 = tpu.matmul %46, %47, %cst_21 {dimension_numbers = #tpu.dot_dimension_numbers<[1], [1], [0], [0], [0, 0, 1, 0], [], []>} : vector<8x16xbf16>, vector<8x16xbf16>, vector<8x8xf32> -> vector<8x8xf32>
    %50 = vector.broadcast %7 : vector<1x8xf32> to vector<8x8xf32>
    %51 = arith.addf %49, %50 : vector<8x8xf32>
    %cst_22 = arith.constant dense<0xFF800000> : vector<8xf32>
    %52 = vector.multi_reduction <maximumf>, %51, %cst_22 [1] : vector<8x8xf32> to vector<8xf32>
    %53 = vector.shape_cast %52 : vector<8xf32> to vector<8x1xf32>
    %54 = vector.broadcast %53 : vector<8x1xf32> to vector<8x8xf32>
    %55 = arith.subf %51, %54 : vector<8x8xf32>
    %56 = math.exp %55 : vector<8x8xf32>
    %cst_23 = arith.constant dense<0.000000e+00> : vector<8xf32>
    %57 = vector.multi_reduction <add>, %56, %cst_23 [1] : vector<8x8xf32> to vector<8xf32>
    %58 = vector.shape_cast %57 : vector<8xf32> to vector<8x1xf32>
    %59 = tpu.reciprocal %58 {approx = true} : vector<8x1xf32> -> vector<8x1xf32>
    %60 = vector.broadcast %59 : vector<8x1xf32> to vector<8x8xf32>
    %61 = arith.mulf %56, %60 : vector<8x8xf32>
    %62 = arith.truncf %61 : vector<8x8xf32> to vector<8x8xbf16>
    %cst_24 = arith.constant dense<0.000000e+00> : vector<8x16xf32>
    %63 = tpu.matmul %62, %48, %cst_24 {dimension_numbers = #tpu.dot_dimension_numbers<[1], [0], [0], [1], [0, 0, 1, 1], [], []>} : vector<8x8xbf16>, vector<8x16xbf16>, vector<8x16xf32> -> vector<8x16xf32>
    %c0_25 = arith.constant 0 : index
    %c32 = arith.constant 32 : index
    %64 = vector.load %arg11[%c0_25, %c32] : memref<8x128xf32, #tpu.memory_space<vmem>>, vector<8x16xf32>
    tpu.vector_store %arg11[%c0_25, %c32], %63 {strides = array<i32>} : memref<8x128xf32, #tpu.memory_space<vmem>>, vector<8x16xf32>,
    %65 = vector.extract_strided_slice %1 {offsets = [0, 48], sizes = [8, 16], strides = [1, 1]} : vector<8x128xbf16> to vector<8x16xbf16>
    %66 = vector.extract_strided_slice %3 {offsets = [0, 48], sizes = [8, 16], strides = [1, 1]} : vector<8x128xbf16> to vector<8x16xbf16>
    %67 = vector.extract_strided_slice %5 {offsets = [0, 48], sizes = [8, 16], strides = [1, 1]} : vector<8x128xbf16> to vector<8x16xbf16>
    %cst_26 = arith.constant dense<0.000000e+00> : vector<8x8xf32>
    %68 = tpu.matmul %65, %66, %cst_26 {dimension_numbers = #tpu.dot_dimension_numbers<[1], [1], [0], [0], [0, 0, 1, 0], [], []>} : vector<8x16xbf16>, vector<8x16xbf16>, vector<8x8xf32> -> vector<8x8xf32>
    %69 = vector.broadcast %7 : vector<1x8xf32> to vector<8x8xf32>
    %70 = arith.addf %68, %69 : vector<8x8xf32>
    %cst_27 = arith.constant dense<0xFF800000> : vector<8xf32>
    %71 = vector.multi_reduction <maximumf>, %70, %cst_27 [1] : vector<8x8xf32> to vector<8xf32>
    %72 = vector.shape_cast %71 : vector<8xf32> to vector<8x1xf32>
    %73 = vector.broadcast %72 : vector<8x1xf32> to vector<8x8xf32>
    %74 = arith.subf %70, %73 : vector<8x8xf32>
    %75 = math.exp %74 : vector<8x8xf32>
    %cst_28 = arith.constant dense<0.000000e+00> : vector<8xf32>
    %76 = vector.multi_reduction <add>, %75, %cst_28 [1] : vector<8x8xf32> to vector<8xf32>
    %77 = vector.shape_cast %76 : vector<8xf32> to vector<8x1xf32>
    %78 = tpu.reciprocal %77 {approx = true} : vector<8x1xf32> -> vector<8x1xf32>
    %79 = vector.broadcast %78 : vector<8x1xf32> to vector<8x8xf32>
    %80 = arith.mulf %75, %79 : vector<8x8xf32>
    %81 = arith.truncf %80 : vector<8x8xf32> to vector<8x8xbf16>
    %cst_29 = arith.constant dense<0.000000e+00> : vector<8x16xf32>
    %82 = tpu.matmul %81, %67, %cst_29 {dimension_numbers = #tpu.dot_dimension_numbers<[1], [0], [0], [1], [0, 0, 1, 1], [], []>} : vector<8x8xbf16>, vector<8x16xbf16>, vector<8x16xf32> -> vector<8x16xf32>
    %c0_30 = arith.constant 0 : index
    %c48 = arith.constant 48 : index
    %83 = vector.load %arg11[%c0_30, %c48] : memref<8x128xf32, #tpu.memory_space<vmem>>, vector<8x16xf32>
    tpu.vector_store %arg11[%c0_30, %c48], %82 {strides = array<i32>} : memref<8x128xf32, #tpu.memory_space<vmem>>, vector<8x16xf32>,
    %84 = vector.extract_strided_slice %1 {offsets = [0, 64], sizes = [8, 16], strides = [1, 1]} : vector<8x128xbf16> to vector<8x16xbf16>
    %85 = vector.extract_strided_slice %3 {offsets = [0, 64], sizes = [8, 16], strides = [1, 1]} : vector<8x128xbf16> to vector<8x16xbf16>
    %86 = vector.extract_strided_slice %5 {offsets = [0, 64], sizes = [8, 16], strides = [1, 1]} : vector<8x128xbf16> to vector<8x16xbf16>
    %cst_31 = arith.constant dense<0.000000e+00> : vector<8x8xf32>
    %87 = tpu.matmul %84, %85, %cst_31 {dimension_numbers = #tpu.dot_dimension_numbers<[1], [1], [0], [0], [0, 0, 1, 0], [], []>} : vector<8x16xbf16>, vector<8x16xbf16>, vector<8x8xf32> -> vector<8x8xf32>
    %88 = vector.broadcast %7 : vector<1x8xf32> to vector<8x8xf32>
    %89 = arith.addf %87, %88 : vector<8x8xf32>
    %cst_32 = arith.constant dense<0xFF800000> : vector<8xf32>
    %90 = vector.multi_reduction <maximumf>, %89, %cst_32 [1] : vector<8x8xf32> to vector<8xf32>
    %91 = vector.shape_cast %90 : vector<8xf32> to vector<8x1xf32>
    %92 = vector.broadcast %91 : vector<8x1xf32> to vector<8x8xf32>
    %93 = arith.subf %89, %92 : vector<8x8xf32>
    %94 = math.exp %93 : vector<8x8xf32>
    %cst_33 = arith.constant dense<0.000000e+00> : vector<8xf32>
    %95 = vector.multi_reduction <add>, %94, %cst_33 [1] : vector<8x8xf32> to vector<8xf32>
    %96 = vector.shape_cast %95 : vector<8xf32> to vector<8x1xf32>
    %97 = tpu.reciprocal %96 {approx = true} : vector<8x1xf32> -> vector<8x1xf32>
    %98 = vector.broadcast %97 : vector<8x1xf32> to vector<8x8xf32>
    %99 = arith.mulf %94, %98 : vector<8x8xf32>
    %100 = arith.truncf %99 : vector<8x8xf32> to vector<8x8xbf16>
    %cst_34 = arith.constant dense<0.000000e+00> : vector<8x16xf32>
    %101 = tpu.matmul %100, %86, %cst_34 {dimension_numbers = #tpu.dot_dimension_numbers<[1], [0], [0], [1], [0, 0, 1, 1], [], []>} : vector<8x8xbf16>, vector<8x16xbf16>, vector<8x16xf32> -> vector<8x16xf32>
    %c0_35 = arith.constant 0 : index
    %c64 = arith.constant 64 : index
    %102 = vector.load %arg11[%c0_35, %c64] : memref<8x128xf32, #tpu.memory_space<vmem>>, vector<8x16xf32>
    tpu.vector_store %arg11[%c0_35, %c64], %101 {strides = array<i32>} : memref<8x128xf32, #tpu.memory_space<vmem>>, vector<8x16xf32>,
    %103 = vector.extract_strided_slice %1 {offsets = [0, 80], sizes = [8, 16], strides = [1, 1]} : vector<8x128xbf16> to vector<8x16xbf16>
    %104 = vector.extract_strided_slice %3 {offsets = [0, 80], sizes = [8, 16], strides = [1, 1]} : vector<8x128xbf16> to vector<8x16xbf16>
    %105 = vector.extract_strided_slice %5 {offsets = [0, 80], sizes = [8, 16], strides = [1, 1]} : vector<8x128xbf16> to vector<8x16xbf16>
    %cst_36 = arith.constant dense<0.000000e+00> : vector<8x8xf32>
    %106 = tpu.matmul %103, %104, %cst_36 {dimension_numbers = #tpu.dot_dimension_numbers<[1], [1], [0], [0], [0, 0, 1, 0], [], []>} : vector<8x16xbf16>, vector<8x16xbf16>, vector<8x8xf32> -> vector<8x8xf32>
    %107 = vector.broadcast %7 : vector<1x8xf32> to vector<8x8xf32>
    %108 = arith.addf %106, %107 : vector<8x8xf32>
    %cst_37 = arith.constant dense<0xFF800000> : vector<8xf32>
    %109 = vector.multi_reduction <maximumf>, %108, %cst_37 [1] : vector<8x8xf32> to vector<8xf32>
    %110 = vector.shape_cast %109 : vector<8xf32> to vector<8x1xf32>
    %111 = vector.broadcast %110 : vector<8x1xf32> to vector<8x8xf32>
    %112 = arith.subf %108, %111 : vector<8x8xf32>
    %113 = math.exp %112 : vector<8x8xf32>
    %cst_38 = arith.constant dense<0.000000e+00> : vector<8xf32>
    %114 = vector.multi_reduction <add>, %113, %cst_38 [1] : vector<8x8xf32> to vector<8xf32>
    %115 = vector.shape_cast %114 : vector<8xf32> to vector<8x1xf32>
    %116 = tpu.reciprocal %115 {approx = true} : vector<8x1xf32> -> vector<8x1xf32>
    %117 = vector.broadcast %116 : vector<8x1xf32> to vector<8x8xf32>
    %118 = arith.mulf %113, %117 : vector<8x8xf32>
    %119 = arith.truncf %118 : vector<8x8xf32> to vector<8x8xbf16>
    %cst_39 = arith.constant dense<0.000000e+00> : vector<8x16xf32>
    %120 = tpu.matmul %119, %105, %cst_39 {dimension_numbers = #tpu.dot_dimension_numbers<[1], [0], [0], [1], [0, 0, 1, 1], [], []>} : vector<8x8xbf16>, vector<8x16xbf16>, vector<8x16xf32> -> vector<8x16xf32>
    %c0_40 = arith.constant 0 : index
    %c80 = arith.constant 80 : index
    %121 = vector.load %arg11[%c0_40, %c80] : memref<8x128xf32, #tpu.memory_space<vmem>>, vector<8x16xf32>
    tpu.vector_store %arg11[%c0_40, %c80], %120 {strides = array<i32>} : memref<8x128xf32, #tpu.memory_space<vmem>>, vector<8x16xf32>,
    %122 = vector.extract_strided_slice %1 {offsets = [0, 96], sizes = [8, 16], strides = [1, 1]} : vector<8x128xbf16> to vector<8x16xbf16>
    %123 = vector.extract_strided_slice %3 {offsets = [0, 96], sizes = [8, 16], strides = [1, 1]} : vector<8x128xbf16> to vector<8x16xbf16>
    %124 = vector.extract_strided_slice %5 {offsets = [0, 96], sizes = [8, 16], strides = [1, 1]} : vector<8x128xbf16> to vector<8x16xbf16>
    %cst_41 = arith.constant dense<0.000000e+00> : vector<8x8xf32>
    %125 = tpu.matmul %122, %123, %cst_41 {dimension_numbers = #tpu.dot_dimension_numbers<[1], [1], [0], [0], [0, 0, 1, 0], [], []>} : vector<8x16xbf16>, vector<8x16xbf16>, vector<8x8xf32> -> vector<8x8xf32>
    %126 = vector.broadcast %7 : vector<1x8xf32> to vector<8x8xf32>
    %127 = arith.addf %125, %126 : vector<8x8xf32>
    %cst_42 = arith.constant dense<0xFF800000> : vector<8xf32>
    %128 = vector.multi_reduction <maximumf>, %127, %cst_42 [1] : vector<8x8xf32> to vector<8xf32>
    %129 = vector.shape_cast %128 : vector<8xf32> to vector<8x1xf32>
    %130 = vector.broadcast %129 : vector<8x1xf32> to vector<8x8xf32>
    %131 = arith.subf %127, %130 : vector<8x8xf32>
    %132 = math.exp %131 : vector<8x8xf32>
    %cst_43 = arith.constant dense<0.000000e+00> : vector<8xf32>
    %133 = vector.multi_reduction <add>, %132, %cst_43 [1] : vector<8x8xf32> to vector<8xf32>
    %134 = vector.shape_cast %133 : vector<8xf32> to vector<8x1xf32>
    %135 = tpu.reciprocal %134 {approx = true} : vector<8x1xf32> -> vector<8x1xf32>
    %136 = vector.broadcast %135 : vector<8x1xf32> to vector<8x8xf32>
    %137 = arith.mulf %132, %136 : vector<8x8xf32>
    %138 = arith.truncf %137 : vector<8x8xf32> to vector<8x8xbf16>
    %cst_44 = arith.constant dense<0.000000e+00> : vector<8x16xf32>
    %139 = tpu.matmul %138, %124, %cst_44 {dimension_numbers = #tpu.dot_dimension_numbers<[1], [0], [0], [1], [0, 0, 1, 1], [], []>} : vector<8x8xbf16>, vector<8x16xbf16>, vector<8x16xf32> -> vector<8x16xf32>
    %c0_45 = arith.constant 0 : index
    %c96 = arith.constant 96 : index
    %140 = vector.load %arg11[%c0_45, %c96] : memref<8x128xf32, #tpu.memory_space<vmem>>, vector<8x16xf32>
    tpu.vector_store %arg11[%c0_45, %c96], %139 {strides = array<i32>} : memref<8x128xf32, #tpu.memory_space<vmem>>, vector<8x16xf32>,
    %141 = vector.extract_strided_slice %1 {offsets = [0, 112], sizes = [8, 16], strides = [1, 1]} : vector<8x128xbf16> to vector<8x16xbf16>
    %142 = vector.extract_strided_slice %3 {offsets = [0, 112], sizes = [8, 16], strides = [1, 1]} : vector<8x128xbf16> to vector<8x16xbf16>
    %143 = vector.extract_strided_slice %5 {offsets = [0, 112], sizes = [8, 16], strides = [1, 1]} : vector<8x128xbf16> to vector<8x16xbf16>
    %cst_46 = arith.constant dense<0.000000e+00> : vector<8x8xf32>
    %144 = tpu.matmul %141, %142, %cst_46 {dimension_numbers = #tpu.dot_dimension_numbers<[1], [1], [0], [0], [0, 0, 1, 0], [], []>} : vector<8x16xbf16>, vector<8x16xbf16>, vector<8x8xf32> -> vector<8x8xf32>
    %145 = vector.broadcast %7 : vector<1x8xf32> to vector<8x8xf32>
    %146 = arith.addf %144, %145 : vector<8x8xf32>
    %cst_47 = arith.constant dense<0xFF800000> : vector<8xf32>
    %147 = vector.multi_reduction <maximumf>, %146, %cst_47 [1] : vector<8x8xf32> to vector<8xf32>
    %148 = vector.shape_cast %147 : vector<8xf32> to vector<8x1xf32>
    %149 = vector.broadcast %148 : vector<8x1xf32> to vector<8x8xf32>
    %150 = arith.subf %146, %149 : vector<8x8xf32>
    %151 = math.exp %150 : vector<8x8xf32>
    %cst_48 = arith.constant dense<0.000000e+00> : vector<8xf32>
    %152 = vector.multi_reduction <add>, %151, %cst_48 [1] : vector<8x8xf32> to vector<8xf32>
    %153 = vector.shape_cast %152 : vector<8xf32> to vector<8x1xf32>
    %154 = tpu.reciprocal %153 {approx = true} : vector<8x1xf32> -> vector<8x1xf32>
    %155 = vector.broadcast %154 : vector<8x1xf32> to vector<8x8xf32>
    %156 = arith.mulf %151, %155 : vector<8x8xf32>
    %157 = arith.truncf %156 : vector<8x8xf32> to vector<8x8xbf16>
    %cst_49 = arith.constant dense<0.000000e+00> : vector<8x16xf32>
    %158 = tpu.matmul %157, %143, %cst_49 {dimension_numbers = #tpu.dot_dimension_numbers<[1], [0], [0], [1], [0, 0, 1, 1], [], []>} : vector<8x8xbf16>, vector<8x16xbf16>, vector<8x16xf32> -> vector<8x16xf32>
    %c0_50 = arith.constant 0 : index
    %c112 = arith.constant 112 : index
    %159 = vector.load %arg11[%c0_50, %c112] : memref<8x128xf32, #tpu.memory_space<vmem>>, vector<8x16xf32>
    tpu.vector_store %arg11[%c0_50, %c112], %158 {strides = array<i32>} : memref<8x128xf32, #tpu.memory_space<vmem>>, vector<8x16xf32>,
    %c0_51 = arith.constant 0 : index
    %c0_52 = arith.constant 0 : index
    %160 = vector.load %arg11[%c0_51, %c0_52] : memref<8x128xf32, #tpu.memory_space<vmem>>, vector<8x128xf32>
    %161 = arith.truncf %160 : vector<8x128xf32> to vector<8x128xbf16>
    %c0_53 = arith.constant 0 : index
    %c0_54 = arith.constant 0 : index
    %162 = vector.load %arg6[%c0_53, %c0_54] : memref<128x128xbf16, #tpu.memory_space<vmem>>, vector<128x128xbf16>
    %cst_55 = arith.constant dense<0.000000e+00> : vector<8x128xf32>
    %163 = tpu.matmul %161, %162, %cst_55 {dimension_numbers = #tpu.dot_dimension_numbers<[1], [0], [0], [1], [0, 0, 1, 1], [], []>} : vector<8x128xbf16>, vector<128x128xbf16>, vector<8x128xf32> -> vector<8x128xf32>
    %c0_56 = arith.constant 0 : index
    %c0_57 = arith.constant 0 : index
    %164 = vector.load %arg7[%c0_56, %c0_57] : memref<1x128xf32, #tpu.memory_space<vmem>>, vector<1x128xf32>
    %165 = vector.broadcast %164 : vector<1x128xf32> to vector<8x128xf32>
    %166 = arith.addf %163, %165 : vector<8x128xf32>
    %c0_58 = arith.constant 0 : index
    %c0_59 = arith.constant 0 : index
    %c0_60 = arith.constant 0 : index
    %167 = vector.load %arg5[%c0_58, %c0_59, %c0_60] : memref<1x8x128xbf16, #tpu.memory_space<vmem>>, vector<1x8x128xbf16>
    %168 = vector.shape_cast %167 : vector<1x8x128xbf16> to vector<8x128xbf16>
    %169 = arith.extf %168 : vector<8x128xbf16> to vector<8x128xf32>
    %170 = arith.addf %166, %169 : vector<8x128xf32>
    %cst_61 = arith.constant dense<0.000000e+00> : vector<8xf32>
    %171 = vector.multi_reduction <add>, %170, %cst_61 [1] : vector<8x128xf32> to vector<8xf32>
    %172 = vector.shape_cast %171 : vector<8xf32> to vector<8x1xf32>
    %cst_62 = arith.constant 1.280000e+02 : f32
    %173 = vector.broadcast %cst_62 : f32 to vector<8x1xf32>
    %174 = arith.divf %172, %173 : vector<8x1xf32>
    %175 = vector.broadcast %174 : vector<8x1xf32> to vector<8x128xf32>
    %176 = arith.subf %170, %175 : vector<8x128xf32>
    %177 = arith.mulf %176, %176 : vector<8x128xf32>
    %cst_63 = arith.constant dense<0.000000e+00> : vector<8xf32>
    %178 = vector.multi_reduction <add>, %177, %cst_63 [1] : vector<8x128xf32> to vector<8xf32>
    %179 = vector.shape_cast %178 : vector<8xf32> to vector<8x1xf32>
    %cst_64 = arith.constant 1.280000e+02 : f32
    %180 = vector.broadcast %cst_64 : f32 to vector<8x1xf32>
    %181 = arith.divf %179, %180 : vector<8x1xf32>
    %cst_65 = arith.constant 9.99999974E-6 : f32
    %182 = vector.broadcast %cst_65 : f32 to vector<8x1xf32>
    %183 = arith.addf %181, %182 : vector<8x1xf32>
    %184 = math.rsqrt %183 : vector<8x1xf32>
    %185 = vector.broadcast %184 : vector<8x1xf32> to vector<8x128xf32>
    %186 = arith.mulf %176, %185 : vector<8x128xf32>
    %c0_66 = arith.constant 0 : index
    %c0_67 = arith.constant 0 : index
    %187 = vector.load %arg8[%c0_66, %c0_67] : memref<1x128xf32, #tpu.memory_space<vmem>>, vector<1x128xf32>
    %188 = vector.broadcast %187 : vector<1x128xf32> to vector<8x128xf32>
    %189 = arith.mulf %186, %188 : vector<8x128xf32>
    %c0_68 = arith.constant 0 : index
    %c0_69 = arith.constant 0 : index
    %190 = vector.load %arg9[%c0_68, %c0_69] : memref<1x128xf32, #tpu.memory_space<vmem>>, vector<1x128xf32>
    %191 = vector.broadcast %190 : vector<1x128xf32> to vector<8x128xf32>
    %192 = arith.addf %189, %191 : vector<8x128xf32>
    %193 = vector.shape_cast %192 : vector<8x128xf32> to vector<1x8x128xf32>
    %194 = arith.truncf %193 : vector<1x8x128xf32> to vector<1x8x128xbf16>
    %c0_70 = arith.constant 0 : index
    %c0_71 = arith.constant 0 : index
    %c0_72 = arith.constant 0 : index
    %195 = vector.load %arg10[%c0_70, %c0_71, %c0_72] : memref<1x8x128xbf16, #tpu.memory_space<vmem>>, vector<1x8x128xbf16>
    tpu.vector_store %arg10[%c0_70, %c0_71, %c0_72], %194 {strides = array<i32>} : memref<1x8x128xbf16, #tpu.memory_space<vmem>>, vector<1x8x128xbf16>,
    return
  }
  func.func @transform_0(%arg0: i32) -> (i32, i32, i32) {
    %c0_i32 = arith.constant 0 : i32
    %c0_i32_0 = arith.constant 0 : i32
    %c0_i32_1 = arith.constant 0 : i32
    return %arg0, %c0_i32, %c0_i32_0 : i32, i32, i32
  }
  func.func @transform_1(%arg0: i32) -> (i32, i32, i32) {
    %c0_i32 = arith.constant 0 : i32
    %c3_i32 = arith.constant 3 : i32
    %c0_i32_0 = arith.constant 0 : i32
    return %arg0, %c0_i32, %c3_i32 : i32, i32, i32
  }
  func.func @transform_2(%arg0: i32) -> (i32, i32, i32) {
    %c0_i32 = arith.constant 0 : i32
    %c4_i32 = arith.constant 4 : i32
    %c0_i32_0 = arith.constant 0 : i32
    return %arg0, %c0_i32, %c4_i32 : i32, i32, i32
  }
  func.func @transform_3(%arg0: i32) -> (i32, i32, i32) {
    %c0_i32 = arith.constant 0 : i32
    %c0_i32_0 = arith.constant 0 : i32
    %c0_i32_1 = arith.constant 0 : i32
    return %arg0, %c0_i32, %c0_i32_0 : i32, i32, i32
  }
  func.func @transform_4(%arg0: i32) -> (i32, i32, i32) {
    %c0_i32 = arith.constant 0 : i32
    %c0_i32_0 = arith.constant 0 : i32
    %c0_i32_1 = arith.constant 0 : i32
    return %arg0, %c0_i32, %c0_i32_0 : i32, i32, i32
  }
  func.func @transform_5(%arg0: i32) -> (i32, i32) {
    %c0_i32 = arith.constant 0 : i32
    %c0_i32_0 = arith.constant 0 : i32
    %c0_i32_1 = arith.constant 0 : i32
    return %c0_i32, %c0_i32_0 : i32, i32
  }
  func.func @transform_6(%arg0: i32) -> (i32, i32) {
    %c0_i32 = arith.constant 0 : i32
    %c0_i32_0 = arith.constant 0 : i32
    %c0_i32_1 = arith.constant 0 : i32
    return %c0_i32, %c0_i32_0 : i32, i32
  }
  func.func @transform_7(%arg0: i32) -> (i32, i32) {
    %c0_i32 = arith.constant 0 : i32
    %c0_i32_0 = arith.constant 0 : i32
    %c0_i32_1 = arith.constant 0 : i32
    return %c0_i32, %c0_i32_0 : i32, i32
  }
  func.func @transform_8(%arg0: i32) -> (i32, i32) {
    %c0_i32 = arith.constant 0 : i32
    %c0_i32_0 = arith.constant 0 : i32
    %c0_i32_1 = arith.constant 0 : i32
    return %c0_i32, %c0_i32_0 : i32, i32
  }
  func.func @transform_9(%arg0: i32) -> (i32, i32, i32) {
    %c0_i32 = arith.constant 0 : i32
    %c0_i32_0 = arith.constant 0 : i32
    %c0_i32_1 = arith.constant 0 : i32
    return %arg0, %c0_i32, %c0_i32_0 : i32, i32, i32
  }
}

module attributes {stable_mosaic.version = 11 : i64} {
  func.func @_ffn_ln_kernel(%arg0: i32, %arg1: memref<8x128xbf16, #tpu.memory_space<vmem>>, %arg2: memref<128x2048xbf16, #tpu.memory_space<vmem>>, %arg3: memref<1x2048xf32, #tpu.memory_space<vmem>>, %arg4: memref<2048x128xbf16, #tpu.memory_space<vmem>>, %arg5: memref<1x128xf32, #tpu.memory_space<vmem>>, %arg6: memref<1x128xf32, #tpu.memory_space<vmem>>, %arg7: memref<1x128xf32, #tpu.memory_space<vmem>>, %arg8: memref<8x128xf32, #tpu.memory_space<vmem>>) attributes {dimension_semantics = [#tpu.dimension_semantics<parallel>], iteration_bounds = array<i64: 2>, scalar_prefetch = 0 : i64, scratch_operands = 0 : i64, tpu.core_type = #tpu.core_type<tc>, window_params = [{transform_indices = @transform_0, window_bounds = array<i64: 8, 128>}, {pipeline_mode = #tpu.pipeline_mode<synchronous>, transform_indices = @transform_1, window_bounds = array<i64: 128, 2048>}, {pipeline_mode = #tpu.pipeline_mode<synchronous>, transform_indices = @transform_2, window_bounds = array<i64: 1, 2048>}, {pipeline_mode = #tpu.pipeline_mode<synchronous>, transform_indices = @transform_3, window_bounds = array<i64: 2048, 128>}, {pipeline_mode = #tpu.pipeline_mode<synchronous>, transform_indices = @transform_4, window_bounds = array<i64: 1, 128>}, {pipeline_mode = #tpu.pipeline_mode<synchronous>, transform_indices = @transform_5, window_bounds = array<i64: 1, 128>}, {pipeline_mode = #tpu.pipeline_mode<synchronous>, transform_indices = @transform_6, window_bounds = array<i64: 1, 128>}, {transform_indices = @transform_7, window_bounds = array<i64: 8, 128>}]} {
    %c0 = arith.constant 0 : index
    %c0_0 = arith.constant 0 : index
    %0 = vector.load %arg1[%c0, %c0_0] : memref<8x128xbf16, #tpu.memory_space<vmem>>, vector<8x128xbf16>
    %c0_1 = arith.constant 0 : index
    %c0_2 = arith.constant 0 : index
    %1 = vector.load %arg2[%c0_1, %c0_2] : memref<128x2048xbf16, #tpu.memory_space<vmem>>, vector<128x2048xbf16>
    %cst = arith.constant dense<0.000000e+00> : vector<8x2048xf32>
    %2 = tpu.matmul %0, %1, %cst {dimension_numbers = #tpu.dot_dimension_numbers<[1], [0], [0], [1], [0, 0, 1, 1], [], []>} : vector<8x128xbf16>, vector<128x2048xbf16>, vector<8x2048xf32> -> vector<8x2048xf32>
    %c0_3 = arith.constant 0 : index
    %c0_4 = arith.constant 0 : index
    %3 = vector.load %arg3[%c0_3, %c0_4] : memref<1x2048xf32, #tpu.memory_space<vmem>>, vector<1x2048xf32>
    %4 = vector.broadcast %3 : vector<1x2048xf32> to vector<8x2048xf32>
    %5 = arith.addf %2, %4 : vector<8x2048xf32>
    %cst_5 = arith.constant 0.000000e+00 : f32
    %6 = vector.broadcast %cst_5 : f32 to vector<8x2048xf32>
    %7 = arith.maximumf %5, %6 : vector<8x2048xf32>
    %8 = arith.truncf %7 : vector<8x2048xf32> to vector<8x2048xbf16>
    %c0_6 = arith.constant 0 : index
    %c0_7 = arith.constant 0 : index
    %9 = vector.load %arg4[%c0_6, %c0_7] : memref<2048x128xbf16, #tpu.memory_space<vmem>>, vector<2048x128xbf16>
    %cst_8 = arith.constant dense<0.000000e+00> : vector<8x128xf32>
    %10 = tpu.matmul %8, %9, %cst_8 {dimension_numbers = #tpu.dot_dimension_numbers<[1], [0], [0], [1], [0, 0, 1, 1], [], []>} : vector<8x2048xbf16>, vector<2048x128xbf16>, vector<8x128xf32> -> vector<8x128xf32>
    %c0_9 = arith.constant 0 : index
    %c0_10 = arith.constant 0 : index
    %11 = vector.load %arg5[%c0_9, %c0_10] : memref<1x128xf32, #tpu.memory_space<vmem>>, vector<1x128xf32>
    %12 = vector.broadcast %11 : vector<1x128xf32> to vector<8x128xf32>
    %13 = arith.addf %10, %12 : vector<8x128xf32>
    %14 = arith.extf %0 : vector<8x128xbf16> to vector<8x128xf32>
    %15 = arith.addf %13, %14 : vector<8x128xf32>
    %cst_11 = arith.constant dense<0.000000e+00> : vector<8xf32>
    %16 = vector.multi_reduction <add>, %15, %cst_11 [1] : vector<8x128xf32> to vector<8xf32>
    %17 = vector.shape_cast %16 : vector<8xf32> to vector<8x1xf32>
    %cst_12 = arith.constant 1.280000e+02 : f32
    %18 = vector.broadcast %cst_12 : f32 to vector<8x1xf32>
    %19 = arith.divf %17, %18 : vector<8x1xf32>
    %20 = vector.broadcast %19 : vector<8x1xf32> to vector<8x128xf32>
    %21 = arith.subf %15, %20 : vector<8x128xf32>
    %22 = arith.mulf %21, %21 : vector<8x128xf32>
    %cst_13 = arith.constant dense<0.000000e+00> : vector<8xf32>
    %23 = vector.multi_reduction <add>, %22, %cst_13 [1] : vector<8x128xf32> to vector<8xf32>
    %24 = vector.shape_cast %23 : vector<8xf32> to vector<8x1xf32>
    %cst_14 = arith.constant 1.280000e+02 : f32
    %25 = vector.broadcast %cst_14 : f32 to vector<8x1xf32>
    %26 = arith.divf %24, %25 : vector<8x1xf32>
    %cst_15 = arith.constant 9.99999974E-6 : f32
    %27 = vector.broadcast %cst_15 : f32 to vector<8x1xf32>
    %28 = arith.addf %26, %27 : vector<8x1xf32>
    %29 = math.rsqrt %28 : vector<8x1xf32>
    %30 = vector.broadcast %29 : vector<8x1xf32> to vector<8x128xf32>
    %31 = arith.mulf %21, %30 : vector<8x128xf32>
    %c0_16 = arith.constant 0 : index
    %c0_17 = arith.constant 0 : index
    %32 = vector.load %arg6[%c0_16, %c0_17] : memref<1x128xf32, #tpu.memory_space<vmem>>, vector<1x128xf32>
    %33 = vector.broadcast %32 : vector<1x128xf32> to vector<8x128xf32>
    %34 = arith.mulf %31, %33 : vector<8x128xf32>
    %c0_18 = arith.constant 0 : index
    %c0_19 = arith.constant 0 : index
    %35 = vector.load %arg7[%c0_18, %c0_19] : memref<1x128xf32, #tpu.memory_space<vmem>>, vector<1x128xf32>
    %36 = vector.broadcast %35 : vector<1x128xf32> to vector<8x128xf32>
    %37 = arith.addf %34, %36 : vector<8x128xf32>
    %c0_20 = arith.constant 0 : index
    %c0_21 = arith.constant 0 : index
    %38 = vector.load %arg8[%c0_20, %c0_21] : memref<8x128xf32, #tpu.memory_space<vmem>>, vector<8x128xf32>
    tpu.vector_store %arg8[%c0_20, %c0_21], %37 {strides = array<i32>} : memref<8x128xf32, #tpu.memory_space<vmem>>, vector<8x128xf32>,
    return
  }
  func.func @transform_0(%arg0: i32) -> (i32, i32) {
    %c0_i32 = arith.constant 0 : i32
    %c0_i32_0 = arith.constant 0 : i32
    return %arg0, %c0_i32 : i32, i32
  }
  func.func @transform_1(%arg0: i32) -> (i32, i32) {
    %c0_i32 = arith.constant 0 : i32
    %c0_i32_0 = arith.constant 0 : i32
    %c0_i32_1 = arith.constant 0 : i32
    return %c0_i32, %c0_i32_0 : i32, i32
  }
  func.func @transform_2(%arg0: i32) -> (i32, i32) {
    %c0_i32 = arith.constant 0 : i32
    %c0_i32_0 = arith.constant 0 : i32
    %c0_i32_1 = arith.constant 0 : i32
    return %c0_i32, %c0_i32_0 : i32, i32
  }
  func.func @transform_3(%arg0: i32) -> (i32, i32) {
    %c0_i32 = arith.constant 0 : i32
    %c0_i32_0 = arith.constant 0 : i32
    %c0_i32_1 = arith.constant 0 : i32
    return %c0_i32, %c0_i32_0 : i32, i32
  }
  func.func @transform_4(%arg0: i32) -> (i32, i32) {
    %c0_i32 = arith.constant 0 : i32
    %c0_i32_0 = arith.constant 0 : i32
    %c0_i32_1 = arith.constant 0 : i32
    return %c0_i32, %c0_i32_0 : i32, i32
  }
  func.func @transform_5(%arg0: i32) -> (i32, i32) {
    %c0_i32 = arith.constant 0 : i32
    %c0_i32_0 = arith.constant 0 : i32
    %c0_i32_1 = arith.constant 0 : i32
    return %c0_i32, %c0_i32_0 : i32, i32
  }
  func.func @transform_6(%arg0: i32) -> (i32, i32) {
    %c0_i32 = arith.constant 0 : i32
    %c0_i32_0 = arith.constant 0 : i32
    %c0_i32_1 = arith.constant 0 : i32
    return %c0_i32, %c0_i32_0 : i32, i32
  }
  func.func @transform_7(%arg0: i32) -> (i32, i32) {
    %c0_i32 = arith.constant 0 : i32
    %c0_i32_0 = arith.constant 0 : i32
    return %arg0, %c0_i32 : i32, i32
  }
}

</mosaic_0001>

<llo_original>
// kernel: gpt2_forward.7
$region0: #{gpt2_forward.7}
  #allocation0 [shape = 'u32[]', space=smem, size = 0x4, offset = 0x4, fixed_abs, tag = 'smem constant byte address 0x4 - core index']
  #allocation1 [shape = 'u32[144,128]{1,0:T(1,128)}', space=vmem, size = 0x12000, scoped, tag = 'internal scratch']
  #allocation2 [shape = 'f32[8,128]{1,0:T(8,128)}', space=vmem, size = 0x1000, scoped, tag = 'scratch operand']
  %s0 = inlined_call_operand.hbm [shape: bf16[16,128], index: 0, kind: input, shape index: {}]
  %s1 = inlined_call_operand.hbm [shape: bf16[128,128], index: 1, kind: input, shape index: {}]
  %s2 = inlined_call_operand.hbm [shape: f32[1,128], index: 2, kind: input, shape index: {}]
  %s3 = inlined_call_operand.hbm [shape: bf16[16,128], index: 3, kind: output, shape index: {}]
  %s4 = sld [smem:[#allocation0]]
  $region65: #{gpt2_forward.7} parent=0
    _
  %s6 = ssub.s32 1, %s4
  %s7 = scalar_select 0, %s6, %s4
  $region1: #{gpt2_forward.7} parent=0
    #allocation3 [shape = 'u8[4096]{0}', space=vmem, size = 0x1000, scoped, tag = 'input window, operand 0']
    #allocation4 [shape = 's32[2]{0}', space=sflag, size = 0x8, scoped, tag = 'scoped memory for gpt2_forward.7']
    #allocation5 [shape = 's32[2]{0}', space=sflag, size = 0x8, scoped, tag = 'scoped memory for gpt2_forward.7']
    #allocation6 [shape = 'u8[32768]{0}', space=vmem, size = 0x8000, scoped, tag = 'input window, operand 1, single buffered']
    #allocation7 [shape = 's32[1]{0}', space=sflag, size = 0x4, scoped, tag = 'scoped memory for gpt2_forward.7']
    #allocation8 [shape = 'u8[512]{0}', space=vmem, size = 0x400, scoped, tag = 'input window, operand 2, single buffered']
    #allocation9 [shape = 'u8[4096]{0}', space=vmem, size = 0x1000, scoped, tag = 'output window, operand 0']
    %8 = vsyncpa [#allocation4], 0
    %s9 = scalar_lea.sflag [#allocation4], 1
    %10 = vsyncpa %s9, 0
    %11 = vsyncpa [#allocation7], 0
    %12 = vsyncpa [#allocation5], 0
    %s13 = scalar_lea.sflag [#allocation5], 1
    %14 = vsyncpa %s13, 0
    loop: start=0, step=1, limit=4
    $region2: #{gpt2_forward.7} parent=1 // loop_pre_header
      _
    $region3: #{gpt2_forward.7} parent=1 // loop_header
      %s16 = sphi 0, %s20
      %p17 = scmp.ge.s32.totalorder %s16, 4
      %s23 = sphi 0, %s42
      %s24 = sphi 0, %s38
      %s25 = sphi 0, %s34
      %s26 = sphi 0, %s23
      %s27 = sphi 0, %s24
      %s28 = sphi 0, %s25
      %s29 = sphi 0, %s26
      %s30 = sphi 0, %s27
      %s31 = sphi 0, %s28
      %s47 = sphi 0, %s49
      %s50 = sphi 0, %s47
      %s51 = sphi 0, %s50
      %s67 = sphi 0, %s51
      %s75 = sphi 0, %s77
      %s78 = sphi 0, %s75
      %s79 = sphi 0, %s78
      %s95 = sphi 0, %s79
      %s101 = sphi 0, %s103
      %s104 = sphi 0, %s101
      %s105 = sphi 0, %s104
      %s121 = sphi 0, %s105
      %s129 = sphi 0, %s131
      %s132 = sphi 0, %s129
      %s133 = sphi 0, %s132
      %s149 = sphi 0, %s133
    $region4: #{gpt2_forward.7} parent=1 // loop_header_branch
      %19 = sbr.rel (%p17) target = $region8
    $region5: #{gpt2_forward.7} parent=1 // loop_body
      %s21 = ssub.s32 %s16, 1
      %s22 = ssub.s32 %s16, 2
      %s32 = sadd.s32 1, %s25
      %p33 = scmp.ge.s32.totalorder %s32, 1
      %s34 = scalar_select %p33, 0, %s32
      %s35 = sadd.s32 1, %s24
      %s36 = scalar_select %p33, %s35, %s24
      %p37 = scmp.ge.s32.totalorder %s36, 1
      %s38 = scalar_select %p37, 0, %s36
      %s39 = sadd.s32 1, %s23
      %s40 = scalar_select %p37, %s39, %s23
      %p41 = scmp.ge.s32.totalorder %s40, 2
      %s42 = scalar_select %p41, 0, %s40
      %s43 = ssub.s32 %s23, %s42
      %s44 = ssub.s32 %s25, %s34
      %s45 = sor.u32 %s43, %s44
      %p46 = scmp.eq.s32.totalorder %s45, 0
      %s48 = sadd.s32 %s47, 1
      %s49 = scalar_select %p46, %s47, %s48
      %p52 = pneg %p46
      %p53 = scmp.eq.s32.totalorder %s16, 1
      %p54 = por %p52, %p53
      %p55 = scmp.ne.s32.totalorder %s47, %s50
      %p56 = scmp.eq.s32.totalorder %s16, 0
      %p57 = por %p55, %p56
      %p58 = scmp.ne.s32.totalorder %s47, %s50
      %p59 = scmp.eq.s32.totalorder %s21, 1
      %p60 = por %p58, %p59
      %p61 = scmp.ne.s32.totalorder %s50, %s51
      %p62 = scmp.eq.s32.totalorder %s21, 0
      %p63 = por %p61, %p62
      %p64 = scmp.ne.s32.totalorder %s50, %s51
      %p65 = scmp.eq.s32.totalorder %s22, 1
      %p66 = por %p64, %p65
      %p68 = scmp.ne.s32.totalorder %s51, %s67
      %p69 = scmp.eq.s32.totalorder %s22, 0
      %p70 = por %p68, %p69
      %s71 = ssub.s32 %s25, %s34
      %s72 = ssub.s32 %s24, %s38
      %s73 = sor.u32 %s71, %s72
      %p74 = scmp.eq.s32.totalorder %s73, 0
      %s76 = sadd.s32 %s75, 1
      %s77 = scalar_select %p74, %s75, %s76
      %p80 = pneg %p74
      %p81 = scmp.eq.s32.totalorder %s16, 1
      %p82 = por %p80, %p81
      %p83 = scmp.ne.s32.totalorder %s75, %s78
      %p84 = scmp.eq.s32.totalorder %s16, 0
      %p85 = por %p83, %p84
      %p86 = scmp.ne.s32.totalorder %s75, %s78
      %p87 = scmp.eq.s32.totalorder %s21, 1
      %p88 = por %p86, %p87
      %p89 = scmp.ne.s32.totalorder %s78, %s79
      %p90 = scmp.eq.s32.totalorder %s21, 0
      %p91 = por %p89, %p90
      %p92 = scmp.ne.s32.totalorder %s78, %s79
      %p93 = scmp.eq.s32.totalorder %s22, 1
      %p94 = por %p92, %p93
      %p96 = scmp.ne.s32.totalorder %s79, %s95
      %p97 = scmp.eq.s32.totalorder %s22, 0
      %p98 = por %p96, %p97
      %s99 = ssub.s32 %s24, %s38
      %p100 = scmp.eq.s32.totalorder %s99, 0
      %s102 = sadd.s32 %s101, 1
      %s103 = scalar_select %p100, %s101, %s102
      %p106 = pneg %p100
      %p107 = scmp.eq.s32.totalorder %s16, 1
      %p108 = por %p106, %p107
      %p109 = scmp.ne.s32.totalorder %s101, %s104
      %p110 = scmp.eq.s32.totalorder %s16, 0
      %p111 = por %p109, %p110
      %p112 = scmp.ne.s32.totalorder %s101, %s104
      %p113 = scmp.eq.s32.totalorder %s21, 1
      %p114 = por %p112, %p113
      %p115 = scmp.ne.s32.totalorder %s104, %s105
      %p116 = scmp.eq.s32.totalorder %s21, 0
      %p117 = por %p115, %p116
      %p118 = scmp.ne.s32.totalorder %s104, %s105
      %p119 = scmp.eq.s32.totalorder %s22, 1
      %p120 = por %p118, %p119
      %p122 = scmp.ne.s32.totalorder %s105, %s121
      %p123 = scmp.eq.s32.totalorder %s22, 0
      %p124 = por %p122, %p123
      %s125 = ssub.s32 %s23, %s42
      %s126 = ssub.s32 %s24, %s38
      %s127 = sor.u32 %s125, %s126
      %p128 = scmp.eq.s32.totalorder %s127, 0
      %s130 = sadd.s32 %s129, 1
      %s131 = scalar_select %p128, %s129, %s130
      %p134 = pneg %p128
      %p135 = scmp.eq.s32.totalorder %s16, 1
      %p136 = por %p134, %p135
      %p137 = scmp.ne.s32.totalorder %s129, %s132
      %p138 = scmp.eq.s32.totalorder %s16, 0
      %p139 = por %p137, %p138
      %p140 = scmp.ne.s32.totalorder %s129, %s132
      %p141 = scmp.eq.s32.totalorder %s21, 1
      %p142 = por %p140, %p141
      %p143 = scmp.ne.s32.totalorder %s132, %s133
      %p144 = scmp.eq.s32.totalorder %s21, 0
      %p145 = por %p143, %p144
      %p146 = scmp.ne.s32.totalorder %s132, %s133
      %p147 = scmp.eq.s32.totalorder %s22, 1
      %p148 = por %p146, %p147
      %p150 = scmp.ne.s32.totalorder %s133, %s149
      %p151 = scmp.eq.s32.totalorder %s22, 0
      %p152 = por %p150, %p151
      %p153 = scmp.le.s32.totalorder 1, %s16
      %p154 = scmp.lt.s32.totalorder %s16, 3
      %p155 = pnand %p153, %p154
      %p156 = pneg %p155
      // Predicated region
      $region9: #{gpt2_forward.7} parent=5 // pred_check
        _
      $region10: #{gpt2_forward.7} parent=5 // pred_check_branch
        %158 = sbr.rel (%p155) target = $region12
      $region11: #{gpt2_forward.7} parent=5 // pred_region
        %s159 = ssub.s32 %s16, 1
        // Predicated region
        $region13: #{gpt2_forward.7} parent=11 // pred_check
          %p160 = pneg %p91
        $region14: #{gpt2_forward.7} parent=11 // pred_check_branch
          %162 = sbr.rel (%p160) target = $region16
        $region15: #{gpt2_forward.7} parent=11 // pred_region
          %s163 = smul.u32 16, %s28
          %s165 = ssub.s32 1024, 1024
          %166 = vsyncadd [#allocation7], %s165
          %s167 = sadd.s32 %s27, %s163
          %s168 = smul.addr %s167, 64
          %s169 = scalar_lea.hbm %s1, %s168
          %s170 = sshll.u32 [#allocation6], 4
          %s171 = int_to_ptr.vmem [resolvable:$true] %s170
          %176 = dma.hbm_to_vmem [thread:$0]  %s169, 1024, %s171, [#allocation7], 64, 64, 4
        $region16: #{gpt2_forward.7} parent=11 // pred_fallthru
          _
        // Predicated region
        $region17: #{gpt2_forward.7} parent=11 // pred_check
          %p177 = pneg %p117
        $region18: #{gpt2_forward.7} parent=11 // pred_check_branch
          %179 = sbr.rel (%p177) target = $region20
        $region19: #{gpt2_forward.7} parent=11 // pred_region
          %s181 = ssub.s32 16, 16
          %182 = vsyncadd [#allocation7], %s181
          %s183 = smul.addr %s27, 16
          %s184 = scalar_lea.hbm %s2, %s183
          %s186 = sshll.u32 [#allocation8], 4
          %s187 = int_to_ptr.vmem [resolvable:$true] %s186
          %189 = dma.hbm_to_vmem [thread:$0]  %s184, 16, %s187, [#allocation7]
        $region20: #{gpt2_forward.7} parent=11 // pred_fallthru
          _
      $region12: #{gpt2_forward.7} parent=5 // pred_fallthru
        _
      %p190 = scmp.lt.s32.totalorder %s16, 2
      // Predicated region
      $region21: #{gpt2_forward.7} parent=5 // pred_check
        %p191 = pneg %p190
      $region22: #{gpt2_forward.7} parent=5 // pred_check_branch
        %193 = sbr.rel (%p191) target = $region24
      $region23: #{gpt2_forward.7} parent=5 // pred_region
        // Predicated region
        $region25: #{gpt2_forward.7} parent=23 // pred_check
          %p194 = pneg %p57
        $region26: #{gpt2_forward.7} parent=23 // pred_check_branch
          %196 = sbr.rel (%p194) target = $region28
        $region27: #{gpt2_forward.7} parent=23 // pred_region
          %s197 = sand.u32 %s47, 1
          %s198 = scalar_lea.sflag [#allocation4], %s197
          %s199 = sand.u32 %s47, 1
          %s200 = smul.addr %s199, 4
          %s201 = scalar_lea.vmem [#allocation3], %s200
          %s203 = ssub.s32 64, 64
          %204 = vsyncadd %s198, %s203
          %s205 = sadd.s32 %s25, %s23
          %s206 = smul.addr %s205, 64
          %s207 = scalar_lea.hbm %s0, %s206
          %s209 = sshll.u32 %s201, 4
          %s210 = int_to_ptr.vmem [resolvable:$true] %s209
          %212 = dma.hbm_to_vmem [thread:$0]  %s207, 64, %s210, %s198
        $region28: #{gpt2_forward.7} parent=23 // pred_fallthru
          _
      $region24: #{gpt2_forward.7} parent=5 // pred_fallthru
        _
      %p213 = scmp.le.s32.totalorder 1, %s16
      %p214 = scmp.lt.s32.totalorder %s16, 3
      %p215 = pnand %p213, %p214
      %p216 = pneg %p215
      // Predicated region
      $region29: #{gpt2_forward.7} parent=5 // pred_check
        _
      $region30: #{gpt2_forward.7} parent=5 // pred_check_branch
        %218 = sbr.rel (%p215) target = $region32
      $region31: #{gpt2_forward.7} parent=5 // pred_region
        %s219 = ssub.s32 %s16, 1
        %s220 = sand.u32 %s50, 1
        %s221 = scalar_lea.sflag [#allocation4], %s220
        %s222 = sand.u32 %s50, 1
        %s223 = smul.addr %s222, 4
        %s224 = scalar_lea.vmem [#allocation3], %s223
        // Predicated region
        $region33: #{gpt2_forward.7} parent=31 // pred_check
          %p225 = pneg %p63
        $region34: #{gpt2_forward.7} parent=31 // pred_check_branch
          %227 = sbr.rel (%p225) target = $region36
        $region35: #{gpt2_forward.7} parent=31 // pred_region
          %228 = dma.done %s221, 64
        $region36: #{gpt2_forward.7} parent=31 // pred_fallthru
          _
        // Predicated region
        $region37: #{gpt2_forward.7} parent=31 // pred_check
          %p229 = pneg %p91
        $region38: #{gpt2_forward.7} parent=31 // pred_check_branch
          %231 = sbr.rel (%p229) target = $region40
        $region39: #{gpt2_forward.7} parent=31 // pred_region
          %232 = dma.done [#allocation7], 1024
        $region40: #{gpt2_forward.7} parent=31 // pred_fallthru
          _
        // Predicated region
        $region41: #{gpt2_forward.7} parent=31 // pred_check
          %p233 = pneg %p117
        $region42: #{gpt2_forward.7} parent=31 // pred_check_branch
          %235 = sbr.rel (%p233) target = $region44
        $region43: #{gpt2_forward.7} parent=31 // pred_region
          %236 = dma.done [#allocation7], 16
        $region44: #{gpt2_forward.7} parent=31 // pred_fallthru
          _
        %s237 = sand.u32 %s50, 1
        %s238 = scalar_lea.sflag [#allocation4], %s237
        %s239 = sand.u32 %s50, 1
        %s240 = smul.addr %s239, 4
        %s241 = scalar_lea.vmem [#allocation3], %s240
        %p242 = pneg %p63
        %p243 = pneg %p60
        %p244 = pneg %p91
        %p245 = pneg %p88
        %p246 = pneg %p117
        %p247 = pneg %p114
        %p248 = pneg %p145
        %p249 = pneg %p142
        %s250 = sand.u32 %s132, 1
        %s251 = scalar_lea.sflag [#allocation5], %s250
        %s252 = sand.u32 %s132, 1
        %s253 = smul.addr %s252, 4
        %s254 = scalar_lea.vmem [#allocation9], %s253
        %s255 = smul.u32 16, %s28
        %p257 = scmp.eq.s32.totalorder %s28, 0
        // Predicated region
        $region45: #{gpt2_forward.7} parent=31 // pred_check
          %p258 = pneg %p257
        $region46: #{gpt2_forward.7} parent=31 // pred_check_branch
          %260 = sbr.rel (%p258) target = $region48
        $region47: #{gpt2_forward.7} parent=31 // pred_region
          %261 = vst [vmem:[#allocation2] sm:$0xff] 0.0
        $region48: #{gpt2_forward.7} parent=31 // pred_fallthru
          _
        %v262 = vld [vmem:[#allocation2] sm:$0xff]
        %v263 = vld [vmem:[%s224] sm:$0xf]
        %v264 = vld [vmem:[#allocation6] sm:$0xf]
        %v265 = vld [vmem:[#allocation6 + $0x4] sm:$0xf]
        %v266 = vld [vmem:[#allocation6 + $0x8] sm:$0xf]
        %v267 = vld [vmem:[#allocation6 + $0xc] sm:$0xf]
        %v268 = vld [vmem:[#allocation6 + $0x10] sm:$0xf]
        %v269 = vld [vmem:[#allocation6 + $0x14] sm:$0xf]
        %v270 = vld [vmem:[#allocation6 + $0x18] sm:$0xf]
        %v271 = vld [vmem:[#allocation6 + $0x1c] sm:$0xf]
        %v272 = vld [vmem:[#allocation6 + $0x20] sm:$0xf]
        %v273 = vld [vmem:[#allocation6 + $0x24] sm:$0xf]
        %v274 = vld [vmem:[#allocation6 + $0x28] sm:$0xf]
        %v275 = vld [vmem:[#allocation6 + $0x2c] sm:$0xf]
        %v276 = vld [vmem:[#allocation6 + $0x30] sm:$0xf]
        %v277 = vld [vmem:[#allocation6 + $0x34] sm:$0xf]
        %v278 = vld [vmem:[#allocation6 + $0x38] sm:$0xf]
        %v279 = vld [vmem:[#allocation6 + $0x3c] sm:$0xf]
        %v296 = vunpack.c.l.b16 %v264
        %v297 = vunpack.c.l.b16 %v265
        %v298 = vunpack.c.l.b16 %v266
        %v299 = vunpack.c.l.b16 %v267
        %v300 = vunpack.c.l.b16 %v268
        %v301 = vunpack.c.l.b16 %v269
        %v302 = vunpack.c.l.b16 %v270
        %v303 = vunpack.c.l.b16 %v271
        %v304 = vunpack.c.l.b16 %v272
        %v305 = vunpack.c.l.b16 %v273
        %v306 = vunpack.c.l.b16 %v274
        %v307 = vunpack.c.l.b16 %v275
        %v308 = vunpack.c.l.b16 %v276
        %v309 = vunpack.c.l.b16 %v277
        %v310 = vunpack.c.l.b16 %v278
        %v311 = vunpack.c.l.b16 %v279
        %v312 = vpack.c.b16 %v297, %v296
        %v313 = vpack.c.b16 %v299, %v298
        %v314 = vpack.c.b16 %v301, %v300
        %v315 = vpack.c.b16 %v303, %v302
        %v316 = vpack.c.b16 %v305, %v304
        %v317 = vpack.c.b16 %v307, %v306
        %v318 = vpack.c.b16 %v309, %v308
        %v319 = vpack.c.b16 %v311, %v310
        %328 = vmatprep.subr.bf16.mxu0 0
        %329 = vmatpush1.bf16.msra.mxu0 %v312
        %330 = vmatprep.subr.bf16.mxu0 0
        %331 = vmatpush1.bf16.msra.mxu0 %v313
        %332 = vmatprep.subr.bf16.mxu0 0
        %333 = vmatpush1.bf16.msra.mxu0 %v314
        %334 = vmatprep.subr.bf16.mxu0 0
        %335 = vmatpush1.bf16.msra.mxu0 %v315
        %336 = vmatprep.subr.bf16.mxu0 0
        %337 = vmatpush1.bf16.msra.mxu0 %v316
        %338 = vmatprep.subr.bf16.mxu0 0
        %339 = vmatpush1.bf16.msra.mxu0 %v317
        %340 = vmatprep.subr.bf16.mxu0 0
        %341 = vmatpush1.bf16.msra.mxu0 %v318
        %342 = vmatprep.subr.bf16.mxu0 0
        %343 = vmatpush1.bf16.msra.mxu0 %v319
        %344 = vmatprep.subr.bf16.mxu0 0
        %345 = vmatpush1.bf16.msra.mxu0 0
        %346 = vmatprep.subr.bf16.mxu0 0
        %347 = vmatpush1.bf16.msra.mxu0 0
        %348 = vmatprep.subr.bf16.mxu0 0
        %349 = vmatpush1.bf16.msra.mxu0 0
        %350 = vmatprep.subr.bf16.mxu0 0
        %351 = vmatpush1.bf16.msra.mxu0 0
        %352 = vmatprep.subr.bf16.mxu0 0
        %353 = vmatpush1.bf16.msra.mxu0 0
        %354 = vmatprep.subr.bf16.mxu0 0
        %355 = vmatpush1.bf16.msra.mxu0 0
        %356 = vmatprep.subr.bf16.mxu0 0
        %357 = vmatpush1.bf16.msra.mxu0 0
        %358 = vmatprep.subr.bf16.mxu0 0
        %359 = vmatpush1.bf16.msra.mxu0 0
        %360 = vmatprep.mubr.bf16.mxu0 0
        %361 = vmatmul.mubr.bf16.gmra.mrb[0].mxu0 %v263
        %v362 = vpop.f32.mrb[0].mxu0
        %v363 = vadd.f32 0.0, %v362
        %v364 = vpop.f32.mrb[0].mxu0
        %v365 = vpop.f32.mrb[0].mxu0
        %v366 = vpop.f32.mrb[0].mxu0
        %367 = vdwg.mxu0
        %v368 = vadd.f32 %v262, %v363
        %369 = vst [vmem:[#allocation2] sm:$0xff] %v368
        // Predicated region
        $region49: #{gpt2_forward.7} parent=31 // pred_check
          %p370 = pneg %p257
        $region50: #{gpt2_forward.7} parent=31 // pred_check_branch
          %372 = sbr.rel (%p370) target = $region52
        $region51: #{gpt2_forward.7} parent=31 // pred_region
          %v373 = vld [vmem:[#allocation2] sm:$0xff]
          %v374 = vld [vmem:[#allocation8] sm:$0x1]
          %v376 = vlaneseq
          %v377 = vshrl.u32 %v376, 7
          %v378 = vsub.s32 0, %v377
          %v379 = vrot.slane %v374, %v378
          %v381 = vadd.f32 %v373, %v379
          %v382 = vpack.c.bf16 %v381, %v381
          %383 = vst [vmem:[%s254] sm:$0xf] %v382
        $region52: #{gpt2_forward.7} parent=31 // pred_fallthru
          _
        %s384 = sand.u32 %s132, 1
        %s385 = scalar_lea.sflag [#allocation5], %s384
        %s386 = sand.u32 %s132, 1
        %s387 = smul.addr %s386, 4
        %s388 = scalar_lea.vmem [#allocation9], %s387
        // Predicated region
        $region53: #{gpt2_forward.7} parent=31 // pred_check
          %p389 = pneg %p142
        $region54: #{gpt2_forward.7} parent=31 // pred_check_branch
          %391 = sbr.rel (%p389) target = $region56
        $region55: #{gpt2_forward.7} parent=31 // pred_region
          %s393 = ssub.s32 64, 64
          %394 = vsyncadd %s385, %s393
          %s395 = sadd.s32 %s27, %s26
          %s396 = smul.addr %s395, 64
          %s397 = scalar_lea.hbm %s3, %s396
          %s399 = sshll.u32 %s388, 4
          %s400 = int_to_ptr.vmem [resolvable:$true] %s399
          %402 = dma.vmem_to_hbm [thread:$0]  %s400, 64, %s397, %s385
        $region56: #{gpt2_forward.7} parent=31 // pred_fallthru
          _
      $region32: #{gpt2_forward.7} parent=5 // pred_fallthru
        _
      %p403 = scmp.le.s32.totalorder 2, %s16
      // Predicated region
      $region57: #{gpt2_forward.7} parent=5 // pred_check
        %p404 = pneg %p403
      $region58: #{gpt2_forward.7} parent=5 // pred_check_branch
        %406 = sbr.rel (%p404) target = $region60
      $region59: #{gpt2_forward.7} parent=5 // pred_region
        %s407 = ssub.s32 %s16, 2
        // Predicated region
        $region61: #{gpt2_forward.7} parent=59 // pred_check
          %p408 = pneg %p148
        $region62: #{gpt2_forward.7} parent=59 // pred_check_branch
          %410 = sbr.rel (%p408) target = $region64
        $region63: #{gpt2_forward.7} parent=59 // pred_region
          %s411 = sand.u32 %s133, 1
          %s412 = scalar_lea.sflag [#allocation5], %s411
          %s413 = sand.u32 %s133, 1
          %s414 = smul.addr %s413, 4
          %s415 = scalar_lea.vmem [#allocation9], %s414
          %416 = dma.done %s412, 64
        $region64: #{gpt2_forward.7} parent=59 // pred_fallthru
          _
      $region60: #{gpt2_forward.7} parent=5 // pred_fallthru
        _
    $region6: #{gpt2_forward.7} parent=1 // loop_footer
      %s20 = sadd.s32 1, %s16
    $region7: #{gpt2_forward.7} parent=1 // loop_footer_branch
      %15 = sbr.rel target = $region3
    $region8: #{gpt2_forward.7} parent=1 // loop_exit
      _
    %417 = vsyncpa [#allocation4], 1
    %s418 = scalar_lea.sflag [#allocation4], 1
    %419 = vsyncpa %s418, 1
    %420 = vsyncpa [#allocation7], 1
    %421 = vsyncpa [#allocation5], 1
    %s422 = scalar_lea.sflag [#allocation5], 1
    %423 = vsyncpa %s422, 1

// kernel: gpt2_forward.5
$region0: #{gpt2_forward.5}
  #allocation0 [shape = 'u32[]', space=smem, size = 0x4, offset = 0x4, fixed_abs, tag = 'smem constant byte address 0x4 - core index']
  #allocation1 [shape = 'u32[144,128]{1,0:T(1,128)}', space=vmem, size = 0x12000, scoped, tag = 'internal scratch']
  #allocation2 [shape = 'f32[8,640]{1,0:T(8,128)}', space=vmem, size = 0x5000, scoped, tag = 'scratch operand']
  %s0 = inlined_call_operand.hbm [shape: bf16[16,128], index: 0, kind: input, shape index: {}]
  %s1 = inlined_call_operand.hbm [shape: bf16[128,640], index: 1, kind: input, shape index: {}]
  %s2 = inlined_call_operand.hbm [shape: f32[1,640], index: 2, kind: input, shape index: {}]
  %s3 = inlined_call_operand.hbm [shape: bf16[16,640], index: 3, kind: output, shape index: {}]
  %s4 = sld [smem:[#allocation0]]
  $region65: #{gpt2_forward.5} parent=0
    _
  %s6 = ssub.s32 1, %s4
  %s7 = scalar_select 0, %s6, %s4
  $region1: #{gpt2_forward.5} parent=0
    #allocation3 [shape = 'u8[4096]{0}', space=vmem, size = 0x1000, scoped, tag = 'input window, operand 0']
    #allocation4 [shape = 's32[2]{0}', space=sflag, size = 0x8, scoped, tag = 'scoped memory for gpt2_forward.5']
    #allocation5 [shape = 's32[2]{0}', space=sflag, size = 0x8, scoped, tag = 'scoped memory for gpt2_forward.5']
    #allocation6 [shape = 'u8[163840]{0}', space=vmem, size = 0x28000, scoped, tag = 'input window, operand 1, single buffered']
    #allocation7 [shape = 's32[1]{0}', space=sflag, size = 0x4, scoped, tag = 'scoped memory for gpt2_forward.5']
    #allocation8 [shape = 'u8[2560]{0}', space=vmem, size = 0xc00, scoped, tag = 'input window, operand 2, single buffered']
    #allocation9 [shape = 'u8[20480]{0}', space=vmem, size = 0x5000, scoped, tag = 'output window, operand 0']
    %8 = vsyncpa [#allocation4], 0
    %s9 = scalar_lea.sflag [#allocation4], 1
    %10 = vsyncpa %s9, 0
    %11 = vsyncpa [#allocation7], 0
    %12 = vsyncpa [#allocation5], 0
    %s13 = scalar_lea.sflag [#allocation5], 1
    %14 = vsyncpa %s13, 0
    loop: start=0, step=1, limit=4
    $region2: #{gpt2_forward.5} parent=1 // loop_pre_header
      _
    $region3: #{gpt2_forward.5} parent=1 // loop_header
      %s16 = sphi 0, %s20
      %p17 = scmp.ge.s32.totalorder %s16, 4
      %s23 = sphi 0, %s42
      %s24 = sphi 0, %s38
      %s25 = sphi 0, %s34
      %s26 = sphi 0, %s23
      %s27 = sphi 0, %s24
      %s28 = sphi 0, %s25
      %s29 = sphi 0, %s26
      %s30 = sphi 0, %s27
      %s31 = sphi 0, %s28
      %s47 = sphi 0, %s49
      %s50 = sphi 0, %s47
      %s51 = sphi 0, %s50
      %s67 = sphi 0, %s51
      %s75 = sphi 0, %s77
      %s78 = sphi 0, %s75
      %s79 = sphi 0, %s78
      %s95 = sphi 0, %s79
      %s101 = sphi 0, %s103
      %s104 = sphi 0, %s101
      %s105 = sphi 0, %s104
      %s121 = sphi 0, %s105
      %s129 = sphi 0, %s131
      %s132 = sphi 0, %s129
      %s133 = sphi 0, %s132
      %s149 = sphi 0, %s133
    $region4: #{gpt2_forward.5} parent=1 // loop_header_branch
      %19 = sbr.rel (%p17) target = $region8
    $region5: #{gpt2_forward.5} parent=1 // loop_body
      %s21 = ssub.s32 %s16, 1
      %s22 = ssub.s32 %s16, 2
      %s32 = sadd.s32 1, %s25
      %p33 = scmp.ge.s32.totalorder %s32, 1
      %s34 = scalar_select %p33, 0, %s32
      %s35 = sadd.s32 1, %s24
      %s36 = scalar_select %p33, %s35, %s24
      %p37 = scmp.ge.s32.totalorder %s36, 1
      %s38 = scalar_select %p37, 0, %s36
      %s39 = sadd.s32 1, %s23
      %s40 = scalar_select %p37, %s39, %s23
      %p41 = scmp.ge.s32.totalorder %s40, 2
      %s42 = scalar_select %p41, 0, %s40
      %s43 = ssub.s32 %s23, %s42
      %s44 = ssub.s32 %s25, %s34
      %s45 = sor.u32 %s43, %s44
      %p46 = scmp.eq.s32.totalorder %s45, 0
      %s48 = sadd.s32 %s47, 1
      %s49 = scalar_select %p46, %s47, %s48
      %p52 = pneg %p46
      %p53 = scmp.eq.s32.totalorder %s16, 1
      %p54 = por %p52, %p53
      %p55 = scmp.ne.s32.totalorder %s47, %s50
      %p56 = scmp.eq.s32.totalorder %s16, 0
      %p57 = por %p55, %p56
      %p58 = scmp.ne.s32.totalorder %s47, %s50
      %p59 = scmp.eq.s32.totalorder %s21, 1
      %p60 = por %p58, %p59
      %p61 = scmp.ne.s32.totalorder %s50, %s51
      %p62 = scmp.eq.s32.totalorder %s21, 0
      %p63 = por %p61, %p62
      %p64 = scmp.ne.s32.totalorder %s50, %s51
      %p65 = scmp.eq.s32.totalorder %s22, 1
      %p66 = por %p64, %p65
      %p68 = scmp.ne.s32.totalorder %s51, %s67
      %p69 = scmp.eq.s32.totalorder %s22, 0
      %p70 = por %p68, %p69
      %s71 = ssub.s32 %s25, %s34
      %s72 = ssub.s32 %s24, %s38
      %s73 = sor.u32 %s71, %s72
      %p74 = scmp.eq.s32.totalorder %s73, 0
      %s76 = sadd.s32 %s75, 1
      %s77 = scalar_select %p74, %s75, %s76
      %p80 = pneg %p74
      %p81 = scmp.eq.s32.totalorder %s16, 1
      %p82 = por %p80, %p81
      %p83 = scmp.ne.s32.totalorder %s75, %s78
      %p84 = scmp.eq.s32.totalorder %s16, 0
      %p85 = por %p83, %p84
      %p86 = scmp.ne.s32.totalorder %s75, %s78
      %p87 = scmp.eq.s32.totalorder %s21, 1
      %p88 = por %p86, %p87
      %p89 = scmp.ne.s32.totalorder %s78, %s79
      %p90 = scmp.eq.s32.totalorder %s21, 0
      %p91 = por %p89, %p90
      %p92 = scmp.ne.s32.totalorder %s78, %s79
      %p93 = scmp.eq.s32.totalorder %s22, 1
      %p94 = por %p92, %p93
      %p96 = scmp.ne.s32.totalorder %s79, %s95
      %p97 = scmp.eq.s32.totalorder %s22, 0
      %p98 = por %p96, %p97
      %s99 = ssub.s32 %s24, %s38
      %p100 = scmp.eq.s32.totalorder %s99, 0
      %s102 = sadd.s32 %s101, 1
      %s103 = scalar_select %p100, %s101, %s102
      %p106 = pneg %p100
      %p107 = scmp.eq.s32.totalorder %s16, 1
      %p108 = por %p106, %p107
      %p109 = scmp.ne.s32.totalorder %s101, %s104
      %p110 = scmp.eq.s32.totalorder %s16, 0
      %p111 = por %p109, %p110
      %p112 = scmp.ne.s32.totalorder %s101, %s104
      %p113 = scmp.eq.s32.totalorder %s21, 1
      %p114 = por %p112, %p113
      %p115 = scmp.ne.s32.totalorder %s104, %s105
      %p116 = scmp.eq.s32.totalorder %s21, 0
      %p117 = por %p115, %p116
      %p118 = scmp.ne.s32.totalorder %s104, %s105
      %p119 = scmp.eq.s32.totalorder %s22, 1
      %p120 = por %p118, %p119
      %p122 = scmp.ne.s32.totalorder %s105, %s121
      %p123 = scmp.eq.s32.totalorder %s22, 0
      %p124 = por %p122, %p123
      %s125 = ssub.s32 %s23, %s42
      %s126 = ssub.s32 %s24, %s38
      %s127 = sor.u32 %s125, %s126
      %p128 = scmp.eq.s32.totalorder %s127, 0
      %s130 = sadd.s32 %s129, 1
      %s131 = scalar_select %p128, %s129, %s130
      %p134 = pneg %p128
      %p135 = scmp.eq.s32.totalorder %s16, 1
      %p136 = por %p134, %p135
      %p137 = scmp.ne.s32.totalorder %s129, %s132
      %p138 = scmp.eq.s32.totalorder %s16, 0
      %p139 = por %p137, %p138
      %p140 = scmp.ne.s32.totalorder %s129, %s132
      %p141 = scmp.eq.s32.totalorder %s21, 1
      %p142 = por %p140, %p141
      %p143 = scmp.ne.s32.totalorder %s132, %s133
      %p144 = scmp.eq.s32.totalorder %s21, 0
      %p145 = por %p143, %p144
      %p146 = scmp.ne.s32.totalorder %s132, %s133
      %p147 = scmp.eq.s32.totalorder %s22, 1
      %p148 = por %p146, %p147
      %p150 = scmp.ne.s32.totalorder %s133, %s149
      %p151 = scmp.eq.s32.totalorder %s22, 0
      %p152 = por %p150, %p151
      %p153 = scmp.le.s32.totalorder 1, %s16
      %p154 = scmp.lt.s32.totalorder %s16, 3
      %p155 = pnand %p153, %p154
      %p156 = pneg %p155
      // Predicated region
      $region9: #{gpt2_forward.5} parent=5 // pred_check
        _
      $region10: #{gpt2_forward.5} parent=5 // pred_check_branch
        %158 = sbr.rel (%p155) target = $region12
      $region11: #{gpt2_forward.5} parent=5 // pred_region
        %s159 = ssub.s32 %s16, 1
        // Predicated region
        $region13: #{gpt2_forward.5} parent=11 // pred_check
          %p160 = pneg %p91
        $region14: #{gpt2_forward.5} parent=11 // pred_check_branch
          %162 = sbr.rel (%p160) target = $region16
        $region15: #{gpt2_forward.5} parent=11 // pred_region
          %s163 = smul.u32 16, %s28
          %s164 = smul.u32 5, %s27
          %s166 = ssub.s32 5120, 5120
          %167 = vsyncadd [#allocation7], %s166
          %s168 = smul.addr %s163, 5
          %s169 = sadd.s32 %s164, %s168
          %s170 = smul.addr %s169, 64
          %s171 = scalar_lea.hbm %s1, %s170
          %s172 = sshll.u32 [#allocation6], 4
          %s173 = int_to_ptr.vmem [resolvable:$true] %s172
          %178 = dma.hbm_to_vmem [thread:$0]  %s171, 5120, %s173, [#allocation7], 320, 320, 20
        $region16: #{gpt2_forward.5} parent=11 // pred_fallthru
          _
        // Predicated region
        $region17: #{gpt2_forward.5} parent=11 // pred_check
          %p179 = pneg %p117
        $region18: #{gpt2_forward.5} parent=11 // pred_check_branch
          %181 = sbr.rel (%p179) target = $region20
        $region19: #{gpt2_forward.5} parent=11 // pred_region
          %s182 = smul.u32 5, %s27
          %s184 = ssub.s32 80, 80
          %185 = vsyncadd [#allocation7], %s184
          %s186 = smul.addr %s182, 16
          %s187 = scalar_lea.hbm %s2, %s186
          %s189 = sshll.u32 [#allocation8], 4
          %s190 = int_to_ptr.vmem [resolvable:$true] %s189
          %192 = dma.hbm_to_vmem [thread:$0]  %s187, 80, %s190, [#allocation7]
        $region20: #{gpt2_forward.5} parent=11 // pred_fallthru
          _
      $region12: #{gpt2_forward.5} parent=5 // pred_fallthru
        _
      %p193 = scmp.lt.s32.totalorder %s16, 2
      // Predicated region
      $region21: #{gpt2_forward.5} parent=5 // pred_check
        %p194 = pneg %p193
      $region22: #{gpt2_forward.5} parent=5 // pred_check_branch
        %196 = sbr.rel (%p194) target = $region24
      $region23: #{gpt2_forward.5} parent=5 // pred_region
        // Predicated region
        $region25: #{gpt2_forward.5} parent=23 // pred_check
          %p197 = pneg %p57
        $region26: #{gpt2_forward.5} parent=23 // pred_check_branch
          %199 = sbr.rel (%p197) target = $region28
        $region27: #{gpt2_forward.5} parent=23 // pred_region
          %s200 = sand.u32 %s47, 1
          %s201 = scalar_lea.sflag [#allocation4], %s200
          %s202 = sand.u32 %s47, 1
          %s203 = smul.addr %s202, 4
          %s204 = scalar_lea.vmem [#allocation3], %s203
          %s206 = ssub.s32 64, 64
          %207 = vsyncadd %s201, %s206
          %s208 = sadd.s32 %s25, %s23
          %s209 = smul.addr %s208, 64
          %s210 = scalar_lea.hbm %s0, %s209
          %s212 = sshll.u32 %s204, 4
          %s213 = int_to_ptr.vmem [resolvable:$true] %s212
          %215 = dma.hbm_to_vmem [thread:$0]  %s210, 64, %s213, %s201
        $region28: #{gpt2_forward.5} parent=23 // pred_fallthru
          _
      $region24: #{gpt2_forward.5} parent=5 // pred_fallthru
        _
      %p216 = scmp.le.s32.totalorder 1, %s16
      %p217 = scmp.lt.s32.totalorder %s16, 3
      %p218 = pnand %p216, %p217
      %p219 = pneg %p218
      // Predicated region
      $region29: #{gpt2_forward.5} parent=5 // pred_check
        _
      $region30: #{gpt2_forward.5} parent=5 // pred_check_branch
        %221 = sbr.rel (%p218) target = $region32
      $region31: #{gpt2_forward.5} parent=5 // pred_region
        %s222 = ssub.s32 %s16, 1
        %s223 = sand.u32 %s50, 1
        %s224 = scalar_lea.sflag [#allocation4], %s223
        %s225 = sand.u32 %s50, 1
        %s226 = smul.addr %s225, 4
        %s227 = scalar_lea.vmem [#allocation3], %s226
        // Predicated region
        $region33: #{gpt2_forward.5} parent=31 // pred_check
          %p228 = pneg %p63
        $region34: #{gpt2_forward.5} parent=31 // pred_check_branch
          %230 = sbr.rel (%p228) target = $region36
        $region35: #{gpt2_forward.5} parent=31 // pred_region
          %231 = dma.done %s224, 64
        $region36: #{gpt2_forward.5} parent=31 // pred_fallthru
          _
        // Predicated region
        $region37: #{gpt2_forward.5} parent=31 // pred_check
          %p232 = pneg %p91
        $region38: #{gpt2_forward.5} parent=31 // pred_check_branch
          %234 = sbr.rel (%p232) target = $region40
        $region39: #{gpt2_forward.5} parent=31 // pred_region
          %235 = dma.done [#allocation7], 5120
        $region40: #{gpt2_forward.5} parent=31 // pred_fallthru
          _
        // Predicated region
        $region41: #{gpt2_forward.5} parent=31 // pred_check
          %p236 = pneg %p117
        $region42: #{gpt2_forward.5} parent=31 // pred_check_branch
          %238 = sbr.rel (%p236) target = $region44
        $region43: #{gpt2_forward.5} parent=31 // pred_region
          %239 = dma.done [#allocation7], 80
        $region44: #{gpt2_forward.5} parent=31 // pred_fallthru
          _
        %s240 = sand.u32 %s50, 1
        %s241 = scalar_lea.sflag [#allocation4], %s240
        %s242 = sand.u32 %s50, 1
        %s243 = smul.addr %s242, 4
        %s244 = scalar_lea.vmem [#allocation3], %s243
        %p245 = pneg %p63
        %p246 = pneg %p60
        %p247 = pneg %p91
        %p248 = pneg %p88
        %p249 = pneg %p117
        %p250 = pneg %p114
        %p251 = pneg %p145
        %p252 = pneg %p142
        %s253 = sand.u32 %s132, 1
        %s254 = scalar_lea.sflag [#allocation5], %s253
        %s255 = sand.u32 %s132, 1
        %s256 = smul.addr %s255, 20
        %s257 = scalar_lea.vmem [#allocation9], %s256
        %s258 = smul.u32 16, %s28
        %s259 = smul.u32 5, %s27
        %s260 = smul.u32 5, %s27
        %s261 = smul.u32 5, %s27
        %p263 = scmp.eq.s32.totalorder %s28, 0
        // Predicated region
        $region45: #{gpt2_forward.5} parent=31 // pred_check
          %p264 = pneg %p263
        $region46: #{gpt2_forward.5} parent=31 // pred_check_branch
          %266 = sbr.rel (%p264) target = $region48
        $region47: #{gpt2_forward.5} parent=31 // pred_region
          %267 = vst [vmem:[#allocation2] sm:$0xff] 0.0
          %268 = vst [vmem:[#allocation2 + $0x8] sm:$0xff] 0.0
          %269 = vst [vmem:[#allocation2 + $0x10] sm:$0xff] 0.0
          %270 = vst [vmem:[#allocation2 + $0x18] sm:$0xff] 0.0
          %271 = vst [vmem:[#allocation2 + $0x20] sm:$0xff] 0.0
        $region48: #{gpt2_forward.5} parent=31 // pred_fallthru
          _
        %v272 = vld [vmem:[#allocation2] sm:$0xff]
        %v273 = vld [vmem:[#allocation2 + $0x8] sm:$0xff]
        %v274 = vld [vmem:[#allocation2 + $0x10] sm:$0xff]
        %v275 = vld [vmem:[#allocation2 + $0x18] sm:$0xff]
        %v276 = vld [vmem:[#allocation2 + $0x20] sm:$0xff]
        %v277 = vld [vmem:[%s227] sm:$0xf]
        %v278 = vld [vmem:[#allocation6] sm:$0xff]
        %v279 = vld [vmem:[#allocation6 + $0x8] sm:$0xff]
        %v280 = vld [vmem:[#allocation6 + $0x10] sm:$0xf]
        %v281 = vld [vmem:[#allocation6 + $0x14] sm:$0xff]
        %v282 = vld [vmem:[#allocation6 + $0x1c] sm:$0xff]
        %v283 = vld [vmem:[#allocation6 + $0x24] sm:$0xf]
        %v284 = vld [vmem:[#allocation6 + $0x28] sm:$0xff]
        %v285 = vld [vmem:[#allocation6 + $0x30] sm:$0xff]
        %v286 = vld [vmem:[#allocation6 + $0x38] sm:$0xf]
        %v287 = vld [vmem:[#allocation6 + $0x3c] sm:$0xff]
        %v288 = vld [vmem:[#allocation6 + $0x44] sm:$0xff]
        %v289 = vld [vmem:[#allocation6 + $0x4c] sm:$0xf]
        %v290 = vld [vmem:[#allocation6 + $0x50] sm:$0xff]
        %v291 = vld [vmem:[#allocation6 + $0x58] sm:$0xff]
        %v292 = vld [vmem:[#allocation6 + $0x60] sm:$0xf]
        %v293 = vld [vmem:[#allocation6 + $0x64] sm:$0xff]
        %v294 = vld [vmem:[#allocation6 + $0x6c] sm:$0xff]
        %v295 = vld [vmem:[#allocation6 + $0x74] sm:$0xf]
        %v296 = vld [vmem:[#allocation6 + $0x78] sm:$0xff]
        %v297 = vld [vmem:[#allocation6 + $0x80] sm:$0xff]
        %v298 = vld [vmem:[#allocation6 + $0x88] sm:$0xf]
        %v299 = vld [vmem:[#allocation6 + $0x8c] sm:$0xff]
        %v300 = vld [vmem:[#allocation6 + $0x94] sm:$0xff]
        %v301 = vld [vmem:[#allocation6 + $0x9c] sm:$0xf]
        %v302 = vld [vmem:[#allocation6 + $0xa0] sm:$0xff]
        %v303 = vld [vmem:[#allocation6 + $0xa8] sm:$0xff]
        %v304 = vld [vmem:[#allocation6 + $0xb0] sm:$0xf]
        %v305 = vld [vmem:[#allocation6 + $0xb4] sm:$0xff]
        %v306 = vld [vmem:[#allocation6 + $0xbc] sm:$0xff]
        %v307 = vld [vmem:[#allocation6 + $0xc4] sm:$0xf]
        %v308 = vld [vmem:[#allocation6 + $0xc8] sm:$0xff]
        %v309 = vld [vmem:[#allocation6 + $0xd0] sm:$0xff]
        %v310 = vld [vmem:[#allocation6 + $0xd8] sm:$0xf]
        %v311 = vld [vmem:[#allocation6 + $0xdc] sm:$0xff]
        %v312 = vld [vmem:[#allocation6 + $0xe4] sm:$0xff]
        %v313 = vld [vmem:[#allocation6 + $0xec] sm:$0xf]
        %v314 = vld [vmem:[#allocation6 + $0xf0] sm:$0xff]
        %v315 = vld [vmem:[#allocation6 + $0xf8] sm:$0xff]
        %v316 = vld [vmem:[#allocation6 + $0x100] sm:$0xf]
        %v317 = vld [vmem:[#allocation6 + $0x104] sm:$0xff]
        %v318 = vld [vmem:[#allocation6 + $0x10c] sm:$0xff]
        %v319 = vld [vmem:[#allocation6 + $0x114] sm:$0xf]
        %v320 = vld [vmem:[#allocation6 + $0x118] sm:$0xff]
        %v321 = vld [vmem:[#allocation6 + $0x120] sm:$0xff]
        %v322 = vld [vmem:[#allocation6 + $0x128] sm:$0xf]
        %v323 = vld [vmem:[#allocation6 + $0x12c] sm:$0xff]
        %v324 = vld [vmem:[#allocation6 + $0x134] sm:$0xff]
        %v325 = vld [vmem:[#allocation6 + $0x13c] sm:$0xf]
        %v374 = vunpack.c.l.b16 %v278
        %v375 = vunpack.c.h.b16 %v278
        %v376 = vunpack.c.l.b16 %v279
        %v377 = vunpack.c.h.b16 %v279
        %v378 = vunpack.c.l.b16 %v280
        %v379 = vunpack.c.l.b16 %v281
        %v380 = vunpack.c.h.b16 %v281
        %v381 = vunpack.c.l.b16 %v282
        %v382 = vunpack.c.h.b16 %v282
        %v383 = vunpack.c.l.b16 %v283
        %v384 = vunpack.c.l.b16 %v284
        %v385 = vunpack.c.h.b16 %v284
        %v386 = vunpack.c.l.b16 %v285
        %v387 = vunpack.c.h.b16 %v285
        %v388 = vunpack.c.l.b16 %v286
        %v389 = vunpack.c.l.b16 %v287
        %v390 = vunpack.c.h.b16 %v287
        %v391 = vunpack.c.l.b16 %v288
        %v392 = vunpack.c.h.b16 %v288
        %v393 = vunpack.c.l.b16 %v289
        %v394 = vunpack.c.l.b16 %v290
        %v395 = vunpack.c.h.b16 %v290
        %v396 = vunpack.c.l.b16 %v291
        %v397 = vunpack.c.h.b16 %v291
        %v398 = vunpack.c.l.b16 %v292
        %v399 = vunpack.c.l.b16 %v293
        %v400 = vunpack.c.h.b16 %v293
        %v401 = vunpack.c.l.b16 %v294
        %v402 = vunpack.c.h.b16 %v294
        %v403 = vunpack.c.l.b16 %v295
        %v404 = vunpack.c.l.b16 %v296
        %v405 = vunpack.c.h.b16 %v296
        %v406 = vunpack.c.l.b16 %v297
        %v407 = vunpack.c.h.b16 %v297
        %v408 = vunpack.c.l.b16 %v298
        %v409 = vunpack.c.l.b16 %v299
        %v410 = vunpack.c.h.b16 %v299
        %v411 = vunpack.c.l.b16 %v300
        %v412 = vunpack.c.h.b16 %v300
        %v413 = vunpack.c.l.b16 %v301
        %v414 = vunpack.c.l.b16 %v302
        %v415 = vunpack.c.h.b16 %v302
        %v416 = vunpack.c.l.b16 %v303
        %v417 = vunpack.c.h.b16 %v303
        %v418 = vunpack.c.l.b16 %v304
        %v419 = vunpack.c.l.b16 %v305
        %v420 = vunpack.c.h.b16 %v305
        %v421 = vunpack.c.l.b16 %v306
        %v422 = vunpack.c.h.b16 %v306
        %v423 = vunpack.c.l.b16 %v307
        %v424 = vunpack.c.l.b16 %v308
        %v425 = vunpack.c.h.b16 %v308
        %v426 = vunpack.c.l.b16 %v309
        %v427 = vunpack.c.h.b16 %v309
        %v428 = vunpack.c.l.b16 %v310
        %v429 = vunpack.c.l.b16 %v311
        %v430 = vunpack.c.h.b16 %v311
        %v431 = vunpack.c.l.b16 %v312
        %v432 = vunpack.c.h.b16 %v312
        %v433 = vunpack.c.l.b16 %v313
        %v434 = vunpack.c.l.b16 %v314
        %v435 = vunpack.c.h.b16 %v314
        %v436 = vunpack.c.l.b16 %v315
        %v437 = vunpack.c.h.b16 %v315
        %v438 = vunpack.c.l.b16 %v316
        %v439 = vunpack.c.l.b16 %v317
        %v440 = vunpack.c.h.b16 %v317
        %v441 = vunpack.c.l.b16 %v318
        %v442 = vunpack.c.h.b16 %v318
        %v443 = vunpack.c.l.b16 %v319
        %v444 = vunpack.c.l.b16 %v320
        %v445 = vunpack.c.h.b16 %v320
        %v446 = vunpack.c.l.b16 %v321
        %v447 = vunpack.c.h.b16 %v321
        %v448 = vunpack.c.l.b16 %v322
        %v449 = vunpack.c.l.b16 %v323
        %v450 = vunpack.c.h.b16 %v323
        %v451 = vunpack.c.l.b16 %v324
        %v452 = vunpack.c.h.b16 %v324
        %v453 = vunpack.c.l.b16 %v325
        %v454 = vpack.c.b16 %v379, %v374
        %v455 = vpack.c.b16 %v380, %v375
        %v456 = vpack.c.b16 %v381, %v376
        %v457 = vpack.c.b16 %v382, %v377
        %v458 = vpack.c.b16 %v383, %v378
        %v459 = vpack.c.b16 %v389, %v384
        %v460 = vpack.c.b16 %v390, %v385
        %v461 = vpack.c.b16 %v391, %v386
        %v462 = vpack.c.b16 %v392, %v387
        %v463 = vpack.c.b16 %v393, %v388
        %v464 = vpack.c.b16 %v399, %v394
        %v465 = vpack.c.b16 %v400, %v395
        %v466 = vpack.c.b16 %v401, %v396
        %v467 = vpack.c.b16 %v402, %v397
        %v468 = vpack.c.b16 %v403, %v398
        %v469 = vpack.c.b16 %v409, %v404
        %v470 = vpack.c.b16 %v410, %v405
        %v471 = vpack.c.b16 %v411, %v406
        %v472 = vpack.c.b16 %v412, %v407
        %v473 = vpack.c.b16 %v413, %v408
        %v474 = vpack.c.b16 %v419, %v414
        %v475 = vpack.c.b16 %v420, %v415
        %v476 = vpack.c.b16 %v421, %v416
        %v477 = vpack.c.b16 %v422, %v417
        %v478 = vpack.c.b16 %v423, %v418
        %v479 = vpack.c.b16 %v429, %v424
        %v480 = vpack.c.b16 %v430, %v425
        %v481 = vpack.c.b16 %v431, %v426
        %v482 = vpack.c.b16 %v432, %v427
        %v483 = vpack.c.b16 %v433, %v428
        %v484 = vpack.c.b16 %v439, %v434
        %v485 = vpack.c.b16 %v440, %v435
        %v486 = vpack.c.b16 %v441, %v436
        %v487 = vpack.c.b16 %v442, %v437
        %v488 = vpack.c.b16 %v443, %v438
        %v489 = vpack.c.b16 %v449, %v444
        %v490 = vpack.c.b16 %v450, %v445
        %v491 = vpack.c.b16 %v451, %v446
        %v492 = vpack.c.b16 %v452, %v447
        %v493 = vpack.c.b16 %v453, %v448
        %534 = vmatprep.subr.bf16.mxu0 %v455
        %535 = vmatpush1.bf16.msra.mxu0 %v454
        %536 = vmatprep.subr.bf16.mxu0 %v460
        %537 = vmatpush1.bf16.msra.mxu0 %v459
        %538 = vmatprep.subr.bf16.mxu0 %v465
        %539 = vmatpush1.bf16.msra.mxu0 %v464
        %540 = vmatprep.subr.bf16.mxu0 %v470
        %541 = vmatpush1.bf16.msra.mxu0 %v469
        %542 = vmatprep.subr.bf16.mxu0 %v475
        %543 = vmatpush1.bf16.msra.mxu0 %v474
        %544 = vmatprep.subr.bf16.mxu0 %v480
        %545 = vmatpush1.bf16.msra.mxu0 %v479
        %546 = vmatprep.subr.bf16.mxu0 %v485
        %547 = vmatpush1.bf16.msra.mxu0 %v484
        %548 = vmatprep.subr.bf16.mxu0 %v490
        %549 = vmatpush1.bf16.msra.mxu0 %v489
        %550 = vmatprep.subr.bf16.mxu0 0
        %551 = vmatpush1.bf16.msra.mxu0 0
        %552 = vmatprep.subr.bf16.mxu0 0
        %553 = vmatpush1.bf16.msra.mxu0 0
        %554 = vmatprep.subr.bf16.mxu0 0
        %555 = vmatpush1.bf16.msra.mxu0 0
        %556 = vmatprep.subr.bf16.mxu0 0
        %557 = vmatpush1.bf16.msra.mxu0 0
        %558 = vmatprep.subr.bf16.mxu0 0
        %559 = vmatpush1.bf16.msra.mxu0 0
        %560 = vmatprep.subr.bf16.mxu0 0
        %561 = vmatpush1.bf16.msra.mxu0 0
        %562 = vmatprep.subr.bf16.mxu0 0
        %563 = vmatpush1.bf16.msra.mxu0 0
        %564 = vmatprep.subr.bf16.mxu0 0
        %565 = vmatpush1.bf16.msra.mxu0 0
        %566 = vmatprep.mubr.bf16.mxu0 0
        %567 = vmatmul.mubr.bf16.gmra.mrb[0].mxu0 %v277
        %v568 = vpop.f32.mrb[0].mxu0
        %v569 = vadd.f32 0.0, %v568
        %v570 = vpop.f32.mrb[0].mxu0
        %v571 = vadd.f32 0.0, %v570
        %v572 = vpop.f32.mrb[0].mxu0
        %v573 = vpop.f32.mrb[0].mxu0
        %574 = vdwg.mxu0
        %575 = vmatprep.subr.bf16.mxu0 %v457
        %576 = vmatpush1.bf16.msra.mxu0 %v456
        %577 = vmatprep.subr.bf16.mxu0 %v462
        %578 = vmatpush1.bf16.msra.mxu0 %v461
        %579 = vmatprep.subr.bf16.mxu0 %v467
        %580 = vmatpush1.bf16.msra.mxu0 %v466
        %581 = vmatprep.subr.bf16.mxu0 %v472
        %582 = vmatpush1.bf16.msra.mxu0 %v471
        %583 = vmatprep.subr.bf16.mxu0 %v477
        %584 = vmatpush1.bf16.msra.mxu0 %v476
        %585 = vmatprep.subr.bf16.mxu0 %v482
        %586 = vmatpush1.bf16.msra.mxu0 %v481
        %587 = vmatprep.subr.bf16.mxu0 %v487
        %588 = vmatpush1.bf16.msra.mxu0 %v486
        %589 = vmatprep.subr.bf16.mxu0 %v492
        %590 = vmatpush1.bf16.msra.mxu0 %v491
        %591 = vmatprep.subr.bf16.mxu0 0
        %592 = vmatpush1.bf16.msra.mxu0 0
        %593 = vmatprep.subr.bf16.mxu0 0
        %594 = vmatpush1.bf16.msra.mxu0 0
        %595 = vmatprep.subr.bf16.mxu0 0
        %596 = vmatpush1.bf16.msra.mxu0 0
        %597 = vmatprep.subr.bf16.mxu0 0
        %598 = vmatpush1.bf16.msra.mxu0 0
        %599 = vmatprep.subr.bf16.mxu0 0
        %600 = vmatpush1.bf16.msra.mxu0 0
        %601 = vmatprep.subr.bf16.mxu0 0
        %602 = vmatpush1.bf16.msra.mxu0 0
        %603 = vmatprep.subr.bf16.mxu0 0
        %604 = vmatpush1.bf16.msra.mxu0 0
        %605 = vmatprep.subr.bf16.mxu0 0
        %606 = vmatpush1.bf16.msra.mxu0 0
        %607 = vmatprep.mubr.bf16.mxu0 0
        %608 = vmatmul.mubr.bf16.gmra.mrb[0].mxu0 %v277
        %v609 = vpop.f32.mrb[0].mxu0
        %v610 = vadd.f32 0.0, %v609
        %v611 = vpop.f32.mrb[0].mxu0
        %v612 = vadd.f32 0.0, %v611
        %v613 = vpop.f32.mrb[0].mxu0
        %v614 = vpop.f32.mrb[0].mxu0
        %615 = vdwg.mxu0
        %616 = vmatprep.subr.bf16.mxu0 0
        %617 = vmatpush1.bf16.msra.mxu0 %v458
        %618 = vmatprep.subr.bf16.mxu0 0
        %619 = vmatpush1.bf16.msra.mxu0 %v463
        %620 = vmatprep.subr.bf16.mxu0 0
        %621 = vmatpush1.bf16.msra.mxu0 %v468
        %622 = vmatprep.subr.bf16.mxu0 0
        %623 = vmatpush1.bf16.msra.mxu0 %v473
        %624 = vmatprep.subr.bf16.mxu0 0
        %625 = vmatpush1.bf16.msra.mxu0 %v478
        %626 = vmatprep.subr.bf16.mxu0 0
        %627 = vmatpush1.bf16.msra.mxu0 %v483
        %628 = vmatprep.subr.bf16.mxu0 0
        %629 = vmatpush1.bf16.msra.mxu0 %v488
        %630 = vmatprep.subr.bf16.mxu0 0
        %631 = vmatpush1.bf16.msra.mxu0 %v493
        %632 = vmatprep.subr.bf16.mxu0 0
        %633 = vmatpush1.bf16.msra.mxu0 0
        %634 = vmatprep.subr.bf16.mxu0 0
        %635 = vmatpush1.bf16.msra.mxu0 0
        %636 = vmatprep.subr.bf16.mxu0 0
        %637 = vmatpush1.bf16.msra.mxu0 0
        %638 = vmatprep.subr.bf16.mxu0 0
        %639 = vmatpush1.bf16.msra.mxu0 0
        %640 = vmatprep.subr.bf16.mxu0 0
        %641 = vmatpush1.bf16.msra.mxu0 0
        %642 = vmatprep.subr.bf16.mxu0 0
        %643 = vmatpush1.bf16.msra.mxu0 0
        %644 = vmatprep.subr.bf16.mxu0 0
        %645 = vmatpush1.bf16.msra.mxu0 0
        %646 = vmatprep.subr.bf16.mxu0 0
        %647 = vmatpush1.bf16.msra.mxu0 0
        %648 = vmatprep.mubr.bf16.mxu0 0
        %649 = vmatmul.mubr.bf16.gmra.mrb[0].mxu0 %v277
        %v650 = vpop.f32.mrb[0].mxu0
        %v651 = vadd.f32 0.0, %v650
        %v652 = vpop.f32.mrb[0].mxu0
        %v653 = vpop.f32.mrb[0].mxu0
        %v654 = vpop.f32.mrb[0].mxu0
        %655 = vdwg.mxu0
        %v656 = vadd.f32 %v272, %v569
        %v657 = vadd.f32 %v273, %v571
        %v658 = vadd.f32 %v274, %v610
        %v659 = vadd.f32 %v275, %v612
        %v660 = vadd.f32 %v276, %v651
        %661 = vst [vmem:[#allocation2] sm:$0xff] %v656
        %662 = vst [vmem:[#allocation2 + $0x8] sm:$0xff] %v657
        %663 = vst [vmem:[#allocation2 + $0x10] sm:$0xff] %v658
        %664 = vst [vmem:[#allocation2 + $0x18] sm:$0xff] %v659
        %665 = vst [vmem:[#allocation2 + $0x20] sm:$0xff] %v660
        // Predicated region
        $region49: #{gpt2_forward.5} parent=31 // pred_check
          %p666 = pneg %p263
        $region50: #{gpt2_forward.5} parent=31 // pred_check_branch
          %668 = sbr.rel (%p666) target = $region52
        $region51: #{gpt2_forward.5} parent=31 // pred_region
          %v669 = vld [vmem:[#allocation2] sm:$0xff]
          %v670 = vld [vmem:[#allocation2 + $0x8] sm:$0xff]
          %v671 = vld [vmem:[#allocation2 + $0x10] sm:$0xff]
          %v672 = vld [vmem:[#allocation2 + $0x18] sm:$0xff]
          %v673 = vld [vmem:[#allocation2 + $0x20] sm:$0xff]
          %v674 = vld [vmem:[#allocation8] sm:$0x1f]
          %v676 = vlaneseq
          %v677 = vshrl.u32 %v676, 7
          %v678 = vsub.s32 0, %v677
          %v679 = vrot.slane %v674, %v678
          %v680 = vlaneseq
          %v681 = vshrl.u32 %v680, 7
          %v682 = vsub.s32 1, %v681
          %v683 = vrot.slane %v674, %v682
          %v684 = vlaneseq
          %v685 = vshrl.u32 %v684, 7
          %v686 = vsub.s32 2, %v685
          %v687 = vrot.slane %v674, %v686
          %v688 = vlaneseq
          %v689 = vshrl.u32 %v688, 7
          %v690 = vsub.s32 3, %v689
          %v691 = vrot.slane %v674, %v690
          %v692 = vlaneseq
          %v693 = vshrl.u32 %v692, 7
          %v694 = vsub.s32 4, %v693
          %v695 = vrot.slane %v674, %v694
          %v701 = vadd.f32 %v669, %v679
          %v702 = vadd.f32 %v670, %v683
          %v703 = vadd.f32 %v671, %v687
          %v704 = vadd.f32 %v672, %v691
          %v705 = vadd.f32 %v673, %v695
          %v706 = vpack.c.bf16 %v701, %v701
          %v707 = vpack.c.bf16 %v702, %v702
          %v708 = vpack.c.bf16 %v703, %v703
          %v709 = vpack.c.bf16 %v704, %v704
          %v710 = vpack.c.bf16 %v705, %v705
          %v716 = vunpack.c.l.b16 %v706
          %v717 = vunpack.c.l.b16 %v707
          %v718 = vunpack.c.l.b16 %v708
          %v719 = vunpack.c.l.b16 %v709
          %v720 = vunpack.c.l.b16 %v710
          %v721 = vpack.c.b16 %v717, %v716
          %v722 = vpack.c.b16 %v719, %v718
          %v723 = vpack.c.b16 %v720, %v720
          %727 = vst [vmem:[%s257] sm:$0xff] %v721
          %728 = vst [vmem:[%s257 + $0x8] sm:$0xff] %v722
          %729 = vst [vmem:[%s257 + $0x10] sm:$0xf] %v723
        $region52: #{gpt2_forward.5} parent=31 // pred_fallthru
          _
        %s730 = sand.u32 %s132, 1
        %s731 = scalar_lea.sflag [#allocation5], %s730
        %s732 = sand.u32 %s132, 1
        %s733 = smul.addr %s732, 20
        %s734 = scalar_lea.vmem [#allocation9], %s733
        // Predicated region
        $region53: #{gpt2_forward.5} parent=31 // pred_check
          %p735 = pneg %p142
        $region54: #{gpt2_forward.5} parent=31 // pred_check_branch
          %737 = sbr.rel (%p735) target = $region56
        $region55: #{gpt2_forward.5} parent=31 // pred_region
          %s738 = smul.u32 5, %s27
          %s740 = ssub.s32 320, 320
          %741 = vsyncadd %s731, %s740
          %s742 = smul.addr %s26, 5
          %s743 = sadd.s32 %s738, %s742
          %s744 = smul.addr %s743, 64
          %s745 = scalar_lea.hbm %s3, %s744
          %s747 = sshll.u32 %s734, 4
          %s748 = int_to_ptr.vmem [resolvable:$true] %s747
          %750 = dma.vmem_to_hbm [thread:$0]  %s748, 320, %s745, %s731
        $region56: #{gpt2_forward.5} parent=31 // pred_fallthru
          _
      $region32: #{gpt2_forward.5} parent=5 // pred_fallthru
        _
      %p751 = scmp.le.s32.totalorder 2, %s16
      // Predicated region
      $region57: #{gpt2_forward.5} parent=5 // pred_check
        %p752 = pneg %p751
      $region58: #{gpt2_forward.5} parent=5 // pred_check_branch
        %754 = sbr.rel (%p752) target = $region60
      $region59: #{gpt2_forward.5} parent=5 // pred_region
        %s755 = ssub.s32 %s16, 2
        // Predicated region
        $region61: #{gpt2_forward.5} parent=59 // pred_check
          %p756 = pneg %p148
        $region62: #{gpt2_forward.5} parent=59 // pred_check_branch
          %758 = sbr.rel (%p756) target = $region64
        $region63: #{gpt2_forward.5} parent=59 // pred_region
          %s759 = sand.u32 %s133, 1
          %s760 = scalar_lea.sflag [#allocation5], %s759
          %s761 = sand.u32 %s133, 1
          %s762 = smul.addr %s761, 20
          %s763 = scalar_lea.vmem [#allocation9], %s762
          %764 = dma.done %s760, 320
        $region64: #{gpt2_forward.5} parent=59 // pred_fallthru
          _
      $region60: #{gpt2_forward.5} parent=5 // pred_fallthru
        _
    $region6: #{gpt2_forward.5} parent=1 // loop_footer
      %s20 = sadd.s32 1, %s16
    $region7: #{gpt2_forward.5} parent=1 // loop_footer_branch
      %15 = sbr.rel target = $region3
    $region8: #{gpt2_forward.5} parent=1 // loop_exit
      _
    %765 = vsyncpa [#allocation4], 1
    %s766 = scalar_lea.sflag [#allocation4], 1
    %767 = vsyncpa %s766, 1
    %768 = vsyncpa [#allocation7], 1
    %769 = vsyncpa [#allocation5], 1
    %s770 = scalar_lea.sflag [#allocation5], 1
    %771 = vsyncpa %s770, 1

// kernel: gpt2_forward.8
$region0: #{gpt2_forward.8}
  #allocation0 [shape = 'u32[]', space=smem, size = 0x4, offset = 0x4, fixed_abs, tag = 'smem constant byte address 0x4 - core index']
  #allocation1 [shape = 'u32[144,128]{1,0:T(1,128)}', space=vmem, size = 0x12000, scoped, tag = 'internal scratch']
  #allocation2 [shape = 'f32[8,128]{1,0:T(8,128)}', space=vmem, size = 0x1000, scoped, tag = 'scratch operand']
  %s0 = inlined_call_operand.hbm [shape: bf16[2,8,128], index: 0, kind: input, shape index: {}]
  %s1 = inlined_call_operand.hbm [shape: bf16[2,8,640], index: 1, kind: input, shape index: {}, may-alias: {1,2}]
  %s2 = inlined_call_operand.hbm [shape: bf16[2,8,640], index: 2, kind: input, shape index: {}, may-alias: {1,2}]
  %s3 = inlined_call_operand.hbm [shape: f32[2,1,8], index: 3, kind: input, shape index: {}]
  %s4 = inlined_call_operand.hbm [shape: bf16[2,8,128], index: 4, kind: input, shape index: {}]
  %s5 = inlined_call_operand.hbm [shape: bf16[128,128], index: 5, kind: input, shape index: {}]
  %s6 = inlined_call_operand.hbm [shape: f32[1,128], index: 6, kind: input, shape index: {}]
  %s7 = inlined_call_operand.hbm [shape: f32[1,128], index: 7, kind: input, shape index: {}]
  %s8 = inlined_call_operand.hbm [shape: f32[1,128], index: 8, kind: input, shape index: {}]
  %s9 = inlined_call_operand.hbm [shape: bf16[2,8,128], index: 9, kind: output, shape index: {}]
  %s10 = sld [smem:[#allocation0]]
  $region105: #{gpt2_forward.8} parent=0
    _
  %s12 = ssub.s32 1, %s10
  %s13 = scalar_select 0, %s12, %s10
  $region1: #{gpt2_forward.8} parent=0
    #allocation3 [shape = 'u8[4096]{0}', space=vmem, size = 0x1000, scoped, tag = 'input window, operand 0']
    #allocation4 [shape = 's32[2]{0}', space=sflag, size = 0x8, scoped, tag = 'scoped memory for gpt2_forward.8']
    #allocation5 [shape = 's32[2]{0}', space=sflag, size = 0x8, scoped, tag = 'scoped memory for gpt2_forward.8']
    #allocation6 [shape = 'u8[4096]{0}', space=vmem, size = 0x1000, scoped, tag = 'input window, operand 1']
    #allocation7 [shape = 's32[2]{0}', space=sflag, size = 0x8, scoped, tag = 'scoped memory for gpt2_forward.8']
    #allocation8 [shape = 'u8[4096]{0}', space=vmem, size = 0x1000, scoped, tag = 'input window, operand 2']
    #allocation9 [shape = 'u8[1024]{0}', space=vmem, size = 0x400, scoped, tag = 'input window, operand 3']
    #allocation10 [shape = 's32[2]{0}', space=sflag, size = 0x8, scoped, tag = 'scoped memory for gpt2_forward.8']
    #allocation11 [shape = 'u8[4096]{0}', space=vmem, size = 0x1000, scoped, tag = 'input window, operand 4']
    #allocation12 [shape = 'u8[32768]{0}', space=vmem, size = 0x8000, scoped, tag = 'input window, operand 5, single buffered']
    #allocation13 [shape = 's32[1]{0}', space=sflag, size = 0x4, scoped, tag = 'scoped memory for gpt2_forward.8']
    #allocation14 [shape = 'u8[512]{0}', space=vmem, size = 0x400, scoped, tag = 'input window, operand 6, single buffered']
    #allocation15 [shape = 'u8[512]{0}', space=vmem, size = 0x400, scoped, tag = 'input window, operand 7, single buffered']
    #allocation16 [shape = 's32[1]{0}', space=sflag, size = 0x4, scoped, tag = 'scoped memory for gpt2_forward.8']
    #allocation17 [shape = 'u8[512]{0}', space=vmem, size = 0x400, scoped, tag = 'input window, operand 8, single buffered']
    #allocation18 [shape = 'u8[4096]{0}', space=vmem, size = 0x1000, scoped, tag = 'output window, operand 0']
    %14 = vsyncpa [#allocation4], 0
    %s15 = scalar_lea.sflag [#allocation4], 1
    %16 = vsyncpa %s15, 0
    %17 = vsyncpa [#allocation7], 0
    %s18 = scalar_lea.sflag [#allocation7], 1
    %19 = vsyncpa %s18, 0
    %20 = vsyncpa [#allocation10], 0
    %s21 = scalar_lea.sflag [#allocation10], 1
    %22 = vsyncpa %s21, 0
    %23 = vsyncpa [#allocation13], 0
    %24 = vsyncpa [#allocation16], 0
    %25 = vsyncpa [#allocation5], 0
    %s26 = scalar_lea.sflag [#allocation5], 1
    %27 = vsyncpa %s26, 0
    loop: start=0, step=1, limit=4
    $region2: #{gpt2_forward.8} parent=1 // loop_pre_header
      _
    $region3: #{gpt2_forward.8} parent=1 // loop_header
      %s29 = sphi 0, %s33
      %p30 = scmp.ge.s32.totalorder %s29, 4
      %s39 = sphi 0, %s41
      %s42 = sphi 0, %s39
      %s43 = sphi 0, %s42
      %s59 = sphi 0, %s43
      %s65 = sphi 0, %s67
      %s68 = sphi 0, %s65
      %s69 = sphi 0, %s68
      %s85 = sphi 0, %s69
      %s91 = sphi 0, %s93
      %s94 = sphi 0, %s91
      %s95 = sphi 0, %s94
      %s111 = sphi 0, %s95
      %s117 = sphi 0, %s119
      %s120 = sphi 0, %s117
      %s121 = sphi 0, %s120
      %s137 = sphi 0, %s121
      %s143 = sphi 0, %s145
      %s146 = sphi 0, %s143
      %s147 = sphi 0, %s146
      %s163 = sphi 0, %s147
      %s167 = sphi 0, %s167
      %s169 = sphi 0, %s167
      %s170 = sphi 0, %s169
      %s184 = sphi 0, %s170
      %s188 = sphi 0, %s188
      %s190 = sphi 0, %s188
      %s191 = sphi 0, %s190
      %s205 = sphi 0, %s191
      %s209 = sphi 0, %s209
      %s211 = sphi 0, %s209
      %s212 = sphi 0, %s211
      %s226 = sphi 0, %s212
      %s230 = sphi 0, %s230
      %s232 = sphi 0, %s230
      %s233 = sphi 0, %s232
      %s247 = sphi 0, %s233
      %s253 = sphi 0, %s255
      %s256 = sphi 0, %s253
      %s257 = sphi 0, %s256
      %s273 = sphi 0, %s257
    $region4: #{gpt2_forward.8} parent=1 // loop_header_branch
      %32 = sbr.rel (%p30) target = $region8
    $region5: #{gpt2_forward.8} parent=1 // loop_body
      %s34 = ssub.s32 %s29, 1
      %s35 = ssub.s32 %s29, 2
      %s36 = sadd.s32 %s29, 1
      %s37 = ssub.s32 %s29, %s36
      %p38 = scmp.eq.s32.totalorder %s37, 0
      %s40 = sadd.s32 %s39, 1
      %s41 = scalar_select %p38, %s39, %s40
      %p44 = pneg %p38
      %p45 = scmp.eq.s32.totalorder %s29, 1
      %p46 = por %p44, %p45
      %p47 = scmp.ne.s32.totalorder %s39, %s42
      %p48 = scmp.eq.s32.totalorder %s29, 0
      %p49 = por %p47, %p48
      %p50 = scmp.ne.s32.totalorder %s39, %s42
      %p51 = scmp.eq.s32.totalorder %s34, 1
      %p52 = por %p50, %p51
      %p53 = scmp.ne.s32.totalorder %s42, %s43
      %p54 = scmp.eq.s32.totalorder %s34, 0
      %p55 = por %p53, %p54
      %p56 = scmp.ne.s32.totalorder %s42, %s43
      %p57 = scmp.eq.s32.totalorder %s35, 1
      %p58 = por %p56, %p57
      %p60 = scmp.ne.s32.totalorder %s43, %s59
      %p61 = scmp.eq.s32.totalorder %s35, 0
      %p62 = por %p60, %p61
      %s63 = ssub.s32 %s29, %s36
      %p64 = scmp.eq.s32.totalorder %s63, 0
      %s66 = sadd.s32 %s65, 1
      %s67 = scalar_select %p64, %s65, %s66
      %p70 = pneg %p64
      %p71 = scmp.eq.s32.totalorder %s29, 1
      %p72 = por %p70, %p71
      %p73 = scmp.ne.s32.totalorder %s65, %s68
      %p74 = scmp.eq.s32.totalorder %s29, 0
      %p75 = por %p73, %p74
      %p76 = scmp.ne.s32.totalorder %s65, %s68
      %p77 = scmp.eq.s32.totalorder %s34, 1
      %p78 = por %p76, %p77
      %p79 = scmp.ne.s32.totalorder %s68, %s69
      %p80 = scmp.eq.s32.totalorder %s34, 0
      %p81 = por %p79, %p80
      %p82 = scmp.ne.s32.totalorder %s68, %s69
      %p83 = scmp.eq.s32.totalorder %s35, 1
      %p84 = por %p82, %p83
      %p86 = scmp.ne.s32.totalorder %s69, %s85
      %p87 = scmp.eq.s32.totalorder %s35, 0
      %p88 = por %p86, %p87
      %s89 = ssub.s32 %s29, %s36
      %p90 = scmp.eq.s32.totalorder %s89, 0
      %s92 = sadd.s32 %s91, 1
      %s93 = scalar_select %p90, %s91, %s92
      %p96 = pneg %p90
      %p97 = scmp.eq.s32.totalorder %s29, 1
      %p98 = por %p96, %p97
      %p99 = scmp.ne.s32.totalorder %s91, %s94
      %p100 = scmp.eq.s32.totalorder %s29, 0
      %p101 = por %p99, %p100
      %p102 = scmp.ne.s32.totalorder %s91, %s94
      %p103 = scmp.eq.s32.totalorder %s34, 1
      %p104 = por %p102, %p103
      %p105 = scmp.ne.s32.totalorder %s94, %s95
      %p106 = scmp.eq.s32.totalorder %s34, 0
      %p107 = por %p105, %p106
      %p108 = scmp.ne.s32.totalorder %s94, %s95
      %p109 = scmp.eq.s32.totalorder %s35, 1
      %p110 = por %p108, %p109
      %p112 = scmp.ne.s32.totalorder %s95, %s111
      %p113 = scmp.eq.s32.totalorder %s35, 0
      %p114 = por %p112, %p113
      %s115 = ssub.s32 %s29, %s36
      %p116 = scmp.eq.s32.totalorder %s115, 0
      %s118 = sadd.s32 %s117, 1
      %s119 = scalar_select %p116, %s117, %s118
      %p122 = pneg %p116
      %p123 = scmp.eq.s32.totalorder %s29, 1
      %p124 = por %p122, %p123
      %p125 = scmp.ne.s32.totalorder %s117, %s120
      %p126 = scmp.eq.s32.totalorder %s29, 0
      %p127 = por %p125, %p126
      %p128 = scmp.ne.s32.totalorder %s117, %s120
      %p129 = scmp.eq.s32.totalorder %s34, 1
      %p130 = por %p128, %p129
      %p131 = scmp.ne.s32.totalorder %s120, %s121
      %p132 = scmp.eq.s32.totalorder %s34, 0
      %p133 = por %p131, %p132
      %p134 = scmp.ne.s32.totalorder %s120, %s121
      %p135 = scmp.eq.s32.totalorder %s35, 1
      %p136 = por %p134, %p135
      %p138 = scmp.ne.s32.totalorder %s121, %s137
      %p139 = scmp.eq.s32.totalorder %s35, 0
      %p140 = por %p138, %p139
      %s141 = ssub.s32 %s29, %s36
      %p142 = scmp.eq.s32.totalorder %s141, 0
      %s144 = sadd.s32 %s143, 1
      %s145 = scalar_select %p142, %s143, %s144
      %p148 = pneg %p142
      %p149 = scmp.eq.s32.totalorder %s29, 1
      %p150 = por %p148, %p149
      %p151 = scmp.ne.s32.totalorder %s143, %s146
      %p152 = scmp.eq.s32.totalorder %s29, 0
      %p153 = por %p151, %p152
      %p154 = scmp.ne.s32.totalorder %s143, %s146
      %p155 = scmp.eq.s32.totalorder %s34, 1
      %p156 = por %p154, %p155
      %p157 = scmp.ne.s32.totalorder %s146, %s147
      %p158 = scmp.eq.s32.totalorder %s34, 0
      %p159 = por %p157, %p158
      %p160 = scmp.ne.s32.totalorder %s146, %s147
      %p161 = scmp.eq.s32.totalorder %s35, 1
      %p162 = por %p160, %p161
      %p164 = scmp.ne.s32.totalorder %s147, %s163
      %p165 = scmp.eq.s32.totalorder %s35, 0
      %p166 = por %p164, %p165
      %s168 = sadd.s32 %s167, 1
      %p171 = scmp.eq.s32.totalorder %s29, 1
      %p172 = scmp.ne.s32.totalorder %s167, %s169
      %p173 = scmp.eq.s32.totalorder %s29, 0
      %p174 = por %p172, %p173
      %p175 = scmp.ne.s32.totalorder %s167, %s169
      %p176 = scmp.eq.s32.totalorder %s34, 1
      %p177 = por %p175, %p176
      %p178 = scmp.ne.s32.totalorder %s169, %s170
      %p179 = scmp.eq.s32.totalorder %s34, 0
      %p180 = por %p178, %p179
      %p181 = scmp.ne.s32.totalorder %s169, %s170
      %p182 = scmp.eq.s32.totalorder %s35, 1
      %p183 = por %p181, %p182
      %p185 = scmp.ne.s32.totalorder %s170, %s184
      %p186 = scmp.eq.s32.totalorder %s35, 0
      %p187 = por %p185, %p186
      %s189 = sadd.s32 %s188, 1
      %p192 = scmp.eq.s32.totalorder %s29, 1
      %p193 = scmp.ne.s32.totalorder %s188, %s190
      %p194 = scmp.eq.s32.totalorder %s29, 0
      %p195 = por %p193, %p194
      %p196 = scmp.ne.s32.totalorder %s188, %s190
      %p197 = scmp.eq.s32.totalorder %s34, 1
      %p198 = por %p196, %p197
      %p199 = scmp.ne.s32.totalorder %s190, %s191
      %p200 = scmp.eq.s32.totalorder %s34, 0
      %p201 = por %p199, %p200
      %p202 = scmp.ne.s32.totalorder %s190, %s191
      %p203 = scmp.eq.s32.totalorder %s35, 1
      %p204 = por %p202, %p203
      %p206 = scmp.ne.s32.totalorder %s191, %s205
      %p207 = scmp.eq.s32.totalorder %s35, 0
      %p208 = por %p206, %p207
      %s210 = sadd.s32 %s209, 1
      %p213 = scmp.eq.s32.totalorder %s29, 1
      %p214 = scmp.ne.s32.totalorder %s209, %s211
      %p215 = scmp.eq.s32.totalorder %s29, 0
      %p216 = por %p214, %p215
      %p217 = scmp.ne.s32.totalorder %s209, %s211
      %p218 = scmp.eq.s32.totalorder %s34, 1
      %p219 = por %p217, %p218
      %p220 = scmp.ne.s32.totalorder %s211, %s212
      %p221 = scmp.eq.s32.totalorder %s34, 0
      %p222 = por %p220, %p221
      %p223 = scmp.ne.s32.totalorder %s211, %s212
      %p224 = scmp.eq.s32.totalorder %s35, 1
      %p225 = por %p223, %p224
      %p227 = scmp.ne.s32.totalorder %s212, %s226
      %p228 = scmp.eq.s32.totalorder %s35, 0
      %p229 = por %p227, %p228
      %s231 = sadd.s32 %s230, 1
      %p234 = scmp.eq.s32.totalorder %s29, 1
      %p235 = scmp.ne.s32.totalorder %s230, %s232
      %p236 = scmp.eq.s32.totalorder %s29, 0
      %p237 = por %p235, %p236
      %p238 = scmp.ne.s32.totalorder %s230, %s232
      %p239 = scmp.eq.s32.totalorder %s34, 1
      %p240 = por %p238, %p239
      %p241 = scmp.ne.s32.totalorder %s232, %s233
      %p242 = scmp.eq.s32.totalorder %s34, 0
      %p243 = por %p241, %p242
      %p244 = scmp.ne.s32.totalorder %s232, %s233
      %p245 = scmp.eq.s32.totalorder %s35, 1
      %p246 = por %p244, %p245
      %p248 = scmp.ne.s32.totalorder %s233, %s247
      %p249 = scmp.eq.s32.totalorder %s35, 0
      %p250 = por %p248, %p249
      %s251 = ssub.s32 %s29, %s36
      %p252 = scmp.eq.s32.totalorder %s251, 0
      %s254 = sadd.s32 %s253, 1
      %s255 = scalar_select %p252, %s253, %s254
      %p258 = pneg %p252
      %p259 = scmp.eq.s32.totalorder %s29, 1
      %p260 = por %p258, %p259
      %p261 = scmp.ne.s32.totalorder %s253, %s256
      %p262 = scmp.eq.s32.totalorder %s29, 0
      %p263 = por %p261, %p262
      %p264 = scmp.ne.s32.totalorder %s253, %s256
      %p265 = scmp.eq.s32.totalorder %s34, 1
      %p266 = por %p264, %p265
      %p267 = scmp.ne.s32.totalorder %s256, %s257
      %p268 = scmp.eq.s32.totalorder %s34, 0
      %p269 = por %p267, %p268
      %p270 = scmp.ne.s32.totalorder %s256, %s257
      %p271 = scmp.eq.s32.totalorder %s35, 1
      %p272 = por %p270, %p271
      %p274 = scmp.ne.s32.totalorder %s257, %s273
      %p275 = scmp.eq.s32.totalorder %s35, 0
      %p276 = por %p274, %p275
      %p277 = scmp.le.s32.totalorder 1, %s29
      %p278 = scmp.lt.s32.totalorder %s29, 3
      %p279 = pnand %p277, %p278
      %p280 = pneg %p279
      // Predicated region
      $region9: #{gpt2_forward.8} parent=5 // pred_check
        _
      $region10: #{gpt2_forward.8} parent=5 // pred_check_branch
        %282 = sbr.rel (%p279) target = $region12
      $region11: #{gpt2_forward.8} parent=5 // pred_region
        %s283 = ssub.s32 %s29, 1
        // Predicated region
        $region13: #{gpt2_forward.8} parent=11 // pred_check
          %p284 = pneg %p180
        $region14: #{gpt2_forward.8} parent=11 // pred_check_branch
          %286 = sbr.rel (%p284) target = $region16
        $region15: #{gpt2_forward.8} parent=11 // pred_region
          %s288 = ssub.s32 1024, 1024
          %289 = vsyncadd [#allocation13], %s288
          %s290 = sshll.u32 [#allocation12], 4
          %s291 = int_to_ptr.vmem [resolvable:$true] %s290
          %296 = dma.hbm_to_vmem [thread:$0]  %s5, 1024, %s291, [#allocation13], 64, 64, 4
        $region16: #{gpt2_forward.8} parent=11 // pred_fallthru
          _
        // Predicated region
        $region17: #{gpt2_forward.8} parent=11 // pred_check
          %p297 = pneg %p201
        $region18: #{gpt2_forward.8} parent=11 // pred_check_branch
          %299 = sbr.rel (%p297) target = $region20
        $region19: #{gpt2_forward.8} parent=11 // pred_region
          %s301 = ssub.s32 16, 16
          %302 = vsyncadd [#allocation13], %s301
          %s304 = sshll.u32 [#allocation14], 4
          %s305 = int_to_ptr.vmem [resolvable:$true] %s304
          %307 = dma.hbm_to_vmem [thread:$0]  %s6, 16, %s305, [#allocation13]
        $region20: #{gpt2_forward.8} parent=11 // pred_fallthru
          _
        // Predicated region
        $region21: #{gpt2_forward.8} parent=11 // pred_check
          %p308 = pneg %p222
        $region22: #{gpt2_forward.8} parent=11 // pred_check_branch
          %310 = sbr.rel (%p308) target = $region24
        $region23: #{gpt2_forward.8} parent=11 // pred_region
          %s312 = ssub.s32 16, 16
          %313 = vsyncadd [#allocation16], %s312
          %s315 = sshll.u32 [#allocation15], 4
          %s316 = int_to_ptr.vmem [resolvable:$true] %s315
          %318 = dma.hbm_to_vmem [thread:$0]  %s7, 16, %s316, [#allocation16]
        $region24: #{gpt2_forward.8} parent=11 // pred_fallthru
          _
        // Predicated region
        $region25: #{gpt2_forward.8} parent=11 // pred_check
          %p319 = pneg %p243
        $region26: #{gpt2_forward.8} parent=11 // pred_check_branch
          %321 = sbr.rel (%p319) target = $region28
        $region27: #{gpt2_forward.8} parent=11 // pred_region
          %s323 = ssub.s32 16, 16
          %324 = vsyncadd [#allocation16], %s323
          %s326 = sshll.u32 [#allocation17], 4
          %s327 = int_to_ptr.vmem [resolvable:$true] %s326
          %329 = dma.hbm_to_vmem [thread:$0]  %s8, 16, %s327, [#allocation16]
        $region28: #{gpt2_forward.8} parent=11 // pred_fallthru
          _
      $region12: #{gpt2_forward.8} parent=5 // pred_fallthru
        _
      %p330 = scmp.lt.s32.totalorder %s29, 2
      // Predicated region
      $region29: #{gpt2_forward.8} parent=5 // pred_check
        %p331 = pneg %p330
      $region30: #{gpt2_forward.8} parent=5 // pred_check_branch
        %333 = sbr.rel (%p331) target = $region32
      $region31: #{gpt2_forward.8} parent=5 // pred_region
        // Predicated region
        $region33: #{gpt2_forward.8} parent=31 // pred_check
          %p334 = pneg %p49
        $region34: #{gpt2_forward.8} parent=31 // pred_check_branch
          %336 = sbr.rel (%p334) target = $region36
        $region35: #{gpt2_forward.8} parent=31 // pred_region
          %s337 = sand.u32 %s39, 1
          %s338 = scalar_lea.sflag [#allocation4], %s337
          %s339 = sand.u32 %s39, 1
          %s340 = smul.addr %s339, 4
          %s341 = scalar_lea.vmem [#allocation3], %s340
          %s343 = ssub.s32 64, 64
          %344 = vsyncadd %s338, %s343
          %s345 = smul.addr %s29, 64
          %s346 = scalar_lea.hbm %s0, %s345
          %s348 = sshll.u32 %s341, 4
          %s349 = int_to_ptr.vmem [resolvable:$true] %s348
          %351 = dma.hbm_to_vmem [thread:$0]  %s346, 64, %s349, %s338
        $region36: #{gpt2_forward.8} parent=31 // pred_fallthru
          _
        // Predicated region
        $region37: #{gpt2_forward.8} parent=31 // pred_check
          %p352 = pneg %p75
        $region38: #{gpt2_forward.8} parent=31 // pred_check_branch
          %354 = sbr.rel (%p352) target = $region40
        $region39: #{gpt2_forward.8} parent=31 // pred_region
          %s355 = sand.u32 %s29, 1
          %s356 = scalar_lea.sflag [#allocation7], %s355
          %s357 = sand.u32 %s65, 1
          %s358 = smul.addr %s357, 4
          %s359 = scalar_lea.vmem [#allocation6], %s358
          %s361 = ssub.s32 64, 64
          %362 = vsyncadd %s356, %s361
          %s363 = smul.addr %s29, 5
          %s364 = sadd.s32 3, %s363
          %s365 = smul.addr %s364, 64
          %s366 = scalar_lea.hbm %s1, %s365
          %s368 = sshll.u32 %s359, 4
          %s369 = int_to_ptr.vmem [resolvable:$true] %s368
          %371 = dma.hbm_to_vmem [thread:$0]  %s366, 64, %s369, %s356
        $region40: #{gpt2_forward.8} parent=31 // pred_fallthru
          _
        // Predicated region
        $region41: #{gpt2_forward.8} parent=31 // pred_check
          %p372 = pneg %p101
        $region42: #{gpt2_forward.8} parent=31 // pred_check_branch
          %374 = sbr.rel (%p372) target = $region44
        $region43: #{gpt2_forward.8} parent=31 // pred_region
          %s375 = sand.u32 %s29, 1
          %s376 = scalar_lea.sflag [#allocation7], %s375
          %s377 = sand.u32 %s91, 1
          %s378 = smul.addr %s377, 4
          %s379 = scalar_lea.vmem [#allocation8], %s378
          %s381 = ssub.s32 64, 64
          %382 = vsyncadd %s376, %s381
          %s383 = smul.addr %s29, 5
          %s384 = sadd.s32 4, %s383
          %s385 = smul.addr %s384, 64
          %s386 = scalar_lea.hbm %s2, %s385
          %s388 = sshll.u32 %s379, 4
          %s389 = int_to_ptr.vmem [resolvable:$true] %s388
          %391 = dma.hbm_to_vmem [thread:$0]  %s386, 64, %s389, %s376
        $region44: #{gpt2_forward.8} parent=31 // pred_fallthru
          _
        // Predicated region
        $region45: #{gpt2_forward.8} parent=31 // pred_check
          %p392 = pneg %p127
        $region46: #{gpt2_forward.8} parent=31 // pred_check_branch
          %394 = sbr.rel (%p392) target = $region48
        $region47: #{gpt2_forward.8} parent=31 // pred_region
          %s395 = sand.u32 %s29, 1
          %s396 = scalar_lea.sflag [#allocation10], %s395
          %s397 = sand.u32 %s117, 1
          %s398 = scalar_lea.vmem [#allocation9], %s397
          %s400 = ssub.s32 16, 16
          %401 = vsyncadd %s396, %s400
          %s402 = smul.addr %s29, 16
          %s403 = scalar_lea.hbm %s3, %s402
          %s405 = sshll.u32 %s398, 4
          %s406 = int_to_ptr.vmem [resolvable:$true] %s405
          %408 = dma.hbm_to_vmem [thread:$0]  %s403, 16, %s406, %s396
        $region48: #{gpt2_forward.8} parent=31 // pred_fallthru
          _
        // Predicated region
        $region49: #{gpt2_forward.8} parent=31 // pred_check
          %p409 = pneg %p153
        $region50: #{gpt2_forward.8} parent=31 // pred_check_branch
          %411 = sbr.rel (%p409) target = $region52
        $region51: #{gpt2_forward.8} parent=31 // pred_region
          %s412 = sand.u32 %s29, 1
          %s413 = scalar_lea.sflag [#allocation10], %s412
          %s414 = sand.u32 %s143, 1
          %s415 = smul.addr %s414, 4
          %s416 = scalar_lea.vmem [#allocation11], %s415
          %s418 = ssub.s32 64, 64
          %419 = vsyncadd %s413, %s418
          %s420 = smul.addr %s29, 64
          %s421 = scalar_lea.hbm %s4, %s420
          %s423 = sshll.u32 %s416, 4
          %s424 = int_to_ptr.vmem [resolvable:$true] %s423
          %426 = dma.hbm_to_vmem [thread:$0]  %s421, 64, %s424, %s413
        $region52: #{gpt2_forward.8} parent=31 // pred_fallthru
          _
      $region32: #{gpt2_forward.8} parent=5 // pred_fallthru
        _
      %p427 = scmp.le.s32.totalorder 1, %s29
      %p428 = scmp.lt.s32.totalorder %s29, 3
      %p429 = pnand %p427, %p428
      %p430 = pneg %p429
      // Predicated region
      $region53: #{gpt2_forward.8} parent=5 // pred_check
        _
      $region54: #{gpt2_forward.8} parent=5 // pred_check_branch
        %432 = sbr.rel (%p429) target = $region56
      $region55: #{gpt2_forward.8} parent=5 // pred_region
        %s433 = ssub.s32 %s29, 1
        %s434 = sand.u32 %s42, 1
        %s435 = scalar_lea.sflag [#allocation4], %s434
        %s436 = sand.u32 %s42, 1
        %s437 = smul.addr %s436, 4
        %s438 = scalar_lea.vmem [#allocation3], %s437
        // Predicated region
        $region57: #{gpt2_forward.8} parent=55 // pred_check
          %p439 = pneg %p55
        $region58: #{gpt2_forward.8} parent=55 // pred_check_branch
          %441 = sbr.rel (%p439) target = $region60
        $region59: #{gpt2_forward.8} parent=55 // pred_region
          %442 = dma.done %s435, 64
        $region60: #{gpt2_forward.8} parent=55 // pred_fallthru
          _
        %s443 = sand.u32 %s34, 1
        %s444 = scalar_lea.sflag [#allocation7], %s443
        %s445 = sand.u32 %s68, 1
        %s446 = smul.addr %s445, 4
        %s447 = scalar_lea.vmem [#allocation6], %s446
        // Predicated region
        $region61: #{gpt2_forward.8} parent=55 // pred_check
          %p448 = pneg %p81
        $region62: #{gpt2_forward.8} parent=55 // pred_check_branch
          %450 = sbr.rel (%p448) target = $region64
        $region63: #{gpt2_forward.8} parent=55 // pred_region
          %451 = dma.done %s444, 64
        $region64: #{gpt2_forward.8} parent=55 // pred_fallthru
          _
        %s452 = sand.u32 %s34, 1
        %s453 = scalar_lea.sflag [#allocation7], %s452
        %s454 = sand.u32 %s94, 1
        %s455 = smul.addr %s454, 4
        %s456 = scalar_lea.vmem [#allocation8], %s455
        // Predicated region
        $region65: #{gpt2_forward.8} parent=55 // pred_check
          %p457 = pneg %p107
        $region66: #{gpt2_forward.8} parent=55 // pred_check_branch
          %459 = sbr.rel (%p457) target = $region68
        $region67: #{gpt2_forward.8} parent=55 // pred_region
          %460 = dma.done %s453, 64
        $region68: #{gpt2_forward.8} parent=55 // pred_fallthru
          _
        %s461 = sand.u32 %s34, 1
        %s462 = scalar_lea.sflag [#allocation10], %s461
        %s463 = sand.u32 %s120, 1
        %s464 = scalar_lea.vmem [#allocation9], %s463
        // Predicated region
        $region69: #{gpt2_forward.8} parent=55 // pred_check
          %p465 = pneg %p133
        $region70: #{gpt2_forward.8} parent=55 // pred_check_branch
          %467 = sbr.rel (%p465) target = $region72
        $region71: #{gpt2_forward.8} parent=55 // pred_region
          %468 = dma.done %s462, 16
        $region72: #{gpt2_forward.8} parent=55 // pred_fallthru
          _
        %s469 = sand.u32 %s34, 1
        %s470 = scalar_lea.sflag [#allocation10], %s469
        %s471 = sand.u32 %s146, 1
        %s472 = smul.addr %s471, 4
        %s473 = scalar_lea.vmem [#allocation11], %s472
        // Predicated region
        $region73: #{gpt2_forward.8} parent=55 // pred_check
          %p474 = pneg %p159
        $region74: #{gpt2_forward.8} parent=55 // pred_check_branch
          %476 = sbr.rel (%p474) target = $region76
        $region75: #{gpt2_forward.8} parent=55 // pred_region
          %477 = dma.done %s470, 64
        $region76: #{gpt2_forward.8} parent=55 // pred_fallthru
          _
        // Predicated region
        $region77: #{gpt2_forward.8} parent=55 // pred_check
          %p478 = pneg %p180
        $region78: #{gpt2_forward.8} parent=55 // pred_check_branch
          %480 = sbr.rel (%p478) target = $region80
        $region79: #{gpt2_forward.8} parent=55 // pred_region
          %481 = dma.done [#allocation13], 1024
        $region80: #{gpt2_forward.8} parent=55 // pred_fallthru
          _
        // Predicated region
        $region81: #{gpt2_forward.8} parent=55 // pred_check
          %p482 = pneg %p201
        $region82: #{gpt2_forward.8} parent=55 // pred_check_branch
          %484 = sbr.rel (%p482) target = $region84
        $region83: #{gpt2_forward.8} parent=55 // pred_region
          %485 = dma.done [#allocation13], 16
        $region84: #{gpt2_forward.8} parent=55 // pred_fallthru
          _
        // Predicated region
        $region85: #{gpt2_forward.8} parent=55 // pred_check
          %p486 = pneg %p222
        $region86: #{gpt2_forward.8} parent=55 // pred_check_branch
          %488 = sbr.rel (%p486) target = $region88
        $region87: #{gpt2_forward.8} parent=55 // pred_region
          %489 = dma.done [#allocation16], 16
        $region88: #{gpt2_forward.8} parent=55 // pred_fallthru
          _
        // Predicated region
        $region89: #{gpt2_forward.8} parent=55 // pred_check
          %p490 = pneg %p243
        $region90: #{gpt2_forward.8} parent=55 // pred_check_branch
          %492 = sbr.rel (%p490) target = $region92
        $region91: #{gpt2_forward.8} parent=55 // pred_region
          %493 = dma.done [#allocation16], 16
        $region92: #{gpt2_forward.8} parent=55 // pred_fallthru
          _
        %s494 = sand.u32 %s42, 1
        %s495 = scalar_lea.sflag [#allocation4], %s494
        %s496 = sand.u32 %s42, 1
        %s497 = smul.addr %s496, 4
        %s498 = scalar_lea.vmem [#allocation3], %s497
        %p499 = pneg %p55
        %p500 = pneg %p52
        %s501 = sand.u32 %s34, 1
        %s502 = scalar_lea.sflag [#allocation7], %s501
        %s503 = sand.u32 %s68, 1
        %s504 = smul.addr %s503, 4
        %s505 = scalar_lea.vmem [#allocation6], %s504
        %p506 = pneg %p81
        %p507 = pneg %p78
        %s508 = sand.u32 %s34, 1
        %s509 = scalar_lea.sflag [#allocation7], %s508
        %s510 = sand.u32 %s94, 1
        %s511 = smul.addr %s510, 4
        %s512 = scalar_lea.vmem [#allocation8], %s511
        %p513 = pneg %p107
        %p514 = pneg %p104
        %s515 = sand.u32 %s34, 1
        %s516 = scalar_lea.sflag [#allocation10], %s515
        %s517 = sand.u32 %s120, 1
        %s518 = scalar_lea.vmem [#allocation9], %s517
        %p519 = pneg %p133
        %p520 = pneg %p130
        %s521 = sand.u32 %s34, 1
        %s522 = scalar_lea.sflag [#allocation10], %s521
        %s523 = sand.u32 %s146, 1
        %s524 = smul.addr %s523, 4
        %s525 = scalar_lea.vmem [#allocation11], %s524
        %p526 = pneg %p159
        %p527 = pneg %p156
        %p528 = pneg %p180
        %p529 = pneg %p177
        %p530 = pneg %p201
        %p531 = pneg %p198
        %p532 = pneg %p222
        %p533 = pneg %p219
        %p534 = pneg %p243
        %p535 = pneg %p240
        %p536 = pneg %p269
        %p537 = pneg %p266
        %s538 = sand.u32 %s256, 1
        %s539 = scalar_lea.sflag [#allocation5], %s538
        %s540 = sand.u32 %s256, 1
        %s541 = smul.addr %s540, 4
        %s542 = scalar_lea.vmem [#allocation18], %s541
        %v544 = vld [vmem:[%s438] sm:$0xf]
        %v545 = vld [vmem:[%s447] sm:$0xf]
        %v546 = vld [vmem:[%s456] sm:$0xf]
        %v547 = vld [vmem:[%s464] sm:$0x1]
        %v549 = vlaneseq
        %v550 = vshrl.u32 %v549, 7
        %v551 = vsub.s32 0, %v550
        %v552 = vrot.slane %v547, %v551
        %vm554 = vcmask 130048
        %v556 = vsel %vm554, %v544, 0
        %v559 = vsel %vm554, %v545, 0
        %561 = vmatprep.subr.bf16.mxu0 0
        %562 = vmatpush1.bf16.xpose.msra.mxu0 %v559
        %563 = vmatprep.subr.bf16.mxu0 0
        %564 = vmatpush1.bf16.xpose.msra.mxu0 0
        %565 = vmatprep.subr.bf16.mxu0 0
        %566 = vmatpush1.bf16.xpose.msra.mxu0 0
        %567 = vmatprep.subr.bf16.mxu0 0
        %568 = vmatpush1.bf16.xpose.msra.mxu0 0
        %569 = vmatprep.subr.bf16.mxu0 0
        %570 = vmatpush1.bf16.xpose.msra.mxu0 0
        %571 = vmatprep.subr.bf16.mxu0 0
        %572 = vmatpush1.bf16.xpose.msra.mxu0 0
        %573 = vmatprep.subr.bf16.mxu0 0
        %574 = vmatpush1.bf16.xpose.msra.mxu0 0
        %575 = vmatprep.subr.bf16.mxu0 0
        %576 = vmatpush1.bf16.xpose.msra.mxu0 0
        %577 = vmatprep.subr.bf16.mxu0 0
        %578 = vmatpush1.bf16.xpose.msra.mxu0 0
        %579 = vmatprep.subr.bf16.mxu0 0
        %580 = vmatpush1.bf16.xpose.msra.mxu0 0
        %581 = vmatprep.subr.bf16.mxu0 0
        %582 = vmatpush1.bf16.xpose.msra.mxu0 0
        %583 = vmatprep.subr.bf16.mxu0 0
        %584 = vmatpush1.bf16.xpose.msra.mxu0 0
        %585 = vmatprep.subr.bf16.mxu0 0
        %586 = vmatpush1.bf16.xpose.msra.mxu0 0
        %587 = vmatprep.subr.bf16.mxu0 0
        %588 = vmatpush1.bf16.xpose.msra.mxu0 0
        %589 = vmatprep.subr.bf16.mxu0 0
        %590 = vmatpush1.bf16.xpose.msra.mxu0 0
        %591 = vmatprep.subr.bf16.mxu0 0
        %592 = vmatpush1.bf16.xpose.msra.mxu0 0
        %593 = vmatprep.mubr.bf16.mxu0 0
        %594 = vmatmul.mubr.bf16.gmra.mrb[0].mxu0 %v556
        %v595 = vpop.f32.mrb[0].mxu0
        %v596 = vadd.f32 %v552, %v595
        %v597 = vpop.f32.mrb[0].mxu0
        %v598 = vpop.f32.mrb[0].mxu0
        %v599 = vpop.f32.mrb[0].mxu0
        %600 = vdwg.mxu0
        %vm601 = vcmask 64512
        %v602 = vsel %vm601, %v596, -inf
        %603 = vmax.xlane.f32.xlu0 %v602
        %v604 = vpop.xlane.xlu0 %603
        %v605 = vsub.f32 %v596, %v604
        %v606 = vmul.f32 %v605, 1.442695
        %v607 = vpow.pop %v606
        %v608 = vsel %vm601, %v607, 0.0
        %609 = vadd.xlane.f32.xlu0 %v608
        %v610 = vpop.xlane.xlu0 %609
        %v611 = vrcp.pop %v610
        %v612 = vmul.f32 %v607, %v611
        %v613 = vpack.c.bf16 %v612, %v612
        %v615 = vsel %vm601, %v613, 0
        %vm617 = vcmask 1043456
        %v619 = vsel %vm617, %v546, 0
        %621 = vmatprep.subr.bf16.mxu0 0
        %622 = vmatpush1.bf16.msra.mxu0 %v619
        %623 = vmatprep.subr.bf16.mxu0 0
        %624 = vmatpush1.bf16.msra.mxu0 0
        %625 = vmatprep.subr.bf16.mxu0 0
        %626 = vmatpush1.bf16.msra.mxu0 0
        %627 = vmatprep.subr.bf16.mxu0 0
        %628 = vmatpush1.bf16.msra.mxu0 0
        %629 = vmatprep.subr.bf16.mxu0 0
        %630 = vmatpush1.bf16.msra.mxu0 0
        %631 = vmatprep.subr.bf16.mxu0 0
        %632 = vmatpush1.bf16.msra.mxu0 0
        %633 = vmatprep.subr.bf16.mxu0 0
        %634 = vmatpush1.bf16.msra.mxu0 0
        %635 = vmatprep.subr.bf16.mxu0 0
        %636 = vmatpush1.bf16.msra.mxu0 0
        %637 = vmatprep.subr.bf16.mxu0 0
        %638 = vmatpush1.bf16.msra.mxu0 0
        %639 = vmatprep.subr.bf16.mxu0 0
        %640 = vmatpush1.bf16.msra.mxu0 0
        %641 = vmatprep.subr.bf16.mxu0 0
        %642 = vmatpush1.bf16.msra.mxu0 0
        %643 = vmatprep.subr.bf16.mxu0 0
        %644 = vmatpush1.bf16.msra.mxu0 0
        %645 = vmatprep.subr.bf16.mxu0 0
        %646 = vmatpush1.bf16.msra.mxu0 0
        %647 = vmatprep.subr.bf16.mxu0 0
        %648 = vmatpush1.bf16.msra.mxu0 0
        %649 = vmatprep.subr.bf16.mxu0 0
        %650 = vmatpush1.bf16.msra.mxu0 0
        %651 = vmatprep.subr.bf16.mxu0 0
        %652 = vmatpush1.bf16.msra.mxu0 0
        %653 = vmatprep.mubr.bf16.mxu0 0
        %654 = vmatmul.mubr.bf16.gmra.mrb[0].mxu0 %v615
        %v655 = vpop.f32.mrb[0].mxu0
        %v656 = vadd.f32 0.0, %v655
        %v657 = vpop.f32.mrb[0].mxu0
        %v658 = vpop.f32.mrb[0].mxu0
        %v659 = vpop.f32.mrb[0].mxu0
        %660 = vdwg.mxu0
        %661 = vst.msk [vmem:[#allocation2] sm:$0xff] %vm554, %v656
        %v663 = vunpack.c.l.b16 %v544
        %v664 = vpack.c.b16 %v663, %v663
        %665 = vrot.lane.b32.xlu0 %v664, 112
        %v666 = vpop.permute.xlu0 %665
        %v668 = vunpack.c.l.b16 %v545
        %v669 = vpack.c.b16 %v668, %v668
        %670 = vrot.lane.b32.xlu0 %v669, 112
        %v671 = vpop.permute.xlu0 %670
        %v673 = vsel %vm554, %v666, 0
        %v676 = vsel %vm554, %v671, 0
        %678 = vmatprep.subr.bf16.mxu0 0
        %679 = vmatpush1.bf16.xpose.msra.mxu0 %v676
        %680 = vmatprep.subr.bf16.mxu0 0
        %681 = vmatpush1.bf16.xpose.msra.mxu0 0
        %682 = vmatprep.subr.bf16.mxu0 0
        %683 = vmatpush1.bf16.xpose.msra.mxu0 0
        %684 = vmatprep.subr.bf16.mxu0 0
        %685 = vmatpush1.bf16.xpose.msra.mxu0 0
        %686 = vmatprep.subr.bf16.mxu0 0
        %687 = vmatpush1.bf16.xpose.msra.mxu0 0
        %688 = vmatprep.subr.bf16.mxu0 0
        %689 = vmatpush1.bf16.xpose.msra.mxu0 0
        %690 = vmatprep.subr.bf16.mxu0 0
        %691 = vmatpush1.bf16.xpose.msra.mxu0 0
        %692 = vmatprep.subr.bf16.mxu0 0
        %693 = vmatpush1.bf16.xpose.msra.mxu0 0
        %694 = vmatprep.subr.bf16.mxu0 0
        %695 = vmatpush1.bf16.xpose.msra.mxu0 0
        %696 = vmatprep.subr.bf16.mxu0 0
        %697 = vmatpush1.bf16.xpose.msra.mxu0 0
        %698 = vmatprep.subr.bf16.mxu0 0
        %699 = vmatpush1.bf16.xpose.msra.mxu0 0
        %700 = vmatprep.subr.bf16.mxu0 0
        %701 = vmatpush1.bf16.xpose.msra.mxu0 0
        %702 = vmatprep.subr.bf16.mxu0 0
        %703 = vmatpush1.bf16.xpose.msra.mxu0 0
        %704 = vmatprep.subr.bf16.mxu0 0
        %705 = vmatpush1.bf16.xpose.msra.mxu0 0
        %706 = vmatprep.subr.bf16.mxu0 0
        %707 = vmatpush1.bf16.xpose.msra.mxu0 0
        %708 = vmatprep.subr.bf16.mxu0 0
        %709 = vmatpush1.bf16.xpose.msra.mxu0 0
        %710 = vmatprep.mubr.bf16.mxu0 0
        %711 = vmatmul.mubr.bf16.gmra.mrb[0].mxu0 %v673
        %v712 = vpop.f32.mrb[0].mxu0
        %v713 = vadd.f32 %v552, %v712
        %v714 = vpop.f32.mrb[0].mxu0
        %v715 = vpop.f32.mrb[0].mxu0
        %v716 = vpop.f32.mrb[0].mxu0
        %717 = vdwg.mxu0
        %v718 = vsel %vm601, %v713, -inf
        %719 = vmax.xlane.f32.xlu0 %v718
        %v720 = vpop.xlane.xlu0 %719
        %v721 = vsub.f32 %v713, %v720
        %v722 = vmul.f32 %v721, 1.442695
        %v723 = vpow.pop %v722
        %v724 = vsel %vm601, %v723, 0.0
        %725 = vadd.xlane.f32.xlu0 %v724
        %v726 = vpop.xlane.xlu0 %725
        %v727 = vrcp.pop %v726
        %v728 = vmul.f32 %v723, %v727
        %v729 = vpack.c.bf16 %v728, %v728
        %v731 = vunpack.c.l.b16 %v546
        %v732 = vpack.c.b16 %v731, %v731
        %733 = vrot.lane.b32.xlu0 %v732, 112
        %v734 = vpop.permute.xlu0 %733
        %v736 = vsel %vm601, %v729, 0
        %v739 = vsel %vm617, %v734, 0
        %741 = vmatprep.subr.bf16.mxu0 0
        %742 = vmatpush1.bf16.msra.mxu0 %v739
        %743 = vmatprep.subr.bf16.mxu0 0
        %744 = vmatpush1.bf16.msra.mxu0 0
        %745 = vmatprep.subr.bf16.mxu0 0
        %746 = vmatpush1.bf16.msra.mxu0 0
        %747 = vmatprep.subr.bf16.mxu0 0
        %748 = vmatpush1.bf16.msra.mxu0 0
        %749 = vmatprep.subr.bf16.mxu0 0
        %750 = vmatpush1.bf16.msra.mxu0 0
        %751 = vmatprep.subr.bf16.mxu0 0
        %752 = vmatpush1.bf16.msra.mxu0 0
        %753 = vmatprep.subr.bf16.mxu0 0
        %754 = vmatpush1.bf16.msra.mxu0 0
        %755 = vmatprep.subr.bf16.mxu0 0
        %756 = vmatpush1.bf16.msra.mxu0 0
        %757 = vmatprep.subr.bf16.mxu0 0
        %758 = vmatpush1.bf16.msra.mxu0 0
        %759 = vmatprep.subr.bf16.mxu0 0
        %760 = vmatpush1.bf16.msra.mxu0 0
        %761 = vmatprep.subr.bf16.mxu0 0
        %762 = vmatpush1.bf16.msra.mxu0 0
        %763 = vmatprep.subr.bf16.mxu0 0
        %764 = vmatpush1.bf16.msra.mxu0 0
        %765 = vmatprep.subr.bf16.mxu0 0
        %766 = vmatpush1.bf16.msra.mxu0 0
        %767 = vmatprep.subr.bf16.mxu0 0
        %768 = vmatpush1.bf16.msra.mxu0 0
        %769 = vmatprep.subr.bf16.mxu0 0
        %770 = vmatpush1.bf16.msra.mxu0 0
        %771 = vmatprep.subr.bf16.mxu0 0
        %772 = vmatpush1.bf16.msra.mxu0 0
        %773 = vmatprep.mubr.bf16.mxu0 0
        %774 = vmatmul.mubr.bf16.gmra.mrb[0].mxu0 %v736
        %v775 = vpop.f32.mrb[0].mxu0
        %v776 = vadd.f32 0.0, %v775
        %v777 = vpop.f32.mrb[0].mxu0
        %v778 = vpop.f32.mrb[0].mxu0
        %v779 = vpop.f32.mrb[0].mxu0
        %780 = vdwg.mxu0
        %782 = vrot.lane.b32.xlu0 %v776, 16
        %v783 = vpop.permute.xlu0 %782
        %vm785 = vcmask 261248
        %786 = vst.msk [vmem:[#allocation2] sm:$0xff] %vm785, %v783
        %787 = vrot.lane.b32.xlu0 %v664, 96
        %v788 = vpop.permute.xlu0 %787
        %789 = vrot.lane.b32.xlu0 %v669, 96
        %v790 = vpop.permute.xlu0 %789
        %v792 = vsel %vm554, %v788, 0
        %v795 = vsel %vm554, %v790, 0
        %797 = vmatprep.subr.bf16.mxu0 0
        %798 = vmatpush1.bf16.xpose.msra.mxu0 %v795
        %799 = vmatprep.subr.bf16.mxu0 0
        %800 = vmatpush1.bf16.xpose.msra.mxu0 0
        %801 = vmatprep.subr.bf16.mxu0 0
        %802 = vmatpush1.bf16.xpose.msra.mxu0 0
        %803 = vmatprep.subr.bf16.mxu0 0
        %804 = vmatpush1.bf16.xpose.msra.mxu0 0
        %805 = vmatprep.subr.bf16.mxu0 0
        %806 = vmatpush1.bf16.xpose.msra.mxu0 0
        %807 = vmatprep.subr.bf16.mxu0 0
        %808 = vmatpush1.bf16.xpose.msra.mxu0 0
        %809 = vmatprep.subr.bf16.mxu0 0
        %810 = vmatpush1.bf16.xpose.msra.mxu0 0
        %811 = vmatprep.subr.bf16.mxu0 0
        %812 = vmatpush1.bf16.xpose.msra.mxu0 0
        %813 = vmatprep.subr.bf16.mxu0 0
        %814 = vmatpush1.bf16.xpose.msra.mxu0 0
        %815 = vmatprep.subr.bf16.mxu0 0
        %816 = vmatpush1.bf16.xpose.msra.mxu0 0
        %817 = vmatprep.subr.bf16.mxu0 0
        %818 = vmatpush1.bf16.xpose.msra.mxu0 0
        %819 = vmatprep.subr.bf16.mxu0 0
        %820 = vmatpush1.bf16.xpose.msra.mxu0 0
        %821 = vmatprep.subr.bf16.mxu0 0
        %822 = vmatpush1.bf16.xpose.msra.mxu0 0
        %823 = vmatprep.subr.bf16.mxu0 0
        %824 = vmatpush1.bf16.xpose.msra.mxu0 0
        %825 = vmatprep.subr.bf16.mxu0 0
        %826 = vmatpush1.bf16.xpose.msra.mxu0 0
        %827 = vmatprep.subr.bf16.mxu0 0
        %828 = vmatpush1.bf16.xpose.msra.mxu0 0
        %829 = vmatprep.mubr.bf16.mxu0 0
        %830 = vmatmul.mubr.bf16.gmra.mrb[0].mxu0 %v792
        %v831 = vpop.f32.mrb[0].mxu0
        %v832 = vadd.f32 %v552, %v831
        %v833 = vpop.f32.mrb[0].mxu0
        %v834 = vpop.f32.mrb[0].mxu0
        %v835 = vpop.f32.mrb[0].mxu0
        %836 = vdwg.mxu0
        %v837 = vsel %vm601, %v832, -inf
        %838 = vmax.xlane.f32.xlu0 %v837
        %v839 = vpop.xlane.xlu0 %838
        %v840 = vsub.f32 %v832, %v839
        %v841 = vmul.f32 %v840, 1.442695
        %v842 = vpow.pop %v841
        %v843 = vsel %vm601, %v842, 0.0
        %844 = vadd.xlane.f32.xlu0 %v843
        %v845 = vpop.xlane.xlu0 %844
        %v846 = vrcp.pop %v845
        %v847 = vmul.f32 %v842, %v846
        %v848 = vpack.c.bf16 %v847, %v847
        %849 = vrot.lane.b32.xlu0 %v732, 96
        %v850 = vpop.permute.xlu0 %849
        %v852 = vsel %vm601, %v848, 0
        %v855 = vsel %vm617, %v850, 0
        %857 = vmatprep.subr.bf16.mxu0 0
        %858 = vmatpush1.bf16.msra.mxu0 %v855
        %859 = vmatprep.subr.bf16.mxu0 0
        %860 = vmatpush1.bf16.msra.mxu0 0
        %861 = vmatprep.subr.bf16.mxu0 0
        %862 = vmatpush1.bf16.msra.mxu0 0
        %863 = vmatprep.subr.bf16.mxu0 0
        %864 = vmatpush1.bf16.msra.mxu0 0
        %865 = vmatprep.subr.bf16.mxu0 0
        %866 = vmatpush1.bf16.msra.mxu0 0
        %867 = vmatprep.subr.bf16.mxu0 0
        %868 = vmatpush1.bf16.msra.mxu0 0
        %869 = vmatprep.subr.bf16.mxu0 0
        %870 = vmatpush1.bf16.msra.mxu0 0
        %871 = vmatprep.subr.bf16.mxu0 0
        %872 = vmatpush1.bf16.msra.mxu0 0
        %873 = vmatprep.subr.bf16.mxu0 0
        %874 = vmatpush1.bf16.msra.mxu0 0
        %875 = vmatprep.subr.bf16.mxu0 0
        %876 = vmatpush1.bf16.msra.mxu0 0
        %877 = vmatprep.subr.bf16.mxu0 0
        %878 = vmatpush1.bf16.msra.mxu0 0
        %879 = vmatprep.subr.bf16.mxu0 0
        %880 = vmatpush1.bf16.msra.mxu0 0
        %881 = vmatprep.subr.bf16.mxu0 0
        %882 = vmatpush1.bf16.msra.mxu0 0
        %883 = vmatprep.subr.bf16.mxu0 0
        %884 = vmatpush1.bf16.msra.mxu0 0
        %885 = vmatprep.subr.bf16.mxu0 0
        %886 = vmatpush1.bf16.msra.mxu0 0
        %887 = vmatprep.subr.bf16.mxu0 0
        %888 = vmatpush1.bf16.msra.mxu0 0
        %889 = vmatprep.mubr.bf16.mxu0 0
        %890 = vmatmul.mubr.bf16.gmra.mrb[0].mxu0 %v852
        %v891 = vpop.f32.mrb[0].mxu0
        %v892 = vadd.f32 0.0, %v891
        %v893 = vpop.f32.mrb[0].mxu0
        %v894 = vpop.f32.mrb[0].mxu0
        %v895 = vpop.f32.mrb[0].mxu0
        %896 = vdwg.mxu0
        %898 = vrot.lane.b32.xlu0 %v892, 32
        %v899 = vpop.permute.xlu0 %898
        %vm901 = vcmask 392448
        %902 = vst.msk [vmem:[#allocation2] sm:$0xff] %vm901, %v899
        %903 = vrot.lane.b32.xlu0 %v664, 80
        %v904 = vpop.permute.xlu0 %903
        %905 = vrot.lane.b32.xlu0 %v669, 80
        %v906 = vpop.permute.xlu0 %905
        %v908 = vsel %vm554, %v904, 0
        %v911 = vsel %vm554, %v906, 0
        %913 = vmatprep.subr.bf16.mxu0 0
        %914 = vmatpush1.bf16.xpose.msra.mxu0 %v911
        %915 = vmatprep.subr.bf16.mxu0 0
        %916 = vmatpush1.bf16.xpose.msra.mxu0 0
        %917 = vmatprep.subr.bf16.mxu0 0
        %918 = vmatpush1.bf16.xpose.msra.mxu0 0
        %919 = vmatprep.subr.bf16.mxu0 0
        %920 = vmatpush1.bf16.xpose.msra.mxu0 0
        %921 = vmatprep.subr.bf16.mxu0 0
        %922 = vmatpush1.bf16.xpose.msra.mxu0 0
        %923 = vmatprep.subr.bf16.mxu0 0
        %924 = vmatpush1.bf16.xpose.msra.mxu0 0
        %925 = vmatprep.subr.bf16.mxu0 0
        %926 = vmatpush1.bf16.xpose.msra.mxu0 0
        %927 = vmatprep.subr.bf16.mxu0 0
        %928 = vmatpush1.bf16.xpose.msra.mxu0 0
        %929 = vmatprep.subr.bf16.mxu0 0
        %930 = vmatpush1.bf16.xpose.msra.mxu0 0
        %931 = vmatprep.subr.bf16.mxu0 0
        %932 = vmatpush1.bf16.xpose.msra.mxu0 0
        %933 = vmatprep.subr.bf16.mxu0 0
        %934 = vmatpush1.bf16.xpose.msra.mxu0 0
        %935 = vmatprep.subr.bf16.mxu0 0
        %936 = vmatpush1.bf16.xpose.msra.mxu0 0
        %937 = vmatprep.subr.bf16.mxu0 0
        %938 = vmatpush1.bf16.xpose.msra.mxu0 0
        %939 = vmatprep.subr.bf16.mxu0 0
        %940 = vmatpush1.bf16.xpose.msra.mxu0 0
        %941 = vmatprep.subr.bf16.mxu0 0
        %942 = vmatpush1.bf16.xpose.msra.mxu0 0
        %943 = vmatprep.subr.bf16.mxu0 0
        %944 = vmatpush1.bf16.xpose.msra.mxu0 0
        %945 = vmatprep.mubr.bf16.mxu0 0
        %946 = vmatmul.mubr.bf16.gmra.mrb[0].mxu0 %v908
        %v947 = vpop.f32.mrb[0].mxu0
        %v948 = vadd.f32 %v552, %v947
        %v949 = vpop.f32.mrb[0].mxu0
        %v950 = vpop.f32.mrb[0].mxu0
        %v951 = vpop.f32.mrb[0].mxu0
        %952 = vdwg.mxu0
        %v953 = vsel %vm601, %v948, -inf
        %954 = vmax.xlane.f32.xlu0 %v953
        %v955 = vpop.xlane.xlu0 %954
        %v956 = vsub.f32 %v948, %v955
        %v957 = vmul.f32 %v956, 1.442695
        %v958 = vpow.pop %v957
        %v959 = vsel %vm601, %v958, 0.0
        %960 = vadd.xlane.f32.xlu0 %v959
        %v961 = vpop.xlane.xlu0 %960
        %v962 = vrcp.pop %v961
        %v963 = vmul.f32 %v958, %v962
        %v964 = vpack.c.bf16 %v963, %v963
        %965 = vrot.lane.b32.xlu0 %v732, 80
        %v966 = vpop.permute.xlu0 %965
        %v968 = vsel %vm601, %v964, 0
        %v971 = vsel %vm617, %v966, 0
        %973 = vmatprep.subr.bf16.mxu0 0
        %974 = vmatpush1.bf16.msra.mxu0 %v971
        %975 = vmatprep.subr.bf16.mxu0 0
        %976 = vmatpush1.bf16.msra.mxu0 0
        %977 = vmatprep.subr.bf16.mxu0 0
        %978 = vmatpush1.bf16.msra.mxu0 0
        %979 = vmatprep.subr.bf16.mxu0 0
        %980 = vmatpush1.bf16.msra.mxu0 0
        %981 = vmatprep.subr.bf16.mxu0 0
        %982 = vmatpush1.bf16.msra.mxu0 0
        %983 = vmatprep.subr.bf16.mxu0 0
        %984 = vmatpush1.bf16.msra.mxu0 0
        %985 = vmatprep.subr.bf16.mxu0 0
        %986 = vmatpush1.bf16.msra.mxu0 0
        %987 = vmatprep.subr.bf16.mxu0 0
        %988 = vmatpush1.bf16.msra.mxu0 0
        %989 = vmatprep.subr.bf16.mxu0 0
        %990 = vmatpush1.bf16.msra.mxu0 0
        %991 = vmatprep.subr.bf16.mxu0 0
        %992 = vmatpush1.bf16.msra.mxu0 0
        %993 = vmatprep.subr.bf16.mxu0 0
        %994 = vmatpush1.bf16.msra.mxu0 0
        %995 = vmatprep.subr.bf16.mxu0 0
        %996 = vmatpush1.bf16.msra.mxu0 0
        %997 = vmatprep.subr.bf16.mxu0 0
        %998 = vmatpush1.bf16.msra.mxu0 0
        %999 = vmatprep.subr.bf16.mxu0 0
        %1000 = vmatpush1.bf16.msra.mxu0 0
        %1001 = vmatprep.subr.bf16.mxu0 0
        %1002 = vmatpush1.bf16.msra.mxu0 0
        %1003 = vmatprep.subr.bf16.mxu0 0
        %1004 = vmatpush1.bf16.msra.mxu0 0
        %1005 = vmatprep.mubr.bf16.mxu0 0
        %1006 = vmatmul.mubr.bf16.gmra.mrb[0].mxu0 %v968
        %v1007 = vpop.f32.mrb[0].mxu0
        %v1008 = vadd.f32 0.0, %v1007
        %v1009 = vpop.f32.mrb[0].mxu0
        %v1010 = vpop.f32.mrb[0].mxu0
        %v1011 = vpop.f32.mrb[0].mxu0
        %1012 = vdwg.mxu0
        %1014 = vrot.lane.b32.xlu0 %v1008, 48
        %v1015 = vpop.permute.xlu0 %1014
        %vm1017 = vcmask 523648
        %1018 = vst.msk [vmem:[#allocation2] sm:$0xff] %vm1017, %v1015
        %1019 = vrot.lane.b32.xlu0 %v664, 64
        %v1020 = vpop.permute.xlu0 %1019
        %1021 = vrot.lane.b32.xlu0 %v669, 64
        %v1022 = vpop.permute.xlu0 %1021
        %v1024 = vsel %vm554, %v1020, 0
        %v1027 = vsel %vm554, %v1022, 0
        %1029 = vmatprep.subr.bf16.mxu0 0
        %1030 = vmatpush1.bf16.xpose.msra.mxu0 %v1027
        %1031 = vmatprep.subr.bf16.mxu0 0
        %1032 = vmatpush1.bf16.xpose.msra.mxu0 0
        %1033 = vmatprep.subr.bf16.mxu0 0
        %1034 = vmatpush1.bf16.xpose.msra.mxu0 0
        %1035 = vmatprep.subr.bf16.mxu0 0
        %1036 = vmatpush1.bf16.xpose.msra.mxu0 0
        %1037 = vmatprep.subr.bf16.mxu0 0
        %1038 = vmatpush1.bf16.xpose.msra.mxu0 0
        %1039 = vmatprep.subr.bf16.mxu0 0
        %1040 = vmatpush1.bf16.xpose.msra.mxu0 0
        %1041 = vmatprep.subr.bf16.mxu0 0
        %1042 = vmatpush1.bf16.xpose.msra.mxu0 0
        %1043 = vmatprep.subr.bf16.mxu0 0
        %1044 = vmatpush1.bf16.xpose.msra.mxu0 0
        %1045 = vmatprep.subr.bf16.mxu0 0
        %1046 = vmatpush1.bf16.xpose.msra.mxu0 0
        %1047 = vmatprep.subr.bf16.mxu0 0
        %1048 = vmatpush1.bf16.xpose.msra.mxu0 0
        %1049 = vmatprep.subr.bf16.mxu0 0
        %1050 = vmatpush1.bf16.xpose.msra.mxu0 0
        %1051 = vmatprep.subr.bf16.mxu0 0
        %1052 = vmatpush1.bf16.xpose.msra.mxu0 0
        %1053 = vmatprep.subr.bf16.mxu0 0
        %1054 = vmatpush1.bf16.xpose.msra.mxu0 0
        %1055 = vmatprep.subr.bf16.mxu0 0
        %1056 = vmatpush1.bf16.xpose.msra.mxu0 0
        %1057 = vmatprep.subr.bf16.mxu0 0
        %1058 = vmatpush1.bf16.xpose.msra.mxu0 0
        %1059 = vmatprep.subr.bf16.mxu0 0
        %1060 = vmatpush1.bf16.xpose.msra.mxu0 0
        %1061 = vmatprep.mubr.bf16.mxu0 0
        %1062 = vmatmul.mubr.bf16.gmra.mrb[0].mxu0 %v1024
        %v1063 = vpop.f32.mrb[0].mxu0
        %v1064 = vadd.f32 %v552, %v1063
        %v1065 = vpop.f32.mrb[0].mxu0
        %v1066 = vpop.f32.mrb[0].mxu0
        %v1067 = vpop.f32.mrb[0].mxu0
        %1068 = vdwg.mxu0
        %v1069 = vsel %vm601, %v1064, -inf
        %1070 = vmax.xlane.f32.xlu0 %v1069
        %v1071 = vpop.xlane.xlu0 %1070
        %v1072 = vsub.f32 %v1064, %v1071
        %v1073 = vmul.f32 %v1072, 1.442695
        %v1074 = vpow.pop %v1073
        %v1075 = vsel %vm601, %v1074, 0.0
        %1076 = vadd.xlane.f32.xlu0 %v1075
        %v1077 = vpop.xlane.xlu0 %1076
        %v1078 = vrcp.pop %v1077
        %v1079 = vmul.f32 %v1074, %v1078
        %v1080 = vpack.c.bf16 %v1079, %v1079
        %1081 = vrot.lane.b32.xlu0 %v732, 64
        %v1082 = vpop.permute.xlu0 %1081
        %v1084 = vsel %vm601, %v1080, 0
        %v1087 = vsel %vm617, %v1082, 0
        %1089 = vmatprep.subr.bf16.mxu0 0
        %1090 = vmatpush1.bf16.msra.mxu0 %v1087
        %1091 = vmatprep.subr.bf16.mxu0 0
        %1092 = vmatpush1.bf16.msra.mxu0 0
        %1093 = vmatprep.subr.bf16.mxu0 0
        %1094 = vmatpush1.bf16.msra.mxu0 0
        %1095 = vmatprep.subr.bf16.mxu0 0
        %1096 = vmatpush1.bf16.msra.mxu0 0
        %1097 = vmatprep.subr.bf16.mxu0 0
        %1098 = vmatpush1.bf16.msra.mxu0 0
        %1099 = vmatprep.subr.bf16.mxu0 0
        %1100 = vmatpush1.bf16.msra.mxu0 0
        %1101 = vmatprep.subr.bf16.mxu0 0
        %1102 = vmatpush1.bf16.msra.mxu0 0
        %1103 = vmatprep.subr.bf16.mxu0 0
        %1104 = vmatpush1.bf16.msra.mxu0 0
        %1105 = vmatprep.subr.bf16.mxu0 0
        %1106 = vmatpush1.bf16.msra.mxu0 0
        %1107 = vmatprep.subr.bf16.mxu0 0
        %1108 = vmatpush1.bf16.msra.mxu0 0
        %1109 = vmatprep.subr.bf16.mxu0 0
        %1110 = vmatpush1.bf16.msra.mxu0 0
        %1111 = vmatprep.subr.bf16.mxu0 0
        %1112 = vmatpush1.bf16.msra.mxu0 0
        %1113 = vmatprep.subr.bf16.mxu0 0
        %1114 = vmatpush1.bf16.msra.mxu0 0
        %1115 = vmatprep.subr.bf16.mxu0 0
        %1116 = vmatpush1.bf16.msra.mxu0 0
        %1117 = vmatprep.subr.bf16.mxu0 0
        %1118 = vmatpush1.bf16.msra.mxu0 0
        %1119 = vmatprep.subr.bf16.mxu0 0
        %1120 = vmatpush1.bf16.msra.mxu0 0
        %1121 = vmatprep.mubr.bf16.mxu0 0
        %1122 = vmatmul.mubr.bf16.gmra.mrb[0].mxu0 %v1084
        %v1123 = vpop.f32.mrb[0].mxu0
        %v1124 = vadd.f32 0.0, %v1123
        %v1125 = vpop.f32.mrb[0].mxu0
        %v1126 = vpop.f32.mrb[0].mxu0
        %v1127 = vpop.f32.mrb[0].mxu0
        %1128 = vdwg.mxu0
        %1130 = vrot.lane.b32.xlu0 %v1124, 64
        %v1131 = vpop.permute.xlu0 %1130
        %vm1133 = vcmask 654848
        %1134 = vst.msk [vmem:[#allocation2] sm:$0xff] %vm1133, %v1131
        %1135 = vrot.lane.b32.xlu0 %v664, 48
        %v1136 = vpop.permute.xlu0 %1135
        %1137 = vrot.lane.b32.xlu0 %v669, 48
        %v1138 = vpop.permute.xlu0 %1137
        %v1140 = vsel %vm554, %v1136, 0
        %v1143 = vsel %vm554, %v1138, 0
        %1145 = vmatprep.subr.bf16.mxu0 0
        %1146 = vmatpush1.bf16.xpose.msra.mxu0 %v1143
        %1147 = vmatprep.subr.bf16.mxu0 0
        %1148 = vmatpush1.bf16.xpose.msra.mxu0 0
        %1149 = vmatprep.subr.bf16.mxu0 0
        %1150 = vmatpush1.bf16.xpose.msra.mxu0 0
        %1151 = vmatprep.subr.bf16.mxu0 0
        %1152 = vmatpush1.bf16.xpose.msra.mxu0 0
        %1153 = vmatprep.subr.bf16.mxu0 0
        %1154 = vmatpush1.bf16.xpose.msra.mxu0 0
        %1155 = vmatprep.subr.bf16.mxu0 0
        %1156 = vmatpush1.bf16.xpose.msra.mxu0 0
        %1157 = vmatprep.subr.bf16.mxu0 0
        %1158 = vmatpush1.bf16.xpose.msra.mxu0 0
        %1159 = vmatprep.subr.bf16.mxu0 0
        %1160 = vmatpush1.bf16.xpose.msra.mxu0 0
        %1161 = vmatprep.subr.bf16.mxu0 0
        %1162 = vmatpush1.bf16.xpose.msra.mxu0 0
        %1163 = vmatprep.subr.bf16.mxu0 0
        %1164 = vmatpush1.bf16.xpose.msra.mxu0 0
        %1165 = vmatprep.subr.bf16.mxu0 0
        %1166 = vmatpush1.bf16.xpose.msra.mxu0 0
        %1167 = vmatprep.subr.bf16.mxu0 0
        %1168 = vmatpush1.bf16.xpose.msra.mxu0 0
        %1169 = vmatprep.subr.bf16.mxu0 0
        %1170 = vmatpush1.bf16.xpose.msra.mxu0 0
        %1171 = vmatprep.subr.bf16.mxu0 0
        %1172 = vmatpush1.bf16.xpose.msra.mxu0 0
        %1173 = vmatprep.subr.bf16.mxu0 0
        %1174 = vmatpush1.bf16.xpose.msra.mxu0 0
        %1175 = vmatprep.subr.bf16.mxu0 0
        %1176 = vmatpush1.bf16.xpose.msra.mxu0 0
        %1177 = vmatprep.mubr.bf16.mxu0 0
        %1178 = vmatmul.mubr.bf16.gmra.mrb[0].mxu0 %v1140
        %v1179 = vpop.f32.mrb[0].mxu0
        %v1180 = vadd.f32 %v552, %v1179
        %v1181 = vpop.f32.mrb[0].mxu0
        %v1182 = vpop.f32.mrb[0].mxu0
        %v1183 = vpop.f32.mrb[0].mxu0
        %1184 = vdwg.mxu0
        %v1185 = vsel %vm601, %v1180, -inf
        %1186 = vmax.xlane.f32.xlu0 %v1185
        %v1187 = vpop.xlane.xlu0 %1186
        %v1188 = vsub.f32 %v1180, %v1187
        %v1189 = vmul.f32 %v1188, 1.442695
        %v1190 = vpow.pop %v1189
        %v1191 = vsel %vm601, %v1190, 0.0
        %1192 = vadd.xlane.f32.xlu0 %v1191
        %v1193 = vpop.xlane.xlu0 %1192
        %v1194 = vrcp.pop %v1193
        %v1195 = vmul.f32 %v1190, %v1194
        %v1196 = vpack.c.bf16 %v1195, %v1195
        %1197 = vrot.lane.b32.xlu0 %v732, 48
        %v1198 = vpop.permute.xlu0 %1197
        %v1200 = vsel %vm601, %v1196, 0
        %v1203 = vsel %vm617, %v1198, 0
        %1205 = vmatprep.subr.bf16.mxu0 0
        %1206 = vmatpush1.bf16.msra.mxu0 %v1203
        %1207 = vmatprep.subr.bf16.mxu0 0
        %1208 = vmatpush1.bf16.msra.mxu0 0
        %1209 = vmatprep.subr.bf16.mxu0 0
        %1210 = vmatpush1.bf16.msra.mxu0 0
        %1211 = vmatprep.subr.bf16.mxu0 0
        %1212 = vmatpush1.bf16.msra.mxu0 0
        %1213 = vmatprep.subr.bf16.mxu0 0
        %1214 = vmatpush1.bf16.msra.mxu0 0
        %1215 = vmatprep.subr.bf16.mxu0 0
        %1216 = vmatpush1.bf16.msra.mxu0 0
        %1217 = vmatprep.subr.bf16.mxu0 0
        %1218 = vmatpush1.bf16.msra.mxu0 0
        %1219 = vmatprep.subr.bf16.mxu0 0
        %1220 = vmatpush1.bf16.msra.mxu0 0
        %1221 = vmatprep.subr.bf16.mxu0 0
        %1222 = vmatpush1.bf16.msra.mxu0 0
        %1223 = vmatprep.subr.bf16.mxu0 0
        %1224 = vmatpush1.bf16.msra.mxu0 0
        %1225 = vmatprep.subr.bf16.mxu0 0
        %1226 = vmatpush1.bf16.msra.mxu0 0
        %1227 = vmatprep.subr.bf16.mxu0 0
        %1228 = vmatpush1.bf16.msra.mxu0 0
        %1229 = vmatprep.subr.bf16.mxu0 0
        %1230 = vmatpush1.bf16.msra.mxu0 0
        %1231 = vmatprep.subr.bf16.mxu0 0
        %1232 = vmatpush1.bf16.msra.mxu0 0
        %1233 = vmatprep.subr.bf16.mxu0 0
        %1234 = vmatpush1.bf16.msra.mxu0 0
        %1235 = vmatprep.subr.bf16.mxu0 0
        %1236 = vmatpush1.bf16.msra.mxu0 0
        %1237 = vmatprep.mubr.bf16.mxu0 0
        %1238 = vmatmul.mubr.bf16.gmra.mrb[0].mxu0 %v1200
        %v1239 = vpop.f32.mrb[0].mxu0
        %v1240 = vadd.f32 0.0, %v1239
        %v1241 = vpop.f32.mrb[0].mxu0
        %v1242 = vpop.f32.mrb[0].mxu0
        %v1243 = vpop.f32.mrb[0].mxu0
        %1244 = vdwg.mxu0
        %1246 = vrot.lane.b32.xlu0 %v1240, 80
        %v1247 = vpop.permute.xlu0 %1246
        %vm1249 = vcmask 786048
        %1250 = vst.msk [vmem:[#allocation2] sm:$0xff] %vm1249, %v1247
        %1251 = vrot.lane.b32.xlu0 %v664, 32
        %v1252 = vpop.permute.xlu0 %1251
        %1253 = vrot.lane.b32.xlu0 %v669, 32
        %v1254 = vpop.permute.xlu0 %1253
        %v1256 = vsel %vm554, %v1252, 0
        %v1259 = vsel %vm554, %v1254, 0
        %1261 = vmatprep.subr.bf16.mxu0 0
        %1262 = vmatpush1.bf16.xpose.msra.mxu0 %v1259
        %1263 = vmatprep.subr.bf16.mxu0 0
        %1264 = vmatpush1.bf16.xpose.msra.mxu0 0
        %1265 = vmatprep.subr.bf16.mxu0 0
        %1266 = vmatpush1.bf16.xpose.msra.mxu0 0
        %1267 = vmatprep.subr.bf16.mxu0 0
        %1268 = vmatpush1.bf16.xpose.msra.mxu0 0
        %1269 = vmatprep.subr.bf16.mxu0 0
        %1270 = vmatpush1.bf16.xpose.msra.mxu0 0
        %1271 = vmatprep.subr.bf16.mxu0 0
        %1272 = vmatpush1.bf16.xpose.msra.mxu0 0
        %1273 = vmatprep.subr.bf16.mxu0 0
        %1274 = vmatpush1.bf16.xpose.msra.mxu0 0
        %1275 = vmatprep.subr.bf16.mxu0 0
        %1276 = vmatpush1.bf16.xpose.msra.mxu0 0
        %1277 = vmatprep.subr.bf16.mxu0 0
        %1278 = vmatpush1.bf16.xpose.msra.mxu0 0
        %1279 = vmatprep.subr.bf16.mxu0 0
        %1280 = vmatpush1.bf16.xpose.msra.mxu0 0
        %1281 = vmatprep.subr.bf16.mxu0 0
        %1282 = vmatpush1.bf16.xpose.msra.mxu0 0
        %1283 = vmatprep.subr.bf16.mxu0 0
        %1284 = vmatpush1.bf16.xpose.msra.mxu0 0
        %1285 = vmatprep.subr.bf16.mxu0 0
        %1286 = vmatpush1.bf16.xpose.msra.mxu0 0
        %1287 = vmatprep.subr.bf16.mxu0 0
        %1288 = vmatpush1.bf16.xpose.msra.mxu0 0
        %1289 = vmatprep.subr.bf16.mxu0 0
        %1290 = vmatpush1.bf16.xpose.msra.mxu0 0
        %1291 = vmatprep.subr.bf16.mxu0 0
        %1292 = vmatpush1.bf16.xpose.msra.mxu0 0
        %1293 = vmatprep.mubr.bf16.mxu0 0
        %1294 = vmatmul.mubr.bf16.gmra.mrb[0].mxu0 %v1256
        %v1295 = vpop.f32.mrb[0].mxu0
        %v1296 = vadd.f32 %v552, %v1295
        %v1297 = vpop.f32.mrb[0].mxu0
        %v1298 = vpop.f32.mrb[0].mxu0
        %v1299 = vpop.f32.mrb[0].mxu0
        %1300 = vdwg.mxu0
        %v1301 = vsel %vm601, %v1296, -inf
        %1302 = vmax.xlane.f32.xlu0 %v1301
        %v1303 = vpop.xlane.xlu0 %1302
        %v1304 = vsub.f32 %v1296, %v1303
        %v1305 = vmul.f32 %v1304, 1.442695
        %v1306 = vpow.pop %v1305
        %v1307 = vsel %vm601, %v1306, 0.0
        %1308 = vadd.xlane.f32.xlu0 %v1307
        %v1309 = vpop.xlane.xlu0 %1308
        %v1310 = vrcp.pop %v1309
        %v1311 = vmul.f32 %v1306, %v1310
        %v1312 = vpack.c.bf16 %v1311, %v1311
        %1313 = vrot.lane.b32.xlu0 %v732, 32
        %v1314 = vpop.permute.xlu0 %1313
        %v1316 = vsel %vm601, %v1312, 0
        %v1319 = vsel %vm617, %v1314, 0
        %1321 = vmatprep.subr.bf16.mxu0 0
        %1322 = vmatpush1.bf16.msra.mxu0 %v1319
        %1323 = vmatprep.subr.bf16.mxu0 0
        %1324 = vmatpush1.bf16.msra.mxu0 0
        %1325 = vmatprep.subr.bf16.mxu0 0
        %1326 = vmatpush1.bf16.msra.mxu0 0
        %1327 = vmatprep.subr.bf16.mxu0 0
        %1328 = vmatpush1.bf16.msra.mxu0 0
        %1329 = vmatprep.subr.bf16.mxu0 0
        %1330 = vmatpush1.bf16.msra.mxu0 0
        %1331 = vmatprep.subr.bf16.mxu0 0
        %1332 = vmatpush1.bf16.msra.mxu0 0
        %1333 = vmatprep.subr.bf16.mxu0 0
        %1334 = vmatpush1.bf16.msra.mxu0 0
        %1335 = vmatprep.subr.bf16.mxu0 0
        %1336 = vmatpush1.bf16.msra.mxu0 0
        %1337 = vmatprep.subr.bf16.mxu0 0
        %1338 = vmatpush1.bf16.msra.mxu0 0
        %1339 = vmatprep.subr.bf16.mxu0 0
        %1340 = vmatpush1.bf16.msra.mxu0 0
        %1341 = vmatprep.subr.bf16.mxu0 0
        %1342 = vmatpush1.bf16.msra.mxu0 0
        %1343 = vmatprep.subr.bf16.mxu0 0
        %1344 = vmatpush1.bf16.msra.mxu0 0
        %1345 = vmatprep.subr.bf16.mxu0 0
        %1346 = vmatpush1.bf16.msra.mxu0 0
        %1347 = vmatprep.subr.bf16.mxu0 0
        %1348 = vmatpush1.bf16.msra.mxu0 0
        %1349 = vmatprep.subr.bf16.mxu0 0
        %1350 = vmatpush1.bf16.msra.mxu0 0
        %1351 = vmatprep.subr.bf16.mxu0 0
        %1352 = vmatpush1.bf16.msra.mxu0 0
        %1353 = vmatprep.mubr.bf16.mxu0 0
        %1354 = vmatmul.mubr.bf16.gmra.mrb[0].mxu0 %v1316
        %v1355 = vpop.f32.mrb[0].mxu0
        %v1356 = vadd.f32 0.0, %v1355
        %v1357 = vpop.f32.mrb[0].mxu0
        %v1358 = vpop.f32.mrb[0].mxu0
        %v1359 = vpop.f32.mrb[0].mxu0
        %1360 = vdwg.mxu0
        %1362 = vrot.lane.b32.xlu0 %v1356, 96
        %v1363 = vpop.permute.xlu0 %1362
        %vm1365 = vcmask 917248
        %1366 = vst.msk [vmem:[#allocation2] sm:$0xff] %vm1365, %v1363
        %1367 = vrot.lane.b32.xlu0 %v664, 16
        %v1368 = vpop.permute.xlu0 %1367
        %1369 = vrot.lane.b32.xlu0 %v669, 16
        %v1370 = vpop.permute.xlu0 %1369
        %v1372 = vsel %vm554, %v1368, 0
        %v1375 = vsel %vm554, %v1370, 0
        %1377 = vmatprep.subr.bf16.mxu0 0
        %1378 = vmatpush1.bf16.xpose.msra.mxu0 %v1375
        %1379 = vmatprep.subr.bf16.mxu0 0
        %1380 = vmatpush1.bf16.xpose.msra.mxu0 0
        %1381 = vmatprep.subr.bf16.mxu0 0
        %1382 = vmatpush1.bf16.xpose.msra.mxu0 0
        %1383 = vmatprep.subr.bf16.mxu0 0
        %1384 = vmatpush1.bf16.xpose.msra.mxu0 0
        %1385 = vmatprep.subr.bf16.mxu0 0
        %1386 = vmatpush1.bf16.xpose.msra.mxu0 0
        %1387 = vmatprep.subr.bf16.mxu0 0
        %1388 = vmatpush1.bf16.xpose.msra.mxu0 0
        %1389 = vmatprep.subr.bf16.mxu0 0
        %1390 = vmatpush1.bf16.xpose.msra.mxu0 0
        %1391 = vmatprep.subr.bf16.mxu0 0
        %1392 = vmatpush1.bf16.xpose.msra.mxu0 0
        %1393 = vmatprep.subr.bf16.mxu0 0
        %1394 = vmatpush1.bf16.xpose.msra.mxu0 0
        %1395 = vmatprep.subr.bf16.mxu0 0
        %1396 = vmatpush1.bf16.xpose.msra.mxu0 0
        %1397 = vmatprep.subr.bf16.mxu0 0
        %1398 = vmatpush1.bf16.xpose.msra.mxu0 0
        %1399 = vmatprep.subr.bf16.mxu0 0
        %1400 = vmatpush1.bf16.xpose.msra.mxu0 0
        %1401 = vmatprep.subr.bf16.mxu0 0
        %1402 = vmatpush1.bf16.xpose.msra.mxu0 0
        %1403 = vmatprep.subr.bf16.mxu0 0
        %1404 = vmatpush1.bf16.xpose.msra.mxu0 0
        %1405 = vmatprep.subr.bf16.mxu0 0
        %1406 = vmatpush1.bf16.xpose.msra.mxu0 0
        %1407 = vmatprep.subr.bf16.mxu0 0
        %1408 = vmatpush1.bf16.xpose.msra.mxu0 0
        %1409 = vmatprep.mubr.bf16.mxu0 0
        %1410 = vmatmul.mubr.bf16.gmra.mrb[0].mxu0 %v1372
        %v1411 = vpop.f32.mrb[0].mxu0
        %v1412 = vadd.f32 %v552, %v1411
        %v1413 = vpop.f32.mrb[0].mxu0
        %v1414 = vpop.f32.mrb[0].mxu0
        %v1415 = vpop.f32.mrb[0].mxu0
        %1416 = vdwg.mxu0
        %v1417 = vsel %vm601, %v1412, -inf
        %1418 = vmax.xlane.f32.xlu0 %v1417
        %v1419 = vpop.xlane.xlu0 %1418
        %v1420 = vsub.f32 %v1412, %v1419
        %v1421 = vmul.f32 %v1420, 1.442695
        %v1422 = vpow.pop %v1421
        %v1423 = vsel %vm601, %v1422, 0.0
        %1424 = vadd.xlane.f32.xlu0 %v1423
        %v1425 = vpop.xlane.xlu0 %1424
        %v1426 = vrcp.pop %v1425
        %v1427 = vmul.f32 %v1422, %v1426
        %v1428 = vpack.c.bf16 %v1427, %v1427
        %1429 = vrot.lane.b32.xlu0 %v732, 16
        %v1430 = vpop.permute.xlu0 %1429
        %v1432 = vsel %vm601, %v1428, 0
        %v1435 = vsel %vm617, %v1430, 0
        %1437 = vmatprep.subr.bf16.mxu0 0
        %1438 = vmatpush1.bf16.msra.mxu0 %v1435
        %1439 = vmatprep.subr.bf16.mxu0 0
        %1440 = vmatpush1.bf16.msra.mxu0 0
        %1441 = vmatprep.subr.bf16.mxu0 0
        %1442 = vmatpush1.bf16.msra.mxu0 0
        %1443 = vmatprep.subr.bf16.mxu0 0
        %1444 = vmatpush1.bf16.msra.mxu0 0
        %1445 = vmatprep.subr.bf16.mxu0 0
        %1446 = vmatpush1.bf16.msra.mxu0 0
        %1447 = vmatprep.subr.bf16.mxu0 0
        %1448 = vmatpush1.bf16.msra.mxu0 0
        %1449 = vmatprep.subr.bf16.mxu0 0
        %1450 = vmatpush1.bf16.msra.mxu0 0
        %1451 = vmatprep.subr.bf16.mxu0 0
        %1452 = vmatpush1.bf16.msra.mxu0 0
        %1453 = vmatprep.subr.bf16.mxu0 0
        %1454 = vmatpush1.bf16.msra.mxu0 0
        %1455 = vmatprep.subr.bf16.mxu0 0
        %1456 = vmatpush1.bf16.msra.mxu0 0
        %1457 = vmatprep.subr.bf16.mxu0 0
        %1458 = vmatpush1.bf16.msra.mxu0 0
        %1459 = vmatprep.subr.bf16.mxu0 0
        %1460 = vmatpush1.bf16.msra.mxu0 0
        %1461 = vmatprep.subr.bf16.mxu0 0
        %1462 = vmatpush1.bf16.msra.mxu0 0
        %1463 = vmatprep.subr.bf16.mxu0 0
        %1464 = vmatpush1.bf16.msra.mxu0 0
        %1465 = vmatprep.subr.bf16.mxu0 0
        %1466 = vmatpush1.bf16.msra.mxu0 0
        %1467 = vmatprep.subr.bf16.mxu0 0
        %1468 = vmatpush1.bf16.msra.mxu0 0
        %1469 = vmatprep.mubr.bf16.mxu0 0
        %1470 = vmatmul.mubr.bf16.gmra.mrb[0].mxu0 %v1432
        %v1471 = vpop.f32.mrb[0].mxu0
        %v1472 = vadd.f32 0.0, %v1471
        %v1473 = vpop.f32.mrb[0].mxu0
        %v1474 = vpop.f32.mrb[0].mxu0
        %v1475 = vpop.f32.mrb[0].mxu0
        %1476 = vdwg.mxu0
        %1478 = vrot.lane.b32.xlu0 %v1472, 112
        %v1479 = vpop.permute.xlu0 %1478
        %vm1481 = vcmask 1048448
        %1482 = vst.msk [vmem:[#allocation2] sm:$0xff] %vm1481, %v1479
        %v1483 = vld [vmem:[#allocation2] sm:$0xff]
        %v1484 = vpack.c.bf16 %v1483, %v1483
        %v1485 = vld [vmem:[#allocation12] sm:$0xf]
        %v1486 = vld [vmem:[#allocation12 + $0x4] sm:$0xf]
        %v1487 = vld [vmem:[#allocation12 + $0x8] sm:$0xf]
        %v1488 = vld [vmem:[#allocation12 + $0xc] sm:$0xf]
        %v1489 = vld [vmem:[#allocation12 + $0x10] sm:$0xf]
        %v1490 = vld [vmem:[#allocation12 + $0x14] sm:$0xf]
        %v1491 = vld [vmem:[#allocation12 + $0x18] sm:$0xf]
        %v1492 = vld [vmem:[#allocation12 + $0x1c] sm:$0xf]
        %v1493 = vld [vmem:[#allocation12 + $0x20] sm:$0xf]
        %v1494 = vld [vmem:[#allocation12 + $0x24] sm:$0xf]
        %v1495 = vld [vmem:[#allocation12 + $0x28] sm:$0xf]
        %v1496 = vld [vmem:[#allocation12 + $0x2c] sm:$0xf]
        %v1497 = vld [vmem:[#allocation12 + $0x30] sm:$0xf]
        %v1498 = vld [vmem:[#allocation12 + $0x34] sm:$0xf]
        %v1499 = vld [vmem:[#allocation12 + $0x38] sm:$0xf]
        %v1500 = vld [vmem:[#allocation12 + $0x3c] sm:$0xf]
        %v1501 = vld [vmem:[#allocation14] sm:$0x1]
        %v1503 = vlaneseq
        %v1504 = vshrl.u32 %v1503, 7
        %v1505 = vsub.s32 0, %v1504
        %v1506 = vrot.slane %v1501, %v1505
        %v1524 = vunpack.c.l.b16 %v1485
        %v1525 = vunpack.c.l.b16 %v1486
        %v1526 = vunpack.c.l.b16 %v1487
        %v1527 = vunpack.c.l.b16 %v1488
        %v1528 = vunpack.c.l.b16 %v1489
        %v1529 = vunpack.c.l.b16 %v1490
        %v1530 = vunpack.c.l.b16 %v1491
        %v1531 = vunpack.c.l.b16 %v1492
        %v1532 = vunpack.c.l.b16 %v1493
        %v1533 = vunpack.c.l.b16 %v1494
        %v1534 = vunpack.c.l.b16 %v1495
        %v1535 = vunpack.c.l.b16 %v1496
        %v1536 = vunpack.c.l.b16 %v1497
        %v1537 = vunpack.c.l.b16 %v1498
        %v1538 = vunpack.c.l.b16 %v1499
        %v1539 = vunpack.c.l.b16 %v1500
        %v1540 = vpack.c.b16 %v1525, %v1524
        %v1541 = vpack.c.b16 %v1527, %v1526
        %v1542 = vpack.c.b16 %v1529, %v1528
        %v1543 = vpack.c.b16 %v1531, %v1530
        %v1544 = vpack.c.b16 %v1533, %v1532
        %v1545 = vpack.c.b16 %v1535, %v1534
        %v1546 = vpack.c.b16 %v1537, %v1536
        %v1547 = vpack.c.b16 %v1539, %v1538
        %1556 = vmatprep.subr.bf16.mxu0 0
        %1557 = vmatpush1.bf16.msra.mxu0 %v1540
        %1558 = vmatprep.subr.bf16.mxu0 0
        %1559 = vmatpush1.bf16.msra.mxu0 %v1541
        %1560 = vmatprep.subr.bf16.mxu0 0
        %1561 = vmatpush1.bf16.msra.mxu0 %v1542
        %1562 = vmatprep.subr.bf16.mxu0 0
        %1563 = vmatpush1.bf16.msra.mxu0 %v1543
        %1564 = vmatprep.subr.bf16.mxu0 0
        %1565 = vmatpush1.bf16.msra.mxu0 %v1544
        %1566 = vmatprep.subr.bf16.mxu0 0
        %1567 = vmatpush1.bf16.msra.mxu0 %v1545
        %1568 = vmatprep.subr.bf16.mxu0 0
        %1569 = vmatpush1.bf16.msra.mxu0 %v1546
        %1570 = vmatprep.subr.bf16.mxu0 0
        %1571 = vmatpush1.bf16.msra.mxu0 %v1547
        %1572 = vmatprep.subr.bf16.mxu0 0
        %1573 = vmatpush1.bf16.msra.mxu0 0
        %1574 = vmatprep.subr.bf16.mxu0 0
        %1575 = vmatpush1.bf16.msra.mxu0 0
        %1576 = vmatprep.subr.bf16.mxu0 0
        %1577 = vmatpush1.bf16.msra.mxu0 0
        %1578 = vmatprep.subr.bf16.mxu0 0
        %1579 = vmatpush1.bf16.msra.mxu0 0
        %1580 = vmatprep.subr.bf16.mxu0 0
        %1581 = vmatpush1.bf16.msra.mxu0 0
        %1582 = vmatprep.subr.bf16.mxu0 0
        %1583 = vmatpush1.bf16.msra.mxu0 0
        %1584 = vmatprep.subr.bf16.mxu0 0
        %1585 = vmatpush1.bf16.msra.mxu0 0
        %1586 = vmatprep.subr.bf16.mxu0 0
        %1587 = vmatpush1.bf16.msra.mxu0 0
        %1588 = vmatprep.mubr.bf16.mxu0 0
        %1589 = vmatmul.mubr.bf16.gmra.mrb[0].mxu0 %v1484
        %v1590 = vpop.f32.mrb[0].mxu0
        %v1591 = vadd.f32 %v1506, %v1590
        %v1592 = vpop.f32.mrb[0].mxu0
        %v1593 = vpop.f32.mrb[0].mxu0
        %v1594 = vpop.f32.mrb[0].mxu0
        %1595 = vdwg.mxu0
        %v1596 = vld [vmem:[%s473] sm:$0xf]
        %v1597 = vunpack.c.l.bf16 %v1596
        %v1598 = vadd.f32 %v1591, %v1597
        %1599 = vadd.xlane.f32.xlu0 %v1598
        %v1600 = vpop.xlane.xlu0 %1599
        %v1601 = vrcp.pop 128.0
        %v1602 = vmul.f32 %v1600, %v1601
        %v1603 = vsub.f32 %v1598, %v1602
        %v1604 = vmul.f32 %v1603, %v1603
        %1605 = vadd.xlane.f32.xlu0 %v1604
        %v1606 = vpop.xlane.xlu0 %1605
        %v1607 = vmul.f32 %v1606, %v1601
        %v1608 = vadd.f32 %v1607, 1e-05
        %v1609 = vrsqrt.pop %v1608
        %v1610 = vmul.f32 %v1603, %v1609
        %v1611 = vld [vmem:[#allocation15] sm:$0x1]
        %v1613 = vlaneseq
        %v1614 = vshrl.u32 %v1613, 7
        %v1615 = vsub.s32 0, %v1614
        %v1616 = vrot.slane %v1611, %v1615
        %v1618 = vmul.f32 %v1610, %v1616
        %v1619 = vld [vmem:[#allocation17] sm:$0x1]
        %v1621 = vlaneseq
        %v1622 = vshrl.u32 %v1621, 7
        %v1623 = vsub.s32 0, %v1622
        %v1624 = vrot.slane %v1619, %v1623
        %v1626 = vadd.f32 %v1618, %v1624
        %v1627 = vpack.c.bf16 %v1626, %v1626
        %1628 = vst [vmem:[%s542] sm:$0xf] %v1627
        %s1629 = sand.u32 %s256, 1
        %s1630 = scalar_lea.sflag [#allocation5], %s1629
        %s1631 = sand.u32 %s256, 1
        %s1632 = smul.addr %s1631, 4
        %s1633 = scalar_lea.vmem [#allocation18], %s1632
        // Predicated region
        $region93: #{gpt2_forward.8} parent=55 // pred_check
          %p1634 = pneg %p266
        $region94: #{gpt2_forward.8} parent=55 // pred_check_branch
          %1636 = sbr.rel (%p1634) target = $region96
        $region95: #{gpt2_forward.8} parent=55 // pred_region
          %s1638 = ssub.s32 64, 64
          %1639 = vsyncadd %s1630, %s1638
          %s1640 = smul.addr %s34, 64
          %s1641 = scalar_lea.hbm %s9, %s1640
          %s1643 = sshll.u32 %s1633, 4
          %s1644 = int_to_ptr.vmem [resolvable:$true] %s1643
          %1646 = dma.vmem_to_hbm [thread:$0]  %s1644, 64, %s1641, %s1630
        $region96: #{gpt2_forward.8} parent=55 // pred_fallthru
          _
      $region56: #{gpt2_forward.8} parent=5 // pred_fallthru
        _
      %p1647 = scmp.le.s32.totalorder 2, %s29
      // Predicated region
      $region97: #{gpt2_forward.8} parent=5 // pred_check
        %p1648 = pneg %p1647
      $region98: #{gpt2_forward.8} parent=5 // pred_check_branch
        %1650 = sbr.rel (%p1648) target = $region100
      $region99: #{gpt2_forward.8} parent=5 // pred_region
        %s1651 = ssub.s32 %s29, 2
        // Predicated region
        $region101: #{gpt2_forward.8} parent=99 // pred_check
          %p1652 = pneg %p272
        $region102: #{gpt2_forward.8} parent=99 // pred_check_branch
          %1654 = sbr.rel (%p1652) target = $region104
        $region103: #{gpt2_forward.8} parent=99 // pred_region
          %s1655 = sand.u32 %s257, 1
          %s1656 = scalar_lea.sflag [#allocation5], %s1655
          %s1657 = sand.u32 %s257, 1
          %s1658 = smul.addr %s1657, 4
          %s1659 = scalar_lea.vmem [#allocation18], %s1658
          %1660 = dma.done %s1656, 64
        $region104: #{gpt2_forward.8} parent=99 // pred_fallthru
          _
      $region100: #{gpt2_forward.8} parent=5 // pred_fallthru
        _
    $region6: #{gpt2_forward.8} parent=1 // loop_footer
      %s33 = sadd.s32 1, %s29
    $region7: #{gpt2_forward.8} parent=1 // loop_footer_branch
      %28 = sbr.rel target = $region3
    $region8: #{gpt2_forward.8} parent=1 // loop_exit
      _
    %1661 = vsyncpa [#allocation4], 1
    %s1662 = scalar_lea.sflag [#allocation4], 1
    %1663 = vsyncpa %s1662, 1
    %1664 = vsyncpa [#allocation7], 1
    %s1665 = scalar_lea.sflag [#allocation7], 1
    %1666 = vsyncpa %s1665, 1
    %1667 = vsyncpa [#allocation10], 1
    %s1668 = scalar_lea.sflag [#allocation10], 1
    %1669 = vsyncpa %s1668, 1
    %1670 = vsyncpa [#allocation13], 1
    %1671 = vsyncpa [#allocation16], 1
    %1672 = vsyncpa [#allocation5], 1
    %s1673 = scalar_lea.sflag [#allocation5], 1
    %1674 = vsyncpa %s1673, 1

// kernel: gpt2_forward.6
$region0: #{gpt2_forward.6}
  #allocation0 [shape = 'u32[]', space=smem, size = 0x4, offset = 0x4, fixed_abs, tag = 'smem constant byte address 0x4 - core index']
  #allocation1 [shape = 'u32[144,128]{1,0:T(1,128)}', space=vmem, size = 0x12000, scoped, tag = 'internal scratch']
  #allocation2 [shape = 'f32[8,128]{1,0:T(8,128)}', space=vmem, size = 0x1000, scoped, tag = 'scratch operand']
  %s0 = inlined_call_operand.hbm [shape: bf16[2,8,640], index: 0, kind: input, shape index: {}, may-alias: {0,1,2}]
  %s1 = inlined_call_operand.hbm [shape: bf16[2,8,640], index: 1, kind: input, shape index: {}, may-alias: {0,1,2}]
  %s2 = inlined_call_operand.hbm [shape: bf16[2,8,640], index: 2, kind: input, shape index: {}, may-alias: {0,1,2}]
  %s3 = inlined_call_operand.hbm [shape: f32[2,1,8], index: 3, kind: input, shape index: {}]
  %s4 = inlined_call_operand.hbm [shape: bf16[2,8,128], index: 4, kind: input, shape index: {}]
  %s5 = inlined_call_operand.hbm [shape: bf16[128,128], index: 5, kind: input, shape index: {}]
  %s6 = inlined_call_operand.hbm [shape: f32[1,128], index: 6, kind: input, shape index: {}]
  %s7 = inlined_call_operand.hbm [shape: f32[1,128], index: 7, kind: input, shape index: {}]
  %s8 = inlined_call_operand.hbm [shape: f32[1,128], index: 8, kind: input, shape index: {}]
  %s9 = inlined_call_operand.hbm [shape: bf16[2,8,128], index: 9, kind: output, shape index: {}]
  %s10 = sld [smem:[#allocation0]]
  $region105: #{gpt2_forward.6} parent=0
    _
  %s12 = ssub.s32 1, %s10
  %s13 = scalar_select 0, %s12, %s10
  $region1: #{gpt2_forward.6} parent=0
    #allocation3 [shape = 'u8[4096]{0}', space=vmem, size = 0x1000, scoped, tag = 'input window, operand 0']
    #allocation4 [shape = 's32[2]{0}', space=sflag, size = 0x8, scoped, tag = 'scoped memory for gpt2_forward.6']
    #allocation5 [shape = 's32[2]{0}', space=sflag, size = 0x8, scoped, tag = 'scoped memory for gpt2_forward.6']
    #allocation6 [shape = 'u8[4096]{0}', space=vmem, size = 0x1000, scoped, tag = 'input window, operand 1']
    #allocation7 [shape = 's32[2]{0}', space=sflag, size = 0x8, scoped, tag = 'scoped memory for gpt2_forward.6']
    #allocation8 [shape = 'u8[4096]{0}', space=vmem, size = 0x1000, scoped, tag = 'input window, operand 2']
    #allocation9 [shape = 'u8[1024]{0}', space=vmem, size = 0x400, scoped, tag = 'input window, operand 3']
    #allocation10 [shape = 's32[2]{0}', space=sflag, size = 0x8, scoped, tag = 'scoped memory for gpt2_forward.6']
    #allocation11 [shape = 'u8[4096]{0}', space=vmem, size = 0x1000, scoped, tag = 'input window, operand 4']
    #allocation12 [shape = 'u8[32768]{0}', space=vmem, size = 0x8000, scoped, tag = 'input window, operand 5, single buffered']
    #allocation13 [shape = 's32[1]{0}', space=sflag, size = 0x4, scoped, tag = 'scoped memory for gpt2_forward.6']
    #allocation14 [shape = 'u8[512]{0}', space=vmem, size = 0x400, scoped, tag = 'input window, operand 6, single buffered']
    #allocation15 [shape = 'u8[512]{0}', space=vmem, size = 0x400, scoped, tag = 'input window, operand 7, single buffered']
    #allocation16 [shape = 's32[1]{0}', space=sflag, size = 0x4, scoped, tag = 'scoped memory for gpt2_forward.6']
    #allocation17 [shape = 'u8[512]{0}', space=vmem, size = 0x400, scoped, tag = 'input window, operand 8, single buffered']
    #allocation18 [shape = 'u8[4096]{0}', space=vmem, size = 0x1000, scoped, tag = 'output window, operand 0']
    %14 = vsyncpa [#allocation4], 0
    %s15 = scalar_lea.sflag [#allocation4], 1
    %16 = vsyncpa %s15, 0
    %17 = vsyncpa [#allocation7], 0
    %s18 = scalar_lea.sflag [#allocation7], 1
    %19 = vsyncpa %s18, 0
    %20 = vsyncpa [#allocation10], 0
    %s21 = scalar_lea.sflag [#allocation10], 1
    %22 = vsyncpa %s21, 0
    %23 = vsyncpa [#allocation13], 0
    %24 = vsyncpa [#allocation16], 0
    %25 = vsyncpa [#allocation5], 0
    %s26 = scalar_lea.sflag [#allocation5], 1
    %27 = vsyncpa %s26, 0
    loop: start=0, step=1, limit=4
    $region2: #{gpt2_forward.6} parent=1 // loop_pre_header
      _
    $region3: #{gpt2_forward.6} parent=1 // loop_header
      %s29 = sphi 0, %s33
      %p30 = scmp.ge.s32.totalorder %s29, 4
      %s39 = sphi 0, %s41
      %s42 = sphi 0, %s39
      %s43 = sphi 0, %s42
      %s59 = sphi 0, %s43
      %s65 = sphi 0, %s67
      %s68 = sphi 0, %s65
      %s69 = sphi 0, %s68
      %s85 = sphi 0, %s69
      %s91 = sphi 0, %s93
      %s94 = sphi 0, %s91
      %s95 = sphi 0, %s94
      %s111 = sphi 0, %s95
      %s117 = sphi 0, %s119
      %s120 = sphi 0, %s117
      %s121 = sphi 0, %s120
      %s137 = sphi 0, %s121
      %s143 = sphi 0, %s145
      %s146 = sphi 0, %s143
      %s147 = sphi 0, %s146
      %s163 = sphi 0, %s147
      %s167 = sphi 0, %s167
      %s169 = sphi 0, %s167
      %s170 = sphi 0, %s169
      %s184 = sphi 0, %s170
      %s188 = sphi 0, %s188
      %s190 = sphi 0, %s188
      %s191 = sphi 0, %s190
      %s205 = sphi 0, %s191
      %s209 = sphi 0, %s209
      %s211 = sphi 0, %s209
      %s212 = sphi 0, %s211
      %s226 = sphi 0, %s212
      %s230 = sphi 0, %s230
      %s232 = sphi 0, %s230
      %s233 = sphi 0, %s232
      %s247 = sphi 0, %s233
      %s253 = sphi 0, %s255
      %s256 = sphi 0, %s253
      %s257 = sphi 0, %s256
      %s273 = sphi 0, %s257
    $region4: #{gpt2_forward.6} parent=1 // loop_header_branch
      %32 = sbr.rel (%p30) target = $region8
    $region5: #{gpt2_forward.6} parent=1 // loop_body
      %s34 = ssub.s32 %s29, 1
      %s35 = ssub.s32 %s29, 2
      %s36 = sadd.s32 %s29, 1
      %s37 = ssub.s32 %s29, %s36
      %p38 = scmp.eq.s32.totalorder %s37, 0
      %s40 = sadd.s32 %s39, 1
      %s41 = scalar_select %p38, %s39, %s40
      %p44 = pneg %p38
      %p45 = scmp.eq.s32.totalorder %s29, 1
      %p46 = por %p44, %p45
      %p47 = scmp.ne.s32.totalorder %s39, %s42
      %p48 = scmp.eq.s32.totalorder %s29, 0
      %p49 = por %p47, %p48
      %p50 = scmp.ne.s32.totalorder %s39, %s42
      %p51 = scmp.eq.s32.totalorder %s34, 1
      %p52 = por %p50, %p51
      %p53 = scmp.ne.s32.totalorder %s42, %s43
      %p54 = scmp.eq.s32.totalorder %s34, 0
      %p55 = por %p53, %p54
      %p56 = scmp.ne.s32.totalorder %s42, %s43
      %p57 = scmp.eq.s32.totalorder %s35, 1
      %p58 = por %p56, %p57
      %p60 = scmp.ne.s32.totalorder %s43, %s59
      %p61 = scmp.eq.s32.totalorder %s35, 0
      %p62 = por %p60, %p61
      %s63 = ssub.s32 %s29, %s36
      %p64 = scmp.eq.s32.totalorder %s63, 0
      %s66 = sadd.s32 %s65, 1
      %s67 = scalar_select %p64, %s65, %s66
      %p70 = pneg %p64
      %p71 = scmp.eq.s32.totalorder %s29, 1
      %p72 = por %p70, %p71
      %p73 = scmp.ne.s32.totalorder %s65, %s68
      %p74 = scmp.eq.s32.totalorder %s29, 0
      %p75 = por %p73, %p74
      %p76 = scmp.ne.s32.totalorder %s65, %s68
      %p77 = scmp.eq.s32.totalorder %s34, 1
      %p78 = por %p76, %p77
      %p79 = scmp.ne.s32.totalorder %s68, %s69
      %p80 = scmp.eq.s32.totalorder %s34, 0
      %p81 = por %p79, %p80
      %p82 = scmp.ne.s32.totalorder %s68, %s69
      %p83 = scmp.eq.s32.totalorder %s35, 1
      %p84 = por %p82, %p83
      %p86 = scmp.ne.s32.totalorder %s69, %s85
      %p87 = scmp.eq.s32.totalorder %s35, 0
      %p88 = por %p86, %p87
      %s89 = ssub.s32 %s29, %s36
      %p90 = scmp.eq.s32.totalorder %s89, 0
      %s92 = sadd.s32 %s91, 1
      %s93 = scalar_select %p90, %s91, %s92
      %p96 = pneg %p90
      %p97 = scmp.eq.s32.totalorder %s29, 1
      %p98 = por %p96, %p97
      %p99 = scmp.ne.s32.totalorder %s91, %s94
      %p100 = scmp.eq.s32.totalorder %s29, 0
      %p101 = por %p99, %p100
      %p102 = scmp.ne.s32.totalorder %s91, %s94
      %p103 = scmp.eq.s32.totalorder %s34, 1
      %p104 = por %p102, %p103
      %p105 = scmp.ne.s32.totalorder %s94, %s95
      %p106 = scmp.eq.s32.totalorder %s34, 0
      %p107 = por %p105, %p106
      %p108 = scmp.ne.s32.totalorder %s94, %s95
      %p109 = scmp.eq.s32.totalorder %s35, 1
      %p110 = por %p108, %p109
      %p112 = scmp.ne.s32.totalorder %s95, %s111
      %p113 = scmp.eq.s32.totalorder %s35, 0
      %p114 = por %p112, %p113
      %s115 = ssub.s32 %s29, %s36
      %p116 = scmp.eq.s32.totalorder %s115, 0
      %s118 = sadd.s32 %s117, 1
      %s119 = scalar_select %p116, %s117, %s118
      %p122 = pneg %p116
      %p123 = scmp.eq.s32.totalorder %s29, 1
      %p124 = por %p122, %p123
      %p125 = scmp.ne.s32.totalorder %s117, %s120
      %p126 = scmp.eq.s32.totalorder %s29, 0
      %p127 = por %p125, %p126
      %p128 = scmp.ne.s32.totalorder %s117, %s120
      %p129 = scmp.eq.s32.totalorder %s34, 1
      %p130 = por %p128, %p129
      %p131 = scmp.ne.s32.totalorder %s120, %s121
      %p132 = scmp.eq.s32.totalorder %s34, 0
      %p133 = por %p131, %p132
      %p134 = scmp.ne.s32.totalorder %s120, %s121
      %p135 = scmp.eq.s32.totalorder %s35, 1
      %p136 = por %p134, %p135
      %p138 = scmp.ne.s32.totalorder %s121, %s137
      %p139 = scmp.eq.s32.totalorder %s35, 0
      %p140 = por %p138, %p139
      %s141 = ssub.s32 %s29, %s36
      %p142 = scmp.eq.s32.totalorder %s141, 0
      %s144 = sadd.s32 %s143, 1
      %s145 = scalar_select %p142, %s143, %s144
      %p148 = pneg %p142
      %p149 = scmp.eq.s32.totalorder %s29, 1
      %p150 = por %p148, %p149
      %p151 = scmp.ne.s32.totalorder %s143, %s146
      %p152 = scmp.eq.s32.totalorder %s29, 0
      %p153 = por %p151, %p152
      %p154 = scmp.ne.s32.totalorder %s143, %s146
      %p155 = scmp.eq.s32.totalorder %s34, 1
      %p156 = por %p154, %p155
      %p157 = scmp.ne.s32.totalorder %s146, %s147
      %p158 = scmp.eq.s32.totalorder %s34, 0
      %p159 = por %p157, %p158
      %p160 = scmp.ne.s32.totalorder %s146, %s147
      %p161 = scmp.eq.s32.totalorder %s35, 1
      %p162 = por %p160, %p161
      %p164 = scmp.ne.s32.totalorder %s147, %s163
      %p165 = scmp.eq.s32.totalorder %s35, 0
      %p166 = por %p164, %p165
      %s168 = sadd.s32 %s167, 1
      %p171 = scmp.eq.s32.totalorder %s29, 1
      %p172 = scmp.ne.s32.totalorder %s167, %s169
      %p173 = scmp.eq.s32.totalorder %s29, 0
      %p174 = por %p172, %p173
      %p175 = scmp.ne.s32.totalorder %s167, %s169
      %p176 = scmp.eq.s32.totalorder %s34, 1
      %p177 = por %p175, %p176
      %p178 = scmp.ne.s32.totalorder %s169, %s170
      %p179 = scmp.eq.s32.totalorder %s34, 0
      %p180 = por %p178, %p179
      %p181 = scmp.ne.s32.totalorder %s169, %s170
      %p182 = scmp.eq.s32.totalorder %s35, 1
      %p183 = por %p181, %p182
      %p185 = scmp.ne.s32.totalorder %s170, %s184
      %p186 = scmp.eq.s32.totalorder %s35, 0
      %p187 = por %p185, %p186
      %s189 = sadd.s32 %s188, 1
      %p192 = scmp.eq.s32.totalorder %s29, 1
      %p193 = scmp.ne.s32.totalorder %s188, %s190
      %p194 = scmp.eq.s32.totalorder %s29, 0
      %p195 = por %p193, %p194
      %p196 = scmp.ne.s32.totalorder %s188, %s190
      %p197 = scmp.eq.s32.totalorder %s34, 1
      %p198 = por %p196, %p197
      %p199 = scmp.ne.s32.totalorder %s190, %s191
      %p200 = scmp.eq.s32.totalorder %s34, 0
      %p201 = por %p199, %p200
      %p202 = scmp.ne.s32.totalorder %s190, %s191
      %p203 = scmp.eq.s32.totalorder %s35, 1
      %p204 = por %p202, %p203
      %p206 = scmp.ne.s32.totalorder %s191, %s205
      %p207 = scmp.eq.s32.totalorder %s35, 0
      %p208 = por %p206, %p207
      %s210 = sadd.s32 %s209, 1
      %p213 = scmp.eq.s32.totalorder %s29, 1
      %p214 = scmp.ne.s32.totalorder %s209, %s211
      %p215 = scmp.eq.s32.totalorder %s29, 0
      %p216 = por %p214, %p215
      %p217 = scmp.ne.s32.totalorder %s209, %s211
      %p218 = scmp.eq.s32.totalorder %s34, 1
      %p219 = por %p217, %p218
      %p220 = scmp.ne.s32.totalorder %s211, %s212
      %p221 = scmp.eq.s32.totalorder %s34, 0
      %p222 = por %p220, %p221
      %p223 = scmp.ne.s32.totalorder %s211, %s212
      %p224 = scmp.eq.s32.totalorder %s35, 1
      %p225 = por %p223, %p224
      %p227 = scmp.ne.s32.totalorder %s212, %s226
      %p228 = scmp.eq.s32.totalorder %s35, 0
      %p229 = por %p227, %p228
      %s231 = sadd.s32 %s230, 1
      %p234 = scmp.eq.s32.totalorder %s29, 1
      %p235 = scmp.ne.s32.totalorder %s230, %s232
      %p236 = scmp.eq.s32.totalorder %s29, 0
      %p237 = por %p235, %p236
      %p238 = scmp.ne.s32.totalorder %s230, %s232
      %p239 = scmp.eq.s32.totalorder %s34, 1
      %p240 = por %p238, %p239
      %p241 = scmp.ne.s32.totalorder %s232, %s233
      %p242 = scmp.eq.s32.totalorder %s34, 0
      %p243 = por %p241, %p242
      %p244 = scmp.ne.s32.totalorder %s232, %s233
      %p245 = scmp.eq.s32.totalorder %s35, 1
      %p246 = por %p244, %p245
      %p248 = scmp.ne.s32.totalorder %s233, %s247
      %p249 = scmp.eq.s32.totalorder %s35, 0
      %p250 = por %p248, %p249
      %s251 = ssub.s32 %s29, %s36
      %p252 = scmp.eq.s32.totalorder %s251, 0
      %s254 = sadd.s32 %s253, 1
      %s255 = scalar_select %p252, %s253, %s254
      %p258 = pneg %p252
      %p259 = scmp.eq.s32.totalorder %s29, 1
      %p260 = por %p258, %p259
      %p261 = scmp.ne.s32.totalorder %s253, %s256
      %p262 = scmp.eq.s32.totalorder %s29, 0
      %p263 = por %p261, %p262
      %p264 = scmp.ne.s32.totalorder %s253, %s256
      %p265 = scmp.eq.s32.totalorder %s34, 1
      %p266 = por %p264, %p265
      %p267 = scmp.ne.s32.totalorder %s256, %s257
      %p268 = scmp.eq.s32.totalorder %s34, 0
      %p269 = por %p267, %p268
      %p270 = scmp.ne.s32.totalorder %s256, %s257
      %p271 = scmp.eq.s32.totalorder %s35, 1
      %p272 = por %p270, %p271
      %p274 = scmp.ne.s32.totalorder %s257, %s273
      %p275 = scmp.eq.s32.totalorder %s35, 0
      %p276 = por %p274, %p275
      %p277 = scmp.le.s32.totalorder 1, %s29
      %p278 = scmp.lt.s32.totalorder %s29, 3
      %p279 = pnand %p277, %p278
      %p280 = pneg %p279
      // Predicated region
      $region9: #{gpt2_forward.6} parent=5 // pred_check
        _
      $region10: #{gpt2_forward.6} parent=5 // pred_check_branch
        %282 = sbr.rel (%p279) target = $region12
      $region11: #{gpt2_forward.6} parent=5 // pred_region
        %s283 = ssub.s32 %s29, 1
        // Predicated region
        $region13: #{gpt2_forward.6} parent=11 // pred_check
          %p284 = pneg %p180
        $region14: #{gpt2_forward.6} parent=11 // pred_check_branch
          %286 = sbr.rel (%p284) target = $region16
        $region15: #{gpt2_forward.6} parent=11 // pred_region
          %s288 = ssub.s32 1024, 1024
          %289 = vsyncadd [#allocation13], %s288
          %s290 = sshll.u32 [#allocation12], 4
          %s291 = int_to_ptr.vmem [resolvable:$true] %s290
          %296 = dma.hbm_to_vmem [thread:$0]  %s5, 1024, %s291, [#allocation13], 64, 64, 4
        $region16: #{gpt2_forward.6} parent=11 // pred_fallthru
          _
        // Predicated region
        $region17: #{gpt2_forward.6} parent=11 // pred_check
          %p297 = pneg %p201
        $region18: #{gpt2_forward.6} parent=11 // pred_check_branch
          %299 = sbr.rel (%p297) target = $region20
        $region19: #{gpt2_forward.6} parent=11 // pred_region
          %s301 = ssub.s32 16, 16
          %302 = vsyncadd [#allocation13], %s301
          %s304 = sshll.u32 [#allocation14], 4
          %s305 = int_to_ptr.vmem [resolvable:$true] %s304
          %307 = dma.hbm_to_vmem [thread:$0]  %s6, 16, %s305, [#allocation13]
        $region20: #{gpt2_forward.6} parent=11 // pred_fallthru
          _
        // Predicated region
        $region21: #{gpt2_forward.6} parent=11 // pred_check
          %p308 = pneg %p222
        $region22: #{gpt2_forward.6} parent=11 // pred_check_branch
          %310 = sbr.rel (%p308) target = $region24
        $region23: #{gpt2_forward.6} parent=11 // pred_region
          %s312 = ssub.s32 16, 16
          %313 = vsyncadd [#allocation16], %s312
          %s315 = sshll.u32 [#allocation15], 4
          %s316 = int_to_ptr.vmem [resolvable:$true] %s315
          %318 = dma.hbm_to_vmem [thread:$0]  %s7, 16, %s316, [#allocation16]
        $region24: #{gpt2_forward.6} parent=11 // pred_fallthru
          _
        // Predicated region
        $region25: #{gpt2_forward.6} parent=11 // pred_check
          %p319 = pneg %p243
        $region26: #{gpt2_forward.6} parent=11 // pred_check_branch
          %321 = sbr.rel (%p319) target = $region28
        $region27: #{gpt2_forward.6} parent=11 // pred_region
          %s323 = ssub.s32 16, 16
          %324 = vsyncadd [#allocation16], %s323
          %s326 = sshll.u32 [#allocation17], 4
          %s327 = int_to_ptr.vmem [resolvable:$true] %s326
          %329 = dma.hbm_to_vmem [thread:$0]  %s8, 16, %s327, [#allocation16]
        $region28: #{gpt2_forward.6} parent=11 // pred_fallthru
          _
      $region12: #{gpt2_forward.6} parent=5 // pred_fallthru
        _
      %p330 = scmp.lt.s32.totalorder %s29, 2
      // Predicated region
      $region29: #{gpt2_forward.6} parent=5 // pred_check
        %p331 = pneg %p330
      $region30: #{gpt2_forward.6} parent=5 // pred_check_branch
        %333 = sbr.rel (%p331) target = $region32
      $region31: #{gpt2_forward.6} parent=5 // pred_region
        // Predicated region
        $region33: #{gpt2_forward.6} parent=31 // pred_check
          %p334 = pneg %p49
        $region34: #{gpt2_forward.6} parent=31 // pred_check_branch
          %336 = sbr.rel (%p334) target = $region36
        $region35: #{gpt2_forward.6} parent=31 // pred_region
          %s337 = sand.u32 %s39, 1
          %s338 = scalar_lea.sflag [#allocation4], %s337
          %s339 = sand.u32 %s39, 1
          %s340 = smul.addr %s339, 4
          %s341 = scalar_lea.vmem [#allocation3], %s340
          %s343 = ssub.s32 64, 64
          %344 = vsyncadd %s338, %s343
          %s345 = smul.addr %s29, 5
          %s346 = smul.addr %s345, 64
          %s347 = scalar_lea.hbm %s0, %s346
          %s349 = sshll.u32 %s341, 4
          %s350 = int_to_ptr.vmem [resolvable:$true] %s349
          %352 = dma.hbm_to_vmem [thread:$0]  %s347, 64, %s350, %s338
        $region36: #{gpt2_forward.6} parent=31 // pred_fallthru
          _
        // Predicated region
        $region37: #{gpt2_forward.6} parent=31 // pred_check
          %p353 = pneg %p75
        $region38: #{gpt2_forward.6} parent=31 // pred_check_branch
          %355 = sbr.rel (%p353) target = $region40
        $region39: #{gpt2_forward.6} parent=31 // pred_region
          %s356 = sand.u32 %s29, 1
          %s357 = scalar_lea.sflag [#allocation7], %s356
          %s358 = sand.u32 %s65, 1
          %s359 = smul.addr %s358, 4
          %s360 = scalar_lea.vmem [#allocation6], %s359
          %s362 = ssub.s32 64, 64
          %363 = vsyncadd %s357, %s362
          %s364 = smul.addr %s29, 5
          %s365 = sadd.s32 1, %s364
          %s366 = smul.addr %s365, 64
          %s367 = scalar_lea.hbm %s1, %s366
          %s369 = sshll.u32 %s360, 4
          %s370 = int_to_ptr.vmem [resolvable:$true] %s369
          %372 = dma.hbm_to_vmem [thread:$0]  %s367, 64, %s370, %s357
        $region40: #{gpt2_forward.6} parent=31 // pred_fallthru
          _
        // Predicated region
        $region41: #{gpt2_forward.6} parent=31 // pred_check
          %p373 = pneg %p101
        $region42: #{gpt2_forward.6} parent=31 // pred_check_branch
          %375 = sbr.rel (%p373) target = $region44
        $region43: #{gpt2_forward.6} parent=31 // pred_region
          %s376 = sand.u32 %s29, 1
          %s377 = scalar_lea.sflag [#allocation7], %s376
          %s378 = sand.u32 %s91, 1
          %s379 = smul.addr %s378, 4
          %s380 = scalar_lea.vmem [#allocation8], %s379
          %s382 = ssub.s32 64, 64
          %383 = vsyncadd %s377, %s382
          %s384 = smul.addr %s29, 5
          %s385 = sadd.s32 2, %s384
          %s386 = smul.addr %s385, 64
          %s387 = scalar_lea.hbm %s2, %s386
          %s389 = sshll.u32 %s380, 4
          %s390 = int_to_ptr.vmem [resolvable:$true] %s389
          %392 = dma.hbm_to_vmem [thread:$0]  %s387, 64, %s390, %s377
        $region44: #{gpt2_forward.6} parent=31 // pred_fallthru
          _
        // Predicated region
        $region45: #{gpt2_forward.6} parent=31 // pred_check
          %p393 = pneg %p127
        $region46: #{gpt2_forward.6} parent=31 // pred_check_branch
          %395 = sbr.rel (%p393) target = $region48
        $region47: #{gpt2_forward.6} parent=31 // pred_region
          %s396 = sand.u32 %s29, 1
          %s397 = scalar_lea.sflag [#allocation10], %s396
          %s398 = sand.u32 %s117, 1
          %s399 = scalar_lea.vmem [#allocation9], %s398
          %s401 = ssub.s32 16, 16
          %402 = vsyncadd %s397, %s401
          %s403 = smul.addr %s29, 16
          %s404 = scalar_lea.hbm %s3, %s403
          %s406 = sshll.u32 %s399, 4
          %s407 = int_to_ptr.vmem [resolvable:$true] %s406
          %409 = dma.hbm_to_vmem [thread:$0]  %s404, 16, %s407, %s397
        $region48: #{gpt2_forward.6} parent=31 // pred_fallthru
          _
        // Predicated region
        $region49: #{gpt2_forward.6} parent=31 // pred_check
          %p410 = pneg %p153
        $region50: #{gpt2_forward.6} parent=31 // pred_check_branch
          %412 = sbr.rel (%p410) target = $region52
        $region51: #{gpt2_forward.6} parent=31 // pred_region
          %s413 = sand.u32 %s29, 1
          %s414 = scalar_lea.sflag [#allocation10], %s413
          %s415 = sand.u32 %s143, 1
          %s416 = smul.addr %s415, 4
          %s417 = scalar_lea.vmem [#allocation11], %s416
          %s419 = ssub.s32 64, 64
          %420 = vsyncadd %s414, %s419
          %s421 = smul.addr %s29, 64
          %s422 = scalar_lea.hbm %s4, %s421
          %s424 = sshll.u32 %s417, 4
          %s425 = int_to_ptr.vmem [resolvable:$true] %s424
          %427 = dma.hbm_to_vmem [thread:$0]  %s422, 64, %s425, %s414
        $region52: #{gpt2_forward.6} parent=31 // pred_fallthru
          _
      $region32: #{gpt2_forward.6} parent=5 // pred_fallthru
        _
      %p428 = scmp.le.s32.totalorder 1, %s29
      %p429 = scmp.lt.s32.totalorder %s29, 3
      %p430 = pnand %p428, %p429
      %p431 = pneg %p430
      // Predicated region
      $region53: #{gpt2_forward.6} parent=5 // pred_check
        _
      $region54: #{gpt2_forward.6} parent=5 // pred_check_branch
        %433 = sbr.rel (%p430) target = $region56
      $region55: #{gpt2_forward.6} parent=5 // pred_region
        %s434 = ssub.s32 %s29, 1
        %s435 = sand.u32 %s42, 1
        %s436 = scalar_lea.sflag [#allocation4], %s435
        %s437 = sand.u32 %s42, 1
        %s438 = smul.addr %s437, 4
        %s439 = scalar_lea.vmem [#allocation3], %s438
        // Predicated region
        $region57: #{gpt2_forward.6} parent=55 // pred_check
          %p440 = pneg %p55
        $region58: #{gpt2_forward.6} parent=55 // pred_check_branch
          %442 = sbr.rel (%p440) target = $region60
        $region59: #{gpt2_forward.6} parent=55 // pred_region
          %443 = dma.done %s436, 64
        $region60: #{gpt2_forward.6} parent=55 // pred_fallthru
          _
        %s444 = sand.u32 %s34, 1
        %s445 = scalar_lea.sflag [#allocation7], %s444
        %s446 = sand.u32 %s68, 1
        %s447 = smul.addr %s446, 4
        %s448 = scalar_lea.vmem [#allocation6], %s447
        // Predicated region
        $region61: #{gpt2_forward.6} parent=55 // pred_check
          %p449 = pneg %p81
        $region62: #{gpt2_forward.6} parent=55 // pred_check_branch
          %451 = sbr.rel (%p449) target = $region64
        $region63: #{gpt2_forward.6} parent=55 // pred_region
          %452 = dma.done %s445, 64
        $region64: #{gpt2_forward.6} parent=55 // pred_fallthru
          _
        %s453 = sand.u32 %s34, 1
        %s454 = scalar_lea.sflag [#allocation7], %s453
        %s455 = sand.u32 %s94, 1
        %s456 = smul.addr %s455, 4
        %s457 = scalar_lea.vmem [#allocation8], %s456
        // Predicated region
        $region65: #{gpt2_forward.6} parent=55 // pred_check
          %p458 = pneg %p107
        $region66: #{gpt2_forward.6} parent=55 // pred_check_branch
          %460 = sbr.rel (%p458) target = $region68
        $region67: #{gpt2_forward.6} parent=55 // pred_region
          %461 = dma.done %s454, 64
        $region68: #{gpt2_forward.6} parent=55 // pred_fallthru
          _
        %s462 = sand.u32 %s34, 1
        %s463 = scalar_lea.sflag [#allocation10], %s462
        %s464 = sand.u32 %s120, 1
        %s465 = scalar_lea.vmem [#allocation9], %s464
        // Predicated region
        $region69: #{gpt2_forward.6} parent=55 // pred_check
          %p466 = pneg %p133
        $region70: #{gpt2_forward.6} parent=55 // pred_check_branch
          %468 = sbr.rel (%p466) target = $region72
        $region71: #{gpt2_forward.6} parent=55 // pred_region
          %469 = dma.done %s463, 16
        $region72: #{gpt2_forward.6} parent=55 // pred_fallthru
          _
        %s470 = sand.u32 %s34, 1
        %s471 = scalar_lea.sflag [#allocation10], %s470
        %s472 = sand.u32 %s146, 1
        %s473 = smul.addr %s472, 4
        %s474 = scalar_lea.vmem [#allocation11], %s473
        // Predicated region
        $region73: #{gpt2_forward.6} parent=55 // pred_check
          %p475 = pneg %p159
        $region74: #{gpt2_forward.6} parent=55 // pred_check_branch
          %477 = sbr.rel (%p475) target = $region76
        $region75: #{gpt2_forward.6} parent=55 // pred_region
          %478 = dma.done %s471, 64
        $region76: #{gpt2_forward.6} parent=55 // pred_fallthru
          _
        // Predicated region
        $region77: #{gpt2_forward.6} parent=55 // pred_check
          %p479 = pneg %p180
        $region78: #{gpt2_forward.6} parent=55 // pred_check_branch
          %481 = sbr.rel (%p479) target = $region80
        $region79: #{gpt2_forward.6} parent=55 // pred_region
          %482 = dma.done [#allocation13], 1024
        $region80: #{gpt2_forward.6} parent=55 // pred_fallthru
          _
        // Predicated region
        $region81: #{gpt2_forward.6} parent=55 // pred_check
          %p483 = pneg %p201
        $region82: #{gpt2_forward.6} parent=55 // pred_check_branch
          %485 = sbr.rel (%p483) target = $region84
        $region83: #{gpt2_forward.6} parent=55 // pred_region
          %486 = dma.done [#allocation13], 16
        $region84: #{gpt2_forward.6} parent=55 // pred_fallthru
          _
        // Predicated region
        $region85: #{gpt2_forward.6} parent=55 // pred_check
          %p487 = pneg %p222
        $region86: #{gpt2_forward.6} parent=55 // pred_check_branch
          %489 = sbr.rel (%p487) target = $region88
        $region87: #{gpt2_forward.6} parent=55 // pred_region
          %490 = dma.done [#allocation16], 16
        $region88: #{gpt2_forward.6} parent=55 // pred_fallthru
          _
        // Predicated region
        $region89: #{gpt2_forward.6} parent=55 // pred_check
          %p491 = pneg %p243
        $region90: #{gpt2_forward.6} parent=55 // pred_check_branch
          %493 = sbr.rel (%p491) target = $region92
        $region91: #{gpt2_forward.6} parent=55 // pred_region
          %494 = dma.done [#allocation16], 16
        $region92: #{gpt2_forward.6} parent=55 // pred_fallthru
          _
        %s495 = sand.u32 %s42, 1
        %s496 = scalar_lea.sflag [#allocation4], %s495
        %s497 = sand.u32 %s42, 1
        %s498 = smul.addr %s497, 4
        %s499 = scalar_lea.vmem [#allocation3], %s498
        %p500 = pneg %p55
        %p501 = pneg %p52
        %s502 = sand.u32 %s34, 1
        %s503 = scalar_lea.sflag [#allocation7], %s502
        %s504 = sand.u32 %s68, 1
        %s505 = smul.addr %s504, 4
        %s506 = scalar_lea.vmem [#allocation6], %s505
        %p507 = pneg %p81
        %p508 = pneg %p78
        %s509 = sand.u32 %s34, 1
        %s510 = scalar_lea.sflag [#allocation7], %s509
        %s511 = sand.u32 %s94, 1
        %s512 = smul.addr %s511, 4
        %s513 = scalar_lea.vmem [#allocation8], %s512
        %p514 = pneg %p107
        %p515 = pneg %p104
        %s516 = sand.u32 %s34, 1
        %s517 = scalar_lea.sflag [#allocation10], %s516
        %s518 = sand.u32 %s120, 1
        %s519 = scalar_lea.vmem [#allocation9], %s518
        %p520 = pneg %p133
        %p521 = pneg %p130
        %s522 = sand.u32 %s34, 1
        %s523 = scalar_lea.sflag [#allocation10], %s522
        %s524 = sand.u32 %s146, 1
        %s525 = smul.addr %s524, 4
        %s526 = scalar_lea.vmem [#allocation11], %s525
        %p527 = pneg %p159
        %p528 = pneg %p156
        %p529 = pneg %p180
        %p530 = pneg %p177
        %p531 = pneg %p201
        %p532 = pneg %p198
        %p533 = pneg %p222
        %p534 = pneg %p219
        %p535 = pneg %p243
        %p536 = pneg %p240
        %p537 = pneg %p269
        %p538 = pneg %p266
        %s539 = sand.u32 %s256, 1
        %s540 = scalar_lea.sflag [#allocation5], %s539
        %s541 = sand.u32 %s256, 1
        %s542 = smul.addr %s541, 4
        %s543 = scalar_lea.vmem [#allocation18], %s542
        %v545 = vld [vmem:[%s439] sm:$0xf]
        %v546 = vld [vmem:[%s448] sm:$0xf]
        %v547 = vld [vmem:[%s457] sm:$0xf]
        %v548 = vld [vmem:[%s465] sm:$0x1]
        %v550 = vlaneseq
        %v551 = vshrl.u32 %v550, 7
        %v552 = vsub.s32 0, %v551
        %v553 = vrot.slane %v548, %v552
        %vm555 = vcmask 130048
        %v557 = vsel %vm555, %v545, 0
        %v560 = vsel %vm555, %v546, 0
        %562 = vmatprep.subr.bf16.mxu0 0
        %563 = vmatpush1.bf16.xpose.msra.mxu0 %v560
        %564 = vmatprep.subr.bf16.mxu0 0
        %565 = vmatpush1.bf16.xpose.msra.mxu0 0
        %566 = vmatprep.subr.bf16.mxu0 0
        %567 = vmatpush1.bf16.xpose.msra.mxu0 0
        %568 = vmatprep.subr.bf16.mxu0 0
        %569 = vmatpush1.bf16.xpose.msra.mxu0 0
        %570 = vmatprep.subr.bf16.mxu0 0
        %571 = vmatpush1.bf16.xpose.msra.mxu0 0
        %572 = vmatprep.subr.bf16.mxu0 0
        %573 = vmatpush1.bf16.xpose.msra.mxu0 0
        %574 = vmatprep.subr.bf16.mxu0 0
        %575 = vmatpush1.bf16.xpose.msra.mxu0 0
        %576 = vmatprep.subr.bf16.mxu0 0
        %577 = vmatpush1.bf16.xpose.msra.mxu0 0
        %578 = vmatprep.subr.bf16.mxu0 0
        %579 = vmatpush1.bf16.xpose.msra.mxu0 0
        %580 = vmatprep.subr.bf16.mxu0 0
        %581 = vmatpush1.bf16.xpose.msra.mxu0 0
        %582 = vmatprep.subr.bf16.mxu0 0
        %583 = vmatpush1.bf16.xpose.msra.mxu0 0
        %584 = vmatprep.subr.bf16.mxu0 0
        %585 = vmatpush1.bf16.xpose.msra.mxu0 0
        %586 = vmatprep.subr.bf16.mxu0 0
        %587 = vmatpush1.bf16.xpose.msra.mxu0 0
        %588 = vmatprep.subr.bf16.mxu0 0
        %589 = vmatpush1.bf16.xpose.msra.mxu0 0
        %590 = vmatprep.subr.bf16.mxu0 0
        %591 = vmatpush1.bf16.xpose.msra.mxu0 0
        %592 = vmatprep.subr.bf16.mxu0 0
        %593 = vmatpush1.bf16.xpose.msra.mxu0 0
        %594 = vmatprep.mubr.bf16.mxu0 0
        %595 = vmatmul.mubr.bf16.gmra.mrb[0].mxu0 %v557
        %v596 = vpop.f32.mrb[0].mxu0
        %v597 = vadd.f32 %v553, %v596
        %v598 = vpop.f32.mrb[0].mxu0
        %v599 = vpop.f32.mrb[0].mxu0
        %v600 = vpop.f32.mrb[0].mxu0
        %601 = vdwg.mxu0
        %vm602 = vcmask 64512
        %v603 = vsel %vm602, %v597, -inf
        %604 = vmax.xlane.f32.xlu0 %v603
        %v605 = vpop.xlane.xlu0 %604
        %v606 = vsub.f32 %v597, %v605
        %v607 = vmul.f32 %v606, 1.442695
        %v608 = vpow.pop %v607
        %v609 = vsel %vm602, %v608, 0.0
        %610 = vadd.xlane.f32.xlu0 %v609
        %v611 = vpop.xlane.xlu0 %610
        %v612 = vrcp.pop %v611
        %v613 = vmul.f32 %v608, %v612
        %v614 = vpack.c.bf16 %v613, %v613
        %v616 = vsel %vm602, %v614, 0
        %vm618 = vcmask 1043456
        %v620 = vsel %vm618, %v547, 0
        %622 = vmatprep.subr.bf16.mxu0 0
        %623 = vmatpush1.bf16.msra.mxu0 %v620
        %624 = vmatprep.subr.bf16.mxu0 0
        %625 = vmatpush1.bf16.msra.mxu0 0
        %626 = vmatprep.subr.bf16.mxu0 0
        %627 = vmatpush1.bf16.msra.mxu0 0
        %628 = vmatprep.subr.bf16.mxu0 0
        %629 = vmatpush1.bf16.msra.mxu0 0
        %630 = vmatprep.subr.bf16.mxu0 0
        %631 = vmatpush1.bf16.msra.mxu0 0
        %632 = vmatprep.subr.bf16.mxu0 0
        %633 = vmatpush1.bf16.msra.mxu0 0
        %634 = vmatprep.subr.bf16.mxu0 0
        %635 = vmatpush1.bf16.msra.mxu0 0
        %636 = vmatprep.subr.bf16.mxu0 0
        %637 = vmatpush1.bf16.msra.mxu0 0
        %638 = vmatprep.subr.bf16.mxu0 0
        %639 = vmatpush1.bf16.msra.mxu0 0
        %640 = vmatprep.subr.bf16.mxu0 0
        %641 = vmatpush1.bf16.msra.mxu0 0
        %642 = vmatprep.subr.bf16.mxu0 0
        %643 = vmatpush1.bf16.msra.mxu0 0
        %644 = vmatprep.subr.bf16.mxu0 0
        %645 = vmatpush1.bf16.msra.mxu0 0
        %646 = vmatprep.subr.bf16.mxu0 0
        %647 = vmatpush1.bf16.msra.mxu0 0
        %648 = vmatprep.subr.bf16.mxu0 0
        %649 = vmatpush1.bf16.msra.mxu0 0
        %650 = vmatprep.subr.bf16.mxu0 0
        %651 = vmatpush1.bf16.msra.mxu0 0
        %652 = vmatprep.subr.bf16.mxu0 0
        %653 = vmatpush1.bf16.msra.mxu0 0
        %654 = vmatprep.mubr.bf16.mxu0 0
        %655 = vmatmul.mubr.bf16.gmra.mrb[0].mxu0 %v616
        %v656 = vpop.f32.mrb[0].mxu0
        %v657 = vadd.f32 0.0, %v656
        %v658 = vpop.f32.mrb[0].mxu0
        %v659 = vpop.f32.mrb[0].mxu0
        %v660 = vpop.f32.mrb[0].mxu0
        %661 = vdwg.mxu0
        %662 = vst.msk [vmem:[#allocation2] sm:$0xff] %vm555, %v657
        %v664 = vunpack.c.l.b16 %v545
        %v665 = vpack.c.b16 %v664, %v664
        %666 = vrot.lane.b32.xlu0 %v665, 112
        %v667 = vpop.permute.xlu0 %666
        %v669 = vunpack.c.l.b16 %v546
        %v670 = vpack.c.b16 %v669, %v669
        %671 = vrot.lane.b32.xlu0 %v670, 112
        %v672 = vpop.permute.xlu0 %671
        %v674 = vsel %vm555, %v667, 0
        %v677 = vsel %vm555, %v672, 0
        %679 = vmatprep.subr.bf16.mxu0 0
        %680 = vmatpush1.bf16.xpose.msra.mxu0 %v677
        %681 = vmatprep.subr.bf16.mxu0 0
        %682 = vmatpush1.bf16.xpose.msra.mxu0 0
        %683 = vmatprep.subr.bf16.mxu0 0
        %684 = vmatpush1.bf16.xpose.msra.mxu0 0
        %685 = vmatprep.subr.bf16.mxu0 0
        %686 = vmatpush1.bf16.xpose.msra.mxu0 0
        %687 = vmatprep.subr.bf16.mxu0 0
        %688 = vmatpush1.bf16.xpose.msra.mxu0 0
        %689 = vmatprep.subr.bf16.mxu0 0
        %690 = vmatpush1.bf16.xpose.msra.mxu0 0
        %691 = vmatprep.subr.bf16.mxu0 0
        %692 = vmatpush1.bf16.xpose.msra.mxu0 0
        %693 = vmatprep.subr.bf16.mxu0 0
        %694 = vmatpush1.bf16.xpose.msra.mxu0 0
        %695 = vmatprep.subr.bf16.mxu0 0
        %696 = vmatpush1.bf16.xpose.msra.mxu0 0
        %697 = vmatprep.subr.bf16.mxu0 0
        %698 = vmatpush1.bf16.xpose.msra.mxu0 0
        %699 = vmatprep.subr.bf16.mxu0 0
        %700 = vmatpush1.bf16.xpose.msra.mxu0 0
        %701 = vmatprep.subr.bf16.mxu0 0
        %702 = vmatpush1.bf16.xpose.msra.mxu0 0
        %703 = vmatprep.subr.bf16.mxu0 0
        %704 = vmatpush1.bf16.xpose.msra.mxu0 0
        %705 = vmatprep.subr.bf16.mxu0 0
        %706 = vmatpush1.bf16.xpose.msra.mxu0 0
        %707 = vmatprep.subr.bf16.mxu0 0
        %708 = vmatpush1.bf16.xpose.msra.mxu0 0
        %709 = vmatprep.subr.bf16.mxu0 0
        %710 = vmatpush1.bf16.xpose.msra.mxu0 0
        %711 = vmatprep.mubr.bf16.mxu0 0
        %712 = vmatmul.mubr.bf16.gmra.mrb[0].mxu0 %v674
        %v713 = vpop.f32.mrb[0].mxu0
        %v714 = vadd.f32 %v553, %v713
        %v715 = vpop.f32.mrb[0].mxu0
        %v716 = vpop.f32.mrb[0].mxu0
        %v717 = vpop.f32.mrb[0].mxu0
        %718 = vdwg.mxu0
        %v719 = vsel %vm602, %v714, -inf
        %720 = vmax.xlane.f32.xlu0 %v719
        %v721 = vpop.xlane.xlu0 %720
        %v722 = vsub.f32 %v714, %v721
        %v723 = vmul.f32 %v722, 1.442695
        %v724 = vpow.pop %v723
        %v725 = vsel %vm602, %v724, 0.0
        %726 = vadd.xlane.f32.xlu0 %v725
        %v727 = vpop.xlane.xlu0 %726
        %v728 = vrcp.pop %v727
        %v729 = vmul.f32 %v724, %v728
        %v730 = vpack.c.bf16 %v729, %v729
        %v732 = vunpack.c.l.b16 %v547
        %v733 = vpack.c.b16 %v732, %v732
        %734 = vrot.lane.b32.xlu0 %v733, 112
        %v735 = vpop.permute.xlu0 %734
        %v737 = vsel %vm602, %v730, 0
        %v740 = vsel %vm618, %v735, 0
        %742 = vmatprep.subr.bf16.mxu0 0
        %743 = vmatpush1.bf16.msra.mxu0 %v740
        %744 = vmatprep.subr.bf16.mxu0 0
        %745 = vmatpush1.bf16.msra.mxu0 0
        %746 = vmatprep.subr.bf16.mxu0 0
        %747 = vmatpush1.bf16.msra.mxu0 0
        %748 = vmatprep.subr.bf16.mxu0 0
        %749 = vmatpush1.bf16.msra.mxu0 0
        %750 = vmatprep.subr.bf16.mxu0 0
        %751 = vmatpush1.bf16.msra.mxu0 0
        %752 = vmatprep.subr.bf16.mxu0 0
        %753 = vmatpush1.bf16.msra.mxu0 0
        %754 = vmatprep.subr.bf16.mxu0 0
        %755 = vmatpush1.bf16.msra.mxu0 0
        %756 = vmatprep.subr.bf16.mxu0 0
        %757 = vmatpush1.bf16.msra.mxu0 0
        %758 = vmatprep.subr.bf16.mxu0 0
        %759 = vmatpush1.bf16.msra.mxu0 0
        %760 = vmatprep.subr.bf16.mxu0 0
        %761 = vmatpush1.bf16.msra.mxu0 0
        %762 = vmatprep.subr.bf16.mxu0 0
        %763 = vmatpush1.bf16.msra.mxu0 0
        %764 = vmatprep.subr.bf16.mxu0 0
        %765 = vmatpush1.bf16.msra.mxu0 0
        %766 = vmatprep.subr.bf16.mxu0 0
        %767 = vmatpush1.bf16.msra.mxu0 0
        %768 = vmatprep.subr.bf16.mxu0 0
        %769 = vmatpush1.bf16.msra.mxu0 0
        %770 = vmatprep.subr.bf16.mxu0 0
        %771 = vmatpush1.bf16.msra.mxu0 0
        %772 = vmatprep.subr.bf16.mxu0 0
        %773 = vmatpush1.bf16.msra.mxu0 0
        %774 = vmatprep.mubr.bf16.mxu0 0
        %775 = vmatmul.mubr.bf16.gmra.mrb[0].mxu0 %v737
        %v776 = vpop.f32.mrb[0].mxu0
        %v777 = vadd.f32 0.0, %v776
        %v778 = vpop.f32.mrb[0].mxu0
        %v779 = vpop.f32.mrb[0].mxu0
        %v780 = vpop.f32.mrb[0].mxu0
        %781 = vdwg.mxu0
        %783 = vrot.lane.b32.xlu0 %v777, 16
        %v784 = vpop.permute.xlu0 %783
        %vm786 = vcmask 261248
        %787 = vst.msk [vmem:[#allocation2] sm:$0xff] %vm786, %v784
        %788 = vrot.lane.b32.xlu0 %v665, 96
        %v789 = vpop.permute.xlu0 %788
        %790 = vrot.lane.b32.xlu0 %v670, 96
        %v791 = vpop.permute.xlu0 %790
        %v793 = vsel %vm555, %v789, 0
        %v796 = vsel %vm555, %v791, 0
        %798 = vmatprep.subr.bf16.mxu0 0
        %799 = vmatpush1.bf16.xpose.msra.mxu0 %v796
        %800 = vmatprep.subr.bf16.mxu0 0
        %801 = vmatpush1.bf16.xpose.msra.mxu0 0
        %802 = vmatprep.subr.bf16.mxu0 0
        %803 = vmatpush1.bf16.xpose.msra.mxu0 0
        %804 = vmatprep.subr.bf16.mxu0 0
        %805 = vmatpush1.bf16.xpose.msra.mxu0 0
        %806 = vmatprep.subr.bf16.mxu0 0
        %807 = vmatpush1.bf16.xpose.msra.mxu0 0
        %808 = vmatprep.subr.bf16.mxu0 0
        %809 = vmatpush1.bf16.xpose.msra.mxu0 0
        %810 = vmatprep.subr.bf16.mxu0 0
        %811 = vmatpush1.bf16.xpose.msra.mxu0 0
        %812 = vmatprep.subr.bf16.mxu0 0
        %813 = vmatpush1.bf16.xpose.msra.mxu0 0
        %814 = vmatprep.subr.bf16.mxu0 0
        %815 = vmatpush1.bf16.xpose.msra.mxu0 0
        %816 = vmatprep.subr.bf16.mxu0 0
        %817 = vmatpush1.bf16.xpose.msra.mxu0 0
        %818 = vmatprep.subr.bf16.mxu0 0
        %819 = vmatpush1.bf16.xpose.msra.mxu0 0
        %820 = vmatprep.subr.bf16.mxu0 0
        %821 = vmatpush1.bf16.xpose.msra.mxu0 0
        %822 = vmatprep.subr.bf16.mxu0 0
        %823 = vmatpush1.bf16.xpose.msra.mxu0 0
        %824 = vmatprep.subr.bf16.mxu0 0
        %825 = vmatpush1.bf16.xpose.msra.mxu0 0
        %826 = vmatprep.subr.bf16.mxu0 0
        %827 = vmatpush1.bf16.xpose.msra.mxu0 0
        %828 = vmatprep.subr.bf16.mxu0 0
        %829 = vmatpush1.bf16.xpose.msra.mxu0 0
        %830 = vmatprep.mubr.bf16.mxu0 0
        %831 = vmatmul.mubr.bf16.gmra.mrb[0].mxu0 %v793
        %v832 = vpop.f32.mrb[0].mxu0
        %v833 = vadd.f32 %v553, %v832
        %v834 = vpop.f32.mrb[0].mxu0
        %v835 = vpop.f32.mrb[0].mxu0
        %v836 = vpop.f32.mrb[0].mxu0
        %837 = vdwg.mxu0
        %v838 = vsel %vm602, %v833, -inf
        %839 = vmax.xlane.f32.xlu0 %v838
        %v840 = vpop.xlane.xlu0 %839
        %v841 = vsub.f32 %v833, %v840
        %v842 = vmul.f32 %v841, 1.442695
        %v843 = vpow.pop %v842
        %v844 = vsel %vm602, %v843, 0.0
        %845 = vadd.xlane.f32.xlu0 %v844
        %v846 = vpop.xlane.xlu0 %845
        %v847 = vrcp.pop %v846
        %v848 = vmul.f32 %v843, %v847
        %v849 = vpack.c.bf16 %v848, %v848
        %850 = vrot.lane.b32.xlu0 %v733, 96
        %v851 = vpop.permute.xlu0 %850
        %v853 = vsel %vm602, %v849, 0
        %v856 = vsel %vm618, %v851, 0
        %858 = vmatprep.subr.bf16.mxu0 0
        %859 = vmatpush1.bf16.msra.mxu0 %v856
        %860 = vmatprep.subr.bf16.mxu0 0
        %861 = vmatpush1.bf16.msra.mxu0 0
        %862 = vmatprep.subr.bf16.mxu0 0
        %863 = vmatpush1.bf16.msra.mxu0 0
        %864 = vmatprep.subr.bf16.mxu0 0
        %865 = vmatpush1.bf16.msra.mxu0 0
        %866 = vmatprep.subr.bf16.mxu0 0
        %867 = vmatpush1.bf16.msra.mxu0 0
        %868 = vmatprep.subr.bf16.mxu0 0
        %869 = vmatpush1.bf16.msra.mxu0 0
        %870 = vmatprep.subr.bf16.mxu0 0
        %871 = vmatpush1.bf16.msra.mxu0 0
        %872 = vmatprep.subr.bf16.mxu0 0
        %873 = vmatpush1.bf16.msra.mxu0 0
        %874 = vmatprep.subr.bf16.mxu0 0
        %875 = vmatpush1.bf16.msra.mxu0 0
        %876 = vmatprep.subr.bf16.mxu0 0
        %877 = vmatpush1.bf16.msra.mxu0 0
        %878 = vmatprep.subr.bf16.mxu0 0
        %879 = vmatpush1.bf16.msra.mxu0 0
        %880 = vmatprep.subr.bf16.mxu0 0
        %881 = vmatpush1.bf16.msra.mxu0 0
        %882 = vmatprep.subr.bf16.mxu0 0
        %883 = vmatpush1.bf16.msra.mxu0 0
        %884 = vmatprep.subr.bf16.mxu0 0
        %885 = vmatpush1.bf16.msra.mxu0 0
        %886 = vmatprep.subr.bf16.mxu0 0
        %887 = vmatpush1.bf16.msra.mxu0 0
        %888 = vmatprep.subr.bf16.mxu0 0
        %889 = vmatpush1.bf16.msra.mxu0 0
        %890 = vmatprep.mubr.bf16.mxu0 0
        %891 = vmatmul.mubr.bf16.gmra.mrb[0].mxu0 %v853
        %v892 = vpop.f32.mrb[0].mxu0
        %v893 = vadd.f32 0.0, %v892
        %v894 = vpop.f32.mrb[0].mxu0
        %v895 = vpop.f32.mrb[0].mxu0
        %v896 = vpop.f32.mrb[0].mxu0
        %897 = vdwg.mxu0
        %899 = vrot.lane.b32.xlu0 %v893, 32
        %v900 = vpop.permute.xlu0 %899
        %vm902 = vcmask 392448
        %903 = vst.msk [vmem:[#allocation2] sm:$0xff] %vm902, %v900
        %904 = vrot.lane.b32.xlu0 %v665, 80
        %v905 = vpop.permute.xlu0 %904
        %906 = vrot.lane.b32.xlu0 %v670, 80
        %v907 = vpop.permute.xlu0 %906
        %v909 = vsel %vm555, %v905, 0
        %v912 = vsel %vm555, %v907, 0
        %914 = vmatprep.subr.bf16.mxu0 0
        %915 = vmatpush1.bf16.xpose.msra.mxu0 %v912
        %916 = vmatprep.subr.bf16.mxu0 0
        %917 = vmatpush1.bf16.xpose.msra.mxu0 0
        %918 = vmatprep.subr.bf16.mxu0 0
        %919 = vmatpush1.bf16.xpose.msra.mxu0 0
        %920 = vmatprep.subr.bf16.mxu0 0
        %921 = vmatpush1.bf16.xpose.msra.mxu0 0
        %922 = vmatprep.subr.bf16.mxu0 0
        %923 = vmatpush1.bf16.xpose.msra.mxu0 0
        %924 = vmatprep.subr.bf16.mxu0 0
        %925 = vmatpush1.bf16.xpose.msra.mxu0 0
        %926 = vmatprep.subr.bf16.mxu0 0
        %927 = vmatpush1.bf16.xpose.msra.mxu0 0
        %928 = vmatprep.subr.bf16.mxu0 0
        %929 = vmatpush1.bf16.xpose.msra.mxu0 0
        %930 = vmatprep.subr.bf16.mxu0 0
        %931 = vmatpush1.bf16.xpose.msra.mxu0 0
        %932 = vmatprep.subr.bf16.mxu0 0
        %933 = vmatpush1.bf16.xpose.msra.mxu0 0
        %934 = vmatprep.subr.bf16.mxu0 0
        %935 = vmatpush1.bf16.xpose.msra.mxu0 0
        %936 = vmatprep.subr.bf16.mxu0 0
        %937 = vmatpush1.bf16.xpose.msra.mxu0 0
        %938 = vmatprep.subr.bf16.mxu0 0
        %939 = vmatpush1.bf16.xpose.msra.mxu0 0
        %940 = vmatprep.subr.bf16.mxu0 0
        %941 = vmatpush1.bf16.xpose.msra.mxu0 0
        %942 = vmatprep.subr.bf16.mxu0 0
        %943 = vmatpush1.bf16.xpose.msra.mxu0 0
        %944 = vmatprep.subr.bf16.mxu0 0
        %945 = vmatpush1.bf16.xpose.msra.mxu0 0
        %946 = vmatprep.mubr.bf16.mxu0 0
        %947 = vmatmul.mubr.bf16.gmra.mrb[0].mxu0 %v909
        %v948 = vpop.f32.mrb[0].mxu0
        %v949 = vadd.f32 %v553, %v948
        %v950 = vpop.f32.mrb[0].mxu0
        %v951 = vpop.f32.mrb[0].mxu0
        %v952 = vpop.f32.mrb[0].mxu0
        %953 = vdwg.mxu0
        %v954 = vsel %vm602, %v949, -inf
        %955 = vmax.xlane.f32.xlu0 %v954
        %v956 = vpop.xlane.xlu0 %955
        %v957 = vsub.f32 %v949, %v956
        %v958 = vmul.f32 %v957, 1.442695
        %v959 = vpow.pop %v958
        %v960 = vsel %vm602, %v959, 0.0
        %961 = vadd.xlane.f32.xlu0 %v960
        %v962 = vpop.xlane.xlu0 %961
        %v963 = vrcp.pop %v962
        %v964 = vmul.f32 %v959, %v963
        %v965 = vpack.c.bf16 %v964, %v964
        %966 = vrot.lane.b32.xlu0 %v733, 80
        %v967 = vpop.permute.xlu0 %966
        %v969 = vsel %vm602, %v965, 0
        %v972 = vsel %vm618, %v967, 0
        %974 = vmatprep.subr.bf16.mxu0 0
        %975 = vmatpush1.bf16.msra.mxu0 %v972
        %976 = vmatprep.subr.bf16.mxu0 0
        %977 = vmatpush1.bf16.msra.mxu0 0
        %978 = vmatprep.subr.bf16.mxu0 0
        %979 = vmatpush1.bf16.msra.mxu0 0
        %980 = vmatprep.subr.bf16.mxu0 0
        %981 = vmatpush1.bf16.msra.mxu0 0
        %982 = vmatprep.subr.bf16.mxu0 0
        %983 = vmatpush1.bf16.msra.mxu0 0
        %984 = vmatprep.subr.bf16.mxu0 0
        %985 = vmatpush1.bf16.msra.mxu0 0
        %986 = vmatprep.subr.bf16.mxu0 0
        %987 = vmatpush1.bf16.msra.mxu0 0
        %988 = vmatprep.subr.bf16.mxu0 0
        %989 = vmatpush1.bf16.msra.mxu0 0
        %990 = vmatprep.subr.bf16.mxu0 0
        %991 = vmatpush1.bf16.msra.mxu0 0
        %992 = vmatprep.subr.bf16.mxu0 0
        %993 = vmatpush1.bf16.msra.mxu0 0
        %994 = vmatprep.subr.bf16.mxu0 0
        %995 = vmatpush1.bf16.msra.mxu0 0
        %996 = vmatprep.subr.bf16.mxu0 0
        %997 = vmatpush1.bf16.msra.mxu0 0
        %998 = vmatprep.subr.bf16.mxu0 0
        %999 = vmatpush1.bf16.msra.mxu0 0
        %1000 = vmatprep.subr.bf16.mxu0 0
        %1001 = vmatpush1.bf16.msra.mxu0 0
        %1002 = vmatprep.subr.bf16.mxu0 0
        %1003 = vmatpush1.bf16.msra.mxu0 0
        %1004 = vmatprep.subr.bf16.mxu0 0
        %1005 = vmatpush1.bf16.msra.mxu0 0
        %1006 = vmatprep.mubr.bf16.mxu0 0
        %1007 = vmatmul.mubr.bf16.gmra.mrb[0].mxu0 %v969
        %v1008 = vpop.f32.mrb[0].mxu0
        %v1009 = vadd.f32 0.0, %v1008
        %v1010 = vpop.f32.mrb[0].mxu0
        %v1011 = vpop.f32.mrb[0].mxu0
        %v1012 = vpop.f32.mrb[0].mxu0
        %1013 = vdwg.mxu0
        %1015 = vrot.lane.b32.xlu0 %v1009, 48
        %v1016 = vpop.permute.xlu0 %1015
        %vm1018 = vcmask 523648
        %1019 = vst.msk [vmem:[#allocation2] sm:$0xff] %vm1018, %v1016
        %1020 = vrot.lane.b32.xlu0 %v665, 64
        %v1021 = vpop.permute.xlu0 %1020
        %1022 = vrot.lane.b32.xlu0 %v670, 64
        %v1023 = vpop.permute.xlu0 %1022
        %v1025 = vsel %vm555, %v1021, 0
        %v1028 = vsel %vm555, %v1023, 0
        %1030 = vmatprep.subr.bf16.mxu0 0
        %1031 = vmatpush1.bf16.xpose.msra.mxu0 %v1028
        %1032 = vmatprep.subr.bf16.mxu0 0
        %1033 = vmatpush1.bf16.xpose.msra.mxu0 0
        %1034 = vmatprep.subr.bf16.mxu0 0
        %1035 = vmatpush1.bf16.xpose.msra.mxu0 0
        %1036 = vmatprep.subr.bf16.mxu0 0
        %1037 = vmatpush1.bf16.xpose.msra.mxu0 0
        %1038 = vmatprep.subr.bf16.mxu0 0
        %1039 = vmatpush1.bf16.xpose.msra.mxu0 0
        %1040 = vmatprep.subr.bf16.mxu0 0
        %1041 = vmatpush1.bf16.xpose.msra.mxu0 0
        %1042 = vmatprep.subr.bf16.mxu0 0
        %1043 = vmatpush1.bf16.xpose.msra.mxu0 0
        %1044 = vmatprep.subr.bf16.mxu0 0
        %1045 = vmatpush1.bf16.xpose.msra.mxu0 0
        %1046 = vmatprep.subr.bf16.mxu0 0
        %1047 = vmatpush1.bf16.xpose.msra.mxu0 0
        %1048 = vmatprep.subr.bf16.mxu0 0
        %1049 = vmatpush1.bf16.xpose.msra.mxu0 0
        %1050 = vmatprep.subr.bf16.mxu0 0
        %1051 = vmatpush1.bf16.xpose.msra.mxu0 0
        %1052 = vmatprep.subr.bf16.mxu0 0
        %1053 = vmatpush1.bf16.xpose.msra.mxu0 0
        %1054 = vmatprep.subr.bf16.mxu0 0
        %1055 = vmatpush1.bf16.xpose.msra.mxu0 0
        %1056 = vmatprep.subr.bf16.mxu0 0
        %1057 = vmatpush1.bf16.xpose.msra.mxu0 0
        %1058 = vmatprep.subr.bf16.mxu0 0
        %1059 = vmatpush1.bf16.xpose.msra.mxu0 0
        %1060 = vmatprep.subr.bf16.mxu0 0
        %1061 = vmatpush1.bf16.xpose.msra.mxu0 0
        %1062 = vmatprep.mubr.bf16.mxu0 0
        %1063 = vmatmul.mubr.bf16.gmra.mrb[0].mxu0 %v1025
        %v1064 = vpop.f32.mrb[0].mxu0
        %v1065 = vadd.f32 %v553, %v1064
        %v1066 = vpop.f32.mrb[0].mxu0
        %v1067 = vpop.f32.mrb[0].mxu0
        %v1068 = vpop.f32.mrb[0].mxu0
        %1069 = vdwg.mxu0
        %v1070 = vsel %vm602, %v1065, -inf
        %1071 = vmax.xlane.f32.xlu0 %v1070
        %v1072 = vpop.xlane.xlu0 %1071
        %v1073 = vsub.f32 %v1065, %v1072
        %v1074 = vmul.f32 %v1073, 1.442695
        %v1075 = vpow.pop %v1074
        %v1076 = vsel %vm602, %v1075, 0.0
        %1077 = vadd.xlane.f32.xlu0 %v1076
        %v1078 = vpop.xlane.xlu0 %1077
        %v1079 = vrcp.pop %v1078
        %v1080 = vmul.f32 %v1075, %v1079
        %v1081 = vpack.c.bf16 %v1080, %v1080
        %1082 = vrot.lane.b32.xlu0 %v733, 64
        %v1083 = vpop.permute.xlu0 %1082
        %v1085 = vsel %vm602, %v1081, 0
        %v1088 = vsel %vm618, %v1083, 0
        %1090 = vmatprep.subr.bf16.mxu0 0
        %1091 = vmatpush1.bf16.msra.mxu0 %v1088
        %1092 = vmatprep.subr.bf16.mxu0 0
        %1093 = vmatpush1.bf16.msra.mxu0 0
        %1094 = vmatprep.subr.bf16.mxu0 0
        %1095 = vmatpush1.bf16.msra.mxu0 0
        %1096 = vmatprep.subr.bf16.mxu0 0
        %1097 = vmatpush1.bf16.msra.mxu0 0
        %1098 = vmatprep.subr.bf16.mxu0 0
        %1099 = vmatpush1.bf16.msra.mxu0 0
        %1100 = vmatprep.subr.bf16.mxu0 0
        %1101 = vmatpush1.bf16.msra.mxu0 0
        %1102 = vmatprep.subr.bf16.mxu0 0
        %1103 = vmatpush1.bf16.msra.mxu0 0
        %1104 = vmatprep.subr.bf16.mxu0 0
        %1105 = vmatpush1.bf16.msra.mxu0 0
        %1106 = vmatprep.subr.bf16.mxu0 0
        %1107 = vmatpush1.bf16.msra.mxu0 0
        %1108 = vmatprep.subr.bf16.mxu0 0
        %1109 = vmatpush1.bf16.msra.mxu0 0
        %1110 = vmatprep.subr.bf16.mxu0 0
        %1111 = vmatpush1.bf16.msra.mxu0 0
        %1112 = vmatprep.subr.bf16.mxu0 0
        %1113 = vmatpush1.bf16.msra.mxu0 0
        %1114 = vmatprep.subr.bf16.mxu0 0
        %1115 = vmatpush1.bf16.msra.mxu0 0
        %1116 = vmatprep.subr.bf16.mxu0 0
        %1117 = vmatpush1.bf16.msra.mxu0 0
        %1118 = vmatprep.subr.bf16.mxu0 0
        %1119 = vmatpush1.bf16.msra.mxu0 0
        %1120 = vmatprep.subr.bf16.mxu0 0
        %1121 = vmatpush1.bf16.msra.mxu0 0
        %1122 = vmatprep.mubr.bf16.mxu0 0
        %1123 = vmatmul.mubr.bf16.gmra.mrb[0].mxu0 %v1085
        %v1124 = vpop.f32.mrb[0].mxu0
        %v1125 = vadd.f32 0.0, %v1124
        %v1126 = vpop.f32.mrb[0].mxu0
        %v1127 = vpop.f32.mrb[0].mxu0
        %v1128 = vpop.f32.mrb[0].mxu0
        %1129 = vdwg.mxu0
        %1131 = vrot.lane.b32.xlu0 %v1125, 64
        %v1132 = vpop.permute.xlu0 %1131
        %vm1134 = vcmask 654848
        %1135 = vst.msk [vmem:[#allocation2] sm:$0xff] %vm1134, %v1132
        %1136 = vrot.lane.b32.xlu0 %v665, 48
        %v1137 = vpop.permute.xlu0 %1136
        %1138 = vrot.lane.b32.xlu0 %v670, 48
        %v1139 = vpop.permute.xlu0 %1138
        %v1141 = vsel %vm555, %v1137, 0
        %v1144 = vsel %vm555, %v1139, 0
        %1146 = vmatprep.subr.bf16.mxu0 0
        %1147 = vmatpush1.bf16.xpose.msra.mxu0 %v1144
        %1148 = vmatprep.subr.bf16.mxu0 0
        %1149 = vmatpush1.bf16.xpose.msra.mxu0 0
        %1150 = vmatprep.subr.bf16.mxu0 0
        %1151 = vmatpush1.bf16.xpose.msra.mxu0 0
        %1152 = vmatprep.subr.bf16.mxu0 0
        %1153 = vmatpush1.bf16.xpose.msra.mxu0 0
        %1154 = vmatprep.subr.bf16.mxu0 0
        %1155 = vmatpush1.bf16.xpose.msra.mxu0 0
        %1156 = vmatprep.subr.bf16.mxu0 0
        %1157 = vmatpush1.bf16.xpose.msra.mxu0 0
        %1158 = vmatprep.subr.bf16.mxu0 0
        %1159 = vmatpush1.bf16.xpose.msra.mxu0 0
        %1160 = vmatprep.subr.bf16.mxu0 0
        %1161 = vmatpush1.bf16.xpose.msra.mxu0 0
        %1162 = vmatprep.subr.bf16.mxu0 0
        %1163 = vmatpush1.bf16.xpose.msra.mxu0 0
        %1164 = vmatprep.subr.bf16.mxu0 0
        %1165 = vmatpush1.bf16.xpose.msra.mxu0 0
        %1166 = vmatprep.subr.bf16.mxu0 0
        %1167 = vmatpush1.bf16.xpose.msra.mxu0 0
        %1168 = vmatprep.subr.bf16.mxu0 0
        %1169 = vmatpush1.bf16.xpose.msra.mxu0 0
        %1170 = vmatprep.subr.bf16.mxu0 0
        %1171 = vmatpush1.bf16.xpose.msra.mxu0 0
        %1172 = vmatprep.subr.bf16.mxu0 0
        %1173 = vmatpush1.bf16.xpose.msra.mxu0 0
        %1174 = vmatprep.subr.bf16.mxu0 0
        %1175 = vmatpush1.bf16.xpose.msra.mxu0 0
        %1176 = vmatprep.subr.bf16.mxu0 0
        %1177 = vmatpush1.bf16.xpose.msra.mxu0 0
        %1178 = vmatprep.mubr.bf16.mxu0 0
        %1179 = vmatmul.mubr.bf16.gmra.mrb[0].mxu0 %v1141
        %v1180 = vpop.f32.mrb[0].mxu0
        %v1181 = vadd.f32 %v553, %v1180
        %v1182 = vpop.f32.mrb[0].mxu0
        %v1183 = vpop.f32.mrb[0].mxu0
        %v1184 = vpop.f32.mrb[0].mxu0
        %1185 = vdwg.mxu0
        %v1186 = vsel %vm602, %v1181, -inf
        %1187 = vmax.xlane.f32.xlu0 %v1186
        %v1188 = vpop.xlane.xlu0 %1187
        %v1189 = vsub.f32 %v1181, %v1188
        %v1190 = vmul.f32 %v1189, 1.442695
        %v1191 = vpow.pop %v1190
        %v1192 = vsel %vm602, %v1191, 0.0
        %1193 = vadd.xlane.f32.xlu0 %v1192
        %v1194 = vpop.xlane.xlu0 %1193
        %v1195 = vrcp.pop %v1194
        %v1196 = vmul.f32 %v1191, %v1195
        %v1197 = vpack.c.bf16 %v1196, %v1196
        %1198 = vrot.lane.b32.xlu0 %v733, 48
        %v1199 = vpop.permute.xlu0 %1198
        %v1201 = vsel %vm602, %v1197, 0
        %v1204 = vsel %vm618, %v1199, 0
        %1206 = vmatprep.subr.bf16.mxu0 0
        %1207 = vmatpush1.bf16.msra.mxu0 %v1204
        %1208 = vmatprep.subr.bf16.mxu0 0
        %1209 = vmatpush1.bf16.msra.mxu0 0
        %1210 = vmatprep.subr.bf16.mxu0 0
        %1211 = vmatpush1.bf16.msra.mxu0 0
        %1212 = vmatprep.subr.bf16.mxu0 0
        %1213 = vmatpush1.bf16.msra.mxu0 0
        %1214 = vmatprep.subr.bf16.mxu0 0
        %1215 = vmatpush1.bf16.msra.mxu0 0
        %1216 = vmatprep.subr.bf16.mxu0 0
        %1217 = vmatpush1.bf16.msra.mxu0 0
        %1218 = vmatprep.subr.bf16.mxu0 0
        %1219 = vmatpush1.bf16.msra.mxu0 0
        %1220 = vmatprep.subr.bf16.mxu0 0
        %1221 = vmatpush1.bf16.msra.mxu0 0
        %1222 = vmatprep.subr.bf16.mxu0 0
        %1223 = vmatpush1.bf16.msra.mxu0 0
        %1224 = vmatprep.subr.bf16.mxu0 0
        %1225 = vmatpush1.bf16.msra.mxu0 0
        %1226 = vmatprep.subr.bf16.mxu0 0
        %1227 = vmatpush1.bf16.msra.mxu0 0
        %1228 = vmatprep.subr.bf16.mxu0 0
        %1229 = vmatpush1.bf16.msra.mxu0 0
        %1230 = vmatprep.subr.bf16.mxu0 0
        %1231 = vmatpush1.bf16.msra.mxu0 0
        %1232 = vmatprep.subr.bf16.mxu0 0
        %1233 = vmatpush1.bf16.msra.mxu0 0
        %1234 = vmatprep.subr.bf16.mxu0 0
        %1235 = vmatpush1.bf16.msra.mxu0 0
        %1236 = vmatprep.subr.bf16.mxu0 0
        %1237 = vmatpush1.bf16.msra.mxu0 0
        %1238 = vmatprep.mubr.bf16.mxu0 0
        %1239 = vmatmul.mubr.bf16.gmra.mrb[0].mxu0 %v1201
        %v1240 = vpop.f32.mrb[0].mxu0
        %v1241 = vadd.f32 0.0, %v1240
        %v1242 = vpop.f32.mrb[0].mxu0
        %v1243 = vpop.f32.mrb[0].mxu0
        %v1244 = vpop.f32.mrb[0].mxu0
        %1245 = vdwg.mxu0
        %1247 = vrot.lane.b32.xlu0 %v1241, 80
        %v1248 = vpop.permute.xlu0 %1247
        %vm1250 = vcmask 786048
        %1251 = vst.msk [vmem:[#allocation2] sm:$0xff] %vm1250, %v1248
        %1252 = vrot.lane.b32.xlu0 %v665, 32
        %v1253 = vpop.permute.xlu0 %1252
        %1254 = vrot.lane.b32.xlu0 %v670, 32
        %v1255 = vpop.permute.xlu0 %1254
        %v1257 = vsel %vm555, %v1253, 0
        %v1260 = vsel %vm555, %v1255, 0
        %1262 = vmatprep.subr.bf16.mxu0 0
        %1263 = vmatpush1.bf16.xpose.msra.mxu0 %v1260
        %1264 = vmatprep.subr.bf16.mxu0 0
        %1265 = vmatpush1.bf16.xpose.msra.mxu0 0
        %1266 = vmatprep.subr.bf16.mxu0 0
        %1267 = vmatpush1.bf16.xpose.msra.mxu0 0
        %1268 = vmatprep.subr.bf16.mxu0 0
        %1269 = vmatpush1.bf16.xpose.msra.mxu0 0
        %1270 = vmatprep.subr.bf16.mxu0 0
        %1271 = vmatpush1.bf16.xpose.msra.mxu0 0
        %1272 = vmatprep.subr.bf16.mxu0 0
        %1273 = vmatpush1.bf16.xpose.msra.mxu0 0
        %1274 = vmatprep.subr.bf16.mxu0 0
        %1275 = vmatpush1.bf16.xpose.msra.mxu0 0
        %1276 = vmatprep.subr.bf16.mxu0 0
        %1277 = vmatpush1.bf16.xpose.msra.mxu0 0
        %1278 = vmatprep.subr.bf16.mxu0 0
        %1279 = vmatpush1.bf16.xpose.msra.mxu0 0
        %1280 = vmatprep.subr.bf16.mxu0 0
        %1281 = vmatpush1.bf16.xpose.msra.mxu0 0
        %1282 = vmatprep.subr.bf16.mxu0 0
        %1283 = vmatpush1.bf16.xpose.msra.mxu0 0
        %1284 = vmatprep.subr.bf16.mxu0 0
        %1285 = vmatpush1.bf16.xpose.msra.mxu0 0
        %1286 = vmatprep.subr.bf16.mxu0 0
        %1287 = vmatpush1.bf16.xpose.msra.mxu0 0
        %1288 = vmatprep.subr.bf16.mxu0 0
        %1289 = vmatpush1.bf16.xpose.msra.mxu0 0
        %1290 = vmatprep.subr.bf16.mxu0 0
        %1291 = vmatpush1.bf16.xpose.msra.mxu0 0
        %1292 = vmatprep.subr.bf16.mxu0 0
        %1293 = vmatpush1.bf16.xpose.msra.mxu0 0
        %1294 = vmatprep.mubr.bf16.mxu0 0
        %1295 = vmatmul.mubr.bf16.gmra.mrb[0].mxu0 %v1257
        %v1296 = vpop.f32.mrb[0].mxu0
        %v1297 = vadd.f32 %v553, %v1296
        %v1298 = vpop.f32.mrb[0].mxu0
        %v1299 = vpop.f32.mrb[0].mxu0
        %v1300 = vpop.f32.mrb[0].mxu0
        %1301 = vdwg.mxu0
        %v1302 = vsel %vm602, %v1297, -inf
        %1303 = vmax.xlane.f32.xlu0 %v1302
        %v1304 = vpop.xlane.xlu0 %1303
        %v1305 = vsub.f32 %v1297, %v1304
        %v1306 = vmul.f32 %v1305, 1.442695
        %v1307 = vpow.pop %v1306
        %v1308 = vsel %vm602, %v1307, 0.0
        %1309 = vadd.xlane.f32.xlu0 %v1308
        %v1310 = vpop.xlane.xlu0 %1309
        %v1311 = vrcp.pop %v1310
        %v1312 = vmul.f32 %v1307, %v1311
        %v1313 = vpack.c.bf16 %v1312, %v1312
        %1314 = vrot.lane.b32.xlu0 %v733, 32
        %v1315 = vpop.permute.xlu0 %1314
        %v1317 = vsel %vm602, %v1313, 0
        %v1320 = vsel %vm618, %v1315, 0
        %1322 = vmatprep.subr.bf16.mxu0 0
        %1323 = vmatpush1.bf16.msra.mxu0 %v1320
        %1324 = vmatprep.subr.bf16.mxu0 0
        %1325 = vmatpush1.bf16.msra.mxu0 0
        %1326 = vmatprep.subr.bf16.mxu0 0
        %1327 = vmatpush1.bf16.msra.mxu0 0
        %1328 = vmatprep.subr.bf16.mxu0 0
        %1329 = vmatpush1.bf16.msra.mxu0 0
        %1330 = vmatprep.subr.bf16.mxu0 0
        %1331 = vmatpush1.bf16.msra.mxu0 0
        %1332 = vmatprep.subr.bf16.mxu0 0
        %1333 = vmatpush1.bf16.msra.mxu0 0
        %1334 = vmatprep.subr.bf16.mxu0 0
        %1335 = vmatpush1.bf16.msra.mxu0 0
        %1336 = vmatprep.subr.bf16.mxu0 0
        %1337 = vmatpush1.bf16.msra.mxu0 0
        %1338 = vmatprep.subr.bf16.mxu0 0
        %1339 = vmatpush1.bf16.msra.mxu0 0
        %1340 = vmatprep.subr.bf16.mxu0 0
        %1341 = vmatpush1.bf16.msra.mxu0 0
        %1342 = vmatprep.subr.bf16.mxu0 0
        %1343 = vmatpush1.bf16.msra.mxu0 0
        %1344 = vmatprep.subr.bf16.mxu0 0
        %1345 = vmatpush1.bf16.msra.mxu0 0
        %1346 = vmatprep.subr.bf16.mxu0 0
        %1347 = vmatpush1.bf16.msra.mxu0 0
        %1348 = vmatprep.subr.bf16.mxu0 0
        %1349 = vmatpush1.bf16.msra.mxu0 0
        %1350 = vmatprep.subr.bf16.mxu0 0
        %1351 = vmatpush1.bf16.msra.mxu0 0
        %1352 = vmatprep.subr.bf16.mxu0 0
        %1353 = vmatpush1.bf16.msra.mxu0 0
        %1354 = vmatprep.mubr.bf16.mxu0 0
        %1355 = vmatmul.mubr.bf16.gmra.mrb[0].mxu0 %v1317
        %v1356 = vpop.f32.mrb[0].mxu0
        %v1357 = vadd.f32 0.0, %v1356
        %v1358 = vpop.f32.mrb[0].mxu0
        %v1359 = vpop.f32.mrb[0].mxu0
        %v1360 = vpop.f32.mrb[0].mxu0
        %1361 = vdwg.mxu0
        %1363 = vrot.lane.b32.xlu0 %v1357, 96
        %v1364 = vpop.permute.xlu0 %1363
        %vm1366 = vcmask 917248
        %1367 = vst.msk [vmem:[#allocation2] sm:$0xff] %vm1366, %v1364
        %1368 = vrot.lane.b32.xlu0 %v665, 16
        %v1369 = vpop.permute.xlu0 %1368
        %1370 = vrot.lane.b32.xlu0 %v670, 16
        %v1371 = vpop.permute.xlu0 %1370
        %v1373 = vsel %vm555, %v1369, 0
        %v1376 = vsel %vm555, %v1371, 0
        %1378 = vmatprep.subr.bf16.mxu0 0
        %1379 = vmatpush1.bf16.xpose.msra.mxu0 %v1376
        %1380 = vmatprep.subr.bf16.mxu0 0
        %1381 = vmatpush1.bf16.xpose.msra.mxu0 0
        %1382 = vmatprep.subr.bf16.mxu0 0
        %1383 = vmatpush1.bf16.xpose.msra.mxu0 0
        %1384 = vmatprep.subr.bf16.mxu0 0
        %1385 = vmatpush1.bf16.xpose.msra.mxu0 0
        %1386 = vmatprep.subr.bf16.mxu0 0
        %1387 = vmatpush1.bf16.xpose.msra.mxu0 0
        %1388 = vmatprep.subr.bf16.mxu0 0
        %1389 = vmatpush1.bf16.xpose.msra.mxu0 0
        %1390 = vmatprep.subr.bf16.mxu0 0
        %1391 = vmatpush1.bf16.xpose.msra.mxu0 0
        %1392 = vmatprep.subr.bf16.mxu0 0
        %1393 = vmatpush1.bf16.xpose.msra.mxu0 0
        %1394 = vmatprep.subr.bf16.mxu0 0
        %1395 = vmatpush1.bf16.xpose.msra.mxu0 0
        %1396 = vmatprep.subr.bf16.mxu0 0
        %1397 = vmatpush1.bf16.xpose.msra.mxu0 0
        %1398 = vmatprep.subr.bf16.mxu0 0
        %1399 = vmatpush1.bf16.xpose.msra.mxu0 0
        %1400 = vmatprep.subr.bf16.mxu0 0
        %1401 = vmatpush1.bf16.xpose.msra.mxu0 0
        %1402 = vmatprep.subr.bf16.mxu0 0
        %1403 = vmatpush1.bf16.xpose.msra.mxu0 0
        %1404 = vmatprep.subr.bf16.mxu0 0
        %1405 = vmatpush1.bf16.xpose.msra.mxu0 0
        %1406 = vmatprep.subr.bf16.mxu0 0
        %1407 = vmatpush1.bf16.xpose.msra.mxu0 0
        %1408 = vmatprep.subr.bf16.mxu0 0
        %1409 = vmatpush1.bf16.xpose.msra.mxu0 0
        %1410 = vmatprep.mubr.bf16.mxu0 0
        %1411 = vmatmul.mubr.bf16.gmra.mrb[0].mxu0 %v1373
        %v1412 = vpop.f32.mrb[0].mxu0
        %v1413 = vadd.f32 %v553, %v1412
        %v1414 = vpop.f32.mrb[0].mxu0
        %v1415 = vpop.f32.mrb[0].mxu0
        %v1416 = vpop.f32.mrb[0].mxu0
        %1417 = vdwg.mxu0
        %v1418 = vsel %vm602, %v1413, -inf
        %1419 = vmax.xlane.f32.xlu0 %v1418
        %v1420 = vpop.xlane.xlu0 %1419
        %v1421 = vsub.f32 %v1413, %v1420
        %v1422 = vmul.f32 %v1421, 1.442695
        %v1423 = vpow.pop %v1422
        %v1424 = vsel %vm602, %v1423, 0.0
        %1425 = vadd.xlane.f32.xlu0 %v1424
        %v1426 = vpop.xlane.xlu0 %1425
        %v1427 = vrcp.pop %v1426
        %v1428 = vmul.f32 %v1423, %v1427
        %v1429 = vpack.c.bf16 %v1428, %v1428
        %1430 = vrot.lane.b32.xlu0 %v733, 16
        %v1431 = vpop.permute.xlu0 %1430
        %v1433 = vsel %vm602, %v1429, 0
        %v1436 = vsel %vm618, %v1431, 0
        %1438 = vmatprep.subr.bf16.mxu0 0
        %1439 = vmatpush1.bf16.msra.mxu0 %v1436
        %1440 = vmatprep.subr.bf16.mxu0 0
        %1441 = vmatpush1.bf16.msra.mxu0 0
        %1442 = vmatprep.subr.bf16.mxu0 0
        %1443 = vmatpush1.bf16.msra.mxu0 0
        %1444 = vmatprep.subr.bf16.mxu0 0
        %1445 = vmatpush1.bf16.msra.mxu0 0
        %1446 = vmatprep.subr.bf16.mxu0 0
        %1447 = vmatpush1.bf16.msra.mxu0 0
        %1448 = vmatprep.subr.bf16.mxu0 0
        %1449 = vmatpush1.bf16.msra.mxu0 0
        %1450 = vmatprep.subr.bf16.mxu0 0
        %1451 = vmatpush1.bf16.msra.mxu0 0
        %1452 = vmatprep.subr.bf16.mxu0 0
        %1453 = vmatpush1.bf16.msra.mxu0 0
        %1454 = vmatprep.subr.bf16.mxu0 0
        %1455 = vmatpush1.bf16.msra.mxu0 0
        %1456 = vmatprep.subr.bf16.mxu0 0
        %1457 = vmatpush1.bf16.msra.mxu0 0
        %1458 = vmatprep.subr.bf16.mxu0 0
        %1459 = vmatpush1.bf16.msra.mxu0 0
        %1460 = vmatprep.subr.bf16.mxu0 0
        %1461 = vmatpush1.bf16.msra.mxu0 0
        %1462 = vmatprep.subr.bf16.mxu0 0
        %1463 = vmatpush1.bf16.msra.mxu0 0
        %1464 = vmatprep.subr.bf16.mxu0 0
        %1465 = vmatpush1.bf16.msra.mxu0 0
        %1466 = vmatprep.subr.bf16.mxu0 0
        %1467 = vmatpush1.bf16.msra.mxu0 0
        %1468 = vmatprep.subr.bf16.mxu0 0
        %1469 = vmatpush1.bf16.msra.mxu0 0
        %1470 = vmatprep.mubr.bf16.mxu0 0
        %1471 = vmatmul.mubr.bf16.gmra.mrb[0].mxu0 %v1433
        %v1472 = vpop.f32.mrb[0].mxu0
        %v1473 = vadd.f32 0.0, %v1472
        %v1474 = vpop.f32.mrb[0].mxu0
        %v1475 = vpop.f32.mrb[0].mxu0
        %v1476 = vpop.f32.mrb[0].mxu0
        %1477 = vdwg.mxu0
        %1479 = vrot.lane.b32.xlu0 %v1473, 112
        %v1480 = vpop.permute.xlu0 %1479
        %vm1482 = vcmask 1048448
        %1483 = vst.msk [vmem:[#allocation2] sm:$0xff] %vm1482, %v1480
        %v1484 = vld [vmem:[#allocation2] sm:$0xff]
        %v1485 = vpack.c.bf16 %v1484, %v1484
        %v1486 = vld [vmem:[#allocation12] sm:$0xf]
        %v1487 = vld [vmem:[#allocation12 + $0x4] sm:$0xf]
        %v1488 = vld [vmem:[#allocation12 + $0x8] sm:$0xf]
        %v1489 = vld [vmem:[#allocation12 + $0xc] sm:$0xf]
        %v1490 = vld [vmem:[#allocation12 + $0x10] sm:$0xf]
        %v1491 = vld [vmem:[#allocation12 + $0x14] sm:$0xf]
        %v1492 = vld [vmem:[#allocation12 + $0x18] sm:$0xf]
        %v1493 = vld [vmem:[#allocation12 + $0x1c] sm:$0xf]
        %v1494 = vld [vmem:[#allocation12 + $0x20] sm:$0xf]
        %v1495 = vld [vmem:[#allocation12 + $0x24] sm:$0xf]
        %v1496 = vld [vmem:[#allocation12 + $0x28] sm:$0xf]
        %v1497 = vld [vmem:[#allocation12 + $0x2c] sm:$0xf]
        %v1498 = vld [vmem:[#allocation12 + $0x30] sm:$0xf]
        %v1499 = vld [vmem:[#allocation12 + $0x34] sm:$0xf]
        %v1500 = vld [vmem:[#allocation12 + $0x38] sm:$0xf]
        %v1501 = vld [vmem:[#allocation12 + $0x3c] sm:$0xf]
        %v1502 = vld [vmem:[#allocation14] sm:$0x1]
        %v1504 = vlaneseq
        %v1505 = vshrl.u32 %v1504, 7
        %v1506 = vsub.s32 0, %v1505
        %v1507 = vrot.slane %v1502, %v1506
        %v1525 = vunpack.c.l.b16 %v1486
        %v1526 = vunpack.c.l.b16 %v1487
        %v1527 = vunpack.c.l.b16 %v1488
        %v1528 = vunpack.c.l.b16 %v1489
        %v1529 = vunpack.c.l.b16 %v1490
        %v1530 = vunpack.c.l.b16 %v1491
        %v1531 = vunpack.c.l.b16 %v1492
        %v1532 = vunpack.c.l.b16 %v1493
        %v1533 = vunpack.c.l.b16 %v1494
        %v1534 = vunpack.c.l.b16 %v1495
        %v1535 = vunpack.c.l.b16 %v1496
        %v1536 = vunpack.c.l.b16 %v1497
        %v1537 = vunpack.c.l.b16 %v1498
        %v1538 = vunpack.c.l.b16 %v1499
        %v1539 = vunpack.c.l.b16 %v1500
        %v1540 = vunpack.c.l.b16 %v1501
        %v1541 = vpack.c.b16 %v1526, %v1525
        %v1542 = vpack.c.b16 %v1528, %v1527
        %v1543 = vpack.c.b16 %v1530, %v1529
        %v1544 = vpack.c.b16 %v1532, %v1531
        %v1545 = vpack.c.b16 %v1534, %v1533
        %v1546 = vpack.c.b16 %v1536, %v1535
        %v1547 = vpack.c.b16 %v1538, %v1537
        %v1548 = vpack.c.b16 %v1540, %v1539
        %1557 = vmatprep.subr.bf16.mxu0 0
        %1558 = vmatpush1.bf16.msra.mxu0 %v1541
        %1559 = vmatprep.subr.bf16.mxu0 0
        %1560 = vmatpush1.bf16.msra.mxu0 %v1542
        %1561 = vmatprep.subr.bf16.mxu0 0
        %1562 = vmatpush1.bf16.msra.mxu0 %v1543
        %1563 = vmatprep.subr.bf16.mxu0 0
        %1564 = vmatpush1.bf16.msra.mxu0 %v1544
        %1565 = vmatprep.subr.bf16.mxu0 0
        %1566 = vmatpush1.bf16.msra.mxu0 %v1545
        %1567 = vmatprep.subr.bf16.mxu0 0
        %1568 = vmatpush1.bf16.msra.mxu0 %v1546
        %1569 = vmatprep.subr.bf16.mxu0 0
        %1570 = vmatpush1.bf16.msra.mxu0 %v1547
        %1571 = vmatprep.subr.bf16.mxu0 0
        %1572 = vmatpush1.bf16.msra.mxu0 %v1548
        %1573 = vmatprep.subr.bf16.mxu0 0
        %1574 = vmatpush1.bf16.msra.mxu0 0
        %1575 = vmatprep.subr.bf16.mxu0 0
        %1576 = vmatpush1.bf16.msra.mxu0 0
        %1577 = vmatprep.subr.bf16.mxu0 0
        %1578 = vmatpush1.bf16.msra.mxu0 0
        %1579 = vmatprep.subr.bf16.mxu0 0
        %1580 = vmatpush1.bf16.msra.mxu0 0
        %1581 = vmatprep.subr.bf16.mxu0 0
        %1582 = vmatpush1.bf16.msra.mxu0 0
        %1583 = vmatprep.subr.bf16.mxu0 0
        %1584 = vmatpush1.bf16.msra.mxu0 0
        %1585 = vmatprep.subr.bf16.mxu0 0
        %1586 = vmatpush1.bf16.msra.mxu0 0
        %1587 = vmatprep.subr.bf16.mxu0 0
        %1588 = vmatpush1.bf16.msra.mxu0 0
        %1589 = vmatprep.mubr.bf16.mxu0 0
        %1590 = vmatmul.mubr.bf16.gmra.mrb[0].mxu0 %v1485
        %v1591 = vpop.f32.mrb[0].mxu0
        %v1592 = vadd.f32 %v1507, %v1591
        %v1593 = vpop.f32.mrb[0].mxu0
        %v1594 = vpop.f32.mrb[0].mxu0
        %v1595 = vpop.f32.mrb[0].mxu0
        %1596 = vdwg.mxu0
        %v1597 = vld [vmem:[%s474] sm:$0xf]
        %v1598 = vunpack.c.l.bf16 %v1597
        %v1599 = vadd.f32 %v1592, %v1598
        %1600 = vadd.xlane.f32.xlu0 %v1599
        %v1601 = vpop.xlane.xlu0 %1600
        %v1602 = vrcp.pop 128.0
        %v1603 = vmul.f32 %v1601, %v1602
        %v1604 = vsub.f32 %v1599, %v1603
        %v1605 = vmul.f32 %v1604, %v1604
        %1606 = vadd.xlane.f32.xlu0 %v1605
        %v1607 = vpop.xlane.xlu0 %1606
        %v1608 = vmul.f32 %v1607, %v1602
        %v1609 = vadd.f32 %v1608, 1e-05
        %v1610 = vrsqrt.pop %v1609
        %v1611 = vmul.f32 %v1604, %v1610
        %v1612 = vld [vmem:[#allocation15] sm:$0x1]
        %v1614 = vlaneseq
        %v1615 = vshrl.u32 %v1614, 7
        %v1616 = vsub.s32 0, %v1615
        %v1617 = vrot.slane %v1612, %v1616
        %v1619 = vmul.f32 %v1611, %v1617
        %v1620 = vld [vmem:[#allocation17] sm:$0x1]
        %v1622 = vlaneseq
        %v1623 = vshrl.u32 %v1622, 7
        %v1624 = vsub.s32 0, %v1623
        %v1625 = vrot.slane %v1620, %v1624
        %v1627 = vadd.f32 %v1619, %v1625
        %v1628 = vpack.c.bf16 %v1627, %v1627
        %1629 = vst [vmem:[%s543] sm:$0xf] %v1628
        %s1630 = sand.u32 %s256, 1
        %s1631 = scalar_lea.sflag [#allocation5], %s1630
        %s1632 = sand.u32 %s256, 1
        %s1633 = smul.addr %s1632, 4
        %s1634 = scalar_lea.vmem [#allocation18], %s1633
        // Predicated region
        $region93: #{gpt2_forward.6} parent=55 // pred_check
          %p1635 = pneg %p266
        $region94: #{gpt2_forward.6} parent=55 // pred_check_branch
          %1637 = sbr.rel (%p1635) target = $region96
        $region95: #{gpt2_forward.6} parent=55 // pred_region
          %s1639 = ssub.s32 64, 64
          %1640 = vsyncadd %s1631, %s1639
          %s1641 = smul.addr %s34, 64
          %s1642 = scalar_lea.hbm %s9, %s1641
          %s1644 = sshll.u32 %s1634, 4
          %s1645 = int_to_ptr.vmem [resolvable:$true] %s1644
          %1647 = dma.vmem_to_hbm [thread:$0]  %s1645, 64, %s1642, %s1631
        $region96: #{gpt2_forward.6} parent=55 // pred_fallthru
          _
      $region56: #{gpt2_forward.6} parent=5 // pred_fallthru
        _
      %p1648 = scmp.le.s32.totalorder 2, %s29
      // Predicated region
      $region97: #{gpt2_forward.6} parent=5 // pred_check
        %p1649 = pneg %p1648
      $region98: #{gpt2_forward.6} parent=5 // pred_check_branch
        %1651 = sbr.rel (%p1649) target = $region100
      $region99: #{gpt2_forward.6} parent=5 // pred_region
        %s1652 = ssub.s32 %s29, 2
        // Predicated region
        $region101: #{gpt2_forward.6} parent=99 // pred_check
          %p1653 = pneg %p272
        $region102: #{gpt2_forward.6} parent=99 // pred_check_branch
          %1655 = sbr.rel (%p1653) target = $region104
        $region103: #{gpt2_forward.6} parent=99 // pred_region
          %s1656 = sand.u32 %s257, 1
          %s1657 = scalar_lea.sflag [#allocation5], %s1656
          %s1658 = sand.u32 %s257, 1
          %s1659 = smul.addr %s1658, 4
          %s1660 = scalar_lea.vmem [#allocation18], %s1659
          %1661 = dma.done %s1657, 64
        $region104: #{gpt2_forward.6} parent=99 // pred_fallthru
          _
      $region100: #{gpt2_forward.6} parent=5 // pred_fallthru
        _
    $region6: #{gpt2_forward.6} parent=1 // loop_footer
      %s33 = sadd.s32 1, %s29
    $region7: #{gpt2_forward.6} parent=1 // loop_footer_branch
      %28 = sbr.rel target = $region3
    $region8: #{gpt2_forward.6} parent=1 // loop_exit
      _
    %1662 = vsyncpa [#allocation4], 1
    %s1663 = scalar_lea.sflag [#allocation4], 1
    %1664 = vsyncpa %s1663, 1
    %1665 = vsyncpa [#allocation7], 1
    %s1666 = scalar_lea.sflag [#allocation7], 1
    %1667 = vsyncpa %s1666, 1
    %1668 = vsyncpa [#allocation10], 1
    %s1669 = scalar_lea.sflag [#allocation10], 1
    %1670 = vsyncpa %s1669, 1
    %1671 = vsyncpa [#allocation13], 1
    %1672 = vsyncpa [#allocation16], 1
    %1673 = vsyncpa [#allocation5], 1
    %s1674 = scalar_lea.sflag [#allocation5], 1
    %1675 = vsyncpa %s1674, 1

// kernel: gpt2_forward.9
$region0: #{gpt2_forward.9}
  #allocation0 [shape = 'u32[]', space=smem, size = 0x4, offset = 0x4, fixed_abs, tag = 'smem constant byte address 0x4 - core index']
  #allocation1 [shape = 'u32[144,128]{1,0:T(1,128)}', space=vmem, size = 0x12000, scoped, tag = 'internal scratch']
  %s0 = inlined_call_operand.hbm [shape: bf16[16,128], index: 0, kind: input, shape index: {}]
  %s1 = inlined_call_operand.hbm [shape: bf16[128,2048], index: 1, kind: input, shape index: {}]
  %s2 = inlined_call_operand.hbm [shape: f32[1,2048], index: 2, kind: input, shape index: {}]
  %s3 = inlined_call_operand.hbm [shape: bf16[2048,128], index: 3, kind: input, shape index: {}]
  %s4 = inlined_call_operand.hbm [shape: f32[1,128], index: 4, kind: input, shape index: {}]
  %s5 = inlined_call_operand.hbm [shape: f32[1,128], index: 5, kind: input, shape index: {}]
  %s6 = inlined_call_operand.hbm [shape: f32[1,128], index: 6, kind: input, shape index: {}]
  %s7 = inlined_call_operand.hbm [shape: f32[16,128], index: 7, kind: output, shape index: {}]
  %s8 = sld [smem:[#allocation0]]
  $region89: #{gpt2_forward.9} parent=0
    _
  %s10 = ssub.s32 1, %s8
  %s11 = scalar_select 0, %s10, %s8
  $region1: #{gpt2_forward.9} parent=0
    #allocation2 [shape = 'u8[4096]{0}', space=vmem, size = 0x1000, scoped, tag = 'input window, operand 0']
    #allocation3 [shape = 's32[2]{0}', space=sflag, size = 0x8, scoped, tag = 'scoped memory for gpt2_forward.9']
    #allocation4 [shape = 's32[2]{0}', space=sflag, size = 0x8, scoped, tag = 'scoped memory for gpt2_forward.9']
    #allocation5 [shape = 'u8[524288]{0}', space=vmem, size = 0x80000, scoped, tag = 'input window, operand 1, single buffered']
    #allocation6 [shape = 's32[1]{0}', space=sflag, size = 0x4, scoped, tag = 'scoped memory for gpt2_forward.9']
    #allocation7 [shape = 'u8[8192]{0}', space=vmem, size = 0x2000, scoped, tag = 'input window, operand 2, single buffered']
    #allocation8 [shape = 'u8[524288]{0}', space=vmem, size = 0x80000, scoped, tag = 'input window, operand 3, single buffered']
    #allocation9 [shape = 's32[1]{0}', space=sflag, size = 0x4, scoped, tag = 'scoped memory for gpt2_forward.9']
    #allocation10 [shape = 'u8[512]{0}', space=vmem, size = 0x400, scoped, tag = 'input window, operand 4, single buffered']
    #allocation11 [shape = 'u8[512]{0}', space=vmem, size = 0x400, scoped, tag = 'input window, operand 5, single buffered']
    #allocation12 [shape = 's32[1]{0}', space=sflag, size = 0x4, scoped, tag = 'scoped memory for gpt2_forward.9']
    #allocation13 [shape = 'u8[512]{0}', space=vmem, size = 0x400, scoped, tag = 'input window, operand 6, single buffered']
    #allocation14 [shape = 'u8[8192]{0}', space=vmem, size = 0x2000, scoped, tag = 'output window, operand 0']
    %12 = vsyncpa [#allocation3], 0
    %s13 = scalar_lea.sflag [#allocation3], 1
    %14 = vsyncpa %s13, 0
    %15 = vsyncpa [#allocation6], 0
    %16 = vsyncpa [#allocation9], 0
    %17 = vsyncpa [#allocation12], 0
    %18 = vsyncpa [#allocation4], 0
    %s19 = scalar_lea.sflag [#allocation4], 1
    %20 = vsyncpa %s19, 0
    loop: start=0, step=1, limit=4
    $region2: #{gpt2_forward.9} parent=1 // loop_pre_header
      _
    $region3: #{gpt2_forward.9} parent=1 // loop_header
      %s22 = sphi 0, %s26
      %p23 = scmp.ge.s32.totalorder %s22, 4
      %s32 = sphi 0, %s34
      %s35 = sphi 0, %s32
      %s36 = sphi 0, %s35
      %s52 = sphi 0, %s36
      %s56 = sphi 0, %s56
      %s58 = sphi 0, %s56
      %s59 = sphi 0, %s58
      %s73 = sphi 0, %s59
      %s77 = sphi 0, %s77
      %s79 = sphi 0, %s77
      %s80 = sphi 0, %s79
      %s94 = sphi 0, %s80
      %s98 = sphi 0, %s98
      %s100 = sphi 0, %s98
      %s101 = sphi 0, %s100
      %s115 = sphi 0, %s101
      %s119 = sphi 0, %s119
      %s121 = sphi 0, %s119
      %s122 = sphi 0, %s121
      %s136 = sphi 0, %s122
      %s140 = sphi 0, %s140
      %s142 = sphi 0, %s140
      %s143 = sphi 0, %s142
      %s157 = sphi 0, %s143
      %s161 = sphi 0, %s161
      %s163 = sphi 0, %s161
      %s164 = sphi 0, %s163
      %s178 = sphi 0, %s164
      %s184 = sphi 0, %s186
      %s187 = sphi 0, %s184
      %s188 = sphi 0, %s187
      %s204 = sphi 0, %s188
    $region4: #{gpt2_forward.9} parent=1 // loop_header_branch
      %25 = sbr.rel (%p23) target = $region8
    $region5: #{gpt2_forward.9} parent=1 // loop_body
      %s27 = ssub.s32 %s22, 1
      %s28 = ssub.s32 %s22, 2
      %s29 = sadd.s32 %s22, 1
      %s30 = ssub.s32 %s22, %s29
      %p31 = scmp.eq.s32.totalorder %s30, 0
      %s33 = sadd.s32 %s32, 1
      %s34 = scalar_select %p31, %s32, %s33
      %p37 = pneg %p31
      %p38 = scmp.eq.s32.totalorder %s22, 1
      %p39 = por %p37, %p38
      %p40 = scmp.ne.s32.totalorder %s32, %s35
      %p41 = scmp.eq.s32.totalorder %s22, 0
      %p42 = por %p40, %p41
      %p43 = scmp.ne.s32.totalorder %s32, %s35
      %p44 = scmp.eq.s32.totalorder %s27, 1
      %p45 = por %p43, %p44
      %p46 = scmp.ne.s32.totalorder %s35, %s36
      %p47 = scmp.eq.s32.totalorder %s27, 0
      %p48 = por %p46, %p47
      %p49 = scmp.ne.s32.totalorder %s35, %s36
      %p50 = scmp.eq.s32.totalorder %s28, 1
      %p51 = por %p49, %p50
      %p53 = scmp.ne.s32.totalorder %s36, %s52
      %p54 = scmp.eq.s32.totalorder %s28, 0
      %p55 = por %p53, %p54
      %s57 = sadd.s32 %s56, 1
      %p60 = scmp.eq.s32.totalorder %s22, 1
      %p61 = scmp.ne.s32.totalorder %s56, %s58
      %p62 = scmp.eq.s32.totalorder %s22, 0
      %p63 = por %p61, %p62
      %p64 = scmp.ne.s32.totalorder %s56, %s58
      %p65 = scmp.eq.s32.totalorder %s27, 1
      %p66 = por %p64, %p65
      %p67 = scmp.ne.s32.totalorder %s58, %s59
      %p68 = scmp.eq.s32.totalorder %s27, 0
      %p69 = por %p67, %p68
      %p70 = scmp.ne.s32.totalorder %s58, %s59
      %p71 = scmp.eq.s32.totalorder %s28, 1
      %p72 = por %p70, %p71
      %p74 = scmp.ne.s32.totalorder %s59, %s73
      %p75 = scmp.eq.s32.totalorder %s28, 0
      %p76 = por %p74, %p75
      %s78 = sadd.s32 %s77, 1
      %p81 = scmp.eq.s32.totalorder %s22, 1
      %p82 = scmp.ne.s32.totalorder %s77, %s79
      %p83 = scmp.eq.s32.totalorder %s22, 0
      %p84 = por %p82, %p83
      %p85 = scmp.ne.s32.totalorder %s77, %s79
      %p86 = scmp.eq.s32.totalorder %s27, 1
      %p87 = por %p85, %p86
      %p88 = scmp.ne.s32.totalorder %s79, %s80
      %p89 = scmp.eq.s32.totalorder %s27, 0
      %p90 = por %p88, %p89
      %p91 = scmp.ne.s32.totalorder %s79, %s80
      %p92 = scmp.eq.s32.totalorder %s28, 1
      %p93 = por %p91, %p92
      %p95 = scmp.ne.s32.totalorder %s80, %s94
      %p96 = scmp.eq.s32.totalorder %s28, 0
      %p97 = por %p95, %p96
      %s99 = sadd.s32 %s98, 1
      %p102 = scmp.eq.s32.totalorder %s22, 1
      %p103 = scmp.ne.s32.totalorder %s98, %s100
      %p104 = scmp.eq.s32.totalorder %s22, 0
      %p105 = por %p103, %p104
      %p106 = scmp.ne.s32.totalorder %s98, %s100
      %p107 = scmp.eq.s32.totalorder %s27, 1
      %p108 = por %p106, %p107
      %p109 = scmp.ne.s32.totalorder %s100, %s101
      %p110 = scmp.eq.s32.totalorder %s27, 0
      %p111 = por %p109, %p110
      %p112 = scmp.ne.s32.totalorder %s100, %s101
      %p113 = scmp.eq.s32.totalorder %s28, 1
      %p114 = por %p112, %p113
      %p116 = scmp.ne.s32.totalorder %s101, %s115
      %p117 = scmp.eq.s32.totalorder %s28, 0
      %p118 = por %p116, %p117
      %s120 = sadd.s32 %s119, 1
      %p123 = scmp.eq.s32.totalorder %s22, 1
      %p124 = scmp.ne.s32.totalorder %s119, %s121
      %p125 = scmp.eq.s32.totalorder %s22, 0
      %p126 = por %p124, %p125
      %p127 = scmp.ne.s32.totalorder %s119, %s121
      %p128 = scmp.eq.s32.totalorder %s27, 1
      %p129 = por %p127, %p128
      %p130 = scmp.ne.s32.totalorder %s121, %s122
      %p131 = scmp.eq.s32.totalorder %s27, 0
      %p132 = por %p130, %p131
      %p133 = scmp.ne.s32.totalorder %s121, %s122
      %p134 = scmp.eq.s32.totalorder %s28, 1
      %p135 = por %p133, %p134
      %p137 = scmp.ne.s32.totalorder %s122, %s136
      %p138 = scmp.eq.s32.totalorder %s28, 0
      %p139 = por %p137, %p138
      %s141 = sadd.s32 %s140, 1
      %p144 = scmp.eq.s32.totalorder %s22, 1
      %p145 = scmp.ne.s32.totalorder %s140, %s142
      %p146 = scmp.eq.s32.totalorder %s22, 0
      %p147 = por %p145, %p146
      %p148 = scmp.ne.s32.totalorder %s140, %s142
      %p149 = scmp.eq.s32.totalorder %s27, 1
      %p150 = por %p148, %p149
      %p151 = scmp.ne.s32.totalorder %s142, %s143
      %p152 = scmp.eq.s32.totalorder %s27, 0
      %p153 = por %p151, %p152
      %p154 = scmp.ne.s32.totalorder %s142, %s143
      %p155 = scmp.eq.s32.totalorder %s28, 1
      %p156 = por %p154, %p155
      %p158 = scmp.ne.s32.totalorder %s143, %s157
      %p159 = scmp.eq.s32.totalorder %s28, 0
      %p160 = por %p158, %p159
      %s162 = sadd.s32 %s161, 1
      %p165 = scmp.eq.s32.totalorder %s22, 1
      %p166 = scmp.ne.s32.totalorder %s161, %s163
      %p167 = scmp.eq.s32.totalorder %s22, 0
      %p168 = por %p166, %p167
      %p169 = scmp.ne.s32.totalorder %s161, %s163
      %p170 = scmp.eq.s32.totalorder %s27, 1
      %p171 = por %p169, %p170
      %p172 = scmp.ne.s32.totalorder %s163, %s164
      %p173 = scmp.eq.s32.totalorder %s27, 0
      %p174 = por %p172, %p173
      %p175 = scmp.ne.s32.totalorder %s163, %s164
      %p176 = scmp.eq.s32.totalorder %s28, 1
      %p177 = por %p175, %p176
      %p179 = scmp.ne.s32.totalorder %s164, %s178
      %p180 = scmp.eq.s32.totalorder %s28, 0
      %p181 = por %p179, %p180
      %s182 = ssub.s32 %s22, %s29
      %p183 = scmp.eq.s32.totalorder %s182, 0
      %s185 = sadd.s32 %s184, 1
      %s186 = scalar_select %p183, %s184, %s185
      %p189 = pneg %p183
      %p190 = scmp.eq.s32.totalorder %s22, 1
      %p191 = por %p189, %p190
      %p192 = scmp.ne.s32.totalorder %s184, %s187
      %p193 = scmp.eq.s32.totalorder %s22, 0
      %p194 = por %p192, %p193
      %p195 = scmp.ne.s32.totalorder %s184, %s187
      %p196 = scmp.eq.s32.totalorder %s27, 1
      %p197 = por %p195, %p196
      %p198 = scmp.ne.s32.totalorder %s187, %s188
      %p199 = scmp.eq.s32.totalorder %s27, 0
      %p200 = por %p198, %p199
      %p201 = scmp.ne.s32.totalorder %s187, %s188
      %p202 = scmp.eq.s32.totalorder %s28, 1
      %p203 = por %p201, %p202
      %p205 = scmp.ne.s32.totalorder %s188, %s204
      %p206 = scmp.eq.s32.totalorder %s28, 0
      %p207 = por %p205, %p206
      %p208 = scmp.le.s32.totalorder 1, %s22
      %p209 = scmp.lt.s32.totalorder %s22, 3
      %p210 = pnand %p208, %p209
      %p211 = pneg %p210
      // Predicated region
      $region9: #{gpt2_forward.9} parent=5 // pred_check
        _
      $region10: #{gpt2_forward.9} parent=5 // pred_check_branch
        %213 = sbr.rel (%p210) target = $region12
      $region11: #{gpt2_forward.9} parent=5 // pred_region
        %s214 = ssub.s32 %s22, 1
        // Predicated region
        $region13: #{gpt2_forward.9} parent=11 // pred_check
          %p215 = pneg %p69
        $region14: #{gpt2_forward.9} parent=11 // pred_check_branch
          %217 = sbr.rel (%p215) target = $region16
        $region15: #{gpt2_forward.9} parent=11 // pred_region
          %s219 = ssub.s32 16384, 16384
          %220 = vsyncadd [#allocation6], %s219
          %s221 = sshll.u32 [#allocation5], 4
          %s222 = int_to_ptr.vmem [resolvable:$true] %s221
          %227 = dma.hbm_to_vmem [thread:$0]  %s1, 16384, %s222, [#allocation6], 1024, 1024, 64
        $region16: #{gpt2_forward.9} parent=11 // pred_fallthru
          _
        // Predicated region
        $region17: #{gpt2_forward.9} parent=11 // pred_check
          %p228 = pneg %p90
        $region18: #{gpt2_forward.9} parent=11 // pred_check_branch
          %230 = sbr.rel (%p228) target = $region20
        $region19: #{gpt2_forward.9} parent=11 // pred_region
          %s232 = ssub.s32 256, 256
          %233 = vsyncadd [#allocation6], %s232
          %s235 = sshll.u32 [#allocation7], 4
          %s236 = int_to_ptr.vmem [resolvable:$true] %s235
          %238 = dma.hbm_to_vmem [thread:$0]  %s2, 256, %s236, [#allocation6]
        $region20: #{gpt2_forward.9} parent=11 // pred_fallthru
          _
        // Predicated region
        $region21: #{gpt2_forward.9} parent=11 // pred_check
          %p239 = pneg %p111
        $region22: #{gpt2_forward.9} parent=11 // pred_check_branch
          %241 = sbr.rel (%p239) target = $region24
        $region23: #{gpt2_forward.9} parent=11 // pred_region
          %s243 = ssub.s32 16384, 16384
          %244 = vsyncadd [#allocation9], %s243
          %s245 = sshll.u32 [#allocation8], 4
          %s246 = int_to_ptr.vmem [resolvable:$true] %s245
          %251 = dma.hbm_to_vmem [thread:$0]  %s3, 16384, %s246, [#allocation9], 64, 64, 4
        $region24: #{gpt2_forward.9} parent=11 // pred_fallthru
          _
        // Predicated region
        $region25: #{gpt2_forward.9} parent=11 // pred_check
          %p252 = pneg %p132
        $region26: #{gpt2_forward.9} parent=11 // pred_check_branch
          %254 = sbr.rel (%p252) target = $region28
        $region27: #{gpt2_forward.9} parent=11 // pred_region
          %s256 = ssub.s32 16, 16
          %257 = vsyncadd [#allocation9], %s256
          %s259 = sshll.u32 [#allocation10], 4
          %s260 = int_to_ptr.vmem [resolvable:$true] %s259
          %262 = dma.hbm_to_vmem [thread:$0]  %s4, 16, %s260, [#allocation9]
        $region28: #{gpt2_forward.9} parent=11 // pred_fallthru
          _
        // Predicated region
        $region29: #{gpt2_forward.9} parent=11 // pred_check
          %p263 = pneg %p153
        $region30: #{gpt2_forward.9} parent=11 // pred_check_branch
          %265 = sbr.rel (%p263) target = $region32
        $region31: #{gpt2_forward.9} parent=11 // pred_region
          %s267 = ssub.s32 16, 16
          %268 = vsyncadd [#allocation12], %s267
          %s270 = sshll.u32 [#allocation11], 4
          %s271 = int_to_ptr.vmem [resolvable:$true] %s270
          %273 = dma.hbm_to_vmem [thread:$0]  %s5, 16, %s271, [#allocation12]
        $region32: #{gpt2_forward.9} parent=11 // pred_fallthru
          _
        // Predicated region
        $region33: #{gpt2_forward.9} parent=11 // pred_check
          %p274 = pneg %p174
        $region34: #{gpt2_forward.9} parent=11 // pred_check_branch
          %276 = sbr.rel (%p274) target = $region36
        $region35: #{gpt2_forward.9} parent=11 // pred_region
          %s278 = ssub.s32 16, 16
          %279 = vsyncadd [#allocation12], %s278
          %s281 = sshll.u32 [#allocation13], 4
          %s282 = int_to_ptr.vmem [resolvable:$true] %s281
          %284 = dma.hbm_to_vmem [thread:$0]  %s6, 16, %s282, [#allocation12]
        $region36: #{gpt2_forward.9} parent=11 // pred_fallthru
          _
      $region12: #{gpt2_forward.9} parent=5 // pred_fallthru
        _
      %p285 = scmp.lt.s32.totalorder %s22, 2
      // Predicated region
      $region37: #{gpt2_forward.9} parent=5 // pred_check
        %p286 = pneg %p285
      $region38: #{gpt2_forward.9} parent=5 // pred_check_branch
        %288 = sbr.rel (%p286) target = $region40
      $region39: #{gpt2_forward.9} parent=5 // pred_region
        // Predicated region
        $region41: #{gpt2_forward.9} parent=39 // pred_check
          %p289 = pneg %p42
        $region42: #{gpt2_forward.9} parent=39 // pred_check_branch
          %291 = sbr.rel (%p289) target = $region44
        $region43: #{gpt2_forward.9} parent=39 // pred_region
          %s292 = sand.u32 %s32, 1
          %s293 = scalar_lea.sflag [#allocation3], %s292
          %s294 = sand.u32 %s32, 1
          %s295 = smul.addr %s294, 4
          %s296 = scalar_lea.vmem [#allocation2], %s295
          %s298 = ssub.s32 64, 64
          %299 = vsyncadd %s293, %s298
          %s300 = smul.addr %s22, 64
          %s301 = scalar_lea.hbm %s0, %s300
          %s303 = sshll.u32 %s296, 4
          %s304 = int_to_ptr.vmem [resolvable:$true] %s303
          %306 = dma.hbm_to_vmem [thread:$0]  %s301, 64, %s304, %s293
        $region44: #{gpt2_forward.9} parent=39 // pred_fallthru
          _
      $region40: #{gpt2_forward.9} parent=5 // pred_fallthru
        _
      %p307 = scmp.le.s32.totalorder 1, %s22
      %p308 = scmp.lt.s32.totalorder %s22, 3
      %p309 = pnand %p307, %p308
      %p310 = pneg %p309
      // Predicated region
      $region45: #{gpt2_forward.9} parent=5 // pred_check
        _
      $region46: #{gpt2_forward.9} parent=5 // pred_check_branch
        %312 = sbr.rel (%p309) target = $region48
      $region47: #{gpt2_forward.9} parent=5 // pred_region
        %s313 = ssub.s32 %s22, 1
        %s314 = sand.u32 %s35, 1
        %s315 = scalar_lea.sflag [#allocation3], %s314
        %s316 = sand.u32 %s35, 1
        %s317 = smul.addr %s316, 4
        %s318 = scalar_lea.vmem [#allocation2], %s317
        // Predicated region
        $region49: #{gpt2_forward.9} parent=47 // pred_check
          %p319 = pneg %p48
        $region50: #{gpt2_forward.9} parent=47 // pred_check_branch
          %321 = sbr.rel (%p319) target = $region52
        $region51: #{gpt2_forward.9} parent=47 // pred_region
          %322 = dma.done %s315, 64
        $region52: #{gpt2_forward.9} parent=47 // pred_fallthru
          _
        // Predicated region
        $region53: #{gpt2_forward.9} parent=47 // pred_check
          %p323 = pneg %p69
        $region54: #{gpt2_forward.9} parent=47 // pred_check_branch
          %325 = sbr.rel (%p323) target = $region56
        $region55: #{gpt2_forward.9} parent=47 // pred_region
          %326 = dma.done [#allocation6], 16384
        $region56: #{gpt2_forward.9} parent=47 // pred_fallthru
          _
        // Predicated region
        $region57: #{gpt2_forward.9} parent=47 // pred_check
          %p327 = pneg %p90
        $region58: #{gpt2_forward.9} parent=47 // pred_check_branch
          %329 = sbr.rel (%p327) target = $region60
        $region59: #{gpt2_forward.9} parent=47 // pred_region
          %330 = dma.done [#allocation6], 256
        $region60: #{gpt2_forward.9} parent=47 // pred_fallthru
          _
        // Predicated region
        $region61: #{gpt2_forward.9} parent=47 // pred_check
          %p331 = pneg %p111
        $region62: #{gpt2_forward.9} parent=47 // pred_check_branch
          %333 = sbr.rel (%p331) target = $region64
        $region63: #{gpt2_forward.9} parent=47 // pred_region
          %334 = dma.done [#allocation9], 16384
        $region64: #{gpt2_forward.9} parent=47 // pred_fallthru
          _
        // Predicated region
        $region65: #{gpt2_forward.9} parent=47 // pred_check
          %p335 = pneg %p132
        $region66: #{gpt2_forward.9} parent=47 // pred_check_branch
          %337 = sbr.rel (%p335) target = $region68
        $region67: #{gpt2_forward.9} parent=47 // pred_region
          %338 = dma.done [#allocation9], 16
        $region68: #{gpt2_forward.9} parent=47 // pred_fallthru
          _
        // Predicated region
        $region69: #{gpt2_forward.9} parent=47 // pred_check
          %p339 = pneg %p153
        $region70: #{gpt2_forward.9} parent=47 // pred_check_branch
          %341 = sbr.rel (%p339) target = $region72
        $region71: #{gpt2_forward.9} parent=47 // pred_region
          %342 = dma.done [#allocation12], 16
        $region72: #{gpt2_forward.9} parent=47 // pred_fallthru
          _
        // Predicated region
        $region73: #{gpt2_forward.9} parent=47 // pred_check
          %p343 = pneg %p174
        $region74: #{gpt2_forward.9} parent=47 // pred_check_branch
          %345 = sbr.rel (%p343) target = $region76
        $region75: #{gpt2_forward.9} parent=47 // pred_region
          %346 = dma.done [#allocation12], 16
        $region76: #{gpt2_forward.9} parent=47 // pred_fallthru
          _
        %s347 = sand.u32 %s35, 1
        %s348 = scalar_lea.sflag [#allocation3], %s347
        %s349 = sand.u32 %s35, 1
        %s350 = smul.addr %s349, 4
        %s351 = scalar_lea.vmem [#allocation2], %s350
        %p352 = pneg %p48
        %p353 = pneg %p45
        %p354 = pneg %p69
        %p355 = pneg %p66
        %p356 = pneg %p90
        %p357 = pneg %p87
        %p358 = pneg %p111
        %p359 = pneg %p108
        %p360 = pneg %p132
        %p361 = pneg %p129
        %p362 = pneg %p153
        %p363 = pneg %p150
        %p364 = pneg %p174
        %p365 = pneg %p171
        %p366 = pneg %p200
        %p367 = pneg %p197
        %s368 = sand.u32 %s187, 1
        %s369 = scalar_lea.sflag [#allocation4], %s368
        %s370 = sand.u32 %s187, 1
        %s371 = smul.addr %s370, 8
        %s372 = scalar_lea.vmem [#allocation14], %s371
        %v374 = vld [vmem:[%s318] sm:$0xf]
        %v375 = vld [vmem:[#allocation5] sm:$0xff]
        %v376 = vld [vmem:[#allocation5 + $0x8] sm:$0xff]
        %v377 = vld [vmem:[#allocation5 + $0x10] sm:$0xff]
        %v378 = vld [vmem:[#allocation5 + $0x18] sm:$0xff]
        %v379 = vld [vmem:[#allocation5 + $0x20] sm:$0xff]
        %v380 = vld [vmem:[#allocation5 + $0x28] sm:$0xff]
        %v381 = vld [vmem:[#allocation5 + $0x30] sm:$0xff]
        %v382 = vld [vmem:[#allocation5 + $0x38] sm:$0xff]
        %v383 = vld [vmem:[#allocation5 + $0x40] sm:$0xff]
        %v384 = vld [vmem:[#allocation5 + $0x48] sm:$0xff]
        %v385 = vld [vmem:[#allocation5 + $0x50] sm:$0xff]
        %v386 = vld [vmem:[#allocation5 + $0x58] sm:$0xff]
        %v387 = vld [vmem:[#allocation5 + $0x60] sm:$0xff]
        %v388 = vld [vmem:[#allocation5 + $0x68] sm:$0xff]
        %v389 = vld [vmem:[#allocation5 + $0x70] sm:$0xff]
        %v390 = vld [vmem:[#allocation5 + $0x78] sm:$0xff]
        %v391 = vld [vmem:[#allocation5 + $0x80] sm:$0xff]
        %v392 = vld [vmem:[#allocation5 + $0x88] sm:$0xff]
        %v393 = vld [vmem:[#allocation5 + $0x90] sm:$0xff]
        %v394 = vld [vmem:[#allocation5 + $0x98] sm:$0xff]
        %v395 = vld [vmem:[#allocation5 + $0xa0] sm:$0xff]
        %v396 = vld [vmem:[#allocation5 + $0xa8] sm:$0xff]
        %v397 = vld [vmem:[#allocation5 + $0xb0] sm:$0xff]
        %v398 = vld [vmem:[#allocation5 + $0xb8] sm:$0xff]
        %v399 = vld [vmem:[#allocation5 + $0xc0] sm:$0xff]
        %v400 = vld [vmem:[#allocation5 + $0xc8] sm:$0xff]
        %v401 = vld [vmem:[#allocation5 + $0xd0] sm:$0xff]
        %v402 = vld [vmem:[#allocation5 + $0xd8] sm:$0xff]
        %v403 = vld [vmem:[#allocation5 + $0xe0] sm:$0xff]
        %v404 = vld [vmem:[#allocation5 + $0xe8] sm:$0xff]
        %v405 = vld [vmem:[#allocation5 + $0xf0] sm:$0xff]
        %v406 = vld [vmem:[#allocation5 + $0xf8] sm:$0xff]
        %v407 = vld [vmem:[#allocation5 + $0x100] sm:$0xff]
        %v408 = vld [vmem:[#allocation5 + $0x108] sm:$0xff]
        %v409 = vld [vmem:[#allocation5 + $0x110] sm:$0xff]
        %v410 = vld [vmem:[#allocation5 + $0x118] sm:$0xff]
        %v411 = vld [vmem:[#allocation5 + $0x120] sm:$0xff]
        %v412 = vld [vmem:[#allocation5 + $0x128] sm:$0xff]
        %v413 = vld [vmem:[#allocation5 + $0x130] sm:$0xff]
        %v414 = vld [vmem:[#allocation5 + $0x138] sm:$0xff]
        %v415 = vld [vmem:[#allocation5 + $0x140] sm:$0xff]
        %v416 = vld [vmem:[#allocation5 + $0x148] sm:$0xff]
        %v417 = vld [vmem:[#allocation5 + $0x150] sm:$0xff]
        %v418 = vld [vmem:[#allocation5 + $0x158] sm:$0xff]
        %v419 = vld [vmem:[#allocation5 + $0x160] sm:$0xff]
        %v420 = vld [vmem:[#allocation5 + $0x168] sm:$0xff]
        %v421 = vld [vmem:[#allocation5 + $0x170] sm:$0xff]
        %v422 = vld [vmem:[#allocation5 + $0x178] sm:$0xff]
        %v423 = vld [vmem:[#allocation5 + $0x180] sm:$0xff]
        %v424 = vld [vmem:[#allocation5 + $0x188] sm:$0xff]
        %v425 = vld [vmem:[#allocation5 + $0x190] sm:$0xff]
        %v426 = vld [vmem:[#allocation5 + $0x198] sm:$0xff]
        %v427 = vld [vmem:[#allocation5 + $0x1a0] sm:$0xff]
        %v428 = vld [vmem:[#allocation5 + $0x1a8] sm:$0xff]
        %v429 = vld [vmem:[#allocation5 + $0x1b0] sm:$0xff]
        %v430 = vld [vmem:[#allocation5 + $0x1b8] sm:$0xff]
        %v431 = vld [vmem:[#allocation5 + $0x1c0] sm:$0xff]
        %v432 = vld [vmem:[#allocation5 + $0x1c8] sm:$0xff]
        %v433 = vld [vmem:[#allocation5 + $0x1d0] sm:$0xff]
        %v434 = vld [vmem:[#allocation5 + $0x1d8] sm:$0xff]
        %v435 = vld [vmem:[#allocation5 + $0x1e0] sm:$0xff]
        %v436 = vld [vmem:[#allocation5 + $0x1e8] sm:$0xff]
        %v437 = vld [vmem:[#allocation5 + $0x1f0] sm:$0xff]
        %v438 = vld [vmem:[#allocation5 + $0x1f8] sm:$0xff]
        %v439 = vld [vmem:[#allocation5 + $0x200] sm:$0xff]
        %v440 = vld [vmem:[#allocation5 + $0x208] sm:$0xff]
        %v441 = vld [vmem:[#allocation5 + $0x210] sm:$0xff]
        %v442 = vld [vmem:[#allocation5 + $0x218] sm:$0xff]
        %v443 = vld [vmem:[#allocation5 + $0x220] sm:$0xff]
        %v444 = vld [vmem:[#allocation5 + $0x228] sm:$0xff]
        %v445 = vld [vmem:[#allocation5 + $0x230] sm:$0xff]
        %v446 = vld [vmem:[#allocation5 + $0x238] sm:$0xff]
        %v447 = vld [vmem:[#allocation5 + $0x240] sm:$0xff]
        %v448 = vld [vmem:[#allocation5 + $0x248] sm:$0xff]
        %v449 = vld [vmem:[#allocation5 + $0x250] sm:$0xff]
        %v450 = vld [vmem:[#allocation5 + $0x258] sm:$0xff]
        %v451 = vld [vmem:[#allocation5 + $0x260] sm:$0xff]
        %v452 = vld [vmem:[#allocation5 + $0x268] sm:$0xff]
        %v453 = vld [vmem:[#allocation5 + $0x270] sm:$0xff]
        %v454 = vld [vmem:[#allocation5 + $0x278] sm:$0xff]
        %v455 = vld [vmem:[#allocation5 + $0x280] sm:$0xff]
        %v456 = vld [vmem:[#allocation5 + $0x288] sm:$0xff]
        %v457 = vld [vmem:[#allocation5 + $0x290] sm:$0xff]
        %v458 = vld [vmem:[#allocation5 + $0x298] sm:$0xff]
        %v459 = vld [vmem:[#allocation5 + $0x2a0] sm:$0xff]
        %v460 = vld [vmem:[#allocation5 + $0x2a8] sm:$0xff]
        %v461 = vld [vmem:[#allocation5 + $0x2b0] sm:$0xff]
        %v462 = vld [vmem:[#allocation5 + $0x2b8] sm:$0xff]
        %v463 = vld [vmem:[#allocation5 + $0x2c0] sm:$0xff]
        %v464 = vld [vmem:[#allocation5 + $0x2c8] sm:$0xff]
        %v465 = vld [vmem:[#allocation5 + $0x2d0] sm:$0xff]
        %v466 = vld [vmem:[#allocation5 + $0x2d8] sm:$0xff]
        %v467 = vld [vmem:[#allocation5 + $0x2e0] sm:$0xff]
        %v468 = vld [vmem:[#allocation5 + $0x2e8] sm:$0xff]
        %v469 = vld [vmem:[#allocation5 + $0x2f0] sm:$0xff]
        %v470 = vld [vmem:[#allocation5 + $0x2f8] sm:$0xff]
        %v471 = vld [vmem:[#allocation5 + $0x300] sm:$0xff]
        %v472 = vld [vmem:[#allocation5 + $0x308] sm:$0xff]
        %v473 = vld [vmem:[#allocation5 + $0x310] sm:$0xff]
        %v474 = vld [vmem:[#allocation5 + $0x318] sm:$0xff]
        %v475 = vld [vmem:[#allocation5 + $0x320] sm:$0xff]
        %v476 = vld [vmem:[#allocation5 + $0x328] sm:$0xff]
        %v477 = vld [vmem:[#allocation5 + $0x330] sm:$0xff]
        %v478 = vld [vmem:[#allocation5 + $0x338] sm:$0xff]
        %v479 = vld [vmem:[#allocation5 + $0x340] sm:$0xff]
        %v480 = vld [vmem:[#allocation5 + $0x348] sm:$0xff]
        %v481 = vld [vmem:[#allocation5 + $0x350] sm:$0xff]
        %v482 = vld [vmem:[#allocation5 + $0x358] sm:$0xff]
        %v483 = vld [vmem:[#allocation5 + $0x360] sm:$0xff]
        %v484 = vld [vmem:[#allocation5 + $0x368] sm:$0xff]
        %v485 = vld [vmem:[#allocation5 + $0x370] sm:$0xff]
        %v486 = vld [vmem:[#allocation5 + $0x378] sm:$0xff]
        %v487 = vld [vmem:[#allocation5 + $0x380] sm:$0xff]
        %v488 = vld [vmem:[#allocation5 + $0x388] sm:$0xff]
        %v489 = vld [vmem:[#allocation5 + $0x390] sm:$0xff]
        %v490 = vld [vmem:[#allocation5 + $0x398] sm:$0xff]
        %v491 = vld [vmem:[#allocation5 + $0x3a0] sm:$0xff]
        %v492 = vld [vmem:[#allocation5 + $0x3a8] sm:$0xff]
        %v493 = vld [vmem:[#allocation5 + $0x3b0] sm:$0xff]
        %v494 = vld [vmem:[#allocation5 + $0x3b8] sm:$0xff]
        %v495 = vld [vmem:[#allocation5 + $0x3c0] sm:$0xff]
        %v496 = vld [vmem:[#allocation5 + $0x3c8] sm:$0xff]
        %v497 = vld [vmem:[#allocation5 + $0x3d0] sm:$0xff]
        %v498 = vld [vmem:[#allocation5 + $0x3d8] sm:$0xff]
        %v499 = vld [vmem:[#allocation5 + $0x3e0] sm:$0xff]
        %v500 = vld [vmem:[#allocation5 + $0x3e8] sm:$0xff]
        %v501 = vld [vmem:[#allocation5 + $0x3f0] sm:$0xff]
        %v502 = vld [vmem:[#allocation5 + $0x3f8] sm:$0xff]
        %v503 = vld [vmem:[#allocation7] sm:$0xff]
        %v504 = vld [vmem:[#allocation7 + $0x8] sm:$0xff]
        %v507 = vlaneseq
        %v508 = vshrl.u32 %v507, 7
        %v509 = vsub.s32 0, %v508
        %v510 = vrot.slane %v503, %v509
        %v511 = vlaneseq
        %v512 = vshrl.u32 %v511, 7
        %v513 = vsub.s32 1, %v512
        %v514 = vrot.slane %v503, %v513
        %v515 = vlaneseq
        %v516 = vshrl.u32 %v515, 7
        %v517 = vsub.s32 2, %v516
        %v518 = vrot.slane %v503, %v517
        %v519 = vlaneseq
        %v520 = vshrl.u32 %v519, 7
        %v521 = vsub.s32 3, %v520
        %v522 = vrot.slane %v503, %v521
        %v523 = vlaneseq
        %v524 = vshrl.u32 %v523, 7
        %v525 = vsub.s32 4, %v524
        %v526 = vrot.slane %v503, %v525
        %v527 = vlaneseq
        %v528 = vshrl.u32 %v527, 7
        %v529 = vsub.s32 5, %v528
        %v530 = vrot.slane %v503, %v529
        %v531 = vlaneseq
        %v532 = vshrl.u32 %v531, 7
        %v533 = vsub.s32 6, %v532
        %v534 = vrot.slane %v503, %v533
        %v535 = vlaneseq
        %v536 = vshrl.u32 %v535, 7
        %v537 = vsub.s32 7, %v536
        %v538 = vrot.slane %v503, %v537
        %v539 = vlaneseq
        %v540 = vshrl.u32 %v539, 7
        %v541 = vsub.s32 0, %v540
        %v542 = vrot.slane %v504, %v541
        %v543 = vlaneseq
        %v544 = vshrl.u32 %v543, 7
        %v545 = vsub.s32 1, %v544
        %v546 = vrot.slane %v504, %v545
        %v547 = vlaneseq
        %v548 = vshrl.u32 %v547, 7
        %v549 = vsub.s32 2, %v548
        %v550 = vrot.slane %v504, %v549
        %v551 = vlaneseq
        %v552 = vshrl.u32 %v551, 7
        %v553 = vsub.s32 3, %v552
        %v554 = vrot.slane %v504, %v553
        %v555 = vlaneseq
        %v556 = vshrl.u32 %v555, 7
        %v557 = vsub.s32 4, %v556
        %v558 = vrot.slane %v504, %v557
        %v559 = vlaneseq
        %v560 = vshrl.u32 %v559, 7
        %v561 = vsub.s32 5, %v560
        %v562 = vrot.slane %v504, %v561
        %v563 = vlaneseq
        %v564 = vshrl.u32 %v563, 7
        %v565 = vsub.s32 6, %v564
        %v566 = vrot.slane %v504, %v565
        %v567 = vlaneseq
        %v568 = vshrl.u32 %v567, 7
        %v569 = vsub.s32 7, %v568
        %v570 = vrot.slane %v504, %v569
        %v715 = vunpack.c.l.b16 %v375
        %v716 = vunpack.c.h.b16 %v375
        %v717 = vunpack.c.l.b16 %v376
        %v718 = vunpack.c.h.b16 %v376
        %v719 = vunpack.c.l.b16 %v377
        %v720 = vunpack.c.h.b16 %v377
        %v721 = vunpack.c.l.b16 %v378
        %v722 = vunpack.c.h.b16 %v378
        %v723 = vunpack.c.l.b16 %v379
        %v724 = vunpack.c.h.b16 %v379
        %v725 = vunpack.c.l.b16 %v380
        %v726 = vunpack.c.h.b16 %v380
        %v727 = vunpack.c.l.b16 %v381
        %v728 = vunpack.c.h.b16 %v381
        %v729 = vunpack.c.l.b16 %v382
        %v730 = vunpack.c.h.b16 %v382
        %v731 = vunpack.c.l.b16 %v383
        %v732 = vunpack.c.h.b16 %v383
        %v733 = vunpack.c.l.b16 %v384
        %v734 = vunpack.c.h.b16 %v384
        %v735 = vunpack.c.l.b16 %v385
        %v736 = vunpack.c.h.b16 %v385
        %v737 = vunpack.c.l.b16 %v386
        %v738 = vunpack.c.h.b16 %v386
        %v739 = vunpack.c.l.b16 %v387
        %v740 = vunpack.c.h.b16 %v387
        %v741 = vunpack.c.l.b16 %v388
        %v742 = vunpack.c.h.b16 %v388
        %v743 = vunpack.c.l.b16 %v389
        %v744 = vunpack.c.h.b16 %v389
        %v745 = vunpack.c.l.b16 %v390
        %v746 = vunpack.c.h.b16 %v390
        %v747 = vunpack.c.l.b16 %v391
        %v748 = vunpack.c.h.b16 %v391
        %v749 = vunpack.c.l.b16 %v392
        %v750 = vunpack.c.h.b16 %v392
        %v751 = vunpack.c.l.b16 %v393
        %v752 = vunpack.c.h.b16 %v393
        %v753 = vunpack.c.l.b16 %v394
        %v754 = vunpack.c.h.b16 %v394
        %v755 = vunpack.c.l.b16 %v395
        %v756 = vunpack.c.h.b16 %v395
        %v757 = vunpack.c.l.b16 %v396
        %v758 = vunpack.c.h.b16 %v396
        %v759 = vunpack.c.l.b16 %v397
        %v760 = vunpack.c.h.b16 %v397
        %v761 = vunpack.c.l.b16 %v398
        %v762 = vunpack.c.h.b16 %v398
        %v763 = vunpack.c.l.b16 %v399
        %v764 = vunpack.c.h.b16 %v399
        %v765 = vunpack.c.l.b16 %v400
        %v766 = vunpack.c.h.b16 %v400
        %v767 = vunpack.c.l.b16 %v401
        %v768 = vunpack.c.h.b16 %v401
        %v769 = vunpack.c.l.b16 %v402
        %v770 = vunpack.c.h.b16 %v402
        %v771 = vunpack.c.l.b16 %v403
        %v772 = vunpack.c.h.b16 %v403
        %v773 = vunpack.c.l.b16 %v404
        %v774 = vunpack.c.h.b16 %v404
        %v775 = vunpack.c.l.b16 %v405
        %v776 = vunpack.c.h.b16 %v405
        %v777 = vunpack.c.l.b16 %v406
        %v778 = vunpack.c.h.b16 %v406
        %v779 = vunpack.c.l.b16 %v407
        %v780 = vunpack.c.h.b16 %v407
        %v781 = vunpack.c.l.b16 %v408
        %v782 = vunpack.c.h.b16 %v408
        %v783 = vunpack.c.l.b16 %v409
        %v784 = vunpack.c.h.b16 %v409
        %v785 = vunpack.c.l.b16 %v410
        %v786 = vunpack.c.h.b16 %v410
        %v787 = vunpack.c.l.b16 %v411
        %v788 = vunpack.c.h.b16 %v411
        %v789 = vunpack.c.l.b16 %v412
        %v790 = vunpack.c.h.b16 %v412
        %v791 = vunpack.c.l.b16 %v413
        %v792 = vunpack.c.h.b16 %v413
        %v793 = vunpack.c.l.b16 %v414
        %v794 = vunpack.c.h.b16 %v414
        %v795 = vunpack.c.l.b16 %v415
        %v796 = vunpack.c.h.b16 %v415
        %v797 = vunpack.c.l.b16 %v416
        %v798 = vunpack.c.h.b16 %v416
        %v799 = vunpack.c.l.b16 %v417
        %v800 = vunpack.c.h.b16 %v417
        %v801 = vunpack.c.l.b16 %v418
        %v802 = vunpack.c.h.b16 %v418
        %v803 = vunpack.c.l.b16 %v419
        %v804 = vunpack.c.h.b16 %v419
        %v805 = vunpack.c.l.b16 %v420
        %v806 = vunpack.c.h.b16 %v420
        %v807 = vunpack.c.l.b16 %v421
        %v808 = vunpack.c.h.b16 %v421
        %v809 = vunpack.c.l.b16 %v422
        %v810 = vunpack.c.h.b16 %v422
        %v811 = vunpack.c.l.b16 %v423
        %v812 = vunpack.c.h.b16 %v423
        %v813 = vunpack.c.l.b16 %v424
        %v814 = vunpack.c.h.b16 %v424
        %v815 = vunpack.c.l.b16 %v425
        %v816 = vunpack.c.h.b16 %v425
        %v817 = vunpack.c.l.b16 %v426
        %v818 = vunpack.c.h.b16 %v426
        %v819 = vunpack.c.l.b16 %v427
        %v820 = vunpack.c.h.b16 %v427
        %v821 = vunpack.c.l.b16 %v428
        %v822 = vunpack.c.h.b16 %v428
        %v823 = vunpack.c.l.b16 %v429
        %v824 = vunpack.c.h.b16 %v429
        %v825 = vunpack.c.l.b16 %v430
        %v826 = vunpack.c.h.b16 %v430
        %v827 = vunpack.c.l.b16 %v431
        %v828 = vunpack.c.h.b16 %v431
        %v829 = vunpack.c.l.b16 %v432
        %v830 = vunpack.c.h.b16 %v432
        %v831 = vunpack.c.l.b16 %v433
        %v832 = vunpack.c.h.b16 %v433
        %v833 = vunpack.c.l.b16 %v434
        %v834 = vunpack.c.h.b16 %v434
        %v835 = vunpack.c.l.b16 %v435
        %v836 = vunpack.c.h.b16 %v435
        %v837 = vunpack.c.l.b16 %v436
        %v838 = vunpack.c.h.b16 %v436
        %v839 = vunpack.c.l.b16 %v437
        %v840 = vunpack.c.h.b16 %v437
        %v841 = vunpack.c.l.b16 %v438
        %v842 = vunpack.c.h.b16 %v438
        %v843 = vunpack.c.l.b16 %v439
        %v844 = vunpack.c.h.b16 %v439
        %v845 = vunpack.c.l.b16 %v440
        %v846 = vunpack.c.h.b16 %v440
        %v847 = vunpack.c.l.b16 %v441
        %v848 = vunpack.c.h.b16 %v441
        %v849 = vunpack.c.l.b16 %v442
        %v850 = vunpack.c.h.b16 %v442
        %v851 = vunpack.c.l.b16 %v443
        %v852 = vunpack.c.h.b16 %v443
        %v853 = vunpack.c.l.b16 %v444
        %v854 = vunpack.c.h.b16 %v444
        %v855 = vunpack.c.l.b16 %v445
        %v856 = vunpack.c.h.b16 %v445
        %v857 = vunpack.c.l.b16 %v446
        %v858 = vunpack.c.h.b16 %v446
        %v859 = vunpack.c.l.b16 %v447
        %v860 = vunpack.c.h.b16 %v447
        %v861 = vunpack.c.l.b16 %v448
        %v862 = vunpack.c.h.b16 %v448
        %v863 = vunpack.c.l.b16 %v449
        %v864 = vunpack.c.h.b16 %v449
        %v865 = vunpack.c.l.b16 %v450
        %v866 = vunpack.c.h.b16 %v450
        %v867 = vunpack.c.l.b16 %v451
        %v868 = vunpack.c.h.b16 %v451
        %v869 = vunpack.c.l.b16 %v452
        %v870 = vunpack.c.h.b16 %v452
        %v871 = vunpack.c.l.b16 %v453
        %v872 = vunpack.c.h.b16 %v453
        %v873 = vunpack.c.l.b16 %v454
        %v874 = vunpack.c.h.b16 %v454
        %v875 = vunpack.c.l.b16 %v455
        %v876 = vunpack.c.h.b16 %v455
        %v877 = vunpack.c.l.b16 %v456
        %v878 = vunpack.c.h.b16 %v456
        %v879 = vunpack.c.l.b16 %v457
        %v880 = vunpack.c.h.b16 %v457
        %v881 = vunpack.c.l.b16 %v458
        %v882 = vunpack.c.h.b16 %v458
        %v883 = vunpack.c.l.b16 %v459
        %v884 = vunpack.c.h.b16 %v459
        %v885 = vunpack.c.l.b16 %v460
        %v886 = vunpack.c.h.b16 %v460
        %v887 = vunpack.c.l.b16 %v461
        %v888 = vunpack.c.h.b16 %v461
        %v889 = vunpack.c.l.b16 %v462
        %v890 = vunpack.c.h.b16 %v462
        %v891 = vunpack.c.l.b16 %v463
        %v892 = vunpack.c.h.b16 %v463
        %v893 = vunpack.c.l.b16 %v464
        %v894 = vunpack.c.h.b16 %v464
        %v895 = vunpack.c.l.b16 %v465
        %v896 = vunpack.c.h.b16 %v465
        %v897 = vunpack.c.l.b16 %v466
        %v898 = vunpack.c.h.b16 %v466
        %v899 = vunpack.c.l.b16 %v467
        %v900 = vunpack.c.h.b16 %v467
        %v901 = vunpack.c.l.b16 %v468
        %v902 = vunpack.c.h.b16 %v468
        %v903 = vunpack.c.l.b16 %v469
        %v904 = vunpack.c.h.b16 %v469
        %v905 = vunpack.c.l.b16 %v470
        %v906 = vunpack.c.h.b16 %v470
        %v907 = vunpack.c.l.b16 %v471
        %v908 = vunpack.c.h.b16 %v471
        %v909 = vunpack.c.l.b16 %v472
        %v910 = vunpack.c.h.b16 %v472
        %v911 = vunpack.c.l.b16 %v473
        %v912 = vunpack.c.h.b16 %v473
        %v913 = vunpack.c.l.b16 %v474
        %v914 = vunpack.c.h.b16 %v474
        %v915 = vunpack.c.l.b16 %v475
        %v916 = vunpack.c.h.b16 %v475
        %v917 = vunpack.c.l.b16 %v476
        %v918 = vunpack.c.h.b16 %v476
        %v919 = vunpack.c.l.b16 %v477
        %v920 = vunpack.c.h.b16 %v477
        %v921 = vunpack.c.l.b16 %v478
        %v922 = vunpack.c.h.b16 %v478
        %v923 = vunpack.c.l.b16 %v479
        %v924 = vunpack.c.h.b16 %v479
        %v925 = vunpack.c.l.b16 %v480
        %v926 = vunpack.c.h.b16 %v480
        %v927 = vunpack.c.l.b16 %v481
        %v928 = vunpack.c.h.b16 %v481
        %v929 = vunpack.c.l.b16 %v482
        %v930 = vunpack.c.h.b16 %v482
        %v931 = vunpack.c.l.b16 %v483
        %v932 = vunpack.c.h.b16 %v483
        %v933 = vunpack.c.l.b16 %v484
        %v934 = vunpack.c.h.b16 %v484
        %v935 = vunpack.c.l.b16 %v485
        %v936 = vunpack.c.h.b16 %v485
        %v937 = vunpack.c.l.b16 %v486
        %v938 = vunpack.c.h.b16 %v486
        %v939 = vunpack.c.l.b16 %v487
        %v940 = vunpack.c.h.b16 %v487
        %v941 = vunpack.c.l.b16 %v488
        %v942 = vunpack.c.h.b16 %v488
        %v943 = vunpack.c.l.b16 %v489
        %v944 = vunpack.c.h.b16 %v489
        %v945 = vunpack.c.l.b16 %v490
        %v946 = vunpack.c.h.b16 %v490
        %v947 = vunpack.c.l.b16 %v491
        %v948 = vunpack.c.h.b16 %v491
        %v949 = vunpack.c.l.b16 %v492
        %v950 = vunpack.c.h.b16 %v492
        %v951 = vunpack.c.l.b16 %v493
        %v952 = vunpack.c.h.b16 %v493
        %v953 = vunpack.c.l.b16 %v494
        %v954 = vunpack.c.h.b16 %v494
        %v955 = vunpack.c.l.b16 %v495
        %v956 = vunpack.c.h.b16 %v495
        %v957 = vunpack.c.l.b16 %v496
        %v958 = vunpack.c.h.b16 %v496
        %v959 = vunpack.c.l.b16 %v497
        %v960 = vunpack.c.h.b16 %v497
        %v961 = vunpack.c.l.b16 %v498
        %v962 = vunpack.c.h.b16 %v498
        %v963 = vunpack.c.l.b16 %v499
        %v964 = vunpack.c.h.b16 %v499
        %v965 = vunpack.c.l.b16 %v500
        %v966 = vunpack.c.h.b16 %v500
        %v967 = vunpack.c.l.b16 %v501
        %v968 = vunpack.c.h.b16 %v501
        %v969 = vunpack.c.l.b16 %v502
        %v970 = vunpack.c.h.b16 %v502
        %v971 = vpack.c.b16 %v731, %v715
        %v972 = vpack.c.b16 %v732, %v716
        %v973 = vpack.c.b16 %v733, %v717
        %v974 = vpack.c.b16 %v734, %v718
        %v975 = vpack.c.b16 %v735, %v719
        %v976 = vpack.c.b16 %v736, %v720
        %v977 = vpack.c.b16 %v737, %v721
        %v978 = vpack.c.b16 %v738, %v722
        %v979 = vpack.c.b16 %v739, %v723
        %v980 = vpack.c.b16 %v740, %v724
        %v981 = vpack.c.b16 %v741, %v725
        %v982 = vpack.c.b16 %v742, %v726
        %v983 = vpack.c.b16 %v743, %v727
        %v984 = vpack.c.b16 %v744, %v728
        %v985 = vpack.c.b16 %v745, %v729
        %v986 = vpack.c.b16 %v746, %v730
        %v987 = vpack.c.b16 %v763, %v747
        %v988 = vpack.c.b16 %v764, %v748
        %v989 = vpack.c.b16 %v765, %v749
        %v990 = vpack.c.b16 %v766, %v750
        %v991 = vpack.c.b16 %v767, %v751
        %v992 = vpack.c.b16 %v768, %v752
        %v993 = vpack.c.b16 %v769, %v753
        %v994 = vpack.c.b16 %v770, %v754
        %v995 = vpack.c.b16 %v771, %v755
        %v996 = vpack.c.b16 %v772, %v756
        %v997 = vpack.c.b16 %v773, %v757
        %v998 = vpack.c.b16 %v774, %v758
        %v999 = vpack.c.b16 %v775, %v759
        %v1000 = vpack.c.b16 %v776, %v760
        %v1001 = vpack.c.b16 %v777, %v761
        %v1002 = vpack.c.b16 %v778, %v762
        %v1003 = vpack.c.b16 %v795, %v779
        %v1004 = vpack.c.b16 %v796, %v780
        %v1005 = vpack.c.b16 %v797, %v781
        %v1006 = vpack.c.b16 %v798, %v782
        %v1007 = vpack.c.b16 %v799, %v783
        %v1008 = vpack.c.b16 %v800, %v784
        %v1009 = vpack.c.b16 %v801, %v785
        %v1010 = vpack.c.b16 %v802, %v786
        %v1011 = vpack.c.b16 %v803, %v787
        %v1012 = vpack.c.b16 %v804, %v788
        %v1013 = vpack.c.b16 %v805, %v789
        %v1014 = vpack.c.b16 %v806, %v790
        %v1015 = vpack.c.b16 %v807, %v791
        %v1016 = vpack.c.b16 %v808, %v792
        %v1017 = vpack.c.b16 %v809, %v793
        %v1018 = vpack.c.b16 %v810, %v794
        %v1019 = vpack.c.b16 %v827, %v811
        %v1020 = vpack.c.b16 %v828, %v812
        %v1021 = vpack.c.b16 %v829, %v813
        %v1022 = vpack.c.b16 %v830, %v814
        %v1023 = vpack.c.b16 %v831, %v815
        %v1024 = vpack.c.b16 %v832, %v816
        %v1025 = vpack.c.b16 %v833, %v817
        %v1026 = vpack.c.b16 %v834, %v818
        %v1027 = vpack.c.b16 %v835, %v819
        %v1028 = vpack.c.b16 %v836, %v820
        %v1029 = vpack.c.b16 %v837, %v821
        %v1030 = vpack.c.b16 %v838, %v822
        %v1031 = vpack.c.b16 %v839, %v823
        %v1032 = vpack.c.b16 %v840, %v824
        %v1033 = vpack.c.b16 %v841, %v825
        %v1034 = vpack.c.b16 %v842, %v826
        %v1035 = vpack.c.b16 %v859, %v843
        %v1036 = vpack.c.b16 %v860, %v844
        %v1037 = vpack.c.b16 %v861, %v845
        %v1038 = vpack.c.b16 %v862, %v846
        %v1039 = vpack.c.b16 %v863, %v847
        %v1040 = vpack.c.b16 %v864, %v848
        %v1041 = vpack.c.b16 %v865, %v849
        %v1042 = vpack.c.b16 %v866, %v850
        %v1043 = vpack.c.b16 %v867, %v851
        %v1044 = vpack.c.b16 %v868, %v852
        %v1045 = vpack.c.b16 %v869, %v853
        %v1046 = vpack.c.b16 %v870, %v854
        %v1047 = vpack.c.b16 %v871, %v855
        %v1048 = vpack.c.b16 %v872, %v856
        %v1049 = vpack.c.b16 %v873, %v857
        %v1050 = vpack.c.b16 %v874, %v858
        %v1051 = vpack.c.b16 %v891, %v875
        %v1052 = vpack.c.b16 %v892, %v876
        %v1053 = vpack.c.b16 %v893, %v877
        %v1054 = vpack.c.b16 %v894, %v878
        %v1055 = vpack.c.b16 %v895, %v879
        %v1056 = vpack.c.b16 %v896, %v880
        %v1057 = vpack.c.b16 %v897, %v881
        %v1058 = vpack.c.b16 %v898, %v882
        %v1059 = vpack.c.b16 %v899, %v883
        %v1060 = vpack.c.b16 %v900, %v884
        %v1061 = vpack.c.b16 %v901, %v885
        %v1062 = vpack.c.b16 %v902, %v886
        %v1063 = vpack.c.b16 %v903, %v887
        %v1064 = vpack.c.b16 %v904, %v888
        %v1065 = vpack.c.b16 %v905, %v889
        %v1066 = vpack.c.b16 %v906, %v890
        %v1067 = vpack.c.b16 %v923, %v907
        %v1068 = vpack.c.b16 %v924, %v908
        %v1069 = vpack.c.b16 %v925, %v909
        %v1070 = vpack.c.b16 %v926, %v910
        %v1071 = vpack.c.b16 %v927, %v911
        %v1072 = vpack.c.b16 %v928, %v912
        %v1073 = vpack.c.b16 %v929, %v913
        %v1074 = vpack.c.b16 %v930, %v914
        %v1075 = vpack.c.b16 %v931, %v915
        %v1076 = vpack.c.b16 %v932, %v916
        %v1077 = vpack.c.b16 %v933, %v917
        %v1078 = vpack.c.b16 %v934, %v918
        %v1079 = vpack.c.b16 %v935, %v919
        %v1080 = vpack.c.b16 %v936, %v920
        %v1081 = vpack.c.b16 %v937, %v921
        %v1082 = vpack.c.b16 %v938, %v922
        %v1083 = vpack.c.b16 %v955, %v939
        %v1084 = vpack.c.b16 %v956, %v940
        %v1085 = vpack.c.b16 %v957, %v941
        %v1086 = vpack.c.b16 %v958, %v942
        %v1087 = vpack.c.b16 %v959, %v943
        %v1088 = vpack.c.b16 %v960, %v944
        %v1089 = vpack.c.b16 %v961, %v945
        %v1090 = vpack.c.b16 %v962, %v946
        %v1091 = vpack.c.b16 %v963, %v947
        %v1092 = vpack.c.b16 %v964, %v948
        %v1093 = vpack.c.b16 %v965, %v949
        %v1094 = vpack.c.b16 %v966, %v950
        %v1095 = vpack.c.b16 %v967, %v951
        %v1096 = vpack.c.b16 %v968, %v952
        %v1097 = vpack.c.b16 %v969, %v953
        %v1098 = vpack.c.b16 %v970, %v954
        %1227 = vmatprep.subr.bf16.mxu0 %v972
        %1228 = vmatpush1.bf16.msra.mxu0 %v971
        %1229 = vmatprep.subr.bf16.mxu0 %v988
        %1230 = vmatpush1.bf16.msra.mxu0 %v987
        %1231 = vmatprep.subr.bf16.mxu0 %v1004
        %1232 = vmatpush1.bf16.msra.mxu0 %v1003
        %1233 = vmatprep.subr.bf16.mxu0 %v1020
        %1234 = vmatpush1.bf16.msra.mxu0 %v1019
        %1235 = vmatprep.subr.bf16.mxu0 %v1036
        %1236 = vmatpush1.bf16.msra.mxu0 %v1035
        %1237 = vmatprep.subr.bf16.mxu0 %v1052
        %1238 = vmatpush1.bf16.msra.mxu0 %v1051
        %1239 = vmatprep.subr.bf16.mxu0 %v1068
        %1240 = vmatpush1.bf16.msra.mxu0 %v1067
        %1241 = vmatprep.subr.bf16.mxu0 %v1084
        %1242 = vmatpush1.bf16.msra.mxu0 %v1083
        %1243 = vmatprep.subr.bf16.mxu0 0
        %1244 = vmatpush1.bf16.msra.mxu0 0
        %1245 = vmatprep.subr.bf16.mxu0 0
        %1246 = vmatpush1.bf16.msra.mxu0 0
        %1247 = vmatprep.subr.bf16.mxu0 0
        %1248 = vmatpush1.bf16.msra.mxu0 0
        %1249 = vmatprep.subr.bf16.mxu0 0
        %1250 = vmatpush1.bf16.msra.mxu0 0
        %1251 = vmatprep.subr.bf16.mxu0 0
        %1252 = vmatpush1.bf16.msra.mxu0 0
        %1253 = vmatprep.subr.bf16.mxu0 0
        %1254 = vmatpush1.bf16.msra.mxu0 0
        %1255 = vmatprep.subr.bf16.mxu0 0
        %1256 = vmatpush1.bf16.msra.mxu0 0
        %1257 = vmatprep.subr.bf16.mxu0 0
        %1258 = vmatpush1.bf16.msra.mxu0 0
        %1259 = vmatprep.mubr.bf16.mxu0 0
        %1260 = vmatmul.mubr.bf16.gmra.mrb[0].mxu0 %v374
        %v1261 = vpop.f32.mrb[0].mxu0
        %v1262 = vadd.f32 %v510, %v1261
        %v1263 = vpop.f32.mrb[0].mxu0
        %v1264 = vadd.f32 %v514, %v1263
        %v1265 = vpop.f32.mrb[0].mxu0
        %v1266 = vpop.f32.mrb[0].mxu0
        %1267 = vdwg.mxu0
        %1268 = vmatprep.subr.bf16.mxu0 %v974
        %1269 = vmatpush1.bf16.msra.mxu0 %v973
        %1270 = vmatprep.subr.bf16.mxu0 %v990
        %1271 = vmatpush1.bf16.msra.mxu0 %v989
        %1272 = vmatprep.subr.bf16.mxu0 %v1006
        %1273 = vmatpush1.bf16.msra.mxu0 %v1005
        %1274 = vmatprep.subr.bf16.mxu0 %v1022
        %1275 = vmatpush1.bf16.msra.mxu0 %v1021
        %1276 = vmatprep.subr.bf16.mxu0 %v1038
        %1277 = vmatpush1.bf16.msra.mxu0 %v1037
        %1278 = vmatprep.subr.bf16.mxu0 %v1054
        %1279 = vmatpush1.bf16.msra.mxu0 %v1053
        %1280 = vmatprep.subr.bf16.mxu0 %v1070
        %1281 = vmatpush1.bf16.msra.mxu0 %v1069
        %1282 = vmatprep.subr.bf16.mxu0 %v1086
        %1283 = vmatpush1.bf16.msra.mxu0 %v1085
        %1284 = vmatprep.subr.bf16.mxu0 0
        %1285 = vmatpush1.bf16.msra.mxu0 0
        %1286 = vmatprep.subr.bf16.mxu0 0
        %1287 = vmatpush1.bf16.msra.mxu0 0
        %1288 = vmatprep.subr.bf16.mxu0 0
        %1289 = vmatpush1.bf16.msra.mxu0 0
        %1290 = vmatprep.subr.bf16.mxu0 0
        %1291 = vmatpush1.bf16.msra.mxu0 0
        %1292 = vmatprep.subr.bf16.mxu0 0
        %1293 = vmatpush1.bf16.msra.mxu0 0
        %1294 = vmatprep.subr.bf16.mxu0 0
        %1295 = vmatpush1.bf16.msra.mxu0 0
        %1296 = vmatprep.subr.bf16.mxu0 0
        %1297 = vmatpush1.bf16.msra.mxu0 0
        %1298 = vmatprep.subr.bf16.mxu0 0
        %1299 = vmatpush1.bf16.msra.mxu0 0
        %1300 = vmatprep.mubr.bf16.mxu0 0
        %1301 = vmatmul.mubr.bf16.gmra.mrb[0].mxu0 %v374
        %v1302 = vpop.f32.mrb[0].mxu0
        %v1303 = vadd.f32 %v518, %v1302
        %v1304 = vpop.f32.mrb[0].mxu0
        %v1305 = vadd.f32 %v522, %v1304
        %v1306 = vpop.f32.mrb[0].mxu0
        %v1307 = vpop.f32.mrb[0].mxu0
        %1308 = vdwg.mxu0
        %1309 = vmatprep.subr.bf16.mxu0 %v976
        %1310 = vmatpush1.bf16.msra.mxu0 %v975
        %1311 = vmatprep.subr.bf16.mxu0 %v992
        %1312 = vmatpush1.bf16.msra.mxu0 %v991
        %1313 = vmatprep.subr.bf16.mxu0 %v1008
        %1314 = vmatpush1.bf16.msra.mxu0 %v1007
        %1315 = vmatprep.subr.bf16.mxu0 %v1024
        %1316 = vmatpush1.bf16.msra.mxu0 %v1023
        %1317 = vmatprep.subr.bf16.mxu0 %v1040
        %1318 = vmatpush1.bf16.msra.mxu0 %v1039
        %1319 = vmatprep.subr.bf16.mxu0 %v1056
        %1320 = vmatpush1.bf16.msra.mxu0 %v1055
        %1321 = vmatprep.subr.bf16.mxu0 %v1072
        %1322 = vmatpush1.bf16.msra.mxu0 %v1071
        %1323 = vmatprep.subr.bf16.mxu0 %v1088
        %1324 = vmatpush1.bf16.msra.mxu0 %v1087
        %1325 = vmatprep.subr.bf16.mxu0 0
        %1326 = vmatpush1.bf16.msra.mxu0 0
        %1327 = vmatprep.subr.bf16.mxu0 0
        %1328 = vmatpush1.bf16.msra.mxu0 0
        %1329 = vmatprep.subr.bf16.mxu0 0
        %1330 = vmatpush1.bf16.msra.mxu0 0
        %1331 = vmatprep.subr.bf16.mxu0 0
        %1332 = vmatpush1.bf16.msra.mxu0 0
        %1333 = vmatprep.subr.bf16.mxu0 0
        %1334 = vmatpush1.bf16.msra.mxu0 0
        %1335 = vmatprep.subr.bf16.mxu0 0
        %1336 = vmatpush1.bf16.msra.mxu0 0
        %1337 = vmatprep.subr.bf16.mxu0 0
        %1338 = vmatpush1.bf16.msra.mxu0 0
        %1339 = vmatprep.subr.bf16.mxu0 0
        %1340 = vmatpush1.bf16.msra.mxu0 0
        %1341 = vmatprep.mubr.bf16.mxu0 0
        %1342 = vmatmul.mubr.bf16.gmra.mrb[0].mxu0 %v374
        %v1343 = vpop.f32.mrb[0].mxu0
        %v1344 = vadd.f32 %v526, %v1343
        %v1345 = vpop.f32.mrb[0].mxu0
        %v1346 = vadd.f32 %v530, %v1345
        %v1347 = vpop.f32.mrb[0].mxu0
        %v1348 = vpop.f32.mrb[0].mxu0
        %1349 = vdwg.mxu0
        %1350 = vmatprep.subr.bf16.mxu0 %v978
        %1351 = vmatpush1.bf16.msra.mxu0 %v977
        %1352 = vmatprep.subr.bf16.mxu0 %v994
        %1353 = vmatpush1.bf16.msra.mxu0 %v993
        %1354 = vmatprep.subr.bf16.mxu0 %v1010
        %1355 = vmatpush1.bf16.msra.mxu0 %v1009
        %1356 = vmatprep.subr.bf16.mxu0 %v1026
        %1357 = vmatpush1.bf16.msra.mxu0 %v1025
        %1358 = vmatprep.subr.bf16.mxu0 %v1042
        %1359 = vmatpush1.bf16.msra.mxu0 %v1041
        %1360 = vmatprep.subr.bf16.mxu0 %v1058
        %1361 = vmatpush1.bf16.msra.mxu0 %v1057
        %1362 = vmatprep.subr.bf16.mxu0 %v1074
        %1363 = vmatpush1.bf16.msra.mxu0 %v1073
        %1364 = vmatprep.subr.bf16.mxu0 %v1090
        %1365 = vmatpush1.bf16.msra.mxu0 %v1089
        %1366 = vmatprep.subr.bf16.mxu0 0
        %1367 = vmatpush1.bf16.msra.mxu0 0
        %1368 = vmatprep.subr.bf16.mxu0 0
        %1369 = vmatpush1.bf16.msra.mxu0 0
        %1370 = vmatprep.subr.bf16.mxu0 0
        %1371 = vmatpush1.bf16.msra.mxu0 0
        %1372 = vmatprep.subr.bf16.mxu0 0
        %1373 = vmatpush1.bf16.msra.mxu0 0
        %1374 = vmatprep.subr.bf16.mxu0 0
        %1375 = vmatpush1.bf16.msra.mxu0 0
        %1376 = vmatprep.subr.bf16.mxu0 0
        %1377 = vmatpush1.bf16.msra.mxu0 0
        %1378 = vmatprep.subr.bf16.mxu0 0
        %1379 = vmatpush1.bf16.msra.mxu0 0
        %1380 = vmatprep.subr.bf16.mxu0 0
        %1381 = vmatpush1.bf16.msra.mxu0 0
        %1382 = vmatprep.mubr.bf16.mxu0 0
        %1383 = vmatmul.mubr.bf16.gmra.mrb[0].mxu0 %v374
        %v1384 = vpop.f32.mrb[0].mxu0
        %v1385 = vadd.f32 %v534, %v1384
        %v1386 = vpop.f32.mrb[0].mxu0
        %v1387 = vadd.f32 %v538, %v1386
        %v1388 = vpop.f32.mrb[0].mxu0
        %v1389 = vpop.f32.mrb[0].mxu0
        %1390 = vdwg.mxu0
        %1391 = vmatprep.subr.bf16.mxu0 %v980
        %1392 = vmatpush1.bf16.msra.mxu0 %v979
        %1393 = vmatprep.subr.bf16.mxu0 %v996
        %1394 = vmatpush1.bf16.msra.mxu0 %v995
        %1395 = vmatprep.subr.bf16.mxu0 %v1012
        %1396 = vmatpush1.bf16.msra.mxu0 %v1011
        %1397 = vmatprep.subr.bf16.mxu0 %v1028
        %1398 = vmatpush1.bf16.msra.mxu0 %v1027
        %1399 = vmatprep.subr.bf16.mxu0 %v1044
        %1400 = vmatpush1.bf16.msra.mxu0 %v1043
        %1401 = vmatprep.subr.bf16.mxu0 %v1060
        %1402 = vmatpush1.bf16.msra.mxu0 %v1059
        %1403 = vmatprep.subr.bf16.mxu0 %v1076
        %1404 = vmatpush1.bf16.msra.mxu0 %v1075
        %1405 = vmatprep.subr.bf16.mxu0 %v1092
        %1406 = vmatpush1.bf16.msra.mxu0 %v1091
        %1407 = vmatprep.subr.bf16.mxu0 0
        %1408 = vmatpush1.bf16.msra.mxu0 0
        %1409 = vmatprep.subr.bf16.mxu0 0
        %1410 = vmatpush1.bf16.msra.mxu0 0
        %1411 = vmatprep.subr.bf16.mxu0 0
        %1412 = vmatpush1.bf16.msra.mxu0 0
        %1413 = vmatprep.subr.bf16.mxu0 0
        %1414 = vmatpush1.bf16.msra.mxu0 0
        %1415 = vmatprep.subr.bf16.mxu0 0
        %1416 = vmatpush1.bf16.msra.mxu0 0
        %1417 = vmatprep.subr.bf16.mxu0 0
        %1418 = vmatpush1.bf16.msra.mxu0 0
        %1419 = vmatprep.subr.bf16.mxu0 0
        %1420 = vmatpush1.bf16.msra.mxu0 0
        %1421 = vmatprep.subr.bf16.mxu0 0
        %1422 = vmatpush1.bf16.msra.mxu0 0
        %1423 = vmatprep.mubr.bf16.mxu0 0
        %1424 = vmatmul.mubr.bf16.gmra.mrb[0].mxu0 %v374
        %v1425 = vpop.f32.mrb[0].mxu0
        %v1426 = vadd.f32 %v542, %v1425
        %v1427 = vpop.f32.mrb[0].mxu0
        %v1428 = vadd.f32 %v546, %v1427
        %v1429 = vpop.f32.mrb[0].mxu0
        %v1430 = vpop.f32.mrb[0].mxu0
        %1431 = vdwg.mxu0
        %1432 = vmatprep.subr.bf16.mxu0 %v982
        %1433 = vmatpush1.bf16.msra.mxu0 %v981
        %1434 = vmatprep.subr.bf16.mxu0 %v998
        %1435 = vmatpush1.bf16.msra.mxu0 %v997
        %1436 = vmatprep.subr.bf16.mxu0 %v1014
        %1437 = vmatpush1.bf16.msra.mxu0 %v1013
        %1438 = vmatprep.subr.bf16.mxu0 %v1030
        %1439 = vmatpush1.bf16.msra.mxu0 %v1029
        %1440 = vmatprep.subr.bf16.mxu0 %v1046
        %1441 = vmatpush1.bf16.msra.mxu0 %v1045
        %1442 = vmatprep.subr.bf16.mxu0 %v1062
        %1443 = vmatpush1.bf16.msra.mxu0 %v1061
        %1444 = vmatprep.subr.bf16.mxu0 %v1078
        %1445 = vmatpush1.bf16.msra.mxu0 %v1077
        %1446 = vmatprep.subr.bf16.mxu0 %v1094
        %1447 = vmatpush1.bf16.msra.mxu0 %v1093
        %1448 = vmatprep.subr.bf16.mxu0 0
        %1449 = vmatpush1.bf16.msra.mxu0 0
        %1450 = vmatprep.subr.bf16.mxu0 0
        %1451 = vmatpush1.bf16.msra.mxu0 0
        %1452 = vmatprep.subr.bf16.mxu0 0
        %1453 = vmatpush1.bf16.msra.mxu0 0
        %1454 = vmatprep.subr.bf16.mxu0 0
        %1455 = vmatpush1.bf16.msra.mxu0 0
        %1456 = vmatprep.subr.bf16.mxu0 0
        %1457 = vmatpush1.bf16.msra.mxu0 0
        %1458 = vmatprep.subr.bf16.mxu0 0
        %1459 = vmatpush1.bf16.msra.mxu0 0
        %1460 = vmatprep.subr.bf16.mxu0 0
        %1461 = vmatpush1.bf16.msra.mxu0 0
        %1462 = vmatprep.subr.bf16.mxu0 0
        %1463 = vmatpush1.bf16.msra.mxu0 0
        %1464 = vmatprep.mubr.bf16.mxu0 0
        %1465 = vmatmul.mubr.bf16.gmra.mrb[0].mxu0 %v374
        %v1466 = vpop.f32.mrb[0].mxu0
        %v1467 = vadd.f32 %v550, %v1466
        %v1468 = vpop.f32.mrb[0].mxu0
        %v1469 = vadd.f32 %v554, %v1468
        %v1470 = vpop.f32.mrb[0].mxu0
        %v1471 = vpop.f32.mrb[0].mxu0
        %1472 = vdwg.mxu0
        %1473 = vmatprep.subr.bf16.mxu0 %v984
        %1474 = vmatpush1.bf16.msra.mxu0 %v983
        %1475 = vmatprep.subr.bf16.mxu0 %v1000
        %1476 = vmatpush1.bf16.msra.mxu0 %v999
        %1477 = vmatprep.subr.bf16.mxu0 %v1016
        %1478 = vmatpush1.bf16.msra.mxu0 %v1015
        %1479 = vmatprep.subr.bf16.mxu0 %v1032
        %1480 = vmatpush1.bf16.msra.mxu0 %v1031
        %1481 = vmatprep.subr.bf16.mxu0 %v1048
        %1482 = vmatpush1.bf16.msra.mxu0 %v1047
        %1483 = vmatprep.subr.bf16.mxu0 %v1064
        %1484 = vmatpush1.bf16.msra.mxu0 %v1063
        %1485 = vmatprep.subr.bf16.mxu0 %v1080
        %1486 = vmatpush1.bf16.msra.mxu0 %v1079
        %1487 = vmatprep.subr.bf16.mxu0 %v1096
        %1488 = vmatpush1.bf16.msra.mxu0 %v1095
        %1489 = vmatprep.subr.bf16.mxu0 0
        %1490 = vmatpush1.bf16.msra.mxu0 0
        %1491 = vmatprep.subr.bf16.mxu0 0
        %1492 = vmatpush1.bf16.msra.mxu0 0
        %1493 = vmatprep.subr.bf16.mxu0 0
        %1494 = vmatpush1.bf16.msra.mxu0 0
        %1495 = vmatprep.subr.bf16.mxu0 0
        %1496 = vmatpush1.bf16.msra.mxu0 0
        %1497 = vmatprep.subr.bf16.mxu0 0
        %1498 = vmatpush1.bf16.msra.mxu0 0
        %1499 = vmatprep.subr.bf16.mxu0 0
        %1500 = vmatpush1.bf16.msra.mxu0 0
        %1501 = vmatprep.subr.bf16.mxu0 0
        %1502 = vmatpush1.bf16.msra.mxu0 0
        %1503 = vmatprep.subr.bf16.mxu0 0
        %1504 = vmatpush1.bf16.msra.mxu0 0
        %1505 = vmatprep.mubr.bf16.mxu0 0
        %1506 = vmatmul.mubr.bf16.gmra.mrb[0].mxu0 %v374
        %v1507 = vpop.f32.mrb[0].mxu0
        %v1508 = vadd.f32 %v558, %v1507
        %v1509 = vpop.f32.mrb[0].mxu0
        %v1510 = vadd.f32 %v562, %v1509
        %v1511 = vpop.f32.mrb[0].mxu0
        %v1512 = vpop.f32.mrb[0].mxu0
        %1513 = vdwg.mxu0
        %1514 = vmatprep.subr.bf16.mxu0 %v986
        %1515 = vmatpush1.bf16.msra.mxu0 %v985
        %1516 = vmatprep.subr.bf16.mxu0 %v1002
        %1517 = vmatpush1.bf16.msra.mxu0 %v1001
        %1518 = vmatprep.subr.bf16.mxu0 %v1018
        %1519 = vmatpush1.bf16.msra.mxu0 %v1017
        %1520 = vmatprep.subr.bf16.mxu0 %v1034
        %1521 = vmatpush1.bf16.msra.mxu0 %v1033
        %1522 = vmatprep.subr.bf16.mxu0 %v1050
        %1523 = vmatpush1.bf16.msra.mxu0 %v1049
        %1524 = vmatprep.subr.bf16.mxu0 %v1066
        %1525 = vmatpush1.bf16.msra.mxu0 %v1065
        %1526 = vmatprep.subr.bf16.mxu0 %v1082
        %1527 = vmatpush1.bf16.msra.mxu0 %v1081
        %1528 = vmatprep.subr.bf16.mxu0 %v1098
        %1529 = vmatpush1.bf16.msra.mxu0 %v1097
        %1530 = vmatprep.subr.bf16.mxu0 0
        %1531 = vmatpush1.bf16.msra.mxu0 0
        %1532 = vmatprep.subr.bf16.mxu0 0
        %1533 = vmatpush1.bf16.msra.mxu0 0
        %1534 = vmatprep.subr.bf16.mxu0 0
        %1535 = vmatpush1.bf16.msra.mxu0 0
        %1536 = vmatprep.subr.bf16.mxu0 0
        %1537 = vmatpush1.bf16.msra.mxu0 0
        %1538 = vmatprep.subr.bf16.mxu0 0
        %1539 = vmatpush1.bf16.msra.mxu0 0
        %1540 = vmatprep.subr.bf16.mxu0 0
        %1541 = vmatpush1.bf16.msra.mxu0 0
        %1542 = vmatprep.subr.bf16.mxu0 0
        %1543 = vmatpush1.bf16.msra.mxu0 0
        %1544 = vmatprep.subr.bf16.mxu0 0
        %1545 = vmatpush1.bf16.msra.mxu0 0
        %1546 = vmatprep.mubr.bf16.mxu0 0
        %1547 = vmatmul.mubr.bf16.gmra.mrb[0].mxu0 %v374
        %v1548 = vpop.f32.mrb[0].mxu0
        %v1549 = vadd.f32 %v566, %v1548
        %v1550 = vpop.f32.mrb[0].mxu0
        %v1551 = vadd.f32 %v570, %v1550
        %v1552 = vpop.f32.mrb[0].mxu0
        %v1553 = vpop.f32.mrb[0].mxu0
        %1554 = vdwg.mxu0
        %v1555 = vmax.f32 %v1262, 0.0
        %v1556 = vmax.f32 %v1264, 0.0
        %v1557 = vmax.f32 %v1303, 0.0
        %v1558 = vmax.f32 %v1305, 0.0
        %v1559 = vmax.f32 %v1344, 0.0
        %v1560 = vmax.f32 %v1346, 0.0
        %v1561 = vmax.f32 %v1385, 0.0
        %v1562 = vmax.f32 %v1387, 0.0
        %v1563 = vmax.f32 %v1426, 0.0
        %v1564 = vmax.f32 %v1428, 0.0
        %v1565 = vmax.f32 %v1467, 0.0
        %v1566 = vmax.f32 %v1469, 0.0
        %v1567 = vmax.f32 %v1508, 0.0
        %v1568 = vmax.f32 %v1510, 0.0
        %v1569 = vmax.f32 %v1549, 0.0
        %v1570 = vmax.f32 %v1551, 0.0
        %v1571 = vpack.c.bf16 %v1555, %v1555
        %v1572 = vpack.c.bf16 %v1556, %v1556
        %v1573 = vpack.c.bf16 %v1557, %v1557
        %v1574 = vpack.c.bf16 %v1558, %v1558
        %v1575 = vpack.c.bf16 %v1559, %v1559
        %v1576 = vpack.c.bf16 %v1560, %v1560
        %v1577 = vpack.c.bf16 %v1561, %v1561
        %v1578 = vpack.c.bf16 %v1562, %v1562
        %v1579 = vpack.c.bf16 %v1563, %v1563
        %v1580 = vpack.c.bf16 %v1564, %v1564
        %v1581 = vpack.c.bf16 %v1565, %v1565
        %v1582 = vpack.c.bf16 %v1566, %v1566
        %v1583 = vpack.c.bf16 %v1567, %v1567
        %v1584 = vpack.c.bf16 %v1568, %v1568
        %v1585 = vpack.c.bf16 %v1569, %v1569
        %v1586 = vpack.c.bf16 %v1570, %v1570
        %v1587 = vld [vmem:[#allocation8] sm:$0xf]
        %v1588 = vld [vmem:[#allocation8 + $0x4] sm:$0xf]
        %v1589 = vld [vmem:[#allocation8 + $0x8] sm:$0xf]
        %v1590 = vld [vmem:[#allocation8 + $0xc] sm:$0xf]
        %v1591 = vld [vmem:[#allocation8 + $0x10] sm:$0xf]
        %v1592 = vld [vmem:[#allocation8 + $0x14] sm:$0xf]
        %v1593 = vld [vmem:[#allocation8 + $0x18] sm:$0xf]
        %v1594 = vld [vmem:[#allocation8 + $0x1c] sm:$0xf]
        %v1595 = vld [vmem:[#allocation8 + $0x20] sm:$0xf]
        %v1596 = vld [vmem:[#allocation8 + $0x24] sm:$0xf]
        %v1597 = vld [vmem:[#allocation8 + $0x28] sm:$0xf]
        %v1598 = vld [vmem:[#allocation8 + $0x2c] sm:$0xf]
        %v1599 = vld [vmem:[#allocation8 + $0x30] sm:$0xf]
        %v1600 = vld [vmem:[#allocation8 + $0x34] sm:$0xf]
        %v1601 = vld [vmem:[#allocation8 + $0x38] sm:$0xf]
        %v1602 = vld [vmem:[#allocation8 + $0x3c] sm:$0xf]
        %v1603 = vld [vmem:[#allocation8 + $0x40] sm:$0xf]
        %v1604 = vld [vmem:[#allocation8 + $0x44] sm:$0xf]
        %v1605 = vld [vmem:[#allocation8 + $0x48] sm:$0xf]
        %v1606 = vld [vmem:[#allocation8 + $0x4c] sm:$0xf]
        %v1607 = vld [vmem:[#allocation8 + $0x50] sm:$0xf]
        %v1608 = vld [vmem:[#allocation8 + $0x54] sm:$0xf]
        %v1609 = vld [vmem:[#allocation8 + $0x58] sm:$0xf]
        %v1610 = vld [vmem:[#allocation8 + $0x5c] sm:$0xf]
        %v1611 = vld [vmem:[#allocation8 + $0x60] sm:$0xf]
        %v1612 = vld [vmem:[#allocation8 + $0x64] sm:$0xf]
        %v1613 = vld [vmem:[#allocation8 + $0x68] sm:$0xf]
        %v1614 = vld [vmem:[#allocation8 + $0x6c] sm:$0xf]
        %v1615 = vld [vmem:[#allocation8 + $0x70] sm:$0xf]
        %v1616 = vld [vmem:[#allocation8 + $0x74] sm:$0xf]
        %v1617 = vld [vmem:[#allocation8 + $0x78] sm:$0xf]
        %v1618 = vld [vmem:[#allocation8 + $0x7c] sm:$0xf]
        %v1619 = vld [vmem:[#allocation8 + $0x80] sm:$0xf]
        %v1620 = vld [vmem:[#allocation8 + $0x84] sm:$0xf]
        %v1621 = vld [vmem:[#allocation8 + $0x88] sm:$0xf]
        %v1622 = vld [vmem:[#allocation8 + $0x8c] sm:$0xf]
        %v1623 = vld [vmem:[#allocation8 + $0x90] sm:$0xf]
        %v1624 = vld [vmem:[#allocation8 + $0x94] sm:$0xf]
        %v1625 = vld [vmem:[#allocation8 + $0x98] sm:$0xf]
        %v1626 = vld [vmem:[#allocation8 + $0x9c] sm:$0xf]
        %v1627 = vld [vmem:[#allocation8 + $0xa0] sm:$0xf]
        %v1628 = vld [vmem:[#allocation8 + $0xa4] sm:$0xf]
        %v1629 = vld [vmem:[#allocation8 + $0xa8] sm:$0xf]
        %v1630 = vld [vmem:[#allocation8 + $0xac] sm:$0xf]
        %v1631 = vld [vmem:[#allocation8 + $0xb0] sm:$0xf]
        %v1632 = vld [vmem:[#allocation8 + $0xb4] sm:$0xf]
        %v1633 = vld [vmem:[#allocation8 + $0xb8] sm:$0xf]
        %v1634 = vld [vmem:[#allocation8 + $0xbc] sm:$0xf]
        %v1635 = vld [vmem:[#allocation8 + $0xc0] sm:$0xf]
        %v1636 = vld [vmem:[#allocation8 + $0xc4] sm:$0xf]
        %v1637 = vld [vmem:[#allocation8 + $0xc8] sm:$0xf]
        %v1638 = vld [vmem:[#allocation8 + $0xcc] sm:$0xf]
        %v1639 = vld [vmem:[#allocation8 + $0xd0] sm:$0xf]
        %v1640 = vld [vmem:[#allocation8 + $0xd4] sm:$0xf]
        %v1641 = vld [vmem:[#allocation8 + $0xd8] sm:$0xf]
        %v1642 = vld [vmem:[#allocation8 + $0xdc] sm:$0xf]
        %v1643 = vld [vmem:[#allocation8 + $0xe0] sm:$0xf]
        %v1644 = vld [vmem:[#allocation8 + $0xe4] sm:$0xf]
        %v1645 = vld [vmem:[#allocation8 + $0xe8] sm:$0xf]
        %v1646 = vld [vmem:[#allocation8 + $0xec] sm:$0xf]
        %v1647 = vld [vmem:[#allocation8 + $0xf0] sm:$0xf]
        %v1648 = vld [vmem:[#allocation8 + $0xf4] sm:$0xf]
        %v1649 = vld [vmem:[#allocation8 + $0xf8] sm:$0xf]
        %v1650 = vld [vmem:[#allocation8 + $0xfc] sm:$0xf]
        %v1651 = vld [vmem:[#allocation8 + $0x100] sm:$0xf]
        %v1652 = vld [vmem:[#allocation8 + $0x104] sm:$0xf]
        %v1653 = vld [vmem:[#allocation8 + $0x108] sm:$0xf]
        %v1654 = vld [vmem:[#allocation8 + $0x10c] sm:$0xf]
        %v1655 = vld [vmem:[#allocation8 + $0x110] sm:$0xf]
        %v1656 = vld [vmem:[#allocation8 + $0x114] sm:$0xf]
        %v1657 = vld [vmem:[#allocation8 + $0x118] sm:$0xf]
        %v1658 = vld [vmem:[#allocation8 + $0x11c] sm:$0xf]
        %v1659 = vld [vmem:[#allocation8 + $0x120] sm:$0xf]
        %v1660 = vld [vmem:[#allocation8 + $0x124] sm:$0xf]
        %v1661 = vld [vmem:[#allocation8 + $0x128] sm:$0xf]
        %v1662 = vld [vmem:[#allocation8 + $0x12c] sm:$0xf]
        %v1663 = vld [vmem:[#allocation8 + $0x130] sm:$0xf]
        %v1664 = vld [vmem:[#allocation8 + $0x134] sm:$0xf]
        %v1665 = vld [vmem:[#allocation8 + $0x138] sm:$0xf]
        %v1666 = vld [vmem:[#allocation8 + $0x13c] sm:$0xf]
        %v1667 = vld [vmem:[#allocation8 + $0x140] sm:$0xf]
        %v1668 = vld [vmem:[#allocation8 + $0x144] sm:$0xf]
        %v1669 = vld [vmem:[#allocation8 + $0x148] sm:$0xf]
        %v1670 = vld [vmem:[#allocation8 + $0x14c] sm:$0xf]
        %v1671 = vld [vmem:[#allocation8 + $0x150] sm:$0xf]
        %v1672 = vld [vmem:[#allocation8 + $0x154] sm:$0xf]
        %v1673 = vld [vmem:[#allocation8 + $0x158] sm:$0xf]
        %v1674 = vld [vmem:[#allocation8 + $0x15c] sm:$0xf]
        %v1675 = vld [vmem:[#allocation8 + $0x160] sm:$0xf]
        %v1676 = vld [vmem:[#allocation8 + $0x164] sm:$0xf]
        %v1677 = vld [vmem:[#allocation8 + $0x168] sm:$0xf]
        %v1678 = vld [vmem:[#allocation8 + $0x16c] sm:$0xf]
        %v1679 = vld [vmem:[#allocation8 + $0x170] sm:$0xf]
        %v1680 = vld [vmem:[#allocation8 + $0x174] sm:$0xf]
        %v1681 = vld [vmem:[#allocation8 + $0x178] sm:$0xf]
        %v1682 = vld [vmem:[#allocation8 + $0x17c] sm:$0xf]
        %v1683 = vld [vmem:[#allocation8 + $0x180] sm:$0xf]
        %v1684 = vld [vmem:[#allocation8 + $0x184] sm:$0xf]
        %v1685 = vld [vmem:[#allocation8 + $0x188] sm:$0xf]
        %v1686 = vld [vmem:[#allocation8 + $0x18c] sm:$0xf]
        %v1687 = vld [vmem:[#allocation8 + $0x190] sm:$0xf]
        %v1688 = vld [vmem:[#allocation8 + $0x194] sm:$0xf]
        %v1689 = vld [vmem:[#allocation8 + $0x198] sm:$0xf]
        %v1690 = vld [vmem:[#allocation8 + $0x19c] sm:$0xf]
        %v1691 = vld [vmem:[#allocation8 + $0x1a0] sm:$0xf]
        %v1692 = vld [vmem:[#allocation8 + $0x1a4] sm:$0xf]
        %v1693 = vld [vmem:[#allocation8 + $0x1a8] sm:$0xf]
        %v1694 = vld [vmem:[#allocation8 + $0x1ac] sm:$0xf]
        %v1695 = vld [vmem:[#allocation8 + $0x1b0] sm:$0xf]
        %v1696 = vld [vmem:[#allocation8 + $0x1b4] sm:$0xf]
        %v1697 = vld [vmem:[#allocation8 + $0x1b8] sm:$0xf]
        %v1698 = vld [vmem:[#allocation8 + $0x1bc] sm:$0xf]
        %v1699 = vld [vmem:[#allocation8 + $0x1c0] sm:$0xf]
        %v1700 = vld [vmem:[#allocation8 + $0x1c4] sm:$0xf]
        %v1701 = vld [vmem:[#allocation8 + $0x1c8] sm:$0xf]
        %v1702 = vld [vmem:[#allocation8 + $0x1cc] sm:$0xf]
        %v1703 = vld [vmem:[#allocation8 + $0x1d0] sm:$0xf]
        %v1704 = vld [vmem:[#allocation8 + $0x1d4] sm:$0xf]
        %v1705 = vld [vmem:[#allocation8 + $0x1d8] sm:$0xf]
        %v1706 = vld [vmem:[#allocation8 + $0x1dc] sm:$0xf]
        %v1707 = vld [vmem:[#allocation8 + $0x1e0] sm:$0xf]
        %v1708 = vld [vmem:[#allocation8 + $0x1e4] sm:$0xf]
        %v1709 = vld [vmem:[#allocation8 + $0x1e8] sm:$0xf]
        %v1710 = vld [vmem:[#allocation8 + $0x1ec] sm:$0xf]
        %v1711 = vld [vmem:[#allocation8 + $0x1f0] sm:$0xf]
        %v1712 = vld [vmem:[#allocation8 + $0x1f4] sm:$0xf]
        %v1713 = vld [vmem:[#allocation8 + $0x1f8] sm:$0xf]
        %v1714 = vld [vmem:[#allocation8 + $0x1fc] sm:$0xf]
        %v1715 = vld [vmem:[#allocation8 + $0x200] sm:$0xf]
        %v1716 = vld [vmem:[#allocation8 + $0x204] sm:$0xf]
        %v1717 = vld [vmem:[#allocation8 + $0x208] sm:$0xf]
        %v1718 = vld [vmem:[#allocation8 + $0x20c] sm:$0xf]
        %v1719 = vld [vmem:[#allocation8 + $0x210] sm:$0xf]
        %v1720 = vld [vmem:[#allocation8 + $0x214] sm:$0xf]
        %v1721 = vld [vmem:[#allocation8 + $0x218] sm:$0xf]
        %v1722 = vld [vmem:[#allocation8 + $0x21c] sm:$0xf]
        %v1723 = vld [vmem:[#allocation8 + $0x220] sm:$0xf]
        %v1724 = vld [vmem:[#allocation8 + $0x224] sm:$0xf]
        %v1725 = vld [vmem:[#allocation8 + $0x228] sm:$0xf]
        %v1726 = vld [vmem:[#allocation8 + $0x22c] sm:$0xf]
        %v1727 = vld [vmem:[#allocation8 + $0x230] sm:$0xf]
        %v1728 = vld [vmem:[#allocation8 + $0x234] sm:$0xf]
        %v1729 = vld [vmem:[#allocation8 + $0x238] sm:$0xf]
        %v1730 = vld [vmem:[#allocation8 + $0x23c] sm:$0xf]
        %v1731 = vld [vmem:[#allocation8 + $0x240] sm:$0xf]
        %v1732 = vld [vmem:[#allocation8 + $0x244] sm:$0xf]
        %v1733 = vld [vmem:[#allocation8 + $0x248] sm:$0xf]
        %v1734 = vld [vmem:[#allocation8 + $0x24c] sm:$0xf]
        %v1735 = vld [vmem:[#allocation8 + $0x250] sm:$0xf]
        %v1736 = vld [vmem:[#allocation8 + $0x254] sm:$0xf]
        %v1737 = vld [vmem:[#allocation8 + $0x258] sm:$0xf]
        %v1738 = vld [vmem:[#allocation8 + $0x25c] sm:$0xf]
        %v1739 = vld [vmem:[#allocation8 + $0x260] sm:$0xf]
        %v1740 = vld [vmem:[#allocation8 + $0x264] sm:$0xf]
        %v1741 = vld [vmem:[#allocation8 + $0x268] sm:$0xf]
        %v1742 = vld [vmem:[#allocation8 + $0x26c] sm:$0xf]
        %v1743 = vld [vmem:[#allocation8 + $0x270] sm:$0xf]
        %v1744 = vld [vmem:[#allocation8 + $0x274] sm:$0xf]
        %v1745 = vld [vmem:[#allocation8 + $0x278] sm:$0xf]
        %v1746 = vld [vmem:[#allocation8 + $0x27c] sm:$0xf]
        %v1747 = vld [vmem:[#allocation8 + $0x280] sm:$0xf]
        %v1748 = vld [vmem:[#allocation8 + $0x284] sm:$0xf]
        %v1749 = vld [vmem:[#allocation8 + $0x288] sm:$0xf]
        %v1750 = vld [vmem:[#allocation8 + $0x28c] sm:$0xf]
        %v1751 = vld [vmem:[#allocation8 + $0x290] sm:$0xf]
        %v1752 = vld [vmem:[#allocation8 + $0x294] sm:$0xf]
        %v1753 = vld [vmem:[#allocation8 + $0x298] sm:$0xf]
        %v1754 = vld [vmem:[#allocation8 + $0x29c] sm:$0xf]
        %v1755 = vld [vmem:[#allocation8 + $0x2a0] sm:$0xf]
        %v1756 = vld [vmem:[#allocation8 + $0x2a4] sm:$0xf]
        %v1757 = vld [vmem:[#allocation8 + $0x2a8] sm:$0xf]
        %v1758 = vld [vmem:[#allocation8 + $0x2ac] sm:$0xf]
        %v1759 = vld [vmem:[#allocation8 + $0x2b0] sm:$0xf]
        %v1760 = vld [vmem:[#allocation8 + $0x2b4] sm:$0xf]
        %v1761 = vld [vmem:[#allocation8 + $0x2b8] sm:$0xf]
        %v1762 = vld [vmem:[#allocation8 + $0x2bc] sm:$0xf]
        %v1763 = vld [vmem:[#allocation8 + $0x2c0] sm:$0xf]
        %v1764 = vld [vmem:[#allocation8 + $0x2c4] sm:$0xf]
        %v1765 = vld [vmem:[#allocation8 + $0x2c8] sm:$0xf]
        %v1766 = vld [vmem:[#allocation8 + $0x2cc] sm:$0xf]
        %v1767 = vld [vmem:[#allocation8 + $0x2d0] sm:$0xf]
        %v1768 = vld [vmem:[#allocation8 + $0x2d4] sm:$0xf]
        %v1769 = vld [vmem:[#allocation8 + $0x2d8] sm:$0xf]
        %v1770 = vld [vmem:[#allocation8 + $0x2dc] sm:$0xf]
        %v1771 = vld [vmem:[#allocation8 + $0x2e0] sm:$0xf]
        %v1772 = vld [vmem:[#allocation8 + $0x2e4] sm:$0xf]
        %v1773 = vld [vmem:[#allocation8 + $0x2e8] sm:$0xf]
        %v1774 = vld [vmem:[#allocation8 + $0x2ec] sm:$0xf]
        %v1775 = vld [vmem:[#allocation8 + $0x2f0] sm:$0xf]
        %v1776 = vld [vmem:[#allocation8 + $0x2f4] sm:$0xf]
        %v1777 = vld [vmem:[#allocation8 + $0x2f8] sm:$0xf]
        %v1778 = vld [vmem:[#allocation8 + $0x2fc] sm:$0xf]
        %v1779 = vld [vmem:[#allocation8 + $0x300] sm:$0xf]
        %v1780 = vld [vmem:[#allocation8 + $0x304] sm:$0xf]
        %v1781 = vld [vmem:[#allocation8 + $0x308] sm:$0xf]
        %v1782 = vld [vmem:[#allocation8 + $0x30c] sm:$0xf]
        %v1783 = vld [vmem:[#allocation8 + $0x310] sm:$0xf]
        %v1784 = vld [vmem:[#allocation8 + $0x314] sm:$0xf]
        %v1785 = vld [vmem:[#allocation8 + $0x318] sm:$0xf]
        %v1786 = vld [vmem:[#allocation8 + $0x31c] sm:$0xf]
        %v1787 = vld [vmem:[#allocation8 + $0x320] sm:$0xf]
        %v1788 = vld [vmem:[#allocation8 + $0x324] sm:$0xf]
        %v1789 = vld [vmem:[#allocation8 + $0x328] sm:$0xf]
        %v1790 = vld [vmem:[#allocation8 + $0x32c] sm:$0xf]
        %v1791 = vld [vmem:[#allocation8 + $0x330] sm:$0xf]
        %v1792 = vld [vmem:[#allocation8 + $0x334] sm:$0xf]
        %v1793 = vld [vmem:[#allocation8 + $0x338] sm:$0xf]
        %v1794 = vld [vmem:[#allocation8 + $0x33c] sm:$0xf]
        %v1795 = vld [vmem:[#allocation8 + $0x340] sm:$0xf]
        %v1796 = vld [vmem:[#allocation8 + $0x344] sm:$0xf]
        %v1797 = vld [vmem:[#allocation8 + $0x348] sm:$0xf]
        %v1798 = vld [vmem:[#allocation8 + $0x34c] sm:$0xf]
        %v1799 = vld [vmem:[#allocation8 + $0x350] sm:$0xf]
        %v1800 = vld [vmem:[#allocation8 + $0x354] sm:$0xf]
        %v1801 = vld [vmem:[#allocation8 + $0x358] sm:$0xf]
        %v1802 = vld [vmem:[#allocation8 + $0x35c] sm:$0xf]
        %v1803 = vld [vmem:[#allocation8 + $0x360] sm:$0xf]
        %v1804 = vld [vmem:[#allocation8 + $0x364] sm:$0xf]
        %v1805 = vld [vmem:[#allocation8 + $0x368] sm:$0xf]
        %v1806 = vld [vmem:[#allocation8 + $0x36c] sm:$0xf]
        %v1807 = vld [vmem:[#allocation8 + $0x370] sm:$0xf]
        %v1808 = vld [vmem:[#allocation8 + $0x374] sm:$0xf]
        %v1809 = vld [vmem:[#allocation8 + $0x378] sm:$0xf]
        %v1810 = vld [vmem:[#allocation8 + $0x37c] sm:$0xf]
        %v1811 = vld [vmem:[#allocation8 + $0x380] sm:$0xf]
        %v1812 = vld [vmem:[#allocation8 + $0x384] sm:$0xf]
        %v1813 = vld [vmem:[#allocation8 + $0x388] sm:$0xf]
        %v1814 = vld [vmem:[#allocation8 + $0x38c] sm:$0xf]
        %v1815 = vld [vmem:[#allocation8 + $0x390] sm:$0xf]
        %v1816 = vld [vmem:[#allocation8 + $0x394] sm:$0xf]
        %v1817 = vld [vmem:[#allocation8 + $0x398] sm:$0xf]
        %v1818 = vld [vmem:[#allocation8 + $0x39c] sm:$0xf]
        %v1819 = vld [vmem:[#allocation8 + $0x3a0] sm:$0xf]
        %v1820 = vld [vmem:[#allocation8 + $0x3a4] sm:$0xf]
        %v1821 = vld [vmem:[#allocation8 + $0x3a8] sm:$0xf]
        %v1822 = vld [vmem:[#allocation8 + $0x3ac] sm:$0xf]
        %v1823 = vld [vmem:[#allocation8 + $0x3b0] sm:$0xf]
        %v1824 = vld [vmem:[#allocation8 + $0x3b4] sm:$0xf]
        %v1825 = vld [vmem:[#allocation8 + $0x3b8] sm:$0xf]
        %v1826 = vld [vmem:[#allocation8 + $0x3bc] sm:$0xf]
        %v1827 = vld [vmem:[#allocation8 + $0x3c0] sm:$0xf]
        %v1828 = vld [vmem:[#allocation8 + $0x3c4] sm:$0xf]
        %v1829 = vld [vmem:[#allocation8 + $0x3c8] sm:$0xf]
        %v1830 = vld [vmem:[#allocation8 + $0x3cc] sm:$0xf]
        %v1831 = vld [vmem:[#allocation8 + $0x3d0] sm:$0xf]
        %v1832 = vld [vmem:[#allocation8 + $0x3d4] sm:$0xf]
        %v1833 = vld [vmem:[#allocation8 + $0x3d8] sm:$0xf]
        %v1834 = vld [vmem:[#allocation8 + $0x3dc] sm:$0xf]
        %v1835 = vld [vmem:[#allocation8 + $0x3e0] sm:$0xf]
        %v1836 = vld [vmem:[#allocation8 + $0x3e4] sm:$0xf]
        %v1837 = vld [vmem:[#allocation8 + $0x3e8] sm:$0xf]
        %v1838 = vld [vmem:[#allocation8 + $0x3ec] sm:$0xf]
        %v1839 = vld [vmem:[#allocation8 + $0x3f0] sm:$0xf]
        %v1840 = vld [vmem:[#allocation8 + $0x3f4] sm:$0xf]
        %v1841 = vld [vmem:[#allocation8 + $0x3f8] sm:$0xf]
        %v1842 = vld [vmem:[#allocation8 + $0x3fc] sm:$0xf]
        %v1843 = vld [vmem:[#allocation10] sm:$0x1]
        %v1845 = vlaneseq
        %v1846 = vshrl.u32 %v1845, 7
        %v1847 = vsub.s32 0, %v1846
        %v1848 = vrot.slane %v1843, %v1847
        %v2106 = vunpack.c.l.b16 %v1587
        %v2107 = vunpack.c.l.b16 %v1588
        %v2108 = vunpack.c.l.b16 %v1589
        %v2109 = vunpack.c.l.b16 %v1590
        %v2110 = vunpack.c.l.b16 %v1591
        %v2111 = vunpack.c.l.b16 %v1592
        %v2112 = vunpack.c.l.b16 %v1593
        %v2113 = vunpack.c.l.b16 %v1594
        %v2114 = vunpack.c.l.b16 %v1595
        %v2115 = vunpack.c.l.b16 %v1596
        %v2116 = vunpack.c.l.b16 %v1597
        %v2117 = vunpack.c.l.b16 %v1598
        %v2118 = vunpack.c.l.b16 %v1599
        %v2119 = vunpack.c.l.b16 %v1600
        %v2120 = vunpack.c.l.b16 %v1601
        %v2121 = vunpack.c.l.b16 %v1602
        %v2122 = vunpack.c.l.b16 %v1603
        %v2123 = vunpack.c.l.b16 %v1604
        %v2124 = vunpack.c.l.b16 %v1605
        %v2125 = vunpack.c.l.b16 %v1606
        %v2126 = vunpack.c.l.b16 %v1607
        %v2127 = vunpack.c.l.b16 %v1608
        %v2128 = vunpack.c.l.b16 %v1609
        %v2129 = vunpack.c.l.b16 %v1610
        %v2130 = vunpack.c.l.b16 %v1611
        %v2131 = vunpack.c.l.b16 %v1612
        %v2132 = vunpack.c.l.b16 %v1613
        %v2133 = vunpack.c.l.b16 %v1614
        %v2134 = vunpack.c.l.b16 %v1615
        %v2135 = vunpack.c.l.b16 %v1616
        %v2136 = vunpack.c.l.b16 %v1617
        %v2137 = vunpack.c.l.b16 %v1618
        %v2138 = vunpack.c.l.b16 %v1619
        %v2139 = vunpack.c.l.b16 %v1620
        %v2140 = vunpack.c.l.b16 %v1621
        %v2141 = vunpack.c.l.b16 %v1622
        %v2142 = vunpack.c.l.b16 %v1623
        %v2143 = vunpack.c.l.b16 %v1624
        %v2144 = vunpack.c.l.b16 %v1625
        %v2145 = vunpack.c.l.b16 %v1626
        %v2146 = vunpack.c.l.b16 %v1627
        %v2147 = vunpack.c.l.b16 %v1628
        %v2148 = vunpack.c.l.b16 %v1629
        %v2149 = vunpack.c.l.b16 %v1630
        %v2150 = vunpack.c.l.b16 %v1631
        %v2151 = vunpack.c.l.b16 %v1632
        %v2152 = vunpack.c.l.b16 %v1633
        %v2153 = vunpack.c.l.b16 %v1634
        %v2154 = vunpack.c.l.b16 %v1635
        %v2155 = vunpack.c.l.b16 %v1636
        %v2156 = vunpack.c.l.b16 %v1637
        %v2157 = vunpack.c.l.b16 %v1638
        %v2158 = vunpack.c.l.b16 %v1639
        %v2159 = vunpack.c.l.b16 %v1640
        %v2160 = vunpack.c.l.b16 %v1641
        %v2161 = vunpack.c.l.b16 %v1642
        %v2162 = vunpack.c.l.b16 %v1643
        %v2163 = vunpack.c.l.b16 %v1644
        %v2164 = vunpack.c.l.b16 %v1645
        %v2165 = vunpack.c.l.b16 %v1646
        %v2166 = vunpack.c.l.b16 %v1647
        %v2167 = vunpack.c.l.b16 %v1648
        %v2168 = vunpack.c.l.b16 %v1649
        %v2169 = vunpack.c.l.b16 %v1650
        %v2170 = vunpack.c.l.b16 %v1651
        %v2171 = vunpack.c.l.b16 %v1652
        %v2172 = vunpack.c.l.b16 %v1653
        %v2173 = vunpack.c.l.b16 %v1654
        %v2174 = vunpack.c.l.b16 %v1655
        %v2175 = vunpack.c.l.b16 %v1656
        %v2176 = vunpack.c.l.b16 %v1657
        %v2177 = vunpack.c.l.b16 %v1658
        %v2178 = vunpack.c.l.b16 %v1659
        %v2179 = vunpack.c.l.b16 %v1660
        %v2180 = vunpack.c.l.b16 %v1661
        %v2181 = vunpack.c.l.b16 %v1662
        %v2182 = vunpack.c.l.b16 %v1663
        %v2183 = vunpack.c.l.b16 %v1664
        %v2184 = vunpack.c.l.b16 %v1665
        %v2185 = vunpack.c.l.b16 %v1666
        %v2186 = vunpack.c.l.b16 %v1667
        %v2187 = vunpack.c.l.b16 %v1668
        %v2188 = vunpack.c.l.b16 %v1669
        %v2189 = vunpack.c.l.b16 %v1670
        %v2190 = vunpack.c.l.b16 %v1671
        %v2191 = vunpack.c.l.b16 %v1672
        %v2192 = vunpack.c.l.b16 %v1673
        %v2193 = vunpack.c.l.b16 %v1674
        %v2194 = vunpack.c.l.b16 %v1675
        %v2195 = vunpack.c.l.b16 %v1676
        %v2196 = vunpack.c.l.b16 %v1677
        %v2197 = vunpack.c.l.b16 %v1678
        %v2198 = vunpack.c.l.b16 %v1679
        %v2199 = vunpack.c.l.b16 %v1680
        %v2200 = vunpack.c.l.b16 %v1681
        %v2201 = vunpack.c.l.b16 %v1682
        %v2202 = vunpack.c.l.b16 %v1683
        %v2203 = vunpack.c.l.b16 %v1684
        %v2204 = vunpack.c.l.b16 %v1685
        %v2205 = vunpack.c.l.b16 %v1686
        %v2206 = vunpack.c.l.b16 %v1687
        %v2207 = vunpack.c.l.b16 %v1688
        %v2208 = vunpack.c.l.b16 %v1689
        %v2209 = vunpack.c.l.b16 %v1690
        %v2210 = vunpack.c.l.b16 %v1691
        %v2211 = vunpack.c.l.b16 %v1692
        %v2212 = vunpack.c.l.b16 %v1693
        %v2213 = vunpack.c.l.b16 %v1694
        %v2214 = vunpack.c.l.b16 %v1695
        %v2215 = vunpack.c.l.b16 %v1696
        %v2216 = vunpack.c.l.b16 %v1697
        %v2217 = vunpack.c.l.b16 %v1698
        %v2218 = vunpack.c.l.b16 %v1699
        %v2219 = vunpack.c.l.b16 %v1700
        %v2220 = vunpack.c.l.b16 %v1701
        %v2221 = vunpack.c.l.b16 %v1702
        %v2222 = vunpack.c.l.b16 %v1703
        %v2223 = vunpack.c.l.b16 %v1704
        %v2224 = vunpack.c.l.b16 %v1705
        %v2225 = vunpack.c.l.b16 %v1706
        %v2226 = vunpack.c.l.b16 %v1707
        %v2227 = vunpack.c.l.b16 %v1708
        %v2228 = vunpack.c.l.b16 %v1709
        %v2229 = vunpack.c.l.b16 %v1710
        %v2230 = vunpack.c.l.b16 %v1711
        %v2231 = vunpack.c.l.b16 %v1712
        %v2232 = vunpack.c.l.b16 %v1713
        %v2233 = vunpack.c.l.b16 %v1714
        %v2234 = vunpack.c.l.b16 %v1715
        %v2235 = vunpack.c.l.b16 %v1716
        %v2236 = vunpack.c.l.b16 %v1717
        %v2237 = vunpack.c.l.b16 %v1718
        %v2238 = vunpack.c.l.b16 %v1719
        %v2239 = vunpack.c.l.b16 %v1720
        %v2240 = vunpack.c.l.b16 %v1721
        %v2241 = vunpack.c.l.b16 %v1722
        %v2242 = vunpack.c.l.b16 %v1723
        %v2243 = vunpack.c.l.b16 %v1724
        %v2244 = vunpack.c.l.b16 %v1725
        %v2245 = vunpack.c.l.b16 %v1726
        %v2246 = vunpack.c.l.b16 %v1727
        %v2247 = vunpack.c.l.b16 %v1728
        %v2248 = vunpack.c.l.b16 %v1729
        %v2249 = vunpack.c.l.b16 %v1730
        %v2250 = vunpack.c.l.b16 %v1731
        %v2251 = vunpack.c.l.b16 %v1732
        %v2252 = vunpack.c.l.b16 %v1733
        %v2253 = vunpack.c.l.b16 %v1734
        %v2254 = vunpack.c.l.b16 %v1735
        %v2255 = vunpack.c.l.b16 %v1736
        %v2256 = vunpack.c.l.b16 %v1737
        %v2257 = vunpack.c.l.b16 %v1738
        %v2258 = vunpack.c.l.b16 %v1739
        %v2259 = vunpack.c.l.b16 %v1740
        %v2260 = vunpack.c.l.b16 %v1741
        %v2261 = vunpack.c.l.b16 %v1742
        %v2262 = vunpack.c.l.b16 %v1743
        %v2263 = vunpack.c.l.b16 %v1744
        %v2264 = vunpack.c.l.b16 %v1745
        %v2265 = vunpack.c.l.b16 %v1746
        %v2266 = vunpack.c.l.b16 %v1747
        %v2267 = vunpack.c.l.b16 %v1748
        %v2268 = vunpack.c.l.b16 %v1749
        %v2269 = vunpack.c.l.b16 %v1750
        %v2270 = vunpack.c.l.b16 %v1751
        %v2271 = vunpack.c.l.b16 %v1752
        %v2272 = vunpack.c.l.b16 %v1753
        %v2273 = vunpack.c.l.b16 %v1754
        %v2274 = vunpack.c.l.b16 %v1755
        %v2275 = vunpack.c.l.b16 %v1756
        %v2276 = vunpack.c.l.b16 %v1757
        %v2277 = vunpack.c.l.b16 %v1758
        %v2278 = vunpack.c.l.b16 %v1759
        %v2279 = vunpack.c.l.b16 %v1760
        %v2280 = vunpack.c.l.b16 %v1761
        %v2281 = vunpack.c.l.b16 %v1762
        %v2282 = vunpack.c.l.b16 %v1763
        %v2283 = vunpack.c.l.b16 %v1764
        %v2284 = vunpack.c.l.b16 %v1765
        %v2285 = vunpack.c.l.b16 %v1766
        %v2286 = vunpack.c.l.b16 %v1767
        %v2287 = vunpack.c.l.b16 %v1768
        %v2288 = vunpack.c.l.b16 %v1769
        %v2289 = vunpack.c.l.b16 %v1770
        %v2290 = vunpack.c.l.b16 %v1771
        %v2291 = vunpack.c.l.b16 %v1772
        %v2292 = vunpack.c.l.b16 %v1773
        %v2293 = vunpack.c.l.b16 %v1774
        %v2294 = vunpack.c.l.b16 %v1775
        %v2295 = vunpack.c.l.b16 %v1776
        %v2296 = vunpack.c.l.b16 %v1777
        %v2297 = vunpack.c.l.b16 %v1778
        %v2298 = vunpack.c.l.b16 %v1779
        %v2299 = vunpack.c.l.b16 %v1780
        %v2300 = vunpack.c.l.b16 %v1781
        %v2301 = vunpack.c.l.b16 %v1782
        %v2302 = vunpack.c.l.b16 %v1783
        %v2303 = vunpack.c.l.b16 %v1784
        %v2304 = vunpack.c.l.b16 %v1785
        %v2305 = vunpack.c.l.b16 %v1786
        %v2306 = vunpack.c.l.b16 %v1787
        %v2307 = vunpack.c.l.b16 %v1788
        %v2308 = vunpack.c.l.b16 %v1789
        %v2309 = vunpack.c.l.b16 %v1790
        %v2310 = vunpack.c.l.b16 %v1791
        %v2311 = vunpack.c.l.b16 %v1792
        %v2312 = vunpack.c.l.b16 %v1793
        %v2313 = vunpack.c.l.b16 %v1794
        %v2314 = vunpack.c.l.b16 %v1795
        %v2315 = vunpack.c.l.b16 %v1796
        %v2316 = vunpack.c.l.b16 %v1797
        %v2317 = vunpack.c.l.b16 %v1798
        %v2318 = vunpack.c.l.b16 %v1799
        %v2319 = vunpack.c.l.b16 %v1800
        %v2320 = vunpack.c.l.b16 %v1801
        %v2321 = vunpack.c.l.b16 %v1802
        %v2322 = vunpack.c.l.b16 %v1803
        %v2323 = vunpack.c.l.b16 %v1804
        %v2324 = vunpack.c.l.b16 %v1805
        %v2325 = vunpack.c.l.b16 %v1806
        %v2326 = vunpack.c.l.b16 %v1807
        %v2327 = vunpack.c.l.b16 %v1808
        %v2328 = vunpack.c.l.b16 %v1809
        %v2329 = vunpack.c.l.b16 %v1810
        %v2330 = vunpack.c.l.b16 %v1811
        %v2331 = vunpack.c.l.b16 %v1812
        %v2332 = vunpack.c.l.b16 %v1813
        %v2333 = vunpack.c.l.b16 %v1814
        %v2334 = vunpack.c.l.b16 %v1815
        %v2335 = vunpack.c.l.b16 %v1816
        %v2336 = vunpack.c.l.b16 %v1817
        %v2337 = vunpack.c.l.b16 %v1818
        %v2338 = vunpack.c.l.b16 %v1819
        %v2339 = vunpack.c.l.b16 %v1820
        %v2340 = vunpack.c.l.b16 %v1821
        %v2341 = vunpack.c.l.b16 %v1822
        %v2342 = vunpack.c.l.b16 %v1823
        %v2343 = vunpack.c.l.b16 %v1824
        %v2344 = vunpack.c.l.b16 %v1825
        %v2345 = vunpack.c.l.b16 %v1826
        %v2346 = vunpack.c.l.b16 %v1827
        %v2347 = vunpack.c.l.b16 %v1828
        %v2348 = vunpack.c.l.b16 %v1829
        %v2349 = vunpack.c.l.b16 %v1830
        %v2350 = vunpack.c.l.b16 %v1831
        %v2351 = vunpack.c.l.b16 %v1832
        %v2352 = vunpack.c.l.b16 %v1833
        %v2353 = vunpack.c.l.b16 %v1834
        %v2354 = vunpack.c.l.b16 %v1835
        %v2355 = vunpack.c.l.b16 %v1836
        %v2356 = vunpack.c.l.b16 %v1837
        %v2357 = vunpack.c.l.b16 %v1838
        %v2358 = vunpack.c.l.b16 %v1839
        %v2359 = vunpack.c.l.b16 %v1840
        %v2360 = vunpack.c.l.b16 %v1841
        %v2361 = vunpack.c.l.b16 %v1842
        %v2362 = vpack.c.b16 %v2107, %v2106
        %v2363 = vpack.c.b16 %v2109, %v2108
        %v2364 = vpack.c.b16 %v2111, %v2110
        %v2365 = vpack.c.b16 %v2113, %v2112
        %v2366 = vpack.c.b16 %v2115, %v2114
        %v2367 = vpack.c.b16 %v2117, %v2116
        %v2368 = vpack.c.b16 %v2119, %v2118
        %v2369 = vpack.c.b16 %v2121, %v2120
        %v2370 = vpack.c.b16 %v2123, %v2122
        %v2371 = vpack.c.b16 %v2125, %v2124
        %v2372 = vpack.c.b16 %v2127, %v2126
        %v2373 = vpack.c.b16 %v2129, %v2128
        %v2374 = vpack.c.b16 %v2131, %v2130
        %v2375 = vpack.c.b16 %v2133, %v2132
        %v2376 = vpack.c.b16 %v2135, %v2134
        %v2377 = vpack.c.b16 %v2137, %v2136
        %v2378 = vpack.c.b16 %v2139, %v2138
        %v2379 = vpack.c.b16 %v2141, %v2140
        %v2380 = vpack.c.b16 %v2143, %v2142
        %v2381 = vpack.c.b16 %v2145, %v2144
        %v2382 = vpack.c.b16 %v2147, %v2146
        %v2383 = vpack.c.b16 %v2149, %v2148
        %v2384 = vpack.c.b16 %v2151, %v2150
        %v2385 = vpack.c.b16 %v2153, %v2152
        %v2386 = vpack.c.b16 %v2155, %v2154
        %v2387 = vpack.c.b16 %v2157, %v2156
        %v2388 = vpack.c.b16 %v2159, %v2158
        %v2389 = vpack.c.b16 %v2161, %v2160
        %v2390 = vpack.c.b16 %v2163, %v2162
        %v2391 = vpack.c.b16 %v2165, %v2164
        %v2392 = vpack.c.b16 %v2167, %v2166
        %v2393 = vpack.c.b16 %v2169, %v2168
        %v2394 = vpack.c.b16 %v2171, %v2170
        %v2395 = vpack.c.b16 %v2173, %v2172
        %v2396 = vpack.c.b16 %v2175, %v2174
        %v2397 = vpack.c.b16 %v2177, %v2176
        %v2398 = vpack.c.b16 %v2179, %v2178
        %v2399 = vpack.c.b16 %v2181, %v2180
        %v2400 = vpack.c.b16 %v2183, %v2182
        %v2401 = vpack.c.b16 %v2185, %v2184
        %v2402 = vpack.c.b16 %v2187, %v2186
        %v2403 = vpack.c.b16 %v2189, %v2188
        %v2404 = vpack.c.b16 %v2191, %v2190
        %v2405 = vpack.c.b16 %v2193, %v2192
        %v2406 = vpack.c.b16 %v2195, %v2194
        %v2407 = vpack.c.b16 %v2197, %v2196
        %v2408 = vpack.c.b16 %v2199, %v2198
        %v2409 = vpack.c.b16 %v2201, %v2200
        %v2410 = vpack.c.b16 %v2203, %v2202
        %v2411 = vpack.c.b16 %v2205, %v2204
        %v2412 = vpack.c.b16 %v2207, %v2206
        %v2413 = vpack.c.b16 %v2209, %v2208
        %v2414 = vpack.c.b16 %v2211, %v2210
        %v2415 = vpack.c.b16 %v2213, %v2212
        %v2416 = vpack.c.b16 %v2215, %v2214
        %v2417 = vpack.c.b16 %v2217, %v2216
        %v2418 = vpack.c.b16 %v2219, %v2218
        %v2419 = vpack.c.b16 %v2221, %v2220
        %v2420 = vpack.c.b16 %v2223, %v2222
        %v2421 = vpack.c.b16 %v2225, %v2224
        %v2422 = vpack.c.b16 %v2227, %v2226
        %v2423 = vpack.c.b16 %v2229, %v2228
        %v2424 = vpack.c.b16 %v2231, %v2230
        %v2425 = vpack.c.b16 %v2233, %v2232
        %v2426 = vpack.c.b16 %v2235, %v2234
        %v2427 = vpack.c.b16 %v2237, %v2236
        %v2428 = vpack.c.b16 %v2239, %v2238
        %v2429 = vpack.c.b16 %v2241, %v2240
        %v2430 = vpack.c.b16 %v2243, %v2242
        %v2431 = vpack.c.b16 %v2245, %v2244
        %v2432 = vpack.c.b16 %v2247, %v2246
        %v2433 = vpack.c.b16 %v2249, %v2248
        %v2434 = vpack.c.b16 %v2251, %v2250
        %v2435 = vpack.c.b16 %v2253, %v2252
        %v2436 = vpack.c.b16 %v2255, %v2254
        %v2437 = vpack.c.b16 %v2257, %v2256
        %v2438 = vpack.c.b16 %v2259, %v2258
        %v2439 = vpack.c.b16 %v2261, %v2260
        %v2440 = vpack.c.b16 %v2263, %v2262
        %v2441 = vpack.c.b16 %v2265, %v2264
        %v2442 = vpack.c.b16 %v2267, %v2266
        %v2443 = vpack.c.b16 %v2269, %v2268
        %v2444 = vpack.c.b16 %v2271, %v2270
        %v2445 = vpack.c.b16 %v2273, %v2272
        %v2446 = vpack.c.b16 %v2275, %v2274
        %v2447 = vpack.c.b16 %v2277, %v2276
        %v2448 = vpack.c.b16 %v2279, %v2278
        %v2449 = vpack.c.b16 %v2281, %v2280
        %v2450 = vpack.c.b16 %v2283, %v2282
        %v2451 = vpack.c.b16 %v2285, %v2284
        %v2452 = vpack.c.b16 %v2287, %v2286
        %v2453 = vpack.c.b16 %v2289, %v2288
        %v2454 = vpack.c.b16 %v2291, %v2290
        %v2455 = vpack.c.b16 %v2293, %v2292
        %v2456 = vpack.c.b16 %v2295, %v2294
        %v2457 = vpack.c.b16 %v2297, %v2296
        %v2458 = vpack.c.b16 %v2299, %v2298
        %v2459 = vpack.c.b16 %v2301, %v2300
        %v2460 = vpack.c.b16 %v2303, %v2302
        %v2461 = vpack.c.b16 %v2305, %v2304
        %v2462 = vpack.c.b16 %v2307, %v2306
        %v2463 = vpack.c.b16 %v2309, %v2308
        %v2464 = vpack.c.b16 %v2311, %v2310
        %v2465 = vpack.c.b16 %v2313, %v2312
        %v2466 = vpack.c.b16 %v2315, %v2314
        %v2467 = vpack.c.b16 %v2317, %v2316
        %v2468 = vpack.c.b16 %v2319, %v2318
        %v2469 = vpack.c.b16 %v2321, %v2320
        %v2470 = vpack.c.b16 %v2323, %v2322
        %v2471 = vpack.c.b16 %v2325, %v2324
        %v2472 = vpack.c.b16 %v2327, %v2326
        %v2473 = vpack.c.b16 %v2329, %v2328
        %v2474 = vpack.c.b16 %v2331, %v2330
        %v2475 = vpack.c.b16 %v2333, %v2332
        %v2476 = vpack.c.b16 %v2335, %v2334
        %v2477 = vpack.c.b16 %v2337, %v2336
        %v2478 = vpack.c.b16 %v2339, %v2338
        %v2479 = vpack.c.b16 %v2341, %v2340
        %v2480 = vpack.c.b16 %v2343, %v2342
        %v2481 = vpack.c.b16 %v2345, %v2344
        %v2482 = vpack.c.b16 %v2347, %v2346
        %v2483 = vpack.c.b16 %v2349, %v2348
        %v2484 = vpack.c.b16 %v2351, %v2350
        %v2485 = vpack.c.b16 %v2353, %v2352
        %v2486 = vpack.c.b16 %v2355, %v2354
        %v2487 = vpack.c.b16 %v2357, %v2356
        %v2488 = vpack.c.b16 %v2359, %v2358
        %v2489 = vpack.c.b16 %v2361, %v2360
        %2618 = vmatprep.subr.bf16.mxu0 0
        %2619 = vmatpush1.bf16.msra.mxu0 %v2362
        %2620 = vmatprep.subr.bf16.mxu0 0
        %2621 = vmatpush1.bf16.msra.mxu0 %v2363
        %2622 = vmatprep.subr.bf16.mxu0 0
        %2623 = vmatpush1.bf16.msra.mxu0 %v2364
        %2624 = vmatprep.subr.bf16.mxu0 0
        %2625 = vmatpush1.bf16.msra.mxu0 %v2365
        %2626 = vmatprep.subr.bf16.mxu0 0
        %2627 = vmatpush1.bf16.msra.mxu0 %v2366
        %2628 = vmatprep.subr.bf16.mxu0 0
        %2629 = vmatpush1.bf16.msra.mxu0 %v2367
        %2630 = vmatprep.subr.bf16.mxu0 0
        %2631 = vmatpush1.bf16.msra.mxu0 %v2368
        %2632 = vmatprep.subr.bf16.mxu0 0
        %2633 = vmatpush1.bf16.msra.mxu0 %v2369
        %2634 = vmatprep.subr.bf16.mxu0 0
        %2635 = vmatpush1.bf16.msra.mxu0 %v2370
        %2636 = vmatprep.subr.bf16.mxu0 0
        %2637 = vmatpush1.bf16.msra.mxu0 %v2371
        %2638 = vmatprep.subr.bf16.mxu0 0
        %2639 = vmatpush1.bf16.msra.mxu0 %v2372
        %2640 = vmatprep.subr.bf16.mxu0 0
        %2641 = vmatpush1.bf16.msra.mxu0 %v2373
        %2642 = vmatprep.subr.bf16.mxu0 0
        %2643 = vmatpush1.bf16.msra.mxu0 %v2374
        %2644 = vmatprep.subr.bf16.mxu0 0
        %2645 = vmatpush1.bf16.msra.mxu0 %v2375
        %2646 = vmatprep.subr.bf16.mxu0 0
        %2647 = vmatpush1.bf16.msra.mxu0 %v2376
        %2648 = vmatprep.subr.bf16.mxu0 0
        %2649 = vmatpush1.bf16.msra.mxu0 %v2377
        %2650 = vmatprep.mubr.bf16.mxu0 %v1572
        %2651 = vmatmul.mubr.bf16.gmra.mrb[0].mxu0 %v1571
        %v2652 = vpop.f32.mrb[0].mxu0
        %v2653 = vadd.f32 %v1848, %v2652
        %v2654 = vpop.f32.mrb[0].mxu0
        %v2655 = vpop.f32.mrb[0].mxu0
        %v2656 = vpop.f32.mrb[0].mxu0
        %2657 = vdwg.mxu0
        %2658 = vmatprep.subr.bf16.mxu0 0
        %2659 = vmatpush1.bf16.msra.mxu0 %v2378
        %2660 = vmatprep.subr.bf16.mxu0 0
        %2661 = vmatpush1.bf16.msra.mxu0 %v2379
        %2662 = vmatprep.subr.bf16.mxu0 0
        %2663 = vmatpush1.bf16.msra.mxu0 %v2380
        %2664 = vmatprep.subr.bf16.mxu0 0
        %2665 = vmatpush1.bf16.msra.mxu0 %v2381
        %2666 = vmatprep.subr.bf16.mxu0 0
        %2667 = vmatpush1.bf16.msra.mxu0 %v2382
        %2668 = vmatprep.subr.bf16.mxu0 0
        %2669 = vmatpush1.bf16.msra.mxu0 %v2383
        %2670 = vmatprep.subr.bf16.mxu0 0
        %2671 = vmatpush1.bf16.msra.mxu0 %v2384
        %2672 = vmatprep.subr.bf16.mxu0 0
        %2673 = vmatpush1.bf16.msra.mxu0 %v2385
        %2674 = vmatprep.subr.bf16.mxu0 0
        %2675 = vmatpush1.bf16.msra.mxu0 %v2386
        %2676 = vmatprep.subr.bf16.mxu0 0
        %2677 = vmatpush1.bf16.msra.mxu0 %v2387
        %2678 = vmatprep.subr.bf16.mxu0 0
        %2679 = vmatpush1.bf16.msra.mxu0 %v2388
        %2680 = vmatprep.subr.bf16.mxu0 0
        %2681 = vmatpush1.bf16.msra.mxu0 %v2389
        %2682 = vmatprep.subr.bf16.mxu0 0
        %2683 = vmatpush1.bf16.msra.mxu0 %v2390
        %2684 = vmatprep.subr.bf16.mxu0 0
        %2685 = vmatpush1.bf16.msra.mxu0 %v2391
        %2686 = vmatprep.subr.bf16.mxu0 0
        %2687 = vmatpush1.bf16.msra.mxu0 %v2392
        %2688 = vmatprep.subr.bf16.mxu0 0
        %2689 = vmatpush1.bf16.msra.mxu0 %v2393
        %2690 = vmatprep.mubr.bf16.mxu0 %v1574
        %2691 = vmatmul.mubr.bf16.gmra.mrb[0].mxu0 %v1573
        %v2692 = vpop.f32.mrb[0].mxu0
        %v2693 = vadd.f32 %v2653, %v2692
        %v2694 = vpop.f32.mrb[0].mxu0
        %v2695 = vpop.f32.mrb[0].mxu0
        %v2696 = vpop.f32.mrb[0].mxu0
        %2697 = vdwg.mxu0
        %2698 = vmatprep.subr.bf16.mxu0 0
        %2699 = vmatpush1.bf16.msra.mxu0 %v2394
        %2700 = vmatprep.subr.bf16.mxu0 0
        %2701 = vmatpush1.bf16.msra.mxu0 %v2395
        %2702 = vmatprep.subr.bf16.mxu0 0
        %2703 = vmatpush1.bf16.msra.mxu0 %v2396
        %2704 = vmatprep.subr.bf16.mxu0 0
        %2705 = vmatpush1.bf16.msra.mxu0 %v2397
        %2706 = vmatprep.subr.bf16.mxu0 0
        %2707 = vmatpush1.bf16.msra.mxu0 %v2398
        %2708 = vmatprep.subr.bf16.mxu0 0
        %2709 = vmatpush1.bf16.msra.mxu0 %v2399
        %2710 = vmatprep.subr.bf16.mxu0 0
        %2711 = vmatpush1.bf16.msra.mxu0 %v2400
        %2712 = vmatprep.subr.bf16.mxu0 0
        %2713 = vmatpush1.bf16.msra.mxu0 %v2401
        %2714 = vmatprep.subr.bf16.mxu0 0
        %2715 = vmatpush1.bf16.msra.mxu0 %v2402
        %2716 = vmatprep.subr.bf16.mxu0 0
        %2717 = vmatpush1.bf16.msra.mxu0 %v2403
        %2718 = vmatprep.subr.bf16.mxu0 0
        %2719 = vmatpush1.bf16.msra.mxu0 %v2404
        %2720 = vmatprep.subr.bf16.mxu0 0
        %2721 = vmatpush1.bf16.msra.mxu0 %v2405
        %2722 = vmatprep.subr.bf16.mxu0 0
        %2723 = vmatpush1.bf16.msra.mxu0 %v2406
        %2724 = vmatprep.subr.bf16.mxu0 0
        %2725 = vmatpush1.bf16.msra.mxu0 %v2407
        %2726 = vmatprep.subr.bf16.mxu0 0
        %2727 = vmatpush1.bf16.msra.mxu0 %v2408
        %2728 = vmatprep.subr.bf16.mxu0 0
        %2729 = vmatpush1.bf16.msra.mxu0 %v2409
        %2730 = vmatprep.mubr.bf16.mxu0 %v1576
        %2731 = vmatmul.mubr.bf16.gmra.mrb[0].mxu0 %v1575
        %v2732 = vpop.f32.mrb[0].mxu0
        %v2733 = vadd.f32 %v2693, %v2732
        %v2734 = vpop.f32.mrb[0].mxu0
        %v2735 = vpop.f32.mrb[0].mxu0
        %v2736 = vpop.f32.mrb[0].mxu0
        %2737 = vdwg.mxu0
        %2738 = vmatprep.subr.bf16.mxu0 0
        %2739 = vmatpush1.bf16.msra.mxu0 %v2410
        %2740 = vmatprep.subr.bf16.mxu0 0
        %2741 = vmatpush1.bf16.msra.mxu0 %v2411
        %2742 = vmatprep.subr.bf16.mxu0 0
        %2743 = vmatpush1.bf16.msra.mxu0 %v2412
        %2744 = vmatprep.subr.bf16.mxu0 0
        %2745 = vmatpush1.bf16.msra.mxu0 %v2413
        %2746 = vmatprep.subr.bf16.mxu0 0
        %2747 = vmatpush1.bf16.msra.mxu0 %v2414
        %2748 = vmatprep.subr.bf16.mxu0 0
        %2749 = vmatpush1.bf16.msra.mxu0 %v2415
        %2750 = vmatprep.subr.bf16.mxu0 0
        %2751 = vmatpush1.bf16.msra.mxu0 %v2416
        %2752 = vmatprep.subr.bf16.mxu0 0
        %2753 = vmatpush1.bf16.msra.mxu0 %v2417
        %2754 = vmatprep.subr.bf16.mxu0 0
        %2755 = vmatpush1.bf16.msra.mxu0 %v2418
        %2756 = vmatprep.subr.bf16.mxu0 0
        %2757 = vmatpush1.bf16.msra.mxu0 %v2419
        %2758 = vmatprep.subr.bf16.mxu0 0
        %2759 = vmatpush1.bf16.msra.mxu0 %v2420
        %2760 = vmatprep.subr.bf16.mxu0 0
        %2761 = vmatpush1.bf16.msra.mxu0 %v2421
        %2762 = vmatprep.subr.bf16.mxu0 0
        %2763 = vmatpush1.bf16.msra.mxu0 %v2422
        %2764 = vmatprep.subr.bf16.mxu0 0
        %2765 = vmatpush1.bf16.msra.mxu0 %v2423
        %2766 = vmatprep.subr.bf16.mxu0 0
        %2767 = vmatpush1.bf16.msra.mxu0 %v2424
        %2768 = vmatprep.subr.bf16.mxu0 0
        %2769 = vmatpush1.bf16.msra.mxu0 %v2425
        %2770 = vmatprep.mubr.bf16.mxu0 %v1578
        %2771 = vmatmul.mubr.bf16.gmra.mrb[0].mxu0 %v1577
        %v2772 = vpop.f32.mrb[0].mxu0
        %v2773 = vadd.f32 %v2733, %v2772
        %v2774 = vpop.f32.mrb[0].mxu0
        %v2775 = vpop.f32.mrb[0].mxu0
        %v2776 = vpop.f32.mrb[0].mxu0
        %2777 = vdwg.mxu0
        %2778 = vmatprep.subr.bf16.mxu0 0
        %2779 = vmatpush1.bf16.msra.mxu0 %v2426
        %2780 = vmatprep.subr.bf16.mxu0 0
        %2781 = vmatpush1.bf16.msra.mxu0 %v2427
        %2782 = vmatprep.subr.bf16.mxu0 0
        %2783 = vmatpush1.bf16.msra.mxu0 %v2428
        %2784 = vmatprep.subr.bf16.mxu0 0
        %2785 = vmatpush1.bf16.msra.mxu0 %v2429
        %2786 = vmatprep.subr.bf16.mxu0 0
        %2787 = vmatpush1.bf16.msra.mxu0 %v2430
        %2788 = vmatprep.subr.bf16.mxu0 0
        %2789 = vmatpush1.bf16.msra.mxu0 %v2431
        %2790 = vmatprep.subr.bf16.mxu0 0
        %2791 = vmatpush1.bf16.msra.mxu0 %v2432
        %2792 = vmatprep.subr.bf16.mxu0 0
        %2793 = vmatpush1.bf16.msra.mxu0 %v2433
        %2794 = vmatprep.subr.bf16.mxu0 0
        %2795 = vmatpush1.bf16.msra.mxu0 %v2434
        %2796 = vmatprep.subr.bf16.mxu0 0
        %2797 = vmatpush1.bf16.msra.mxu0 %v2435
        %2798 = vmatprep.subr.bf16.mxu0 0
        %2799 = vmatpush1.bf16.msra.mxu0 %v2436
        %2800 = vmatprep.subr.bf16.mxu0 0
        %2801 = vmatpush1.bf16.msra.mxu0 %v2437
        %2802 = vmatprep.subr.bf16.mxu0 0
        %2803 = vmatpush1.bf16.msra.mxu0 %v2438
        %2804 = vmatprep.subr.bf16.mxu0 0
        %2805 = vmatpush1.bf16.msra.mxu0 %v2439
        %2806 = vmatprep.subr.bf16.mxu0 0
        %2807 = vmatpush1.bf16.msra.mxu0 %v2440
        %2808 = vmatprep.subr.bf16.mxu0 0
        %2809 = vmatpush1.bf16.msra.mxu0 %v2441
        %2810 = vmatprep.mubr.bf16.mxu0 %v1580
        %2811 = vmatmul.mubr.bf16.gmra.mrb[0].mxu0 %v1579
        %v2812 = vpop.f32.mrb[0].mxu0
        %v2813 = vadd.f32 %v2773, %v2812
        %v2814 = vpop.f32.mrb[0].mxu0
        %v2815 = vpop.f32.mrb[0].mxu0
        %v2816 = vpop.f32.mrb[0].mxu0
        %2817 = vdwg.mxu0
        %2818 = vmatprep.subr.bf16.mxu0 0
        %2819 = vmatpush1.bf16.msra.mxu0 %v2442
        %2820 = vmatprep.subr.bf16.mxu0 0
        %2821 = vmatpush1.bf16.msra.mxu0 %v2443
        %2822 = vmatprep.subr.bf16.mxu0 0
        %2823 = vmatpush1.bf16.msra.mxu0 %v2444
        %2824 = vmatprep.subr.bf16.mxu0 0
        %2825 = vmatpush1.bf16.msra.mxu0 %v2445
        %2826 = vmatprep.subr.bf16.mxu0 0
        %2827 = vmatpush1.bf16.msra.mxu0 %v2446
        %2828 = vmatprep.subr.bf16.mxu0 0
        %2829 = vmatpush1.bf16.msra.mxu0 %v2447
        %2830 = vmatprep.subr.bf16.mxu0 0
        %2831 = vmatpush1.bf16.msra.mxu0 %v2448
        %2832 = vmatprep.subr.bf16.mxu0 0
        %2833 = vmatpush1.bf16.msra.mxu0 %v2449
        %2834 = vmatprep.subr.bf16.mxu0 0
        %2835 = vmatpush1.bf16.msra.mxu0 %v2450
        %2836 = vmatprep.subr.bf16.mxu0 0
        %2837 = vmatpush1.bf16.msra.mxu0 %v2451
        %2838 = vmatprep.subr.bf16.mxu0 0
        %2839 = vmatpush1.bf16.msra.mxu0 %v2452
        %2840 = vmatprep.subr.bf16.mxu0 0
        %2841 = vmatpush1.bf16.msra.mxu0 %v2453
        %2842 = vmatprep.subr.bf16.mxu0 0
        %2843 = vmatpush1.bf16.msra.mxu0 %v2454
        %2844 = vmatprep.subr.bf16.mxu0 0
        %2845 = vmatpush1.bf16.msra.mxu0 %v2455
        %2846 = vmatprep.subr.bf16.mxu0 0
        %2847 = vmatpush1.bf16.msra.mxu0 %v2456
        %2848 = vmatprep.subr.bf16.mxu0 0
        %2849 = vmatpush1.bf16.msra.mxu0 %v2457
        %2850 = vmatprep.mubr.bf16.mxu0 %v1582
        %2851 = vmatmul.mubr.bf16.gmra.mrb[0].mxu0 %v1581
        %v2852 = vpop.f32.mrb[0].mxu0
        %v2853 = vadd.f32 %v2813, %v2852
        %v2854 = vpop.f32.mrb[0].mxu0
        %v2855 = vpop.f32.mrb[0].mxu0
        %v2856 = vpop.f32.mrb[0].mxu0
        %2857 = vdwg.mxu0
        %2858 = vmatprep.subr.bf16.mxu0 0
        %2859 = vmatpush1.bf16.msra.mxu0 %v2458
        %2860 = vmatprep.subr.bf16.mxu0 0
        %2861 = vmatpush1.bf16.msra.mxu0 %v2459
        %2862 = vmatprep.subr.bf16.mxu0 0
        %2863 = vmatpush1.bf16.msra.mxu0 %v2460
        %2864 = vmatprep.subr.bf16.mxu0 0
        %2865 = vmatpush1.bf16.msra.mxu0 %v2461
        %2866 = vmatprep.subr.bf16.mxu0 0
        %2867 = vmatpush1.bf16.msra.mxu0 %v2462
        %2868 = vmatprep.subr.bf16.mxu0 0
        %2869 = vmatpush1.bf16.msra.mxu0 %v2463
        %2870 = vmatprep.subr.bf16.mxu0 0
        %2871 = vmatpush1.bf16.msra.mxu0 %v2464
        %2872 = vmatprep.subr.bf16.mxu0 0
        %2873 = vmatpush1.bf16.msra.mxu0 %v2465
        %2874 = vmatprep.subr.bf16.mxu0 0
        %2875 = vmatpush1.bf16.msra.mxu0 %v2466
        %2876 = vmatprep.subr.bf16.mxu0 0
        %2877 = vmatpush1.bf16.msra.mxu0 %v2467
        %2878 = vmatprep.subr.bf16.mxu0 0
        %2879 = vmatpush1.bf16.msra.mxu0 %v2468
        %2880 = vmatprep.subr.bf16.mxu0 0
        %2881 = vmatpush1.bf16.msra.mxu0 %v2469
        %2882 = vmatprep.subr.bf16.mxu0 0
        %2883 = vmatpush1.bf16.msra.mxu0 %v2470
        %2884 = vmatprep.subr.bf16.mxu0 0
        %2885 = vmatpush1.bf16.msra.mxu0 %v2471
        %2886 = vmatprep.subr.bf16.mxu0 0
        %2887 = vmatpush1.bf16.msra.mxu0 %v2472
        %2888 = vmatprep.subr.bf16.mxu0 0
        %2889 = vmatpush1.bf16.msra.mxu0 %v2473
        %2890 = vmatprep.mubr.bf16.mxu0 %v1584
        %2891 = vmatmul.mubr.bf16.gmra.mrb[0].mxu0 %v1583
        %v2892 = vpop.f32.mrb[0].mxu0
        %v2893 = vadd.f32 %v2853, %v2892
        %v2894 = vpop.f32.mrb[0].mxu0
        %v2895 = vpop.f32.mrb[0].mxu0
        %v2896 = vpop.f32.mrb[0].mxu0
        %2897 = vdwg.mxu0
        %2898 = vmatprep.subr.bf16.mxu0 0
        %2899 = vmatpush1.bf16.msra.mxu0 %v2474
        %2900 = vmatprep.subr.bf16.mxu0 0
        %2901 = vmatpush1.bf16.msra.mxu0 %v2475
        %2902 = vmatprep.subr.bf16.mxu0 0
        %2903 = vmatpush1.bf16.msra.mxu0 %v2476
        %2904 = vmatprep.subr.bf16.mxu0 0
        %2905 = vmatpush1.bf16.msra.mxu0 %v2477
        %2906 = vmatprep.subr.bf16.mxu0 0
        %2907 = vmatpush1.bf16.msra.mxu0 %v2478
        %2908 = vmatprep.subr.bf16.mxu0 0
        %2909 = vmatpush1.bf16.msra.mxu0 %v2479
        %2910 = vmatprep.subr.bf16.mxu0 0
        %2911 = vmatpush1.bf16.msra.mxu0 %v2480
        %2912 = vmatprep.subr.bf16.mxu0 0
        %2913 = vmatpush1.bf16.msra.mxu0 %v2481
        %2914 = vmatprep.subr.bf16.mxu0 0
        %2915 = vmatpush1.bf16.msra.mxu0 %v2482
        %2916 = vmatprep.subr.bf16.mxu0 0
        %2917 = vmatpush1.bf16.msra.mxu0 %v2483
        %2918 = vmatprep.subr.bf16.mxu0 0
        %2919 = vmatpush1.bf16.msra.mxu0 %v2484
        %2920 = vmatprep.subr.bf16.mxu0 0
        %2921 = vmatpush1.bf16.msra.mxu0 %v2485
        %2922 = vmatprep.subr.bf16.mxu0 0
        %2923 = vmatpush1.bf16.msra.mxu0 %v2486
        %2924 = vmatprep.subr.bf16.mxu0 0
        %2925 = vmatpush1.bf16.msra.mxu0 %v2487
        %2926 = vmatprep.subr.bf16.mxu0 0
        %2927 = vmatpush1.bf16.msra.mxu0 %v2488
        %2928 = vmatprep.subr.bf16.mxu0 0
        %2929 = vmatpush1.bf16.msra.mxu0 %v2489
        %2930 = vmatprep.mubr.bf16.mxu0 %v1586
        %2931 = vmatmul.mubr.bf16.gmra.mrb[0].mxu0 %v1585
        %v2932 = vpop.f32.mrb[0].mxu0
        %v2933 = vadd.f32 %v2893, %v2932
        %v2934 = vpop.f32.mrb[0].mxu0
        %v2935 = vpop.f32.mrb[0].mxu0
        %v2936 = vpop.f32.mrb[0].mxu0
        %2937 = vdwg.mxu0
        %v2938 = vunpack.c.l.bf16 %v374
        %v2939 = vadd.f32 %v2933, %v2938
        %2940 = vadd.xlane.f32.xlu0 %v2939
        %v2941 = vpop.xlane.xlu0 %2940
        %v2942 = vrcp.pop 128.0
        %v2943 = vmul.f32 %v2941, %v2942
        %v2944 = vsub.f32 %v2939, %v2943
        %v2945 = vmul.f32 %v2944, %v2944
        %2946 = vadd.xlane.f32.xlu0 %v2945
        %v2947 = vpop.xlane.xlu0 %2946
        %v2948 = vmul.f32 %v2947, %v2942
        %v2949 = vadd.f32 %v2948, 1e-05
        %v2950 = vrsqrt.pop %v2949
        %v2951 = vmul.f32 %v2944, %v2950
        %v2952 = vld [vmem:[#allocation11] sm:$0x1]
        %v2954 = vlaneseq
        %v2955 = vshrl.u32 %v2954, 7
        %v2956 = vsub.s32 0, %v2955
        %v2957 = vrot.slane %v2952, %v2956
        %v2959 = vmul.f32 %v2951, %v2957
        %v2960 = vld [vmem:[#allocation13] sm:$0x1]
        %v2962 = vlaneseq
        %v2963 = vshrl.u32 %v2962, 7
        %v2964 = vsub.s32 0, %v2963
        %v2965 = vrot.slane %v2960, %v2964
        %v2967 = vadd.f32 %v2959, %v2965
        %2968 = vst [vmem:[%s372] sm:$0xff] %v2967
        %s2969 = sand.u32 %s187, 1
        %s2970 = scalar_lea.sflag [#allocation4], %s2969
        %s2971 = sand.u32 %s187, 1
        %s2972 = smul.addr %s2971, 8
        %s2973 = scalar_lea.vmem [#allocation14], %s2972
        // Predicated region
        $region77: #{gpt2_forward.9} parent=47 // pred_check
          %p2974 = pneg %p197
        $region78: #{gpt2_forward.9} parent=47 // pred_check_branch
          %2976 = sbr.rel (%p2974) target = $region80
        $region79: #{gpt2_forward.9} parent=47 // pred_region
          %s2978 = ssub.s32 128, 128
          %2979 = vsyncadd %s2970, %s2978
          %s2980 = smul.addr %s27, 128
          %s2981 = scalar_lea.hbm %s7, %s2980
          %s2983 = sshll.u32 %s2973, 4
          %s2984 = int_to_ptr.vmem [resolvable:$true] %s2983
          %2986 = dma.vmem_to_hbm [thread:$0]  %s2984, 128, %s2981, %s2970
        $region80: #{gpt2_forward.9} parent=47 // pred_fallthru
          _
      $region48: #{gpt2_forward.9} parent=5 // pred_fallthru
        _
      %p2987 = scmp.le.s32.totalorder 2, %s22
      // Predicated region
      $region81: #{gpt2_forward.9} parent=5 // pred_check
        %p2988 = pneg %p2987
      $region82: #{gpt2_forward.9} parent=5 // pred_check_branch
        %2990 = sbr.rel (%p2988) target = $region84
      $region83: #{gpt2_forward.9} parent=5 // pred_region
        %s2991 = ssub.s32 %s22, 2
        // Predicated region
        $region85: #{gpt2_forward.9} parent=83 // pred_check
          %p2992 = pneg %p203
        $region86: #{gpt2_forward.9} parent=83 // pred_check_branch
          %2994 = sbr.rel (%p2992) target = $region88
        $region87: #{gpt2_forward.9} parent=83 // pred_region
          %s2995 = sand.u32 %s188, 1
          %s2996 = scalar_lea.sflag [#allocation4], %s2995
          %s2997 = sand.u32 %s188, 1
          %s2998 = smul.addr %s2997, 8
          %s2999 = scalar_lea.vmem [#allocation14], %s2998
          %3000 = dma.done %s2996, 128
        $region88: #{gpt2_forward.9} parent=83 // pred_fallthru
          _
      $region84: #{gpt2_forward.9} parent=5 // pred_fallthru
        _
    $region6: #{gpt2_forward.9} parent=1 // loop_footer
      %s26 = sadd.s32 1, %s22
    $region7: #{gpt2_forward.9} parent=1 // loop_footer_branch
      %21 = sbr.rel target = $region3
    $region8: #{gpt2_forward.9} parent=1 // loop_exit
      _
    %3001 = vsyncpa [#allocation3], 1
    %s3002 = scalar_lea.sflag [#allocation3], 1
    %3003 = vsyncpa %s3002, 1
    %3004 = vsyncpa [#allocation6], 1
    %3005 = vsyncpa [#allocation9], 1
    %3006 = vsyncpa [#allocation12], 1
    %3007 = vsyncpa [#allocation4], 1
    %s3008 = scalar_lea.sflag [#allocation4], 1
    %3009 = vsyncpa %s3008, 1

</llo_original>
